<compile_context>
chip_gen: v5e
topology: v5e:2x2
jax: 0.10.0
libtpu: 0.0.40
codegen_flags: <defaults>
</compile_context>

<pallas_src>
import functools

import jax
import jax.numpy as jnp
import numpy as np
from jax import lax
from jax.experimental import pallas as pl
from jax.experimental.pallas import tpu as pltpu


def _round_up(x, m):
    return (x + m - 1) // m * m


_COMPILER_PARAMS = pltpu.CompilerParams(
    dimension_semantics=("parallel",),      # M-tile axis is independent -> megacore
    vmem_limit_bytes=32 * 1024 * 1024,      # explicit budget, safe on v5e/v6e/v7x
)


# ---------------------------------------------------------------------------
# Pallas kernel: out = relu?(x @ w + b), tiled over rows (M), weights resident.
# ---------------------------------------------------------------------------
def _matmul_bias_act_kernel(x_ref, w_ref, b_ref, o_ref, *, apply_relu):
    acc = jnp.dot(x_ref[...], w_ref[...], preferred_element_type=jnp.float32)
    acc = acc + b_ref[...]                  # (1, N) broadcast, f32
    if apply_relu:
        acc = jnp.maximum(acc, 0.0)
    o_ref[...] = acc.astype(o_ref.dtype)


def fused_matmul_bias(x, w, b, *, relu, out_dtype, block_m=512):
    """x: (M, K) bf16, w: (K, N) bf16, b: (1, N) f32 -> (M, N) out_dtype."""
    M, K = x.shape
    N = w.shape[1]
    tm = min(block_m, _round_up(M, 16))     # 16-aligned sublanes (bf16 tiles)
    m_pad = _round_up(M, tm)
    if m_pad != M:
        x = jnp.pad(x, ((0, m_pad - M), (0, 0)))
    kernel = functools.partial(_matmul_bias_act_kernel, apply_relu=relu)
    out = pl.pallas_call(
        kernel,
        out_shape=jax.ShapeDtypeStruct((m_pad, N), out_dtype),
        grid=(m_pad // tm,),
        in_specs=[
            pl.BlockSpec((tm, K), lambda i: (i, 0)),   # streamed M tiles
            pl.BlockSpec((K, N), lambda i: (0, 0)),    # weights resident in VMEM
            pl.BlockSpec((1, N), lambda i: (0, 0)),    # bias resident in VMEM
        ],
        out_specs=pl.BlockSpec((tm, N), lambda i: (i, 0)),
        compiler_params=_COMPILER_PARAMS,
    )(x, w, b)
    return out[:M] if m_pad != M else out


# ---------------------------------------------------------------------------
# Pallas kernel: fused  out = relu(x @ w1 + b1) @ w2 + b2   (fc1 + fc2 head)
# ---------------------------------------------------------------------------
def _mlp_kernel(x_ref, w1_ref, b1_ref, w2_ref, b2_ref, o_ref):
    h = jnp.dot(x_ref[...], w1_ref[...], preferred_element_type=jnp.float32)
    h = jnp.maximum(h + b1_ref[...], 0.0)
    out = jnp.dot(h.astype(w2_ref.dtype), w2_ref[...],
                  preferred_element_type=jnp.float32)
    o_ref[...] = (out + b2_ref[...]).astype(o_ref.dtype)


def fused_mlp(x, w1, b1, w2, b2, *, block_m=256):
    """x: (M, K) bf16; w1: (K, H) bf16; w2: (H, N) bf16; biases f32 -> (M, N) f32."""
    M, K = x.shape
    H = w1.shape[1]
    N = w2.shape[1]
    tm = min(block_m, _round_up(M, 16))
    m_pad = _round_up(M, tm)
    if m_pad != M:
        x = jnp.pad(x, ((0, m_pad - M), (0, 0)))
    out = pl.pallas_call(
        _mlp_kernel,
        out_shape=jax.ShapeDtypeStruct((m_pad, N), jnp.float32),
        grid=(m_pad // tm,),
        in_specs=[
            pl.BlockSpec((tm, K), lambda i: (i, 0)),
            pl.BlockSpec((K, H), lambda i: (0, 0)),    # fc1 weight resident
            pl.BlockSpec((1, H), lambda i: (0, 0)),
            pl.BlockSpec((H, N), lambda i: (0, 0)),    # fc2 weight resident
            pl.BlockSpec((1, N), lambda i: (0, 0)),
        ],
        out_specs=pl.BlockSpec((tm, N), lambda i: (i, 0)),
        compiler_params=_COMPILER_PARAMS,
    )(x, w1, b1, w2, b2)
    return out[:M] if m_pad != M else out


# ---------------------------------------------------------------------------
# Conv2d (valid padding) = strided-slice patch extraction (no gather) + matmul
# ---------------------------------------------------------------------------
def extract_patches_nhwc(x, kh, kw, stride):
    """x: (B, H, W, C) -> (B*Ho*Wo, kh*kw*C); feature index = (dy*kw+dx)*C + c."""
    B, H, W, C = x.shape
    Ho = (H - kh) // stride + 1
    Wo = (W - kw) // stride + 1
    taps = []
    for dy in range(kh):
        for dx in range(kw):
            taps.append(lax.slice(
                x, (0, dy, dx, 0),
                (B, dy + stride * (Ho - 1) + 1, dx + stride * (Wo - 1) + 1, C),
                (1, stride, stride, 1)))                       # (B, Ho, Wo, C)
    p = jnp.stack(taps, axis=3)                                # (B, Ho, Wo, kh*kw, C)
    return p.reshape(B * Ho * Wo, kh * kw * C), Ho, Wo


def conv2d_nhwc(x, w_mat, b, stride, kh, kw):
    """x: (B,H,W,C) bf16; w_mat: (kh*kw*C, O) bf16; b: (1,O) f32 -> (B,Ho,Wo,O) bf16."""
    B = x.shape[0]
    patches, Ho, Wo = extract_patches_nhwc(x, kh, kw, stride)
    y = fused_matmul_bias(patches, w_mat, b, relu=True, out_dtype=jnp.bfloat16)
    return y.reshape(B, Ho, Wo, w_mat.shape[1])


# ---------------------------------------------------------------------------
# DeepmindCNN parameters, one-time prep, forward
# ---------------------------------------------------------------------------
def init_params(key):
    ks = jax.random.split(key, 10)
    def w(k, shape, scale):
        return jax.random.normal(k, shape, jnp.float32) * scale
    return {
        "c1w": w(ks[0], (32, 4, 8, 8), 0.05),  "c1b": w(ks[1], (32,), 0.05),
        "c2w": w(ks[2], (64, 32, 4, 4), 0.03), "c2b": w(ks[3], (64,), 0.03),
        "c3w": w(ks[4], (64, 64, 3, 3), 0.03), "c3b": w(ks[5], (64,), 0.03),
        "f1w": w(ks[6], (512, 3136), 0.01),    "f1b": w(ks[7], (512,), 0.01),
        "f2w": w(ks[8], (4, 512), 0.02),       "f2b": w(ks[9], (4,), 0.02),
    }


def prepare_params(params):
    """One-time weight prep: conv weights -> (kh*kw*C, O) matching the patch
    feature order; fc1 columns permuted from PyTorch (c,h,w) flatten order to
    our NHWC (h,w,c) order; matmul operands cast to bf16; biases kept f32."""
    def conv_w(w):                                    # (O, C, kh, kw) -> (kh*kw*C, O)
        O, C, kh, kw = w.shape
        return w.transpose(2, 3, 1, 0).reshape(kh * kw * C, O).astype(jnp.bfloat16)

    hw = jnp.arange(49)
    c = jnp.arange(64)
    perm = (c[None, :] * 49 + hw[:, None]).reshape(-1)   # ours[hw*64+c] <- theirs[c*49+hw]
    f1w_nhwc = params["f1w"][:, perm]                     # (512, 3136), NHWC-ordered cols

    return {
        "c1w": conv_w(params["c1w"]), "c1b": params["c1b"].reshape(1, -1),
        "c2w": conv_w(params["c2w"]), "c2b": params["c2b"].reshape(1, -1),
        "c3w": conv_w(params["c3w"]), "c3b": params["c3b"].reshape(1, -1),
        "f1w": f1w_nhwc.T.astype(jnp.bfloat16), "f1b": params["f1b"].reshape(1, -1),
        "f2w": params["f2w"].T.astype(jnp.bfloat16), "f2b": params["f2b"].reshape(1, -1),
    }


def deepmind_cnn(prepped, x):
    # x: (B, 4, 84, 84) f32 NCHW (PyTorch convention) -> actions (B, 4) f32
    x = jnp.transpose(x, (0, 2, 3, 1)).astype(jnp.bfloat16)        # to NHWC once
    h = conv2d_nhwc(x, prepped["c1w"], prepped["c1b"], 4, 8, 8)    # (B, 20, 20, 32)
    h = conv2d_nhwc(h, prepped["c2w"], prepped["c2b"], 2, 4, 4)    # (B, 9, 9, 64)
    h = conv2d_nhwc(h, prepped["c3w"], prepped["c3b"], 1, 3, 3)    # (B, 7, 7, 64)
    h = h.reshape(h.shape[0], -1)                                  # (B, 3136), NHWC flatten
    return fused_mlp(h, prepped["f1w"], prepped["f1b"],
                     prepped["f2w"], prepped["f2b"])               # (B, 4) f32


# Pure-JAX f32 reference (numerical sanity check, PyTorch semantics)
def deepmind_cnn_ref(params, x):
    def conv(x, w, b, s):
        y = lax.conv_general_dilated(
            x, w, window_strides=(s, s), padding="VALID",
            dimension_numbers=("NCHW", "OIHW", "NCHW"))
        return y + b[None, :, None, None]
    h = jax.nn.relu(conv(x, params["c1w"], params["c1b"], 4))
    h = jax.nn.relu(conv(h, params["c2w"], params["c2b"], 2))
    h = jax.nn.relu(conv(h, params["c3w"], params["c3b"], 1))
    h = h.reshape(h.shape[0], -1)
    h = jax.nn.relu(h @ params["f1w"].T + params["f1b"])
    return h @ params["f2w"].T + params["f2b"]


if __name__ == "__main__":
    key = jax.random.PRNGKey(0)
    kx, kp = jax.random.split(key)
    # Linear(3136, 512) pins the spatial size: input must be (B, 4, 84, 84).
    x = jax.random.normal(kx, (2, 4, 84, 84), jnp.float32)
    params = init_params(kp)
    prepped = prepare_params(params)

    fwd = jax.jit(deepmind_cnn)
    actions = fwd(prepped, x)
    jax.block_until_ready(actions)
    assert actions.shape == (2, 4) and actions.dtype == jnp.float32

    ref = jax.jit(deepmind_cnn_ref)(params, x)
    np.testing.assert_allclose(np.asarray(actions), np.asarray(ref),
                               rtol=2e-2, atol=2e-2)
    print("KERNEL_OK")
</pallas_src>

<mosaic_0001>
module attributes {stable_mosaic.version = 11 : i64} {
  func.func @_matmul_bias_act_kernel(%arg0: i32, %arg1: memref<512x256xbf16, #tpu.memory_space<vmem>>, %arg2: memref<256x32xbf16, #tpu.memory_space<vmem>>, %arg3: memref<1x32xf32, #tpu.memory_space<vmem>>, %arg4: memref<512x32xbf16, #tpu.memory_space<vmem>>) attributes {dimension_semantics = [#tpu.dimension_semantics<parallel>], iteration_bounds = array<i64: 2>, scalar_prefetch = 0 : i64, scratch_operands = 0 : i64, tpu.core_type = #tpu.core_type<tc>, window_params = [{transform_indices = @transform_0, window_bounds = array<i64: 512, 256>}, {pipeline_mode = #tpu.pipeline_mode<synchronous>, transform_indices = @transform_1, window_bounds = array<i64: 256, 32>}, {pipeline_mode = #tpu.pipeline_mode<synchronous>, transform_indices = @transform_2, window_bounds = array<i64: 1, 32>}, {transform_indices = @transform_3, window_bounds = array<i64: 512, 32>}]} {
    %c0 = arith.constant 0 : index
    %c0_0 = arith.constant 0 : index
    %0 = vector.load %arg1[%c0, %c0_0] : memref<512x256xbf16, #tpu.memory_space<vmem>>, vector<512x256xbf16>
    %c0_1 = arith.constant 0 : index
    %c0_2 = arith.constant 0 : index
    %1 = vector.load %arg2[%c0_1, %c0_2] : memref<256x32xbf16, #tpu.memory_space<vmem>>, vector<256x32xbf16>
    %cst = arith.constant dense<0.000000e+00> : vector<512x32xf32>
    %2 = tpu.matmul %0, %1, %cst {dimension_numbers = #tpu.dot_dimension_numbers<[1], [0], [0], [1], [0, 0, 1, 1], [], []>} : vector<512x256xbf16>, vector<256x32xbf16>, vector<512x32xf32> -> vector<512x32xf32>
    %c0_3 = arith.constant 0 : index
    %c0_4 = arith.constant 0 : index
    %3 = vector.load %arg3[%c0_3, %c0_4] : memref<1x32xf32, #tpu.memory_space<vmem>>, vector<1x32xf32>
    %4 = vector.broadcast %3 : vector<1x32xf32> to vector<512x32xf32>
    %5 = arith.addf %2, %4 : vector<512x32xf32>
    %cst_5 = arith.constant 0.000000e+00 : f32
    %6 = vector.broadcast %cst_5 : f32 to vector<512x32xf32>
    %7 = arith.maximumf %5, %6 : vector<512x32xf32>
    %8 = arith.truncf %7 : vector<512x32xf32> to vector<512x32xbf16>
    %c0_6 = arith.constant 0 : index
    %c0_7 = arith.constant 0 : index
    %9 = vector.load %arg4[%c0_6, %c0_7] : memref<512x32xbf16, #tpu.memory_space<vmem>>, vector<512x32xbf16>
    tpu.vector_store %arg4[%c0_6, %c0_7], %8 {strides = array<i32>} : memref<512x32xbf16, #tpu.memory_space<vmem>>, vector<512x32xbf16>,
    return
  }
  func.func @transform_0(%arg0: i32) -> (i32, i32) {
    %c0_i32 = arith.constant 0 : i32
    %c0_i32_0 = arith.constant 0 : i32
    return %arg0, %c0_i32 : i32, i32
  }
  func.func @transform_1(%arg0: i32) -> (i32, i32) {
    %c0_i32 = arith.constant 0 : i32
    %c0_i32_0 = arith.constant 0 : i32
    %c0_i32_1 = arith.constant 0 : i32
    return %c0_i32, %c0_i32_0 : i32, i32
  }
  func.func @transform_2(%arg0: i32) -> (i32, i32) {
    %c0_i32 = arith.constant 0 : i32
    %c0_i32_0 = arith.constant 0 : i32
    %c0_i32_1 = arith.constant 0 : i32
    return %c0_i32, %c0_i32_0 : i32, i32
  }
  func.func @transform_3(%arg0: i32) -> (i32, i32) {
    %c0_i32 = arith.constant 0 : i32
    %c0_i32_0 = arith.constant 0 : i32
    return %arg0, %c0_i32 : i32, i32
  }
}

module attributes {stable_mosaic.version = 11 : i64} {
  func.func @_matmul_bias_act_kernel(%arg0: i32, %arg1: memref<176x512xbf16, #tpu.memory_space<vmem>>, %arg2: memref<512x64xbf16, #tpu.memory_space<vmem>>, %arg3: memref<1x64xf32, #tpu.memory_space<vmem>>, %arg4: memref<176x64xbf16, #tpu.memory_space<vmem>>) attributes {dimension_semantics = [#tpu.dimension_semantics<parallel>], iteration_bounds = array<i64: 1>, scalar_prefetch = 0 : i64, scratch_operands = 0 : i64, tpu.core_type = #tpu.core_type<tc>, window_params = [{transform_indices = @transform_0, window_bounds = array<i64: 176, 512>}, {pipeline_mode = #tpu.pipeline_mode<synchronous>, transform_indices = @transform_1, window_bounds = array<i64: 512, 64>}, {pipeline_mode = #tpu.pipeline_mode<synchronous>, transform_indices = @transform_2, window_bounds = array<i64: 1, 64>}, {transform_indices = @transform_3, window_bounds = array<i64: 176, 64>}]} {
    %c0 = arith.constant 0 : index
    %c0_0 = arith.constant 0 : index
    %0 = vector.load %arg1[%c0, %c0_0] : memref<176x512xbf16, #tpu.memory_space<vmem>>, vector<176x512xbf16>
    %c0_1 = arith.constant 0 : index
    %c0_2 = arith.constant 0 : index
    %1 = vector.load %arg2[%c0_1, %c0_2] : memref<512x64xbf16, #tpu.memory_space<vmem>>, vector<512x64xbf16>
    %cst = arith.constant dense<0.000000e+00> : vector<176x64xf32>
    %2 = tpu.matmul %0, %1, %cst {dimension_numbers = #tpu.dot_dimension_numbers<[1], [0], [0], [1], [0, 0, 1, 1], [], []>} : vector<176x512xbf16>, vector<512x64xbf16>, vector<176x64xf32> -> vector<176x64xf32>
    %c0_3 = arith.constant 0 : index
    %c0_4 = arith.constant 0 : index
    %3 = vector.load %arg3[%c0_3, %c0_4] : memref<1x64xf32, #tpu.memory_space<vmem>>, vector<1x64xf32>
    %4 = vector.broadcast %3 : vector<1x64xf32> to vector<176x64xf32>
    %5 = arith.addf %2, %4 : vector<176x64xf32>
    %cst_5 = arith.constant 0.000000e+00 : f32
    %6 = vector.broadcast %cst_5 : f32 to vector<176x64xf32>
    %7 = arith.maximumf %5, %6 : vector<176x64xf32>
    %8 = arith.truncf %7 : vector<176x64xf32> to vector<176x64xbf16>
    %c0_6 = arith.constant 0 : index
    %c0_7 = arith.constant 0 : index
    %9 = vector.load %arg4[%c0_6, %c0_7] : memref<176x64xbf16, #tpu.memory_space<vmem>>, vector<176x64xbf16>
    tpu.vector_store %arg4[%c0_6, %c0_7], %8 {strides = array<i32>} : memref<176x64xbf16, #tpu.memory_space<vmem>>, vector<176x64xbf16>,
    return
  }
  func.func @transform_0(%arg0: i32) -> (i32, i32) {
    %c0_i32 = arith.constant 0 : i32
    %c0_i32_0 = arith.constant 0 : i32
    return %arg0, %c0_i32 : i32, i32
  }
  func.func @transform_1(%arg0: i32) -> (i32, i32) {
    %c0_i32 = arith.constant 0 : i32
    %c0_i32_0 = arith.constant 0 : i32
    %c0_i32_1 = arith.constant 0 : i32
    return %c0_i32, %c0_i32_0 : i32, i32
  }
  func.func @transform_2(%arg0: i32) -> (i32, i32) {
    %c0_i32 = arith.constant 0 : i32
    %c0_i32_0 = arith.constant 0 : i32
    %c0_i32_1 = arith.constant 0 : i32
    return %c0_i32, %c0_i32_0 : i32, i32
  }
  func.func @transform_3(%arg0: i32) -> (i32, i32) {
    %c0_i32 = arith.constant 0 : i32
    %c0_i32_0 = arith.constant 0 : i32
    return %arg0, %c0_i32 : i32, i32
  }
}

module attributes {stable_mosaic.version = 11 : i64} {
  func.func @_matmul_bias_act_kernel(%arg0: i32, %arg1: memref<112x576xbf16, #tpu.memory_space<vmem>>, %arg2: memref<576x64xbf16, #tpu.memory_space<vmem>>, %arg3: memref<1x64xf32, #tpu.memory_space<vmem>>, %arg4: memref<112x64xbf16, #tpu.memory_space<vmem>>) attributes {dimension_semantics = [#tpu.dimension_semantics<parallel>], iteration_bounds = array<i64: 1>, scalar_prefetch = 0 : i64, scratch_operands = 0 : i64, tpu.core_type = #tpu.core_type<tc>, window_params = [{transform_indices = @transform_0, window_bounds = array<i64: 112, 576>}, {pipeline_mode = #tpu.pipeline_mode<synchronous>, transform_indices = @transform_1, window_bounds = array<i64: 576, 64>}, {pipeline_mode = #tpu.pipeline_mode<synchronous>, transform_indices = @transform_2, window_bounds = array<i64: 1, 64>}, {transform_indices = @transform_3, window_bounds = array<i64: 112, 64>}]} {
    %c0 = arith.constant 0 : index
    %c0_0 = arith.constant 0 : index
    %0 = vector.load %arg1[%c0, %c0_0] : memref<112x576xbf16, #tpu.memory_space<vmem>>, vector<112x576xbf16>
    %c0_1 = arith.constant 0 : index
    %c0_2 = arith.constant 0 : index
    %1 = vector.load %arg2[%c0_1, %c0_2] : memref<576x64xbf16, #tpu.memory_space<vmem>>, vector<576x64xbf16>
    %cst = arith.constant dense<0.000000e+00> : vector<112x64xf32>
    %2 = tpu.matmul %0, %1, %cst {dimension_numbers = #tpu.dot_dimension_numbers<[1], [0], [0], [1], [0, 0, 1, 1], [], []>} : vector<112x576xbf16>, vector<576x64xbf16>, vector<112x64xf32> -> vector<112x64xf32>
    %c0_3 = arith.constant 0 : index
    %c0_4 = arith.constant 0 : index
    %3 = vector.load %arg3[%c0_3, %c0_4] : memref<1x64xf32, #tpu.memory_space<vmem>>, vector<1x64xf32>
    %4 = vector.broadcast %3 : vector<1x64xf32> to vector<112x64xf32>
    %5 = arith.addf %2, %4 : vector<112x64xf32>
    %cst_5 = arith.constant 0.000000e+00 : f32
    %6 = vector.broadcast %cst_5 : f32 to vector<112x64xf32>
    %7 = arith.maximumf %5, %6 : vector<112x64xf32>
    %8 = arith.truncf %7 : vector<112x64xf32> to vector<112x64xbf16>
    %c0_6 = arith.constant 0 : index
    %c0_7 = arith.constant 0 : index
    %9 = vector.load %arg4[%c0_6, %c0_7] : memref<112x64xbf16, #tpu.memory_space<vmem>>, vector<112x64xbf16>
    tpu.vector_store %arg4[%c0_6, %c0_7], %8 {strides = array<i32>} : memref<112x64xbf16, #tpu.memory_space<vmem>>, vector<112x64xbf16>,
    return
  }
  func.func @transform_0(%arg0: i32) -> (i32, i32) {
    %c0_i32 = arith.constant 0 : i32
    %c0_i32_0 = arith.constant 0 : i32
    return %arg0, %c0_i32 : i32, i32
  }
  func.func @transform_1(%arg0: i32) -> (i32, i32) {
    %c0_i32 = arith.constant 0 : i32
    %c0_i32_0 = arith.constant 0 : i32
    %c0_i32_1 = arith.constant 0 : i32
    return %c0_i32, %c0_i32_0 : i32, i32
  }
  func.func @transform_2(%arg0: i32) -> (i32, i32) {
    %c0_i32 = arith.constant 0 : i32
    %c0_i32_0 = arith.constant 0 : i32
    %c0_i32_1 = arith.constant 0 : i32
    return %c0_i32, %c0_i32_0 : i32, i32
  }
  func.func @transform_3(%arg0: i32) -> (i32, i32) {
    %c0_i32 = arith.constant 0 : i32
    %c0_i32_0 = arith.constant 0 : i32
    return %arg0, %c0_i32 : i32, i32
  }
}

module attributes {stable_mosaic.version = 11 : i64} {
  func.func @_mlp_kernel(%arg0: i32, %arg1: memref<16x3136xbf16, #tpu.memory_space<vmem>>, %arg2: memref<3136x512xbf16, #tpu.memory_space<vmem>>, %arg3: memref<1x512xf32, #tpu.memory_space<vmem>>, %arg4: memref<512x4xbf16, #tpu.memory_space<vmem>>, %arg5: memref<1x4xf32, #tpu.memory_space<vmem>>, %arg6: memref<16x4xf32, #tpu.memory_space<vmem>>) attributes {dimension_semantics = [#tpu.dimension_semantics<parallel>], iteration_bounds = array<i64: 1>, scalar_prefetch = 0 : i64, scratch_operands = 0 : i64, tpu.core_type = #tpu.core_type<tc>, window_params = [{transform_indices = @transform_0, window_bounds = array<i64: 16, 3136>}, {pipeline_mode = #tpu.pipeline_mode<synchronous>, transform_indices = @transform_1, window_bounds = array<i64: 3136, 512>}, {pipeline_mode = #tpu.pipeline_mode<synchronous>, transform_indices = @transform_2, window_bounds = array<i64: 1, 512>}, {pipeline_mode = #tpu.pipeline_mode<synchronous>, transform_indices = @transform_3, window_bounds = array<i64: 512, 4>}, {pipeline_mode = #tpu.pipeline_mode<synchronous>, transform_indices = @transform_4, window_bounds = array<i64: 1, 4>}, {transform_indices = @transform_5, window_bounds = array<i64: 16, 4>}]} {
    %c0 = arith.constant 0 : index
    %c0_0 = arith.constant 0 : index
    %0 = vector.load %arg1[%c0, %c0_0] : memref<16x3136xbf16, #tpu.memory_space<vmem>>, vector<16x3136xbf16>
    %c0_1 = arith.constant 0 : index
    %c0_2 = arith.constant 0 : index
    %1 = vector.load %arg2[%c0_1, %c0_2] : memref<3136x512xbf16, #tpu.memory_space<vmem>>, vector<3136x512xbf16>
    %cst = arith.constant dense<0.000000e+00> : vector<16x512xf32>
    %2 = tpu.matmul %0, %1, %cst {dimension_numbers = #tpu.dot_dimension_numbers<[1], [0], [0], [1], [0, 0, 1, 1], [], []>} : vector<16x3136xbf16>, vector<3136x512xbf16>, vector<16x512xf32> -> vector<16x512xf32>
    %c0_3 = arith.constant 0 : index
    %c0_4 = arith.constant 0 : index
    %3 = vector.load %arg3[%c0_3, %c0_4] : memref<1x512xf32, #tpu.memory_space<vmem>>, vector<1x512xf32>
    %4 = vector.broadcast %3 : vector<1x512xf32> to vector<16x512xf32>
    %5 = arith.addf %2, %4 : vector<16x512xf32>
    %cst_5 = arith.constant 0.000000e+00 : f32
    %6 = vector.broadcast %cst_5 : f32 to vector<16x512xf32>
    %7 = arith.maximumf %5, %6 : vector<16x512xf32>
    %8 = arith.truncf %7 : vector<16x512xf32> to vector<16x512xbf16>
    %c0_6 = arith.constant 0 : index
    %c0_7 = arith.constant 0 : index
    %9 = vector.load %arg4[%c0_6, %c0_7] : memref<512x4xbf16, #tpu.memory_space<vmem>>, vector<512x4xbf16>
    %cst_8 = arith.constant dense<0.000000e+00> : vector<16x4xf32>
    %10 = tpu.matmul %8, %9, %cst_8 {dimension_numbers = #tpu.dot_dimension_numbers<[1], [0], [0], [1], [0, 0, 1, 1], [], []>} : vector<16x512xbf16>, vector<512x4xbf16>, vector<16x4xf32> -> vector<16x4xf32>
    %c0_9 = arith.constant 0 : index
    %c0_10 = arith.constant 0 : index
    %11 = vector.load %arg5[%c0_9, %c0_10] : memref<1x4xf32, #tpu.memory_space<vmem>>, vector<1x4xf32>
    %12 = vector.broadcast %11 : vector<1x4xf32> to vector<16x4xf32>
    %13 = arith.addf %10, %12 : vector<16x4xf32>
    %c0_11 = arith.constant 0 : index
    %c0_12 = arith.constant 0 : index
    %14 = vector.load %arg6[%c0_11, %c0_12] : memref<16x4xf32, #tpu.memory_space<vmem>>, vector<16x4xf32>
    tpu.vector_store %arg6[%c0_11, %c0_12], %13 {strides = array<i32>} : memref<16x4xf32, #tpu.memory_space<vmem>>, vector<16x4xf32>,
    return
  }
  func.func @transform_0(%arg0: i32) -> (i32, i32) {
    %c0_i32 = arith.constant 0 : i32
    %c0_i32_0 = arith.constant 0 : i32
    return %arg0, %c0_i32 : i32, i32
  }
  func.func @transform_1(%arg0: i32) -> (i32, i32) {
    %c0_i32 = arith.constant 0 : i32
    %c0_i32_0 = arith.constant 0 : i32
    %c0_i32_1 = arith.constant 0 : i32
    return %c0_i32, %c0_i32_0 : i32, i32
  }
  func.func @transform_2(%arg0: i32) -> (i32, i32) {
    %c0_i32 = arith.constant 0 : i32
    %c0_i32_0 = arith.constant 0 : i32
    %c0_i32_1 = arith.constant 0 : i32
    return %c0_i32, %c0_i32_0 : i32, i32
  }
  func.func @transform_3(%arg0: i32) -> (i32, i32) {
    %c0_i32 = arith.constant 0 : i32
    %c0_i32_0 = arith.constant 0 : i32
    %c0_i32_1 = arith.constant 0 : i32
    return %c0_i32, %c0_i32_0 : i32, i32
  }
  func.func @transform_4(%arg0: i32) -> (i32, i32) {
    %c0_i32 = arith.constant 0 : i32
    %c0_i32_0 = arith.constant 0 : i32
    %c0_i32_1 = arith.constant 0 : i32
    return %c0_i32, %c0_i32_0 : i32, i32
  }
  func.func @transform_5(%arg0: i32) -> (i32, i32) {
    %c0_i32 = arith.constant 0 : i32
    %c0_i32_0 = arith.constant 0 : i32
    return %arg0, %c0_i32 : i32, i32
  }
}

</mosaic_0001>

<llo_original>
// kernel: deepmind_cnn.4
$region0: #{deepmind_cnn.4}
  #allocation0 [shape = 'u32[]', space=smem, size = 0x4, offset = 0x4, fixed_abs, tag = 'smem constant byte address 0x4 - core index']
  #allocation1 [shape = 'u32[72,128]{1,0:T(1,128)}', space=vmem, size = 0x9000, scoped, tag = 'internal scratch']
  %s0 = inlined_call_operand.vmem [shape: bf16[1024,256], index: 0, kind: input, shape index: {}]
  %s1 = inlined_call_operand.vmem [shape: bf16[256,32], index: 1, kind: input, shape index: {}]
  %s2 = inlined_call_operand.vmem [shape: f32[1,32], index: 2, kind: input, shape index: {}]
  %s3 = inlined_call_operand.vmem [shape: bf16[1024,32], index: 3, kind: output, shape index: {}]
  %s4 = sld [smem:[#allocation0]]
  $region45: #{deepmind_cnn.4} parent=0
    _
  %s6 = ssub.s32 1, %s4
  %s7 = scalar_select 0, %s6, %s4
  loop: start=0, step=1, limit=4
  $region2: #{deepmind_cnn.4} parent=0 // loop_pre_header
    _
  $region3: #{deepmind_cnn.4} parent=0 // loop_header
    %s9 = sphi 0, %s13
    %p10 = scmp.ge.s32.totalorder %s9, 4
    %s19 = sphi 0, %s21
    %s22 = sphi 0, %s19
    %s23 = sphi 0, %s22
    %s39 = sphi 0, %s23
    %s43 = sphi 0, %s43
    %s45 = sphi 0, %s43
    %s46 = sphi 0, %s45
    %s60 = sphi 0, %s46
    %s64 = sphi 0, %s64
    %s66 = sphi 0, %s64
    %s67 = sphi 0, %s66
    %s81 = sphi 0, %s67
    %s87 = sphi 0, %s89
    %s90 = sphi 0, %s87
    %s91 = sphi 0, %s90
    %s107 = sphi 0, %s91
  $region4: #{deepmind_cnn.4} parent=0 // loop_header_branch
    %12 = sbr.rel (%p10) target = $region8
  $region5: #{deepmind_cnn.4} parent=0 // loop_body
    %s14 = ssub.s32 %s9, 1
    %s15 = ssub.s32 %s9, 2
    %s16 = sadd.s32 %s9, 1
    %s17 = ssub.s32 %s9, %s16
    %p18 = scmp.eq.s32.totalorder %s17, 0
    %s20 = sadd.s32 %s19, 1
    %s21 = scalar_select %p18, %s19, %s20
    %p24 = pneg %p18
    %p25 = scmp.eq.s32.totalorder %s9, 1
    %p26 = por %p24, %p25
    %p27 = scmp.ne.s32.totalorder %s19, %s22
    %p28 = scmp.eq.s32.totalorder %s9, 0
    %p29 = por %p27, %p28
    %p30 = scmp.ne.s32.totalorder %s19, %s22
    %p31 = scmp.eq.s32.totalorder %s14, 1
    %p32 = por %p30, %p31
    %p33 = scmp.ne.s32.totalorder %s22, %s23
    %p34 = scmp.eq.s32.totalorder %s14, 0
    %p35 = por %p33, %p34
    %p36 = scmp.ne.s32.totalorder %s22, %s23
    %p37 = scmp.eq.s32.totalorder %s15, 1
    %p38 = por %p36, %p37
    %p40 = scmp.ne.s32.totalorder %s23, %s39
    %p41 = scmp.eq.s32.totalorder %s15, 0
    %p42 = por %p40, %p41
    %s44 = sadd.s32 %s43, 1
    %p47 = scmp.eq.s32.totalorder %s9, 1
    %p48 = scmp.ne.s32.totalorder %s43, %s45
    %p49 = scmp.eq.s32.totalorder %s9, 0
    %p50 = por %p48, %p49
    %p51 = scmp.ne.s32.totalorder %s43, %s45
    %p52 = scmp.eq.s32.totalorder %s14, 1
    %p53 = por %p51, %p52
    %p54 = scmp.ne.s32.totalorder %s45, %s46
    %p55 = scmp.eq.s32.totalorder %s14, 0
    %p56 = por %p54, %p55
    %p57 = scmp.ne.s32.totalorder %s45, %s46
    %p58 = scmp.eq.s32.totalorder %s15, 1
    %p59 = por %p57, %p58
    %p61 = scmp.ne.s32.totalorder %s46, %s60
    %p62 = scmp.eq.s32.totalorder %s15, 0
    %p63 = por %p61, %p62
    %s65 = sadd.s32 %s64, 1
    %p68 = scmp.eq.s32.totalorder %s9, 1
    %p69 = scmp.ne.s32.totalorder %s64, %s66
    %p70 = scmp.eq.s32.totalorder %s9, 0
    %p71 = por %p69, %p70
    %p72 = scmp.ne.s32.totalorder %s64, %s66
    %p73 = scmp.eq.s32.totalorder %s14, 1
    %p74 = por %p72, %p73
    %p75 = scmp.ne.s32.totalorder %s66, %s67
    %p76 = scmp.eq.s32.totalorder %s14, 0
    %p77 = por %p75, %p76
    %p78 = scmp.ne.s32.totalorder %s66, %s67
    %p79 = scmp.eq.s32.totalorder %s15, 1
    %p80 = por %p78, %p79
    %p82 = scmp.ne.s32.totalorder %s67, %s81
    %p83 = scmp.eq.s32.totalorder %s15, 0
    %p84 = por %p82, %p83
    %s85 = ssub.s32 %s9, %s16
    %p86 = scmp.eq.s32.totalorder %s85, 0
    %s88 = sadd.s32 %s87, 1
    %s89 = scalar_select %p86, %s87, %s88
    %p92 = pneg %p86
    %p93 = scmp.eq.s32.totalorder %s9, 1
    %p94 = por %p92, %p93
    %p95 = scmp.ne.s32.totalorder %s87, %s90
    %p96 = scmp.eq.s32.totalorder %s9, 0
    %p97 = por %p95, %p96
    %p98 = scmp.ne.s32.totalorder %s87, %s90
    %p99 = scmp.eq.s32.totalorder %s14, 1
    %p100 = por %p98, %p99
    %p101 = scmp.ne.s32.totalorder %s90, %s91
    %p102 = scmp.eq.s32.totalorder %s14, 0
    %p103 = por %p101, %p102
    %p104 = scmp.ne.s32.totalorder %s90, %s91
    %p105 = scmp.eq.s32.totalorder %s15, 1
    %p106 = por %p104, %p105
    %p108 = scmp.ne.s32.totalorder %s91, %s107
    %p109 = scmp.eq.s32.totalorder %s15, 0
    %p110 = por %p108, %p109
    %p111 = scmp.le.s32.totalorder 1, %s9
    %p112 = scmp.lt.s32.totalorder %s9, 3
    %p113 = pnand %p111, %p112
    %p114 = pneg %p113
    // Predicated region
    $region9: #{deepmind_cnn.4} parent=5 // pred_check
      _
    $region10: #{deepmind_cnn.4} parent=5 // pred_check_branch
      %116 = sbr.rel (%p113) target = $region12
    $region11: #{deepmind_cnn.4} parent=5 // pred_region
      %s117 = ssub.s32 %s9, 1
      // Predicated region
      $region13: #{deepmind_cnn.4} parent=11 // pred_check
        %p118 = pneg %p56
      $region14: #{deepmind_cnn.4} parent=11 // pred_check_branch
        %120 = sbr.rel (%p118) target = $region16
      $region15: #{deepmind_cnn.4} parent=11 // pred_region
        _
      $region16: #{deepmind_cnn.4} parent=11 // pred_fallthru
        _
      // Predicated region
      $region17: #{deepmind_cnn.4} parent=11 // pred_check
        %p121 = pneg %p77
      $region18: #{deepmind_cnn.4} parent=11 // pred_check_branch
        %123 = sbr.rel (%p121) target = $region20
      $region19: #{deepmind_cnn.4} parent=11 // pred_region
        _
      $region20: #{deepmind_cnn.4} parent=11 // pred_fallthru
        _
    $region12: #{deepmind_cnn.4} parent=5 // pred_fallthru
      _
    %p124 = scmp.lt.s32.totalorder %s9, 2
    // Predicated region
    $region21: #{deepmind_cnn.4} parent=5 // pred_check
      %p125 = pneg %p124
    $region22: #{deepmind_cnn.4} parent=5 // pred_check_branch
      %127 = sbr.rel (%p125) target = $region24
    $region23: #{deepmind_cnn.4} parent=5 // pred_region
      // Predicated region
      $region25: #{deepmind_cnn.4} parent=23 // pred_check
        %p128 = pneg %p29
      $region26: #{deepmind_cnn.4} parent=23 // pred_check_branch
        %130 = sbr.rel (%p128) target = $region28
      $region27: #{deepmind_cnn.4} parent=23 // pred_region
        %s131 = smul.u32 64, %s9
        %p132 = scmp.lt.s32.totalorder %s131, 127
        %s133 = scalar_select %p132, %s131, 127
        %s134 = smul.addr %s133, 2
        %s135 = smul.addr %s134, 4
        %s136 = scalar_lea.vmem %s0, %s135
        %s137 = smul.u32 64, %s9
      $region28: #{deepmind_cnn.4} parent=23 // pred_fallthru
        _
    $region24: #{deepmind_cnn.4} parent=5 // pred_fallthru
      _
    %p138 = scmp.le.s32.totalorder 1, %s9
    %p139 = scmp.lt.s32.totalorder %s9, 3
    %p140 = pnand %p138, %p139
    %p141 = pneg %p140
    // Predicated region
    $region29: #{deepmind_cnn.4} parent=5 // pred_check
      _
    $region30: #{deepmind_cnn.4} parent=5 // pred_check_branch
      %143 = sbr.rel (%p140) target = $region32
    $region31: #{deepmind_cnn.4} parent=5 // pred_region
      %s144 = ssub.s32 %s9, 1
      %s145 = smul.u32 64, %s14
      %p146 = scmp.lt.s32.totalorder %s145, 127
      %s147 = scalar_select %p146, %s145, 127
      %s148 = smul.addr %s147, 2
      %s149 = smul.addr %s148, 4
      %s150 = scalar_lea.vmem %s0, %s149
      %p151 = pneg %p35
      %p152 = pneg %p32
      %p153 = pneg %p56
      %p154 = pneg %p53
      %p155 = pneg %p77
      %p156 = pneg %p74
      %p157 = pneg %p103
      %p158 = pneg %p100
      %s159 = smul.u32 64, %s14
      %p160 = scmp.lt.s32.totalorder %s159, 127
      %s161 = scalar_select %p160, %s159, 127
      %s162 = smul.addr %s161, 4
      %s163 = scalar_lea.vmem %s3, %s162
      %s164 = smul.u32 64, %s14
      %p165 = scmp.lt.s32.totalorder %s164, 127
      %s166 = scalar_select %p165, %s164, 127
      %s167 = smul.addr %s166, 2
      %s168 = smul.addr %s167, 4
      %s169 = scalar_lea.vmem %s0, %s168
      %s170 = smul.u32 64, %s14
      %s171 = smul.u32 64, %s14
      %p172 = scmp.lt.s32.totalorder %s171, 127
      %s173 = scalar_select %p172, %s171, 127
      %s174 = smul.addr %s173, 4
      %s175 = scalar_lea.vmem %s3, %s174
      %s176 = smul.u32 64, %s14
      %v177 = vld [vmem:[%s169] sm:$0xff]
      %v178 = vld [vmem:[%s169 + $0x8] sm:$0xff]
      %v179 = vld [vmem:[%s169 + $0x10] sm:$0xff]
      %v180 = vld [vmem:[%s169 + $0x18] sm:$0xff]
      %v181 = vld [vmem:[%s169 + $0x20] sm:$0xff]
      %v182 = vld [vmem:[%s169 + $0x28] sm:$0xff]
      %v183 = vld [vmem:[%s169 + $0x30] sm:$0xff]
      %v184 = vld [vmem:[%s169 + $0x38] sm:$0xff]
      %v185 = vld [vmem:[%s169 + $0x40] sm:$0xff]
      %v186 = vld [vmem:[%s169 + $0x48] sm:$0xff]
      %v187 = vld [vmem:[%s169 + $0x50] sm:$0xff]
      %v188 = vld [vmem:[%s169 + $0x58] sm:$0xff]
      %v189 = vld [vmem:[%s169 + $0x60] sm:$0xff]
      %v190 = vld [vmem:[%s169 + $0x68] sm:$0xff]
      %v191 = vld [vmem:[%s169 + $0x70] sm:$0xff]
      %v192 = vld [vmem:[%s169 + $0x78] sm:$0xff]
      %v193 = vld [vmem:[%s169 + $0x80] sm:$0xff]
      %v194 = vld [vmem:[%s169 + $0x88] sm:$0xff]
      %v195 = vld [vmem:[%s169 + $0x90] sm:$0xff]
      %v196 = vld [vmem:[%s169 + $0x98] sm:$0xff]
      %v197 = vld [vmem:[%s169 + $0xa0] sm:$0xff]
      %v198 = vld [vmem:[%s169 + $0xa8] sm:$0xff]
      %v199 = vld [vmem:[%s169 + $0xb0] sm:$0xff]
      %v200 = vld [vmem:[%s169 + $0xb8] sm:$0xff]
      %v201 = vld [vmem:[%s169 + $0xc0] sm:$0xff]
      %v202 = vld [vmem:[%s169 + $0xc8] sm:$0xff]
      %v203 = vld [vmem:[%s169 + $0xd0] sm:$0xff]
      %v204 = vld [vmem:[%s169 + $0xd8] sm:$0xff]
      %v205 = vld [vmem:[%s169 + $0xe0] sm:$0xff]
      %v206 = vld [vmem:[%s169 + $0xe8] sm:$0xff]
      %v207 = vld [vmem:[%s169 + $0xf0] sm:$0xff]
      %v208 = vld [vmem:[%s169 + $0xf8] sm:$0xff]
      %v209 = vld [vmem:[%s169 + $0x100] sm:$0xff]
      %v210 = vld [vmem:[%s169 + $0x108] sm:$0xff]
      %v211 = vld [vmem:[%s169 + $0x110] sm:$0xff]
      %v212 = vld [vmem:[%s169 + $0x118] sm:$0xff]
      %v213 = vld [vmem:[%s169 + $0x120] sm:$0xff]
      %v214 = vld [vmem:[%s169 + $0x128] sm:$0xff]
      %v215 = vld [vmem:[%s169 + $0x130] sm:$0xff]
      %v216 = vld [vmem:[%s169 + $0x138] sm:$0xff]
      %v217 = vld [vmem:[%s169 + $0x140] sm:$0xff]
      %v218 = vld [vmem:[%s169 + $0x148] sm:$0xff]
      %v219 = vld [vmem:[%s169 + $0x150] sm:$0xff]
      %v220 = vld [vmem:[%s169 + $0x158] sm:$0xff]
      %v221 = vld [vmem:[%s169 + $0x160] sm:$0xff]
      %v222 = vld [vmem:[%s169 + $0x168] sm:$0xff]
      %v223 = vld [vmem:[%s169 + $0x170] sm:$0xff]
      %v224 = vld [vmem:[%s169 + $0x178] sm:$0xff]
      %v225 = vld [vmem:[%s169 + $0x180] sm:$0xff]
      %v226 = vld [vmem:[%s169 + $0x188] sm:$0xff]
      %v227 = vld [vmem:[%s169 + $0x190] sm:$0xff]
      %v228 = vld [vmem:[%s169 + $0x198] sm:$0xff]
      %v229 = vld [vmem:[%s169 + $0x1a0] sm:$0xff]
      %v230 = vld [vmem:[%s169 + $0x1a8] sm:$0xff]
      %v231 = vld [vmem:[%s169 + $0x1b0] sm:$0xff]
      %v232 = vld [vmem:[%s169 + $0x1b8] sm:$0xff]
      %v233 = vld [vmem:[%s169 + $0x1c0] sm:$0xff]
      %v234 = vld [vmem:[%s169 + $0x1c8] sm:$0xff]
      %v235 = vld [vmem:[%s169 + $0x1d0] sm:$0xff]
      %v236 = vld [vmem:[%s169 + $0x1d8] sm:$0xff]
      %v237 = vld [vmem:[%s169 + $0x1e0] sm:$0xff]
      %v238 = vld [vmem:[%s169 + $0x1e8] sm:$0xff]
      %v239 = vld [vmem:[%s169 + $0x1f0] sm:$0xff]
      %v240 = vld [vmem:[%s169 + $0x1f8] sm:$0xff]
      %v241 = vld [vmem:[%s1] sm:$0xf]
      %v242 = vld [vmem:[%s1 + $0x4] sm:$0xf]
      %v243 = vld [vmem:[%s1 + $0x8] sm:$0xf]
      %v244 = vld [vmem:[%s1 + $0xc] sm:$0xf]
      %v245 = vld [vmem:[%s1 + $0x10] sm:$0xf]
      %v246 = vld [vmem:[%s1 + $0x14] sm:$0xf]
      %v247 = vld [vmem:[%s1 + $0x18] sm:$0xf]
      %v248 = vld [vmem:[%s1 + $0x1c] sm:$0xf]
      %v249 = vld [vmem:[%s1 + $0x20] sm:$0xf]
      %v250 = vld [vmem:[%s1 + $0x24] sm:$0xf]
      %v251 = vld [vmem:[%s1 + $0x28] sm:$0xf]
      %v252 = vld [vmem:[%s1 + $0x2c] sm:$0xf]
      %v253 = vld [vmem:[%s1 + $0x30] sm:$0xf]
      %v254 = vld [vmem:[%s1 + $0x34] sm:$0xf]
      %v255 = vld [vmem:[%s1 + $0x38] sm:$0xf]
      %v256 = vld [vmem:[%s1 + $0x3c] sm:$0xf]
      %v257 = vld [vmem:[%s1 + $0x40] sm:$0xf]
      %v258 = vld [vmem:[%s1 + $0x44] sm:$0xf]
      %v259 = vld [vmem:[%s1 + $0x48] sm:$0xf]
      %v260 = vld [vmem:[%s1 + $0x4c] sm:$0xf]
      %v261 = vld [vmem:[%s1 + $0x50] sm:$0xf]
      %v262 = vld [vmem:[%s1 + $0x54] sm:$0xf]
      %v263 = vld [vmem:[%s1 + $0x58] sm:$0xf]
      %v264 = vld [vmem:[%s1 + $0x5c] sm:$0xf]
      %v265 = vld [vmem:[%s1 + $0x60] sm:$0xf]
      %v266 = vld [vmem:[%s1 + $0x64] sm:$0xf]
      %v267 = vld [vmem:[%s1 + $0x68] sm:$0xf]
      %v268 = vld [vmem:[%s1 + $0x6c] sm:$0xf]
      %v269 = vld [vmem:[%s1 + $0x70] sm:$0xf]
      %v270 = vld [vmem:[%s1 + $0x74] sm:$0xf]
      %v271 = vld [vmem:[%s1 + $0x78] sm:$0xf]
      %v272 = vld [vmem:[%s1 + $0x7c] sm:$0xf]
      %v273 = vld [vmem:[%s2] sm:$0x1]
      %v275 = vperm.slane %v273, 0
      %v341 = vunpack.c.l.b16 %v177
      %v342 = vunpack.c.h.b16 %v177
      %v343 = vunpack.c.l.b16 %v178
      %v344 = vunpack.c.h.b16 %v178
      %v345 = vunpack.c.l.b16 %v179
      %v346 = vunpack.c.h.b16 %v179
      %v347 = vunpack.c.l.b16 %v180
      %v348 = vunpack.c.h.b16 %v180
      %v349 = vunpack.c.l.b16 %v181
      %v350 = vunpack.c.h.b16 %v181
      %v351 = vunpack.c.l.b16 %v182
      %v352 = vunpack.c.h.b16 %v182
      %v353 = vunpack.c.l.b16 %v183
      %v354 = vunpack.c.h.b16 %v183
      %v355 = vunpack.c.l.b16 %v184
      %v356 = vunpack.c.h.b16 %v184
      %v357 = vunpack.c.l.b16 %v185
      %v358 = vunpack.c.h.b16 %v185
      %v359 = vunpack.c.l.b16 %v186
      %v360 = vunpack.c.h.b16 %v186
      %v361 = vunpack.c.l.b16 %v187
      %v362 = vunpack.c.h.b16 %v187
      %v363 = vunpack.c.l.b16 %v188
      %v364 = vunpack.c.h.b16 %v188
      %v365 = vunpack.c.l.b16 %v189
      %v366 = vunpack.c.h.b16 %v189
      %v367 = vunpack.c.l.b16 %v190
      %v368 = vunpack.c.h.b16 %v190
      %v369 = vunpack.c.l.b16 %v191
      %v370 = vunpack.c.h.b16 %v191
      %v371 = vunpack.c.l.b16 %v192
      %v372 = vunpack.c.h.b16 %v192
      %v373 = vunpack.c.l.b16 %v193
      %v374 = vunpack.c.h.b16 %v193
      %v375 = vunpack.c.l.b16 %v194
      %v376 = vunpack.c.h.b16 %v194
      %v377 = vunpack.c.l.b16 %v195
      %v378 = vunpack.c.h.b16 %v195
      %v379 = vunpack.c.l.b16 %v196
      %v380 = vunpack.c.h.b16 %v196
      %v381 = vunpack.c.l.b16 %v197
      %v382 = vunpack.c.h.b16 %v197
      %v383 = vunpack.c.l.b16 %v198
      %v384 = vunpack.c.h.b16 %v198
      %v385 = vunpack.c.l.b16 %v199
      %v386 = vunpack.c.h.b16 %v199
      %v387 = vunpack.c.l.b16 %v200
      %v388 = vunpack.c.h.b16 %v200
      %v389 = vunpack.c.l.b16 %v201
      %v390 = vunpack.c.h.b16 %v201
      %v391 = vunpack.c.l.b16 %v202
      %v392 = vunpack.c.h.b16 %v202
      %v393 = vunpack.c.l.b16 %v203
      %v394 = vunpack.c.h.b16 %v203
      %v395 = vunpack.c.l.b16 %v204
      %v396 = vunpack.c.h.b16 %v204
      %v397 = vunpack.c.l.b16 %v205
      %v398 = vunpack.c.h.b16 %v205
      %v399 = vunpack.c.l.b16 %v206
      %v400 = vunpack.c.h.b16 %v206
      %v401 = vunpack.c.l.b16 %v207
      %v402 = vunpack.c.h.b16 %v207
      %v403 = vunpack.c.l.b16 %v208
      %v404 = vunpack.c.h.b16 %v208
      %v405 = vunpack.c.l.b16 %v209
      %v406 = vunpack.c.h.b16 %v209
      %v407 = vunpack.c.l.b16 %v210
      %v408 = vunpack.c.h.b16 %v210
      %v409 = vunpack.c.l.b16 %v211
      %v410 = vunpack.c.h.b16 %v211
      %v411 = vunpack.c.l.b16 %v212
      %v412 = vunpack.c.h.b16 %v212
      %v413 = vunpack.c.l.b16 %v213
      %v414 = vunpack.c.h.b16 %v213
      %v415 = vunpack.c.l.b16 %v214
      %v416 = vunpack.c.h.b16 %v214
      %v417 = vunpack.c.l.b16 %v215
      %v418 = vunpack.c.h.b16 %v215
      %v419 = vunpack.c.l.b16 %v216
      %v420 = vunpack.c.h.b16 %v216
      %v421 = vunpack.c.l.b16 %v217
      %v422 = vunpack.c.h.b16 %v217
      %v423 = vunpack.c.l.b16 %v218
      %v424 = vunpack.c.h.b16 %v218
      %v425 = vunpack.c.l.b16 %v219
      %v426 = vunpack.c.h.b16 %v219
      %v427 = vunpack.c.l.b16 %v220
      %v428 = vunpack.c.h.b16 %v220
      %v429 = vunpack.c.l.b16 %v221
      %v430 = vunpack.c.h.b16 %v221
      %v431 = vunpack.c.l.b16 %v222
      %v432 = vunpack.c.h.b16 %v222
      %v433 = vunpack.c.l.b16 %v223
      %v434 = vunpack.c.h.b16 %v223
      %v435 = vunpack.c.l.b16 %v224
      %v436 = vunpack.c.h.b16 %v224
      %v437 = vunpack.c.l.b16 %v225
      %v438 = vunpack.c.h.b16 %v225
      %v439 = vunpack.c.l.b16 %v226
      %v440 = vunpack.c.h.b16 %v226
      %v441 = vunpack.c.l.b16 %v227
      %v442 = vunpack.c.h.b16 %v227
      %v443 = vunpack.c.l.b16 %v228
      %v444 = vunpack.c.h.b16 %v228
      %v445 = vunpack.c.l.b16 %v229
      %v446 = vunpack.c.h.b16 %v229
      %v447 = vunpack.c.l.b16 %v230
      %v448 = vunpack.c.h.b16 %v230
      %v449 = vunpack.c.l.b16 %v231
      %v450 = vunpack.c.h.b16 %v231
      %v451 = vunpack.c.l.b16 %v232
      %v452 = vunpack.c.h.b16 %v232
      %v453 = vunpack.c.l.b16 %v233
      %v454 = vunpack.c.h.b16 %v233
      %v455 = vunpack.c.l.b16 %v234
      %v456 = vunpack.c.h.b16 %v234
      %v457 = vunpack.c.l.b16 %v235
      %v458 = vunpack.c.h.b16 %v235
      %v459 = vunpack.c.l.b16 %v236
      %v460 = vunpack.c.h.b16 %v236
      %v461 = vunpack.c.l.b16 %v237
      %v462 = vunpack.c.h.b16 %v237
      %v463 = vunpack.c.l.b16 %v238
      %v464 = vunpack.c.h.b16 %v238
      %v465 = vunpack.c.l.b16 %v239
      %v466 = vunpack.c.h.b16 %v239
      %v467 = vunpack.c.l.b16 %v240
      %v468 = vunpack.c.h.b16 %v240
      %v469 = vpack.c.b16 %v343, %v341
      %v470 = vpack.c.b16 %v344, %v342
      %v471 = vpack.c.b16 %v347, %v345
      %v472 = vpack.c.b16 %v348, %v346
      %v473 = vpack.c.b16 %v351, %v349
      %v474 = vpack.c.b16 %v352, %v350
      %v475 = vpack.c.b16 %v355, %v353
      %v476 = vpack.c.b16 %v356, %v354
      %v477 = vpack.c.b16 %v359, %v357
      %v478 = vpack.c.b16 %v360, %v358
      %v479 = vpack.c.b16 %v363, %v361
      %v480 = vpack.c.b16 %v364, %v362
      %v481 = vpack.c.b16 %v367, %v365
      %v482 = vpack.c.b16 %v368, %v366
      %v483 = vpack.c.b16 %v371, %v369
      %v484 = vpack.c.b16 %v372, %v370
      %v485 = vpack.c.b16 %v375, %v373
      %v486 = vpack.c.b16 %v376, %v374
      %v487 = vpack.c.b16 %v379, %v377
      %v488 = vpack.c.b16 %v380, %v378
      %v489 = vpack.c.b16 %v383, %v381
      %v490 = vpack.c.b16 %v384, %v382
      %v491 = vpack.c.b16 %v387, %v385
      %v492 = vpack.c.b16 %v388, %v386
      %v493 = vpack.c.b16 %v391, %v389
      %v494 = vpack.c.b16 %v392, %v390
      %v495 = vpack.c.b16 %v395, %v393
      %v496 = vpack.c.b16 %v396, %v394
      %v497 = vpack.c.b16 %v399, %v397
      %v498 = vpack.c.b16 %v400, %v398
      %v499 = vpack.c.b16 %v403, %v401
      %v500 = vpack.c.b16 %v404, %v402
      %v501 = vpack.c.b16 %v407, %v405
      %v502 = vpack.c.b16 %v408, %v406
      %v503 = vpack.c.b16 %v411, %v409
      %v504 = vpack.c.b16 %v412, %v410
      %v505 = vpack.c.b16 %v415, %v413
      %v506 = vpack.c.b16 %v416, %v414
      %v507 = vpack.c.b16 %v419, %v417
      %v508 = vpack.c.b16 %v420, %v418
      %v509 = vpack.c.b16 %v423, %v421
      %v510 = vpack.c.b16 %v424, %v422
      %v511 = vpack.c.b16 %v427, %v425
      %v512 = vpack.c.b16 %v428, %v426
      %v513 = vpack.c.b16 %v431, %v429
      %v514 = vpack.c.b16 %v432, %v430
      %v515 = vpack.c.b16 %v435, %v433
      %v516 = vpack.c.b16 %v436, %v434
      %v517 = vpack.c.b16 %v439, %v437
      %v518 = vpack.c.b16 %v440, %v438
      %v519 = vpack.c.b16 %v443, %v441
      %v520 = vpack.c.b16 %v444, %v442
      %v521 = vpack.c.b16 %v447, %v445
      %v522 = vpack.c.b16 %v448, %v446
      %v523 = vpack.c.b16 %v451, %v449
      %v524 = vpack.c.b16 %v452, %v450
      %v525 = vpack.c.b16 %v455, %v453
      %v526 = vpack.c.b16 %v456, %v454
      %v527 = vpack.c.b16 %v459, %v457
      %v528 = vpack.c.b16 %v460, %v458
      %v529 = vpack.c.b16 %v463, %v461
      %v530 = vpack.c.b16 %v464, %v462
      %v531 = vpack.c.b16 %v467, %v465
      %v532 = vpack.c.b16 %v468, %v466
      %v629 = vunpack.c.l.b16 %v241
      %v630 = vunpack.c.l.b16 %v242
      %v631 = vunpack.c.l.b16 %v243
      %v632 = vunpack.c.l.b16 %v244
      %v633 = vunpack.c.l.b16 %v245
      %v634 = vunpack.c.l.b16 %v246
      %v635 = vunpack.c.l.b16 %v247
      %v636 = vunpack.c.l.b16 %v248
      %v637 = vunpack.c.l.b16 %v249
      %v638 = vunpack.c.l.b16 %v250
      %v639 = vunpack.c.l.b16 %v251
      %v640 = vunpack.c.l.b16 %v252
      %v641 = vunpack.c.l.b16 %v253
      %v642 = vunpack.c.l.b16 %v254
      %v643 = vunpack.c.l.b16 %v255
      %v644 = vunpack.c.l.b16 %v256
      %v645 = vunpack.c.l.b16 %v257
      %v646 = vunpack.c.l.b16 %v258
      %v647 = vunpack.c.l.b16 %v259
      %v648 = vunpack.c.l.b16 %v260
      %v649 = vunpack.c.l.b16 %v261
      %v650 = vunpack.c.l.b16 %v262
      %v651 = vunpack.c.l.b16 %v263
      %v652 = vunpack.c.l.b16 %v264
      %v653 = vunpack.c.l.b16 %v265
      %v654 = vunpack.c.l.b16 %v266
      %v655 = vunpack.c.l.b16 %v267
      %v656 = vunpack.c.l.b16 %v268
      %v657 = vunpack.c.l.b16 %v269
      %v658 = vunpack.c.l.b16 %v270
      %v659 = vunpack.c.l.b16 %v271
      %v660 = vunpack.c.l.b16 %v272
      %v661 = vpack.c.b16 %v630, %v629
      %v662 = vpack.c.b16 %v632, %v631
      %v663 = vpack.c.b16 %v634, %v633
      %v664 = vpack.c.b16 %v636, %v635
      %v665 = vpack.c.b16 %v638, %v637
      %v666 = vpack.c.b16 %v640, %v639
      %v667 = vpack.c.b16 %v642, %v641
      %v668 = vpack.c.b16 %v644, %v643
      %v669 = vpack.c.b16 %v646, %v645
      %v670 = vpack.c.b16 %v648, %v647
      %v671 = vpack.c.b16 %v650, %v649
      %v672 = vpack.c.b16 %v652, %v651
      %v673 = vpack.c.b16 %v654, %v653
      %v674 = vpack.c.b16 %v656, %v655
      %v675 = vpack.c.b16 %v658, %v657
      %v676 = vpack.c.b16 %v660, %v659
      %693 = vmatpush.bf16.msra.mxu0 %v668
      %694 = vmatpush.bf16.msra.mxu0 %v667
      %695 = vmatpush.bf16.msra.mxu0 %v666
      %696 = vmatpush.bf16.msra.mxu0 %v665
      %697 = vmatpush.bf16.msra.mxu0 %v664
      %698 = vmatpush.bf16.msra.mxu0 %v663
      %699 = vmatpush.bf16.msra.mxu0 %v662
      %700 = vmatpush.bf16.msra.mxu0 %v661
      %701 = vmatmul.bf16.gmra.mxu0 %v469
      %v702 = vpop.f32.mrf.mxu0
      %v703 = vadd.f32 %v275, %v702
      %v704 = vpop.f32.mrf.mxu0
      %v705 = vadd.f32 %v275, %v704
      %706 = vmatmul.bf16.gmra.mxu0 %v471
      %v707 = vpop.f32.mrf.mxu0
      %v708 = vadd.f32 %v275, %v707
      %v709 = vpop.f32.mrf.mxu0
      %v710 = vadd.f32 %v275, %v709
      %711 = vmatmul.bf16.gmra.mxu0 %v473
      %v712 = vpop.f32.mrf.mxu0
      %v713 = vadd.f32 %v275, %v712
      %v714 = vpop.f32.mrf.mxu0
      %v715 = vadd.f32 %v275, %v714
      %716 = vmatmul.bf16.gmra.mxu0 %v475
      %v717 = vpop.f32.mrf.mxu0
      %v718 = vadd.f32 %v275, %v717
      %v719 = vpop.f32.mrf.mxu0
      %v720 = vadd.f32 %v275, %v719
      %721 = vmatmul.bf16.gmra.mxu0 %v477
      %v722 = vpop.f32.mrf.mxu0
      %v723 = vadd.f32 %v275, %v722
      %v724 = vpop.f32.mrf.mxu0
      %v725 = vadd.f32 %v275, %v724
      %726 = vmatmul.bf16.gmra.mxu0 %v479
      %v727 = vpop.f32.mrf.mxu0
      %v728 = vadd.f32 %v275, %v727
      %v729 = vpop.f32.mrf.mxu0
      %v730 = vadd.f32 %v275, %v729
      %731 = vmatmul.bf16.gmra.mxu0 %v481
      %v732 = vpop.f32.mrf.mxu0
      %v733 = vadd.f32 %v275, %v732
      %v734 = vpop.f32.mrf.mxu0
      %v735 = vadd.f32 %v275, %v734
      %736 = vmatmul.bf16.gmra.mxu0 %v483
      %v737 = vpop.f32.mrf.mxu0
      %v738 = vadd.f32 %v275, %v737
      %v739 = vpop.f32.mrf.mxu0
      %v740 = vadd.f32 %v275, %v739
      %741 = vmatmul.bf16.gmra.mxu0 %v485
      %v742 = vpop.f32.mrf.mxu0
      %v743 = vadd.f32 %v275, %v742
      %v744 = vpop.f32.mrf.mxu0
      %v745 = vadd.f32 %v275, %v744
      %746 = vmatmul.bf16.gmra.mxu0 %v487
      %v747 = vpop.f32.mrf.mxu0
      %v748 = vadd.f32 %v275, %v747
      %v749 = vpop.f32.mrf.mxu0
      %v750 = vadd.f32 %v275, %v749
      %751 = vmatmul.bf16.gmra.mxu0 %v489
      %v752 = vpop.f32.mrf.mxu0
      %v753 = vadd.f32 %v275, %v752
      %v754 = vpop.f32.mrf.mxu0
      %v755 = vadd.f32 %v275, %v754
      %756 = vmatmul.bf16.gmra.mxu0 %v491
      %v757 = vpop.f32.mrf.mxu0
      %v758 = vadd.f32 %v275, %v757
      %v759 = vpop.f32.mrf.mxu0
      %v760 = vadd.f32 %v275, %v759
      %761 = vmatmul.bf16.gmra.mxu0 %v493
      %v762 = vpop.f32.mrf.mxu0
      %v763 = vadd.f32 %v275, %v762
      %v764 = vpop.f32.mrf.mxu0
      %v765 = vadd.f32 %v275, %v764
      %766 = vmatmul.bf16.gmra.mxu0 %v495
      %v767 = vpop.f32.mrf.mxu0
      %v768 = vadd.f32 %v275, %v767
      %v769 = vpop.f32.mrf.mxu0
      %v770 = vadd.f32 %v275, %v769
      %771 = vmatmul.bf16.gmra.mxu0 %v497
      %v772 = vpop.f32.mrf.mxu0
      %v773 = vadd.f32 %v275, %v772
      %v774 = vpop.f32.mrf.mxu0
      %v775 = vadd.f32 %v275, %v774
      %776 = vmatmul.bf16.gmra.mxu0 %v499
      %v777 = vpop.f32.mrf.mxu0
      %v778 = vadd.f32 %v275, %v777
      %v779 = vpop.f32.mrf.mxu0
      %v780 = vadd.f32 %v275, %v779
      %781 = vmatmul.bf16.gmra.mxu0 %v501
      %v782 = vpop.f32.mrf.mxu0
      %v783 = vadd.f32 %v275, %v782
      %v784 = vpop.f32.mrf.mxu0
      %v785 = vadd.f32 %v275, %v784
      %786 = vmatmul.bf16.gmra.mxu0 %v503
      %v787 = vpop.f32.mrf.mxu0
      %v788 = vadd.f32 %v275, %v787
      %v789 = vpop.f32.mrf.mxu0
      %v790 = vadd.f32 %v275, %v789
      %791 = vmatmul.bf16.gmra.mxu0 %v505
      %v792 = vpop.f32.mrf.mxu0
      %v793 = vadd.f32 %v275, %v792
      %v794 = vpop.f32.mrf.mxu0
      %v795 = vadd.f32 %v275, %v794
      %796 = vmatmul.bf16.gmra.mxu0 %v507
      %v797 = vpop.f32.mrf.mxu0
      %v798 = vadd.f32 %v275, %v797
      %v799 = vpop.f32.mrf.mxu0
      %v800 = vadd.f32 %v275, %v799
      %801 = vmatmul.bf16.gmra.mxu0 %v509
      %v802 = vpop.f32.mrf.mxu0
      %v803 = vadd.f32 %v275, %v802
      %v804 = vpop.f32.mrf.mxu0
      %v805 = vadd.f32 %v275, %v804
      %806 = vmatmul.bf16.gmra.mxu0 %v511
      %v807 = vpop.f32.mrf.mxu0
      %v808 = vadd.f32 %v275, %v807
      %v809 = vpop.f32.mrf.mxu0
      %v810 = vadd.f32 %v275, %v809
      %811 = vmatmul.bf16.gmra.mxu0 %v513
      %v812 = vpop.f32.mrf.mxu0
      %v813 = vadd.f32 %v275, %v812
      %v814 = vpop.f32.mrf.mxu0
      %v815 = vadd.f32 %v275, %v814
      %816 = vmatmul.bf16.gmra.mxu0 %v515
      %v817 = vpop.f32.mrf.mxu0
      %v818 = vadd.f32 %v275, %v817
      %v819 = vpop.f32.mrf.mxu0
      %v820 = vadd.f32 %v275, %v819
      %821 = vmatmul.bf16.gmra.mxu0 %v517
      %v822 = vpop.f32.mrf.mxu0
      %v823 = vadd.f32 %v275, %v822
      %v824 = vpop.f32.mrf.mxu0
      %v825 = vadd.f32 %v275, %v824
      %826 = vmatmul.bf16.gmra.mxu0 %v519
      %v827 = vpop.f32.mrf.mxu0
      %v828 = vadd.f32 %v275, %v827
      %v829 = vpop.f32.mrf.mxu0
      %v830 = vadd.f32 %v275, %v829
      %831 = vmatmul.bf16.gmra.mxu0 %v521
      %v832 = vpop.f32.mrf.mxu0
      %v833 = vadd.f32 %v275, %v832
      %v834 = vpop.f32.mrf.mxu0
      %v835 = vadd.f32 %v275, %v834
      %836 = vmatmul.bf16.gmra.mxu0 %v523
      %v837 = vpop.f32.mrf.mxu0
      %v838 = vadd.f32 %v275, %v837
      %v839 = vpop.f32.mrf.mxu0
      %v840 = vadd.f32 %v275, %v839
      %841 = vmatmul.bf16.gmra.mxu0 %v525
      %v842 = vpop.f32.mrf.mxu0
      %v843 = vadd.f32 %v275, %v842
      %v844 = vpop.f32.mrf.mxu0
      %v845 = vadd.f32 %v275, %v844
      %846 = vmatmul.bf16.gmra.mxu0 %v527
      %v847 = vpop.f32.mrf.mxu0
      %v848 = vadd.f32 %v275, %v847
      %v849 = vpop.f32.mrf.mxu0
      %v850 = vadd.f32 %v275, %v849
      %851 = vmatmul.bf16.gmra.mxu0 %v529
      %v852 = vpop.f32.mrf.mxu0
      %v853 = vadd.f32 %v275, %v852
      %v854 = vpop.f32.mrf.mxu0
      %v855 = vadd.f32 %v275, %v854
      %856 = vmatmul.bf16.gmra.mxu0 %v531
      %v857 = vpop.f32.mrf.mxu0
      %v858 = vadd.f32 %v275, %v857
      %v859 = vpop.f32.mrf.mxu0
      %v860 = vadd.f32 %v275, %v859
      %861 = vdwg.mxu0
      %862 = vmatpush.bf16.msra.mxu0 %v676
      %863 = vmatpush.bf16.msra.mxu0 %v675
      %864 = vmatpush.bf16.msra.mxu0 %v674
      %865 = vmatpush.bf16.msra.mxu0 %v673
      %866 = vmatpush.bf16.msra.mxu0 %v672
      %867 = vmatpush.bf16.msra.mxu0 %v671
      %868 = vmatpush.bf16.msra.mxu0 %v670
      %869 = vmatpush.bf16.msra.mxu0 %v669
      %870 = vmatmul.bf16.gmra.mxu0 %v470
      %v871 = vpop.f32.mrf.mxu0
      %v872 = vadd.f32 %v703, %v871
      %v873 = vpop.f32.mrf.mxu0
      %v874 = vadd.f32 %v705, %v873
      %875 = vmatmul.bf16.gmra.mxu0 %v472
      %v876 = vpop.f32.mrf.mxu0
      %v877 = vadd.f32 %v708, %v876
      %v878 = vpop.f32.mrf.mxu0
      %v879 = vadd.f32 %v710, %v878
      %880 = vmatmul.bf16.gmra.mxu0 %v474
      %v881 = vpop.f32.mrf.mxu0
      %v882 = vadd.f32 %v713, %v881
      %v883 = vpop.f32.mrf.mxu0
      %v884 = vadd.f32 %v715, %v883
      %885 = vmatmul.bf16.gmra.mxu0 %v476
      %v886 = vpop.f32.mrf.mxu0
      %v887 = vadd.f32 %v718, %v886
      %v888 = vpop.f32.mrf.mxu0
      %v889 = vadd.f32 %v720, %v888
      %890 = vmatmul.bf16.gmra.mxu0 %v478
      %v891 = vpop.f32.mrf.mxu0
      %v892 = vadd.f32 %v723, %v891
      %v893 = vpop.f32.mrf.mxu0
      %v894 = vadd.f32 %v725, %v893
      %895 = vmatmul.bf16.gmra.mxu0 %v480
      %v896 = vpop.f32.mrf.mxu0
      %v897 = vadd.f32 %v728, %v896
      %v898 = vpop.f32.mrf.mxu0
      %v899 = vadd.f32 %v730, %v898
      %900 = vmatmul.bf16.gmra.mxu0 %v482
      %v901 = vpop.f32.mrf.mxu0
      %v902 = vadd.f32 %v733, %v901
      %v903 = vpop.f32.mrf.mxu0
      %v904 = vadd.f32 %v735, %v903
      %905 = vmatmul.bf16.gmra.mxu0 %v484
      %v906 = vpop.f32.mrf.mxu0
      %v907 = vadd.f32 %v738, %v906
      %v908 = vpop.f32.mrf.mxu0
      %v909 = vadd.f32 %v740, %v908
      %910 = vmatmul.bf16.gmra.mxu0 %v486
      %v911 = vpop.f32.mrf.mxu0
      %v912 = vadd.f32 %v743, %v911
      %v913 = vpop.f32.mrf.mxu0
      %v914 = vadd.f32 %v745, %v913
      %915 = vmatmul.bf16.gmra.mxu0 %v488
      %v916 = vpop.f32.mrf.mxu0
      %v917 = vadd.f32 %v748, %v916
      %v918 = vpop.f32.mrf.mxu0
      %v919 = vadd.f32 %v750, %v918
      %920 = vmatmul.bf16.gmra.mxu0 %v490
      %v921 = vpop.f32.mrf.mxu0
      %v922 = vadd.f32 %v753, %v921
      %v923 = vpop.f32.mrf.mxu0
      %v924 = vadd.f32 %v755, %v923
      %925 = vmatmul.bf16.gmra.mxu0 %v492
      %v926 = vpop.f32.mrf.mxu0
      %v927 = vadd.f32 %v758, %v926
      %v928 = vpop.f32.mrf.mxu0
      %v929 = vadd.f32 %v760, %v928
      %930 = vmatmul.bf16.gmra.mxu0 %v494
      %v931 = vpop.f32.mrf.mxu0
      %v932 = vadd.f32 %v763, %v931
      %v933 = vpop.f32.mrf.mxu0
      %v934 = vadd.f32 %v765, %v933
      %935 = vmatmul.bf16.gmra.mxu0 %v496
      %v936 = vpop.f32.mrf.mxu0
      %v937 = vadd.f32 %v768, %v936
      %v938 = vpop.f32.mrf.mxu0
      %v939 = vadd.f32 %v770, %v938
      %940 = vmatmul.bf16.gmra.mxu0 %v498
      %v941 = vpop.f32.mrf.mxu0
      %v942 = vadd.f32 %v773, %v941
      %v943 = vpop.f32.mrf.mxu0
      %v944 = vadd.f32 %v775, %v943
      %945 = vmatmul.bf16.gmra.mxu0 %v500
      %v946 = vpop.f32.mrf.mxu0
      %v947 = vadd.f32 %v778, %v946
      %v948 = vpop.f32.mrf.mxu0
      %v949 = vadd.f32 %v780, %v948
      %950 = vmatmul.bf16.gmra.mxu0 %v502
      %v951 = vpop.f32.mrf.mxu0
      %v952 = vadd.f32 %v783, %v951
      %v953 = vpop.f32.mrf.mxu0
      %v954 = vadd.f32 %v785, %v953
      %955 = vmatmul.bf16.gmra.mxu0 %v504
      %v956 = vpop.f32.mrf.mxu0
      %v957 = vadd.f32 %v788, %v956
      %v958 = vpop.f32.mrf.mxu0
      %v959 = vadd.f32 %v790, %v958
      %960 = vmatmul.bf16.gmra.mxu0 %v506
      %v961 = vpop.f32.mrf.mxu0
      %v962 = vadd.f32 %v793, %v961
      %v963 = vpop.f32.mrf.mxu0
      %v964 = vadd.f32 %v795, %v963
      %965 = vmatmul.bf16.gmra.mxu0 %v508
      %v966 = vpop.f32.mrf.mxu0
      %v967 = vadd.f32 %v798, %v966
      %v968 = vpop.f32.mrf.mxu0
      %v969 = vadd.f32 %v800, %v968
      %970 = vmatmul.bf16.gmra.mxu0 %v510
      %v971 = vpop.f32.mrf.mxu0
      %v972 = vadd.f32 %v803, %v971
      %v973 = vpop.f32.mrf.mxu0
      %v974 = vadd.f32 %v805, %v973
      %975 = vmatmul.bf16.gmra.mxu0 %v512
      %v976 = vpop.f32.mrf.mxu0
      %v977 = vadd.f32 %v808, %v976
      %v978 = vpop.f32.mrf.mxu0
      %v979 = vadd.f32 %v810, %v978
      %980 = vmatmul.bf16.gmra.mxu0 %v514
      %v981 = vpop.f32.mrf.mxu0
      %v982 = vadd.f32 %v813, %v981
      %v983 = vpop.f32.mrf.mxu0
      %v984 = vadd.f32 %v815, %v983
      %985 = vmatmul.bf16.gmra.mxu0 %v516
      %v986 = vpop.f32.mrf.mxu0
      %v987 = vadd.f32 %v818, %v986
      %v988 = vpop.f32.mrf.mxu0
      %v989 = vadd.f32 %v820, %v988
      %990 = vmatmul.bf16.gmra.mxu0 %v518
      %v991 = vpop.f32.mrf.mxu0
      %v992 = vadd.f32 %v823, %v991
      %v993 = vpop.f32.mrf.mxu0
      %v994 = vadd.f32 %v825, %v993
      %995 = vmatmul.bf16.gmra.mxu0 %v520
      %v996 = vpop.f32.mrf.mxu0
      %v997 = vadd.f32 %v828, %v996
      %v998 = vpop.f32.mrf.mxu0
      %v999 = vadd.f32 %v830, %v998
      %1000 = vmatmul.bf16.gmra.mxu0 %v522
      %v1001 = vpop.f32.mrf.mxu0
      %v1002 = vadd.f32 %v833, %v1001
      %v1003 = vpop.f32.mrf.mxu0
      %v1004 = vadd.f32 %v835, %v1003
      %1005 = vmatmul.bf16.gmra.mxu0 %v524
      %v1006 = vpop.f32.mrf.mxu0
      %v1007 = vadd.f32 %v838, %v1006
      %v1008 = vpop.f32.mrf.mxu0
      %v1009 = vadd.f32 %v840, %v1008
      %1010 = vmatmul.bf16.gmra.mxu0 %v526
      %v1011 = vpop.f32.mrf.mxu0
      %v1012 = vadd.f32 %v843, %v1011
      %v1013 = vpop.f32.mrf.mxu0
      %v1014 = vadd.f32 %v845, %v1013
      %1015 = vmatmul.bf16.gmra.mxu0 %v528
      %v1016 = vpop.f32.mrf.mxu0
      %v1017 = vadd.f32 %v848, %v1016
      %v1018 = vpop.f32.mrf.mxu0
      %v1019 = vadd.f32 %v850, %v1018
      %1020 = vmatmul.bf16.gmra.mxu0 %v530
      %v1021 = vpop.f32.mrf.mxu0
      %v1022 = vadd.f32 %v853, %v1021
      %v1023 = vpop.f32.mrf.mxu0
      %v1024 = vadd.f32 %v855, %v1023
      %1025 = vmatmul.bf16.gmra.mxu0 %v532
      %v1026 = vpop.f32.mrf.mxu0
      %v1027 = vadd.f32 %v858, %v1026
      %v1028 = vpop.f32.mrf.mxu0
      %v1029 = vadd.f32 %v860, %v1028
      %1030 = vdwg.mxu0
      %v1031 = vmax.f32 %v872, 0.0
      %v1032 = vmax.f32 %v874, 0.0
      %v1033 = vmax.f32 %v877, 0.0
      %v1034 = vmax.f32 %v879, 0.0
      %v1035 = vmax.f32 %v882, 0.0
      %v1036 = vmax.f32 %v884, 0.0
      %v1037 = vmax.f32 %v887, 0.0
      %v1038 = vmax.f32 %v889, 0.0
      %v1039 = vmax.f32 %v892, 0.0
      %v1040 = vmax.f32 %v894, 0.0
      %v1041 = vmax.f32 %v897, 0.0
      %v1042 = vmax.f32 %v899, 0.0
      %v1043 = vmax.f32 %v902, 0.0
      %v1044 = vmax.f32 %v904, 0.0
      %v1045 = vmax.f32 %v907, 0.0
      %v1046 = vmax.f32 %v909, 0.0
      %v1047 = vmax.f32 %v912, 0.0
      %v1048 = vmax.f32 %v914, 0.0
      %v1049 = vmax.f32 %v917, 0.0
      %v1050 = vmax.f32 %v919, 0.0
      %v1051 = vmax.f32 %v922, 0.0
      %v1052 = vmax.f32 %v924, 0.0
      %v1053 = vmax.f32 %v927, 0.0
      %v1054 = vmax.f32 %v929, 0.0
      %v1055 = vmax.f32 %v932, 0.0
      %v1056 = vmax.f32 %v934, 0.0
      %v1057 = vmax.f32 %v937, 0.0
      %v1058 = vmax.f32 %v939, 0.0
      %v1059 = vmax.f32 %v942, 0.0
      %v1060 = vmax.f32 %v944, 0.0
      %v1061 = vmax.f32 %v947, 0.0
      %v1062 = vmax.f32 %v949, 0.0
      %v1063 = vmax.f32 %v952, 0.0
      %v1064 = vmax.f32 %v954, 0.0
      %v1065 = vmax.f32 %v957, 0.0
      %v1066 = vmax.f32 %v959, 0.0
      %v1067 = vmax.f32 %v962, 0.0
      %v1068 = vmax.f32 %v964, 0.0
      %v1069 = vmax.f32 %v967, 0.0
      %v1070 = vmax.f32 %v969, 0.0
      %v1071 = vmax.f32 %v972, 0.0
      %v1072 = vmax.f32 %v974, 0.0
      %v1073 = vmax.f32 %v977, 0.0
      %v1074 = vmax.f32 %v979, 0.0
      %v1075 = vmax.f32 %v982, 0.0
      %v1076 = vmax.f32 %v984, 0.0
      %v1077 = vmax.f32 %v987, 0.0
      %v1078 = vmax.f32 %v989, 0.0
      %v1079 = vmax.f32 %v992, 0.0
      %v1080 = vmax.f32 %v994, 0.0
      %v1081 = vmax.f32 %v997, 0.0
      %v1082 = vmax.f32 %v999, 0.0
      %v1083 = vmax.f32 %v1002, 0.0
      %v1084 = vmax.f32 %v1004, 0.0
      %v1085 = vmax.f32 %v1007, 0.0
      %v1086 = vmax.f32 %v1009, 0.0
      %v1087 = vmax.f32 %v1012, 0.0
      %v1088 = vmax.f32 %v1014, 0.0
      %v1089 = vmax.f32 %v1017, 0.0
      %v1090 = vmax.f32 %v1019, 0.0
      %v1091 = vmax.f32 %v1022, 0.0
      %v1092 = vmax.f32 %v1024, 0.0
      %v1093 = vmax.f32 %v1027, 0.0
      %v1094 = vmax.f32 %v1029, 0.0
      %v1095 = vpack.c.bf16 %v1031, %v1031
      %v1096 = vpack.c.bf16 %v1032, %v1032
      %v1097 = vpack.c.bf16 %v1033, %v1033
      %v1098 = vpack.c.bf16 %v1034, %v1034
      %v1099 = vpack.c.bf16 %v1035, %v1035
      %v1100 = vpack.c.bf16 %v1036, %v1036
      %v1101 = vpack.c.bf16 %v1037, %v1037
      %v1102 = vpack.c.bf16 %v1038, %v1038
      %v1103 = vpack.c.bf16 %v1039, %v1039
      %v1104 = vpack.c.bf16 %v1040, %v1040
      %v1105 = vpack.c.bf16 %v1041, %v1041
      %v1106 = vpack.c.bf16 %v1042, %v1042
      %v1107 = vpack.c.bf16 %v1043, %v1043
      %v1108 = vpack.c.bf16 %v1044, %v1044
      %v1109 = vpack.c.bf16 %v1045, %v1045
      %v1110 = vpack.c.bf16 %v1046, %v1046
      %v1111 = vpack.c.bf16 %v1047, %v1047
      %v1112 = vpack.c.bf16 %v1048, %v1048
      %v1113 = vpack.c.bf16 %v1049, %v1049
      %v1114 = vpack.c.bf16 %v1050, %v1050
      %v1115 = vpack.c.bf16 %v1051, %v1051
      %v1116 = vpack.c.bf16 %v1052, %v1052
      %v1117 = vpack.c.bf16 %v1053, %v1053
      %v1118 = vpack.c.bf16 %v1054, %v1054
      %v1119 = vpack.c.bf16 %v1055, %v1055
      %v1120 = vpack.c.bf16 %v1056, %v1056
      %v1121 = vpack.c.bf16 %v1057, %v1057
      %v1122 = vpack.c.bf16 %v1058, %v1058
      %v1123 = vpack.c.bf16 %v1059, %v1059
      %v1124 = vpack.c.bf16 %v1060, %v1060
      %v1125 = vpack.c.bf16 %v1061, %v1061
      %v1126 = vpack.c.bf16 %v1062, %v1062
      %v1127 = vpack.c.bf16 %v1063, %v1063
      %v1128 = vpack.c.bf16 %v1064, %v1064
      %v1129 = vpack.c.bf16 %v1065, %v1065
      %v1130 = vpack.c.bf16 %v1066, %v1066
      %v1131 = vpack.c.bf16 %v1067, %v1067
      %v1132 = vpack.c.bf16 %v1068, %v1068
      %v1133 = vpack.c.bf16 %v1069, %v1069
      %v1134 = vpack.c.bf16 %v1070, %v1070
      %v1135 = vpack.c.bf16 %v1071, %v1071
      %v1136 = vpack.c.bf16 %v1072, %v1072
      %v1137 = vpack.c.bf16 %v1073, %v1073
      %v1138 = vpack.c.bf16 %v1074, %v1074
      %v1139 = vpack.c.bf16 %v1075, %v1075
      %v1140 = vpack.c.bf16 %v1076, %v1076
      %v1141 = vpack.c.bf16 %v1077, %v1077
      %v1142 = vpack.c.bf16 %v1078, %v1078
      %v1143 = vpack.c.bf16 %v1079, %v1079
      %v1144 = vpack.c.bf16 %v1080, %v1080
      %v1145 = vpack.c.bf16 %v1081, %v1081
      %v1146 = vpack.c.bf16 %v1082, %v1082
      %v1147 = vpack.c.bf16 %v1083, %v1083
      %v1148 = vpack.c.bf16 %v1084, %v1084
      %v1149 = vpack.c.bf16 %v1085, %v1085
      %v1150 = vpack.c.bf16 %v1086, %v1086
      %v1151 = vpack.c.bf16 %v1087, %v1087
      %v1152 = vpack.c.bf16 %v1088, %v1088
      %v1153 = vpack.c.bf16 %v1089, %v1089
      %v1154 = vpack.c.bf16 %v1090, %v1090
      %v1155 = vpack.c.bf16 %v1091, %v1091
      %v1156 = vpack.c.bf16 %v1092, %v1092
      %v1157 = vpack.c.bf16 %v1093, %v1093
      %v1158 = vpack.c.bf16 %v1094, %v1094
      %vm1159 = vcmask 257024
      %1160 = vst.msk [vmem:[%s175] sm:$0xf] %vm1159, %v1095
      %1161 = vst.msk [vmem:[%s175 + $0x4] sm:$0xf] %vm1159, %v1096
      %1162 = vst.msk [vmem:[%s175 + $0x8] sm:$0xf] %vm1159, %v1097
      %1163 = vst.msk [vmem:[%s175 + $0xc] sm:$0xf] %vm1159, %v1098
      %1164 = vst.msk [vmem:[%s175 + $0x10] sm:$0xf] %vm1159, %v1099
      %1165 = vst.msk [vmem:[%s175 + $0x14] sm:$0xf] %vm1159, %v1100
      %1166 = vst.msk [vmem:[%s175 + $0x18] sm:$0xf] %vm1159, %v1101
      %1167 = vst.msk [vmem:[%s175 + $0x1c] sm:$0xf] %vm1159, %v1102
      %1168 = vst.msk [vmem:[%s175 + $0x20] sm:$0xf] %vm1159, %v1103
      %1169 = vst.msk [vmem:[%s175 + $0x24] sm:$0xf] %vm1159, %v1104
      %1170 = vst.msk [vmem:[%s175 + $0x28] sm:$0xf] %vm1159, %v1105
      %1171 = vst.msk [vmem:[%s175 + $0x2c] sm:$0xf] %vm1159, %v1106
      %1172 = vst.msk [vmem:[%s175 + $0x30] sm:$0xf] %vm1159, %v1107
      %1173 = vst.msk [vmem:[%s175 + $0x34] sm:$0xf] %vm1159, %v1108
      %1174 = vst.msk [vmem:[%s175 + $0x38] sm:$0xf] %vm1159, %v1109
      %1175 = vst.msk [vmem:[%s175 + $0x3c] sm:$0xf] %vm1159, %v1110
      %1176 = vst.msk [vmem:[%s175 + $0x40] sm:$0xf] %vm1159, %v1111
      %1177 = vst.msk [vmem:[%s175 + $0x44] sm:$0xf] %vm1159, %v1112
      %1178 = vst.msk [vmem:[%s175 + $0x48] sm:$0xf] %vm1159, %v1113
      %1179 = vst.msk [vmem:[%s175 + $0x4c] sm:$0xf] %vm1159, %v1114
      %1180 = vst.msk [vmem:[%s175 + $0x50] sm:$0xf] %vm1159, %v1115
      %1181 = vst.msk [vmem:[%s175 + $0x54] sm:$0xf] %vm1159, %v1116
      %1182 = vst.msk [vmem:[%s175 + $0x58] sm:$0xf] %vm1159, %v1117
      %1183 = vst.msk [vmem:[%s175 + $0x5c] sm:$0xf] %vm1159, %v1118
      %1184 = vst.msk [vmem:[%s175 + $0x60] sm:$0xf] %vm1159, %v1119
      %1185 = vst.msk [vmem:[%s175 + $0x64] sm:$0xf] %vm1159, %v1120
      %1186 = vst.msk [vmem:[%s175 + $0x68] sm:$0xf] %vm1159, %v1121
      %1187 = vst.msk [vmem:[%s175 + $0x6c] sm:$0xf] %vm1159, %v1122
      %1188 = vst.msk [vmem:[%s175 + $0x70] sm:$0xf] %vm1159, %v1123
      %1189 = vst.msk [vmem:[%s175 + $0x74] sm:$0xf] %vm1159, %v1124
      %1190 = vst.msk [vmem:[%s175 + $0x78] sm:$0xf] %vm1159, %v1125
      %1191 = vst.msk [vmem:[%s175 + $0x7c] sm:$0xf] %vm1159, %v1126
      %1192 = vst.msk [vmem:[%s175 + $0x80] sm:$0xf] %vm1159, %v1127
      %1193 = vst.msk [vmem:[%s175 + $0x84] sm:$0xf] %vm1159, %v1128
      %1194 = vst.msk [vmem:[%s175 + $0x88] sm:$0xf] %vm1159, %v1129
      %1195 = vst.msk [vmem:[%s175 + $0x8c] sm:$0xf] %vm1159, %v1130
      %1196 = vst.msk [vmem:[%s175 + $0x90] sm:$0xf] %vm1159, %v1131
      %1197 = vst.msk [vmem:[%s175 + $0x94] sm:$0xf] %vm1159, %v1132
      %1198 = vst.msk [vmem:[%s175 + $0x98] sm:$0xf] %vm1159, %v1133
      %1199 = vst.msk [vmem:[%s175 + $0x9c] sm:$0xf] %vm1159, %v1134
      %1200 = vst.msk [vmem:[%s175 + $0xa0] sm:$0xf] %vm1159, %v1135
      %1201 = vst.msk [vmem:[%s175 + $0xa4] sm:$0xf] %vm1159, %v1136
      %1202 = vst.msk [vmem:[%s175 + $0xa8] sm:$0xf] %vm1159, %v1137
      %1203 = vst.msk [vmem:[%s175 + $0xac] sm:$0xf] %vm1159, %v1138
      %1204 = vst.msk [vmem:[%s175 + $0xb0] sm:$0xf] %vm1159, %v1139
      %1205 = vst.msk [vmem:[%s175 + $0xb4] sm:$0xf] %vm1159, %v1140
      %1206 = vst.msk [vmem:[%s175 + $0xb8] sm:$0xf] %vm1159, %v1141
      %1207 = vst.msk [vmem:[%s175 + $0xbc] sm:$0xf] %vm1159, %v1142
      %1208 = vst.msk [vmem:[%s175 + $0xc0] sm:$0xf] %vm1159, %v1143
      %1209 = vst.msk [vmem:[%s175 + $0xc4] sm:$0xf] %vm1159, %v1144
      %1210 = vst.msk [vmem:[%s175 + $0xc8] sm:$0xf] %vm1159, %v1145
      %1211 = vst.msk [vmem:[%s175 + $0xcc] sm:$0xf] %vm1159, %v1146
      %1212 = vst.msk [vmem:[%s175 + $0xd0] sm:$0xf] %vm1159, %v1147
      %1213 = vst.msk [vmem:[%s175 + $0xd4] sm:$0xf] %vm1159, %v1148
      %1214 = vst.msk [vmem:[%s175 + $0xd8] sm:$0xf] %vm1159, %v1149
      %1215 = vst.msk [vmem:[%s175 + $0xdc] sm:$0xf] %vm1159, %v1150
      %1216 = vst.msk [vmem:[%s175 + $0xe0] sm:$0xf] %vm1159, %v1151
      %1217 = vst.msk [vmem:[%s175 + $0xe4] sm:$0xf] %vm1159, %v1152
      %1218 = vst.msk [vmem:[%s175 + $0xe8] sm:$0xf] %vm1159, %v1153
      %1219 = vst.msk [vmem:[%s175 + $0xec] sm:$0xf] %vm1159, %v1154
      %1220 = vst.msk [vmem:[%s175 + $0xf0] sm:$0xf] %vm1159, %v1155
      %1221 = vst.msk [vmem:[%s175 + $0xf4] sm:$0xf] %vm1159, %v1156
      %1222 = vst.msk [vmem:[%s175 + $0xf8] sm:$0xf] %vm1159, %v1157
      %1223 = vst.msk [vmem:[%s175 + $0xfc] sm:$0xf] %vm1159, %v1158
      %s1224 = smul.u32 64, %s14
      %p1225 = scmp.lt.s32.totalorder %s1224, 127
      %s1226 = scalar_select %p1225, %s1224, 127
      %s1227 = smul.addr %s1226, 4
      %s1228 = scalar_lea.vmem %s3, %s1227
      // Predicated region
      $region33: #{deepmind_cnn.4} parent=31 // pred_check
        %p1229 = pneg %p100
      $region34: #{deepmind_cnn.4} parent=31 // pred_check_branch
        %1231 = sbr.rel (%p1229) target = $region36
      $region35: #{deepmind_cnn.4} parent=31 // pred_region
        %s1232 = smul.u32 64, %s14
      $region36: #{deepmind_cnn.4} parent=31 // pred_fallthru
        _
    $region32: #{deepmind_cnn.4} parent=5 // pred_fallthru
      _
    %p1233 = scmp.le.s32.totalorder 2, %s9
    // Predicated region
    $region37: #{deepmind_cnn.4} parent=5 // pred_check
      %p1234 = pneg %p1233
    $region38: #{deepmind_cnn.4} parent=5 // pred_check_branch
      %1236 = sbr.rel (%p1234) target = $region40
    $region39: #{deepmind_cnn.4} parent=5 // pred_region
      %s1237 = ssub.s32 %s9, 2
      // Predicated region
      $region41: #{deepmind_cnn.4} parent=39 // pred_check
        %p1238 = pneg %p106
      $region42: #{deepmind_cnn.4} parent=39 // pred_check_branch
        %1240 = sbr.rel (%p1238) target = $region44
      $region43: #{deepmind_cnn.4} parent=39 // pred_region
        %s1241 = smul.u32 64, %s15
        %p1242 = scmp.lt.s32.totalorder %s1241, 127
        %s1243 = scalar_select %p1242, %s1241, 127
        %s1244 = smul.addr %s1243, 4
        %s1245 = scalar_lea.vmem %s3, %s1244
      $region44: #{deepmind_cnn.4} parent=39 // pred_fallthru
        _
    $region40: #{deepmind_cnn.4} parent=5 // pred_fallthru
      _
  $region6: #{deepmind_cnn.4} parent=0 // loop_footer
    %s13 = sadd.s32 1, %s9
  $region7: #{deepmind_cnn.4} parent=0 // loop_footer_branch
    %8 = sbr.rel target = $region3
  $region8: #{deepmind_cnn.4} parent=0 // loop_exit
    _

// kernel: deepmind_cnn.5
$region0: #{deepmind_cnn.5}
  #allocation0 [shape = 'u32[]', space=smem, size = 0x4, offset = 0x4, fixed_abs, tag = 'smem constant byte address 0x4 - core index']
  #allocation1 [shape = 'u32[72,128]{1,0:T(1,128)}', space=vmem, size = 0x9000, scoped, tag = 'internal scratch']
  %s0 = inlined_call_operand.vmem [shape: bf16[176,512], index: 0, kind: input, shape index: {}]
  %s1 = inlined_call_operand.vmem [shape: bf16[512,64], index: 1, kind: input, shape index: {}]
  %s2 = inlined_call_operand.vmem [shape: f32[1,64], index: 2, kind: input, shape index: {}]
  %s3 = inlined_call_operand.vmem [shape: bf16[176,64], index: 3, kind: output, shape index: {}]
  %s4 = sld [smem:[#allocation0]]
  $region22: #{deepmind_cnn.5} parent=0
    _
  %s6 = ssub.s32 1, %s4
  %s7 = scalar_select 0, %s6, %s4
  // Predicated region
  $region2: #{deepmind_cnn.5} parent=0 // pred_check
    _
  $region3: #{deepmind_cnn.5} parent=0 // pred_check_branch
    %9 = sbr.rel (0) target = $region5
  $region4: #{deepmind_cnn.5} parent=0 // pred_region
    _
  $region5: #{deepmind_cnn.5} parent=0 // pred_fallthru
    _
  // Predicated region
  $region6: #{deepmind_cnn.5} parent=0 // pred_check
    _
  $region7: #{deepmind_cnn.5} parent=0 // pred_check_branch
    %11 = sbr.rel (0) target = $region9
  $region8: #{deepmind_cnn.5} parent=0 // pred_region
    _
  $region9: #{deepmind_cnn.5} parent=0 // pred_fallthru
    _
  // Predicated region
  $region10: #{deepmind_cnn.5} parent=0 // pred_check
    _
  $region11: #{deepmind_cnn.5} parent=0 // pred_check_branch
    %13 = sbr.rel (0) target = $region13
  $region12: #{deepmind_cnn.5} parent=0 // pred_region
    _
  $region13: #{deepmind_cnn.5} parent=0 // pred_fallthru
    _
  %v14 = vld [vmem:[%s0] sm:$0xff]
  %v15 = vld [vmem:[%s0 + $0x8] sm:$0xff]
  %v16 = vld [vmem:[%s0 + $0x10] sm:$0xff]
  %v17 = vld [vmem:[%s0 + $0x18] sm:$0xff]
  %v18 = vld [vmem:[%s0 + $0x20] sm:$0xff]
  %v19 = vld [vmem:[%s0 + $0x28] sm:$0xff]
  %v20 = vld [vmem:[%s0 + $0x30] sm:$0xff]
  %v21 = vld [vmem:[%s0 + $0x38] sm:$0xff]
  %v22 = vld [vmem:[%s0 + $0x40] sm:$0xff]
  %v23 = vld [vmem:[%s0 + $0x48] sm:$0xff]
  %v24 = vld [vmem:[%s0 + $0x50] sm:$0xff]
  %v25 = vld [vmem:[%s0 + $0x58] sm:$0xff]
  %v26 = vld [vmem:[%s0 + $0x60] sm:$0xff]
  %v27 = vld [vmem:[%s0 + $0x68] sm:$0xff]
  %v28 = vld [vmem:[%s0 + $0x70] sm:$0xff]
  %v29 = vld [vmem:[%s0 + $0x78] sm:$0xff]
  %v30 = vld [vmem:[%s0 + $0x80] sm:$0xff]
  %v31 = vld [vmem:[%s0 + $0x88] sm:$0xff]
  %v32 = vld [vmem:[%s0 + $0x90] sm:$0xff]
  %v33 = vld [vmem:[%s0 + $0x98] sm:$0xff]
  %v34 = vld [vmem:[%s0 + $0xa0] sm:$0xff]
  %v35 = vld [vmem:[%s0 + $0xa8] sm:$0xff]
  %v36 = vld [vmem:[%s0 + $0xb0] sm:$0xff]
  %v37 = vld [vmem:[%s0 + $0xb8] sm:$0xff]
  %v38 = vld [vmem:[%s0 + $0xc0] sm:$0xff]
  %v39 = vld [vmem:[%s0 + $0xc8] sm:$0xff]
  %v40 = vld [vmem:[%s0 + $0xd0] sm:$0xff]
  %v41 = vld [vmem:[%s0 + $0xd8] sm:$0xff]
  %v42 = vld [vmem:[%s0 + $0xe0] sm:$0xff]
  %v43 = vld [vmem:[%s0 + $0xe8] sm:$0xff]
  %v44 = vld [vmem:[%s0 + $0xf0] sm:$0xff]
  %v45 = vld [vmem:[%s0 + $0xf8] sm:$0xff]
  %v46 = vld [vmem:[%s0 + $0x100] sm:$0xff]
  %v47 = vld [vmem:[%s0 + $0x108] sm:$0xff]
  %v48 = vld [vmem:[%s0 + $0x110] sm:$0xff]
  %v49 = vld [vmem:[%s0 + $0x118] sm:$0xff]
  %v50 = vld [vmem:[%s0 + $0x120] sm:$0xff]
  %v51 = vld [vmem:[%s0 + $0x128] sm:$0xff]
  %v52 = vld [vmem:[%s0 + $0x130] sm:$0xff]
  %v53 = vld [vmem:[%s0 + $0x138] sm:$0xff]
  %v54 = vld [vmem:[%s0 + $0x140] sm:$0xff]
  %v55 = vld [vmem:[%s0 + $0x148] sm:$0xff]
  %v56 = vld [vmem:[%s0 + $0x150] sm:$0xff]
  %v57 = vld [vmem:[%s0 + $0x158] sm:$0xff]
  %v58 = vld [vmem:[%s1] sm:$0xf]
  %v59 = vld [vmem:[%s1 + $0x4] sm:$0xf]
  %v60 = vld [vmem:[%s1 + $0x8] sm:$0xf]
  %v61 = vld [vmem:[%s1 + $0xc] sm:$0xf]
  %v62 = vld [vmem:[%s1 + $0x10] sm:$0xf]
  %v63 = vld [vmem:[%s1 + $0x14] sm:$0xf]
  %v64 = vld [vmem:[%s1 + $0x18] sm:$0xf]
  %v65 = vld [vmem:[%s1 + $0x1c] sm:$0xf]
  %v66 = vld [vmem:[%s1 + $0x20] sm:$0xf]
  %v67 = vld [vmem:[%s1 + $0x24] sm:$0xf]
  %v68 = vld [vmem:[%s1 + $0x28] sm:$0xf]
  %v69 = vld [vmem:[%s1 + $0x2c] sm:$0xf]
  %v70 = vld [vmem:[%s1 + $0x30] sm:$0xf]
  %v71 = vld [vmem:[%s1 + $0x34] sm:$0xf]
  %v72 = vld [vmem:[%s1 + $0x38] sm:$0xf]
  %v73 = vld [vmem:[%s1 + $0x3c] sm:$0xf]
  %v74 = vld [vmem:[%s1 + $0x40] sm:$0xf]
  %v75 = vld [vmem:[%s1 + $0x44] sm:$0xf]
  %v76 = vld [vmem:[%s1 + $0x48] sm:$0xf]
  %v77 = vld [vmem:[%s1 + $0x4c] sm:$0xf]
  %v78 = vld [vmem:[%s1 + $0x50] sm:$0xf]
  %v79 = vld [vmem:[%s1 + $0x54] sm:$0xf]
  %v80 = vld [vmem:[%s1 + $0x58] sm:$0xf]
  %v81 = vld [vmem:[%s1 + $0x5c] sm:$0xf]
  %v82 = vld [vmem:[%s1 + $0x60] sm:$0xf]
  %v83 = vld [vmem:[%s1 + $0x64] sm:$0xf]
  %v84 = vld [vmem:[%s1 + $0x68] sm:$0xf]
  %v85 = vld [vmem:[%s1 + $0x6c] sm:$0xf]
  %v86 = vld [vmem:[%s1 + $0x70] sm:$0xf]
  %v87 = vld [vmem:[%s1 + $0x74] sm:$0xf]
  %v88 = vld [vmem:[%s1 + $0x78] sm:$0xf]
  %v89 = vld [vmem:[%s1 + $0x7c] sm:$0xf]
  %v90 = vld [vmem:[%s1 + $0x80] sm:$0xf]
  %v91 = vld [vmem:[%s1 + $0x84] sm:$0xf]
  %v92 = vld [vmem:[%s1 + $0x88] sm:$0xf]
  %v93 = vld [vmem:[%s1 + $0x8c] sm:$0xf]
  %v94 = vld [vmem:[%s1 + $0x90] sm:$0xf]
  %v95 = vld [vmem:[%s1 + $0x94] sm:$0xf]
  %v96 = vld [vmem:[%s1 + $0x98] sm:$0xf]
  %v97 = vld [vmem:[%s1 + $0x9c] sm:$0xf]
  %v98 = vld [vmem:[%s1 + $0xa0] sm:$0xf]
  %v99 = vld [vmem:[%s1 + $0xa4] sm:$0xf]
  %v100 = vld [vmem:[%s1 + $0xa8] sm:$0xf]
  %v101 = vld [vmem:[%s1 + $0xac] sm:$0xf]
  %v102 = vld [vmem:[%s1 + $0xb0] sm:$0xf]
  %v103 = vld [vmem:[%s1 + $0xb4] sm:$0xf]
  %v104 = vld [vmem:[%s1 + $0xb8] sm:$0xf]
  %v105 = vld [vmem:[%s1 + $0xbc] sm:$0xf]
  %v106 = vld [vmem:[%s1 + $0xc0] sm:$0xf]
  %v107 = vld [vmem:[%s1 + $0xc4] sm:$0xf]
  %v108 = vld [vmem:[%s1 + $0xc8] sm:$0xf]
  %v109 = vld [vmem:[%s1 + $0xcc] sm:$0xf]
  %v110 = vld [vmem:[%s1 + $0xd0] sm:$0xf]
  %v111 = vld [vmem:[%s1 + $0xd4] sm:$0xf]
  %v112 = vld [vmem:[%s1 + $0xd8] sm:$0xf]
  %v113 = vld [vmem:[%s1 + $0xdc] sm:$0xf]
  %v114 = vld [vmem:[%s1 + $0xe0] sm:$0xf]
  %v115 = vld [vmem:[%s1 + $0xe4] sm:$0xf]
  %v116 = vld [vmem:[%s1 + $0xe8] sm:$0xf]
  %v117 = vld [vmem:[%s1 + $0xec] sm:$0xf]
  %v118 = vld [vmem:[%s1 + $0xf0] sm:$0xf]
  %v119 = vld [vmem:[%s1 + $0xf4] sm:$0xf]
  %v120 = vld [vmem:[%s1 + $0xf8] sm:$0xf]
  %v121 = vld [vmem:[%s1 + $0xfc] sm:$0xf]
  %v122 = vld [vmem:[%s2] sm:$0x1]
  %v124 = vperm.slane %v122, 0
  %v170 = vunpack.c.l.b16 %v14
  %v171 = vunpack.c.h.b16 %v14
  %v172 = vunpack.c.l.b16 %v15
  %v173 = vunpack.c.h.b16 %v15
  %v174 = vunpack.c.l.b16 %v16
  %v175 = vunpack.c.h.b16 %v16
  %v176 = vunpack.c.l.b16 %v17
  %v177 = vunpack.c.h.b16 %v17
  %v178 = vunpack.c.l.b16 %v18
  %v179 = vunpack.c.h.b16 %v18
  %v180 = vunpack.c.l.b16 %v19
  %v181 = vunpack.c.h.b16 %v19
  %v182 = vunpack.c.l.b16 %v20
  %v183 = vunpack.c.h.b16 %v20
  %v184 = vunpack.c.l.b16 %v21
  %v185 = vunpack.c.h.b16 %v21
  %v186 = vunpack.c.l.b16 %v22
  %v187 = vunpack.c.h.b16 %v22
  %v188 = vunpack.c.l.b16 %v23
  %v189 = vunpack.c.h.b16 %v23
  %v190 = vunpack.c.l.b16 %v24
  %v191 = vunpack.c.h.b16 %v24
  %v192 = vunpack.c.l.b16 %v25
  %v193 = vunpack.c.h.b16 %v25
  %v194 = vunpack.c.l.b16 %v26
  %v195 = vunpack.c.h.b16 %v26
  %v196 = vunpack.c.l.b16 %v27
  %v197 = vunpack.c.h.b16 %v27
  %v198 = vunpack.c.l.b16 %v28
  %v199 = vunpack.c.h.b16 %v28
  %v200 = vunpack.c.l.b16 %v29
  %v201 = vunpack.c.h.b16 %v29
  %v202 = vunpack.c.l.b16 %v30
  %v203 = vunpack.c.h.b16 %v30
  %v204 = vunpack.c.l.b16 %v31
  %v205 = vunpack.c.h.b16 %v31
  %v206 = vunpack.c.l.b16 %v32
  %v207 = vunpack.c.h.b16 %v32
  %v208 = vunpack.c.l.b16 %v33
  %v209 = vunpack.c.h.b16 %v33
  %v210 = vunpack.c.l.b16 %v34
  %v211 = vunpack.c.h.b16 %v34
  %v212 = vunpack.c.l.b16 %v35
  %v213 = vunpack.c.h.b16 %v35
  %v214 = vunpack.c.l.b16 %v36
  %v215 = vunpack.c.h.b16 %v36
  %v216 = vunpack.c.l.b16 %v37
  %v217 = vunpack.c.h.b16 %v37
  %v218 = vunpack.c.l.b16 %v38
  %v219 = vunpack.c.h.b16 %v38
  %v220 = vunpack.c.l.b16 %v39
  %v221 = vunpack.c.h.b16 %v39
  %v222 = vunpack.c.l.b16 %v40
  %v223 = vunpack.c.h.b16 %v40
  %v224 = vunpack.c.l.b16 %v41
  %v225 = vunpack.c.h.b16 %v41
  %v226 = vunpack.c.l.b16 %v42
  %v227 = vunpack.c.h.b16 %v42
  %v228 = vunpack.c.l.b16 %v43
  %v229 = vunpack.c.h.b16 %v43
  %v230 = vunpack.c.l.b16 %v44
  %v231 = vunpack.c.h.b16 %v44
  %v232 = vunpack.c.l.b16 %v45
  %v233 = vunpack.c.h.b16 %v45
  %v234 = vunpack.c.l.b16 %v46
  %v235 = vunpack.c.h.b16 %v46
  %v236 = vunpack.c.l.b16 %v47
  %v237 = vunpack.c.h.b16 %v47
  %v238 = vunpack.c.l.b16 %v48
  %v239 = vunpack.c.h.b16 %v48
  %v240 = vunpack.c.l.b16 %v49
  %v241 = vunpack.c.h.b16 %v49
  %v242 = vunpack.c.l.b16 %v50
  %v243 = vunpack.c.h.b16 %v50
  %v244 = vunpack.c.l.b16 %v51
  %v245 = vunpack.c.h.b16 %v51
  %v246 = vunpack.c.l.b16 %v52
  %v247 = vunpack.c.h.b16 %v52
  %v248 = vunpack.c.l.b16 %v53
  %v249 = vunpack.c.h.b16 %v53
  %v250 = vunpack.c.l.b16 %v54
  %v251 = vunpack.c.h.b16 %v54
  %v252 = vunpack.c.l.b16 %v55
  %v253 = vunpack.c.h.b16 %v55
  %v254 = vunpack.c.l.b16 %v56
  %v255 = vunpack.c.h.b16 %v56
  %v256 = vunpack.c.l.b16 %v57
  %v257 = vunpack.c.h.b16 %v57
  %v258 = vpack.c.b16 %v174, %v170
  %v259 = vpack.c.b16 %v175, %v171
  %v260 = vpack.c.b16 %v176, %v172
  %v261 = vpack.c.b16 %v177, %v173
  %v262 = vpack.c.b16 %v182, %v178
  %v263 = vpack.c.b16 %v183, %v179
  %v264 = vpack.c.b16 %v184, %v180
  %v265 = vpack.c.b16 %v185, %v181
  %v266 = vpack.c.b16 %v190, %v186
  %v267 = vpack.c.b16 %v191, %v187
  %v268 = vpack.c.b16 %v192, %v188
  %v269 = vpack.c.b16 %v193, %v189
  %v270 = vpack.c.b16 %v198, %v194
  %v271 = vpack.c.b16 %v199, %v195
  %v272 = vpack.c.b16 %v200, %v196
  %v273 = vpack.c.b16 %v201, %v197
  %v274 = vpack.c.b16 %v206, %v202
  %v275 = vpack.c.b16 %v207, %v203
  %v276 = vpack.c.b16 %v208, %v204
  %v277 = vpack.c.b16 %v209, %v205
  %v278 = vpack.c.b16 %v214, %v210
  %v279 = vpack.c.b16 %v215, %v211
  %v280 = vpack.c.b16 %v216, %v212
  %v281 = vpack.c.b16 %v217, %v213
  %v282 = vpack.c.b16 %v222, %v218
  %v283 = vpack.c.b16 %v223, %v219
  %v284 = vpack.c.b16 %v224, %v220
  %v285 = vpack.c.b16 %v225, %v221
  %v286 = vpack.c.b16 %v230, %v226
  %v287 = vpack.c.b16 %v231, %v227
  %v288 = vpack.c.b16 %v232, %v228
  %v289 = vpack.c.b16 %v233, %v229
  %v290 = vpack.c.b16 %v238, %v234
  %v291 = vpack.c.b16 %v239, %v235
  %v292 = vpack.c.b16 %v240, %v236
  %v293 = vpack.c.b16 %v241, %v237
  %v294 = vpack.c.b16 %v246, %v242
  %v295 = vpack.c.b16 %v247, %v243
  %v296 = vpack.c.b16 %v248, %v244
  %v297 = vpack.c.b16 %v249, %v245
  %v298 = vpack.c.b16 %v254, %v250
  %v299 = vpack.c.b16 %v255, %v251
  %v300 = vpack.c.b16 %v256, %v252
  %v301 = vpack.c.b16 %v257, %v253
  %v410 = vunpack.c.l.b16 %v58
  %v411 = vunpack.c.l.b16 %v59
  %v412 = vunpack.c.l.b16 %v60
  %v413 = vunpack.c.l.b16 %v61
  %v414 = vunpack.c.l.b16 %v62
  %v415 = vunpack.c.l.b16 %v63
  %v416 = vunpack.c.l.b16 %v64
  %v417 = vunpack.c.l.b16 %v65
  %v418 = vunpack.c.l.b16 %v66
  %v419 = vunpack.c.l.b16 %v67
  %v420 = vunpack.c.l.b16 %v68
  %v421 = vunpack.c.l.b16 %v69
  %v422 = vunpack.c.l.b16 %v70
  %v423 = vunpack.c.l.b16 %v71
  %v424 = vunpack.c.l.b16 %v72
  %v425 = vunpack.c.l.b16 %v73
  %v426 = vunpack.c.l.b16 %v74
  %v427 = vunpack.c.l.b16 %v75
  %v428 = vunpack.c.l.b16 %v76
  %v429 = vunpack.c.l.b16 %v77
  %v430 = vunpack.c.l.b16 %v78
  %v431 = vunpack.c.l.b16 %v79
  %v432 = vunpack.c.l.b16 %v80
  %v433 = vunpack.c.l.b16 %v81
  %v434 = vunpack.c.l.b16 %v82
  %v435 = vunpack.c.l.b16 %v83
  %v436 = vunpack.c.l.b16 %v84
  %v437 = vunpack.c.l.b16 %v85
  %v438 = vunpack.c.l.b16 %v86
  %v439 = vunpack.c.l.b16 %v87
  %v440 = vunpack.c.l.b16 %v88
  %v441 = vunpack.c.l.b16 %v89
  %v442 = vunpack.c.l.b16 %v90
  %v443 = vunpack.c.l.b16 %v91
  %v444 = vunpack.c.l.b16 %v92
  %v445 = vunpack.c.l.b16 %v93
  %v446 = vunpack.c.l.b16 %v94
  %v447 = vunpack.c.l.b16 %v95
  %v448 = vunpack.c.l.b16 %v96
  %v449 = vunpack.c.l.b16 %v97
  %v450 = vunpack.c.l.b16 %v98
  %v451 = vunpack.c.l.b16 %v99
  %v452 = vunpack.c.l.b16 %v100
  %v453 = vunpack.c.l.b16 %v101
  %v454 = vunpack.c.l.b16 %v102
  %v455 = vunpack.c.l.b16 %v103
  %v456 = vunpack.c.l.b16 %v104
  %v457 = vunpack.c.l.b16 %v105
  %v458 = vunpack.c.l.b16 %v106
  %v459 = vunpack.c.l.b16 %v107
  %v460 = vunpack.c.l.b16 %v108
  %v461 = vunpack.c.l.b16 %v109
  %v462 = vunpack.c.l.b16 %v110
  %v463 = vunpack.c.l.b16 %v111
  %v464 = vunpack.c.l.b16 %v112
  %v465 = vunpack.c.l.b16 %v113
  %v466 = vunpack.c.l.b16 %v114
  %v467 = vunpack.c.l.b16 %v115
  %v468 = vunpack.c.l.b16 %v116
  %v469 = vunpack.c.l.b16 %v117
  %v470 = vunpack.c.l.b16 %v118
  %v471 = vunpack.c.l.b16 %v119
  %v472 = vunpack.c.l.b16 %v120
  %v473 = vunpack.c.l.b16 %v121
  %v474 = vpack.c.b16 %v411, %v410
  %v475 = vpack.c.b16 %v413, %v412
  %v476 = vpack.c.b16 %v415, %v414
  %v477 = vpack.c.b16 %v417, %v416
  %v478 = vpack.c.b16 %v419, %v418
  %v479 = vpack.c.b16 %v421, %v420
  %v480 = vpack.c.b16 %v423, %v422
  %v481 = vpack.c.b16 %v425, %v424
  %v482 = vpack.c.b16 %v427, %v426
  %v483 = vpack.c.b16 %v429, %v428
  %v484 = vpack.c.b16 %v431, %v430
  %v485 = vpack.c.b16 %v433, %v432
  %v486 = vpack.c.b16 %v435, %v434
  %v487 = vpack.c.b16 %v437, %v436
  %v488 = vpack.c.b16 %v439, %v438
  %v489 = vpack.c.b16 %v441, %v440
  %v490 = vpack.c.b16 %v443, %v442
  %v491 = vpack.c.b16 %v445, %v444
  %v492 = vpack.c.b16 %v447, %v446
  %v493 = vpack.c.b16 %v449, %v448
  %v494 = vpack.c.b16 %v451, %v450
  %v495 = vpack.c.b16 %v453, %v452
  %v496 = vpack.c.b16 %v455, %v454
  %v497 = vpack.c.b16 %v457, %v456
  %v498 = vpack.c.b16 %v459, %v458
  %v499 = vpack.c.b16 %v461, %v460
  %v500 = vpack.c.b16 %v463, %v462
  %v501 = vpack.c.b16 %v465, %v464
  %v502 = vpack.c.b16 %v467, %v466
  %v503 = vpack.c.b16 %v469, %v468
  %v504 = vpack.c.b16 %v471, %v470
  %v505 = vpack.c.b16 %v473, %v472
  %538 = vmatpush.bf16.msra.mxu0 %v481
  %539 = vmatpush.bf16.msra.mxu0 %v480
  %540 = vmatpush.bf16.msra.mxu0 %v479
  %541 = vmatpush.bf16.msra.mxu0 %v478
  %542 = vmatpush.bf16.msra.mxu0 %v477
  %543 = vmatpush.bf16.msra.mxu0 %v476
  %544 = vmatpush.bf16.msra.mxu0 %v475
  %545 = vmatpush.bf16.msra.mxu0 %v474
  %546 = vmatmul.bf16.gmra.mxu0 %v258
  %v547 = vpop.f32.mrf.mxu0
  %v548 = vadd.f32 %v124, %v547
  %v549 = vpop.f32.mrf.mxu0
  %v550 = vadd.f32 %v124, %v549
  %551 = vmatmul.bf16.gmra.mxu0 %v262
  %v552 = vpop.f32.mrf.mxu0
  %v553 = vadd.f32 %v124, %v552
  %v554 = vpop.f32.mrf.mxu0
  %v555 = vadd.f32 %v124, %v554
  %556 = vmatmul.bf16.gmra.mxu0 %v266
  %v557 = vpop.f32.mrf.mxu0
  %v558 = vadd.f32 %v124, %v557
  %v559 = vpop.f32.mrf.mxu0
  %v560 = vadd.f32 %v124, %v559
  %561 = vmatmul.bf16.gmra.mxu0 %v270
  %v562 = vpop.f32.mrf.mxu0
  %v563 = vadd.f32 %v124, %v562
  %v564 = vpop.f32.mrf.mxu0
  %v565 = vadd.f32 %v124, %v564
  %566 = vmatmul.bf16.gmra.mxu0 %v274
  %v567 = vpop.f32.mrf.mxu0
  %v568 = vadd.f32 %v124, %v567
  %v569 = vpop.f32.mrf.mxu0
  %v570 = vadd.f32 %v124, %v569
  %571 = vmatmul.bf16.gmra.mxu0 %v278
  %v572 = vpop.f32.mrf.mxu0
  %v573 = vadd.f32 %v124, %v572
  %v574 = vpop.f32.mrf.mxu0
  %v575 = vadd.f32 %v124, %v574
  %576 = vmatmul.bf16.gmra.mxu0 %v282
  %v577 = vpop.f32.mrf.mxu0
  %v578 = vadd.f32 %v124, %v577
  %v579 = vpop.f32.mrf.mxu0
  %v580 = vadd.f32 %v124, %v579
  %581 = vmatmul.bf16.gmra.mxu0 %v286
  %v582 = vpop.f32.mrf.mxu0
  %v583 = vadd.f32 %v124, %v582
  %v584 = vpop.f32.mrf.mxu0
  %v585 = vadd.f32 %v124, %v584
  %586 = vmatmul.bf16.gmra.mxu0 %v290
  %v587 = vpop.f32.mrf.mxu0
  %v588 = vadd.f32 %v124, %v587
  %v589 = vpop.f32.mrf.mxu0
  %v590 = vadd.f32 %v124, %v589
  %591 = vmatmul.bf16.gmra.mxu0 %v294
  %v592 = vpop.f32.mrf.mxu0
  %v593 = vadd.f32 %v124, %v592
  %v594 = vpop.f32.mrf.mxu0
  %v595 = vadd.f32 %v124, %v594
  %596 = vmatmul.bf16.gmra.mxu0 %v298
  %v597 = vpop.f32.mrf.mxu0
  %v598 = vadd.f32 %v124, %v597
  %v599 = vpop.f32.mrf.mxu0
  %v600 = vadd.f32 %v124, %v599
  %601 = vdwg.mxu0
  %602 = vmatpush.bf16.msra.mxu0 %v489
  %603 = vmatpush.bf16.msra.mxu0 %v488
  %604 = vmatpush.bf16.msra.mxu0 %v487
  %605 = vmatpush.bf16.msra.mxu0 %v486
  %606 = vmatpush.bf16.msra.mxu0 %v485
  %607 = vmatpush.bf16.msra.mxu0 %v484
  %608 = vmatpush.bf16.msra.mxu0 %v483
  %609 = vmatpush.bf16.msra.mxu0 %v482
  %610 = vmatmul.bf16.gmra.mxu0 %v259
  %v611 = vpop.f32.mrf.mxu0
  %v612 = vadd.f32 %v548, %v611
  %v613 = vpop.f32.mrf.mxu0
  %v614 = vadd.f32 %v550, %v613
  %615 = vmatmul.bf16.gmra.mxu0 %v263
  %v616 = vpop.f32.mrf.mxu0
  %v617 = vadd.f32 %v553, %v616
  %v618 = vpop.f32.mrf.mxu0
  %v619 = vadd.f32 %v555, %v618
  %620 = vmatmul.bf16.gmra.mxu0 %v267
  %v621 = vpop.f32.mrf.mxu0
  %v622 = vadd.f32 %v558, %v621
  %v623 = vpop.f32.mrf.mxu0
  %v624 = vadd.f32 %v560, %v623
  %625 = vmatmul.bf16.gmra.mxu0 %v271
  %v626 = vpop.f32.mrf.mxu0
  %v627 = vadd.f32 %v563, %v626
  %v628 = vpop.f32.mrf.mxu0
  %v629 = vadd.f32 %v565, %v628
  %630 = vmatmul.bf16.gmra.mxu0 %v275
  %v631 = vpop.f32.mrf.mxu0
  %v632 = vadd.f32 %v568, %v631
  %v633 = vpop.f32.mrf.mxu0
  %v634 = vadd.f32 %v570, %v633
  %635 = vmatmul.bf16.gmra.mxu0 %v279
  %v636 = vpop.f32.mrf.mxu0
  %v637 = vadd.f32 %v573, %v636
  %v638 = vpop.f32.mrf.mxu0
  %v639 = vadd.f32 %v575, %v638
  %640 = vmatmul.bf16.gmra.mxu0 %v283
  %v641 = vpop.f32.mrf.mxu0
  %v642 = vadd.f32 %v578, %v641
  %v643 = vpop.f32.mrf.mxu0
  %v644 = vadd.f32 %v580, %v643
  %645 = vmatmul.bf16.gmra.mxu0 %v287
  %v646 = vpop.f32.mrf.mxu0
  %v647 = vadd.f32 %v583, %v646
  %v648 = vpop.f32.mrf.mxu0
  %v649 = vadd.f32 %v585, %v648
  %650 = vmatmul.bf16.gmra.mxu0 %v291
  %v651 = vpop.f32.mrf.mxu0
  %v652 = vadd.f32 %v588, %v651
  %v653 = vpop.f32.mrf.mxu0
  %v654 = vadd.f32 %v590, %v653
  %655 = vmatmul.bf16.gmra.mxu0 %v295
  %v656 = vpop.f32.mrf.mxu0
  %v657 = vadd.f32 %v593, %v656
  %v658 = vpop.f32.mrf.mxu0
  %v659 = vadd.f32 %v595, %v658
  %660 = vmatmul.bf16.gmra.mxu0 %v299
  %v661 = vpop.f32.mrf.mxu0
  %v662 = vadd.f32 %v598, %v661
  %v663 = vpop.f32.mrf.mxu0
  %v664 = vadd.f32 %v600, %v663
  %665 = vdwg.mxu0
  %666 = vmatpush.bf16.msra.mxu0 %v497
  %667 = vmatpush.bf16.msra.mxu0 %v496
  %668 = vmatpush.bf16.msra.mxu0 %v495
  %669 = vmatpush.bf16.msra.mxu0 %v494
  %670 = vmatpush.bf16.msra.mxu0 %v493
  %671 = vmatpush.bf16.msra.mxu0 %v492
  %672 = vmatpush.bf16.msra.mxu0 %v491
  %673 = vmatpush.bf16.msra.mxu0 %v490
  %674 = vmatmul.bf16.gmra.mxu0 %v260
  %v675 = vpop.f32.mrf.mxu0
  %v676 = vadd.f32 %v612, %v675
  %v677 = vpop.f32.mrf.mxu0
  %v678 = vadd.f32 %v614, %v677
  %679 = vmatmul.bf16.gmra.mxu0 %v264
  %v680 = vpop.f32.mrf.mxu0
  %v681 = vadd.f32 %v617, %v680
  %v682 = vpop.f32.mrf.mxu0
  %v683 = vadd.f32 %v619, %v682
  %684 = vmatmul.bf16.gmra.mxu0 %v268
  %v685 = vpop.f32.mrf.mxu0
  %v686 = vadd.f32 %v622, %v685
  %v687 = vpop.f32.mrf.mxu0
  %v688 = vadd.f32 %v624, %v687
  %689 = vmatmul.bf16.gmra.mxu0 %v272
  %v690 = vpop.f32.mrf.mxu0
  %v691 = vadd.f32 %v627, %v690
  %v692 = vpop.f32.mrf.mxu0
  %v693 = vadd.f32 %v629, %v692
  %694 = vmatmul.bf16.gmra.mxu0 %v276
  %v695 = vpop.f32.mrf.mxu0
  %v696 = vadd.f32 %v632, %v695
  %v697 = vpop.f32.mrf.mxu0
  %v698 = vadd.f32 %v634, %v697
  %699 = vmatmul.bf16.gmra.mxu0 %v280
  %v700 = vpop.f32.mrf.mxu0
  %v701 = vadd.f32 %v637, %v700
  %v702 = vpop.f32.mrf.mxu0
  %v703 = vadd.f32 %v639, %v702
  %704 = vmatmul.bf16.gmra.mxu0 %v284
  %v705 = vpop.f32.mrf.mxu0
  %v706 = vadd.f32 %v642, %v705
  %v707 = vpop.f32.mrf.mxu0
  %v708 = vadd.f32 %v644, %v707
  %709 = vmatmul.bf16.gmra.mxu0 %v288
  %v710 = vpop.f32.mrf.mxu0
  %v711 = vadd.f32 %v647, %v710
  %v712 = vpop.f32.mrf.mxu0
  %v713 = vadd.f32 %v649, %v712
  %714 = vmatmul.bf16.gmra.mxu0 %v292
  %v715 = vpop.f32.mrf.mxu0
  %v716 = vadd.f32 %v652, %v715
  %v717 = vpop.f32.mrf.mxu0
  %v718 = vadd.f32 %v654, %v717
  %719 = vmatmul.bf16.gmra.mxu0 %v296
  %v720 = vpop.f32.mrf.mxu0
  %v721 = vadd.f32 %v657, %v720
  %v722 = vpop.f32.mrf.mxu0
  %v723 = vadd.f32 %v659, %v722
  %724 = vmatmul.bf16.gmra.mxu0 %v300
  %v725 = vpop.f32.mrf.mxu0
  %v726 = vadd.f32 %v662, %v725
  %v727 = vpop.f32.mrf.mxu0
  %v728 = vadd.f32 %v664, %v727
  %729 = vdwg.mxu0
  %730 = vmatpush.bf16.msra.mxu0 %v505
  %731 = vmatpush.bf16.msra.mxu0 %v504
  %732 = vmatpush.bf16.msra.mxu0 %v503
  %733 = vmatpush.bf16.msra.mxu0 %v502
  %734 = vmatpush.bf16.msra.mxu0 %v501
  %735 = vmatpush.bf16.msra.mxu0 %v500
  %736 = vmatpush.bf16.msra.mxu0 %v499
  %737 = vmatpush.bf16.msra.mxu0 %v498
  %738 = vmatmul.bf16.gmra.mxu0 %v261
  %v739 = vpop.f32.mrf.mxu0
  %v740 = vadd.f32 %v676, %v739
  %v741 = vpop.f32.mrf.mxu0
  %v742 = vadd.f32 %v678, %v741
  %743 = vmatmul.bf16.gmra.mxu0 %v265
  %v744 = vpop.f32.mrf.mxu0
  %v745 = vadd.f32 %v681, %v744
  %v746 = vpop.f32.mrf.mxu0
  %v747 = vadd.f32 %v683, %v746
  %748 = vmatmul.bf16.gmra.mxu0 %v269
  %v749 = vpop.f32.mrf.mxu0
  %v750 = vadd.f32 %v686, %v749
  %v751 = vpop.f32.mrf.mxu0
  %v752 = vadd.f32 %v688, %v751
  %753 = vmatmul.bf16.gmra.mxu0 %v273
  %v754 = vpop.f32.mrf.mxu0
  %v755 = vadd.f32 %v691, %v754
  %v756 = vpop.f32.mrf.mxu0
  %v757 = vadd.f32 %v693, %v756
  %758 = vmatmul.bf16.gmra.mxu0 %v277
  %v759 = vpop.f32.mrf.mxu0
  %v760 = vadd.f32 %v696, %v759
  %v761 = vpop.f32.mrf.mxu0
  %v762 = vadd.f32 %v698, %v761
  %763 = vmatmul.bf16.gmra.mxu0 %v281
  %v764 = vpop.f32.mrf.mxu0
  %v765 = vadd.f32 %v701, %v764
  %v766 = vpop.f32.mrf.mxu0
  %v767 = vadd.f32 %v703, %v766
  %768 = vmatmul.bf16.gmra.mxu0 %v285
  %v769 = vpop.f32.mrf.mxu0
  %v770 = vadd.f32 %v706, %v769
  %v771 = vpop.f32.mrf.mxu0
  %v772 = vadd.f32 %v708, %v771
  %773 = vmatmul.bf16.gmra.mxu0 %v289
  %v774 = vpop.f32.mrf.mxu0
  %v775 = vadd.f32 %v711, %v774
  %v776 = vpop.f32.mrf.mxu0
  %v777 = vadd.f32 %v713, %v776
  %778 = vmatmul.bf16.gmra.mxu0 %v293
  %v779 = vpop.f32.mrf.mxu0
  %v780 = vadd.f32 %v716, %v779
  %v781 = vpop.f32.mrf.mxu0
  %v782 = vadd.f32 %v718, %v781
  %783 = vmatmul.bf16.gmra.mxu0 %v297
  %v784 = vpop.f32.mrf.mxu0
  %v785 = vadd.f32 %v721, %v784
  %v786 = vpop.f32.mrf.mxu0
  %v787 = vadd.f32 %v723, %v786
  %788 = vmatmul.bf16.gmra.mxu0 %v301
  %v789 = vpop.f32.mrf.mxu0
  %v790 = vadd.f32 %v726, %v789
  %v791 = vpop.f32.mrf.mxu0
  %v792 = vadd.f32 %v728, %v791
  %793 = vdwg.mxu0
  %v794 = vmax.f32 %v740, 0.0
  %v795 = vmax.f32 %v742, 0.0
  %v796 = vmax.f32 %v745, 0.0
  %v797 = vmax.f32 %v747, 0.0
  %v798 = vmax.f32 %v750, 0.0
  %v799 = vmax.f32 %v752, 0.0
  %v800 = vmax.f32 %v755, 0.0
  %v801 = vmax.f32 %v757, 0.0
  %v802 = vmax.f32 %v760, 0.0
  %v803 = vmax.f32 %v762, 0.0
  %v804 = vmax.f32 %v765, 0.0
  %v805 = vmax.f32 %v767, 0.0
  %v806 = vmax.f32 %v770, 0.0
  %v807 = vmax.f32 %v772, 0.0
  %v808 = vmax.f32 %v775, 0.0
  %v809 = vmax.f32 %v777, 0.0
  %v810 = vmax.f32 %v780, 0.0
  %v811 = vmax.f32 %v782, 0.0
  %v812 = vmax.f32 %v785, 0.0
  %v813 = vmax.f32 %v787, 0.0
  %v814 = vmax.f32 %v790, 0.0
  %v815 = vmax.f32 %v792, 0.0
  %v816 = vpack.c.bf16 %v794, %v794
  %v817 = vpack.c.bf16 %v795, %v795
  %v818 = vpack.c.bf16 %v796, %v796
  %v819 = vpack.c.bf16 %v797, %v797
  %v820 = vpack.c.bf16 %v798, %v798
  %v821 = vpack.c.bf16 %v799, %v799
  %v822 = vpack.c.bf16 %v800, %v800
  %v823 = vpack.c.bf16 %v801, %v801
  %v824 = vpack.c.bf16 %v802, %v802
  %v825 = vpack.c.bf16 %v803, %v803
  %v826 = vpack.c.bf16 %v804, %v804
  %v827 = vpack.c.bf16 %v805, %v805
  %v828 = vpack.c.bf16 %v806, %v806
  %v829 = vpack.c.bf16 %v807, %v807
  %v830 = vpack.c.bf16 %v808, %v808
  %v831 = vpack.c.bf16 %v809, %v809
  %v832 = vpack.c.bf16 %v810, %v810
  %v833 = vpack.c.bf16 %v811, %v811
  %v834 = vpack.c.bf16 %v812, %v812
  %v835 = vpack.c.bf16 %v813, %v813
  %v836 = vpack.c.bf16 %v814, %v814
  %v837 = vpack.c.bf16 %v815, %v815
  %vm838 = vcmask 519168
  %839 = vst.msk [vmem:[%s3] sm:$0xf] %vm838, %v816
  %840 = vst.msk [vmem:[%s3 + $0x4] sm:$0xf] %vm838, %v817
  %841 = vst.msk [vmem:[%s3 + $0x8] sm:$0xf] %vm838, %v818
  %842 = vst.msk [vmem:[%s3 + $0xc] sm:$0xf] %vm838, %v819
  %843 = vst.msk [vmem:[%s3 + $0x10] sm:$0xf] %vm838, %v820
  %844 = vst.msk [vmem:[%s3 + $0x14] sm:$0xf] %vm838, %v821
  %845 = vst.msk [vmem:[%s3 + $0x18] sm:$0xf] %vm838, %v822
  %846 = vst.msk [vmem:[%s3 + $0x1c] sm:$0xf] %vm838, %v823
  %847 = vst.msk [vmem:[%s3 + $0x20] sm:$0xf] %vm838, %v824
  %848 = vst.msk [vmem:[%s3 + $0x24] sm:$0xf] %vm838, %v825
  %849 = vst.msk [vmem:[%s3 + $0x28] sm:$0xf] %vm838, %v826
  %850 = vst.msk [vmem:[%s3 + $0x2c] sm:$0xf] %vm838, %v827
  %851 = vst.msk [vmem:[%s3 + $0x30] sm:$0xf] %vm838, %v828
  %852 = vst.msk [vmem:[%s3 + $0x34] sm:$0xf] %vm838, %v829
  %853 = vst.msk [vmem:[%s3 + $0x38] sm:$0xf] %vm838, %v830
  %854 = vst.msk [vmem:[%s3 + $0x3c] sm:$0xf] %vm838, %v831
  %855 = vst.msk [vmem:[%s3 + $0x40] sm:$0xf] %vm838, %v832
  %856 = vst.msk [vmem:[%s3 + $0x44] sm:$0xf] %vm838, %v833
  %857 = vst.msk [vmem:[%s3 + $0x48] sm:$0xf] %vm838, %v834
  %858 = vst.msk [vmem:[%s3 + $0x4c] sm:$0xf] %vm838, %v835
  %859 = vst.msk [vmem:[%s3 + $0x50] sm:$0xf] %vm838, %v836
  %860 = vst.msk [vmem:[%s3 + $0x54] sm:$0xf] %vm838, %v837
  // Predicated region
  $region14: #{deepmind_cnn.5} parent=0 // pred_check
    _
  $region15: #{deepmind_cnn.5} parent=0 // pred_check_branch
    %862 = sbr.rel (0) target = $region17
  $region16: #{deepmind_cnn.5} parent=0 // pred_region
    _
  $region17: #{deepmind_cnn.5} parent=0 // pred_fallthru
    _
  // Predicated region
  $region18: #{deepmind_cnn.5} parent=0 // pred_check
    _
  $region19: #{deepmind_cnn.5} parent=0 // pred_check_branch
    %864 = sbr.rel (0) target = $region21
  $region20: #{deepmind_cnn.5} parent=0 // pred_region
    _
  $region21: #{deepmind_cnn.5} parent=0 // pred_fallthru
    _

// kernel: deepmind_cnn.6
$region0: #{deepmind_cnn.6}
  #allocation0 [shape = 'u32[]', space=smem, size = 0x4, offset = 0x4, fixed_abs, tag = 'smem constant byte address 0x4 - core index']
  #allocation1 [shape = 'u32[72,128]{1,0:T(1,128)}', space=vmem, size = 0x9000, scoped, tag = 'internal scratch']
  %s0 = inlined_call_operand.vmem [shape: bf16[112,576], index: 0, kind: input, shape index: {}]
  %s1 = inlined_call_operand.vmem [shape: bf16[576,64], index: 1, kind: input, shape index: {}]
  %s2 = inlined_call_operand.vmem [shape: f32[1,64], index: 2, kind: input, shape index: {}]
  %s3 = inlined_call_operand.vmem [shape: bf16[112,64], index: 3, kind: output, shape index: {}]
  %s4 = sld [smem:[#allocation0]]
  $region22: #{deepmind_cnn.6} parent=0
    _
  %s6 = ssub.s32 1, %s4
  %s7 = scalar_select 0, %s6, %s4
  // Predicated region
  $region2: #{deepmind_cnn.6} parent=0 // pred_check
    _
  $region3: #{deepmind_cnn.6} parent=0 // pred_check_branch
    %9 = sbr.rel (0) target = $region5
  $region4: #{deepmind_cnn.6} parent=0 // pred_region
    _
  $region5: #{deepmind_cnn.6} parent=0 // pred_fallthru
    _
  // Predicated region
  $region6: #{deepmind_cnn.6} parent=0 // pred_check
    _
  $region7: #{deepmind_cnn.6} parent=0 // pred_check_branch
    %11 = sbr.rel (0) target = $region9
  $region8: #{deepmind_cnn.6} parent=0 // pred_region
    _
  $region9: #{deepmind_cnn.6} parent=0 // pred_fallthru
    _
  // Predicated region
  $region10: #{deepmind_cnn.6} parent=0 // pred_check
    _
  $region11: #{deepmind_cnn.6} parent=0 // pred_check_branch
    %13 = sbr.rel (0) target = $region13
  $region12: #{deepmind_cnn.6} parent=0 // pred_region
    _
  $region13: #{deepmind_cnn.6} parent=0 // pred_fallthru
    _
  %v15 = vld [vmem:[%s0] sm:$0xff]
  %v16 = vld [vmem:[%s0 + $0x8] sm:$0xff]
  %v17 = vld [vmem:[%s0 + $0x10] sm:$0xf]
  %v18 = vld [vmem:[%s0 + $0x14] sm:$0xff]
  %v19 = vld [vmem:[%s0 + $0x1c] sm:$0xff]
  %v20 = vld [vmem:[%s0 + $0x24] sm:$0xf]
  %v21 = vld [vmem:[%s0 + $0x28] sm:$0xff]
  %v22 = vld [vmem:[%s0 + $0x30] sm:$0xff]
  %v23 = vld [vmem:[%s0 + $0x38] sm:$0xf]
  %v24 = vld [vmem:[%s0 + $0x3c] sm:$0xff]
  %v25 = vld [vmem:[%s0 + $0x44] sm:$0xff]
  %v26 = vld [vmem:[%s0 + $0x4c] sm:$0xf]
  %v27 = vld [vmem:[%s0 + $0x50] sm:$0xff]
  %v28 = vld [vmem:[%s0 + $0x58] sm:$0xff]
  %v29 = vld [vmem:[%s0 + $0x60] sm:$0xf]
  %v30 = vld [vmem:[%s0 + $0x64] sm:$0xff]
  %v31 = vld [vmem:[%s0 + $0x6c] sm:$0xff]
  %v32 = vld [vmem:[%s0 + $0x74] sm:$0xf]
  %v33 = vld [vmem:[%s0 + $0x78] sm:$0xff]
  %v34 = vld [vmem:[%s0 + $0x80] sm:$0xff]
  %v35 = vld [vmem:[%s0 + $0x88] sm:$0xf]
  %v36 = vld [vmem:[%s0 + $0x8c] sm:$0xff]
  %v37 = vld [vmem:[%s0 + $0x94] sm:$0xff]
  %v38 = vld [vmem:[%s0 + $0x9c] sm:$0xf]
  %v39 = vld [vmem:[%s0 + $0xa0] sm:$0xff]
  %v40 = vld [vmem:[%s0 + $0xa8] sm:$0xff]
  %v41 = vld [vmem:[%s0 + $0xb0] sm:$0xf]
  %v42 = vld [vmem:[%s0 + $0xb4] sm:$0xff]
  %v43 = vld [vmem:[%s0 + $0xbc] sm:$0xff]
  %v44 = vld [vmem:[%s0 + $0xc4] sm:$0xf]
  %v45 = vld [vmem:[%s0 + $0xc8] sm:$0xff]
  %v46 = vld [vmem:[%s0 + $0xd0] sm:$0xff]
  %v47 = vld [vmem:[%s0 + $0xd8] sm:$0xf]
  %v48 = vld [vmem:[%s0 + $0xdc] sm:$0xff]
  %v49 = vld [vmem:[%s0 + $0xe4] sm:$0xff]
  %v50 = vld [vmem:[%s0 + $0xec] sm:$0xf]
  %v51 = vld [vmem:[%s0 + $0xf0] sm:$0xff]
  %v52 = vld [vmem:[%s0 + $0xf8] sm:$0xff]
  %v53 = vld [vmem:[%s0 + $0x100] sm:$0xf]
  %v54 = vld [vmem:[%s0 + $0x104] sm:$0xff]
  %v55 = vld [vmem:[%s0 + $0x10c] sm:$0xff]
  %v56 = vld [vmem:[%s0 + $0x114] sm:$0xf]
  %v57 = vld [vmem:[%s1] sm:$0xf]
  %v58 = vld [vmem:[%s1 + $0x4] sm:$0xf]
  %v59 = vld [vmem:[%s1 + $0x8] sm:$0xf]
  %v60 = vld [vmem:[%s1 + $0xc] sm:$0xf]
  %v61 = vld [vmem:[%s1 + $0x10] sm:$0xf]
  %v62 = vld [vmem:[%s1 + $0x14] sm:$0xf]
  %v63 = vld [vmem:[%s1 + $0x18] sm:$0xf]
  %v64 = vld [vmem:[%s1 + $0x1c] sm:$0xf]
  %v65 = vld [vmem:[%s1 + $0x20] sm:$0xf]
  %v66 = vld [vmem:[%s1 + $0x24] sm:$0xf]
  %v67 = vld [vmem:[%s1 + $0x28] sm:$0xf]
  %v68 = vld [vmem:[%s1 + $0x2c] sm:$0xf]
  %v69 = vld [vmem:[%s1 + $0x30] sm:$0xf]
  %v70 = vld [vmem:[%s1 + $0x34] sm:$0xf]
  %v71 = vld [vmem:[%s1 + $0x38] sm:$0xf]
  %v72 = vld [vmem:[%s1 + $0x3c] sm:$0xf]
  %v73 = vld [vmem:[%s1 + $0x40] sm:$0xf]
  %v74 = vld [vmem:[%s1 + $0x44] sm:$0xf]
  %v75 = vld [vmem:[%s1 + $0x48] sm:$0xf]
  %v76 = vld [vmem:[%s1 + $0x4c] sm:$0xf]
  %v77 = vld [vmem:[%s1 + $0x50] sm:$0xf]
  %v78 = vld [vmem:[%s1 + $0x54] sm:$0xf]
  %v79 = vld [vmem:[%s1 + $0x58] sm:$0xf]
  %v80 = vld [vmem:[%s1 + $0x5c] sm:$0xf]
  %v81 = vld [vmem:[%s1 + $0x60] sm:$0xf]
  %v82 = vld [vmem:[%s1 + $0x64] sm:$0xf]
  %v83 = vld [vmem:[%s1 + $0x68] sm:$0xf]
  %v84 = vld [vmem:[%s1 + $0x6c] sm:$0xf]
  %v85 = vld [vmem:[%s1 + $0x70] sm:$0xf]
  %v86 = vld [vmem:[%s1 + $0x74] sm:$0xf]
  %v87 = vld [vmem:[%s1 + $0x78] sm:$0xf]
  %v88 = vld [vmem:[%s1 + $0x7c] sm:$0xf]
  %v89 = vld [vmem:[%s1 + $0x80] sm:$0xf]
  %v90 = vld [vmem:[%s1 + $0x84] sm:$0xf]
  %v91 = vld [vmem:[%s1 + $0x88] sm:$0xf]
  %v92 = vld [vmem:[%s1 + $0x8c] sm:$0xf]
  %v93 = vld [vmem:[%s1 + $0x90] sm:$0xf]
  %v94 = vld [vmem:[%s1 + $0x94] sm:$0xf]
  %v95 = vld [vmem:[%s1 + $0x98] sm:$0xf]
  %v96 = vld [vmem:[%s1 + $0x9c] sm:$0xf]
  %v97 = vld [vmem:[%s1 + $0xa0] sm:$0xf]
  %v98 = vld [vmem:[%s1 + $0xa4] sm:$0xf]
  %v99 = vld [vmem:[%s1 + $0xa8] sm:$0xf]
  %v100 = vld [vmem:[%s1 + $0xac] sm:$0xf]
  %v101 = vld [vmem:[%s1 + $0xb0] sm:$0xf]
  %v102 = vld [vmem:[%s1 + $0xb4] sm:$0xf]
  %v103 = vld [vmem:[%s1 + $0xb8] sm:$0xf]
  %v104 = vld [vmem:[%s1 + $0xbc] sm:$0xf]
  %v105 = vld [vmem:[%s1 + $0xc0] sm:$0xf]
  %v106 = vld [vmem:[%s1 + $0xc4] sm:$0xf]
  %v107 = vld [vmem:[%s1 + $0xc8] sm:$0xf]
  %v108 = vld [vmem:[%s1 + $0xcc] sm:$0xf]
  %v109 = vld [vmem:[%s1 + $0xd0] sm:$0xf]
  %v110 = vld [vmem:[%s1 + $0xd4] sm:$0xf]
  %v111 = vld [vmem:[%s1 + $0xd8] sm:$0xf]
  %v112 = vld [vmem:[%s1 + $0xdc] sm:$0xf]
  %v113 = vld [vmem:[%s1 + $0xe0] sm:$0xf]
  %v114 = vld [vmem:[%s1 + $0xe4] sm:$0xf]
  %v115 = vld [vmem:[%s1 + $0xe8] sm:$0xf]
  %v116 = vld [vmem:[%s1 + $0xec] sm:$0xf]
  %v117 = vld [vmem:[%s1 + $0xf0] sm:$0xf]
  %v118 = vld [vmem:[%s1 + $0xf4] sm:$0xf]
  %v119 = vld [vmem:[%s1 + $0xf8] sm:$0xf]
  %v120 = vld [vmem:[%s1 + $0xfc] sm:$0xf]
  %v121 = vld [vmem:[%s1 + $0x100] sm:$0xf]
  %v122 = vld [vmem:[%s1 + $0x104] sm:$0xf]
  %v123 = vld [vmem:[%s1 + $0x108] sm:$0xf]
  %v124 = vld [vmem:[%s1 + $0x10c] sm:$0xf]
  %v125 = vld [vmem:[%s1 + $0x110] sm:$0xf]
  %v126 = vld [vmem:[%s1 + $0x114] sm:$0xf]
  %v127 = vld [vmem:[%s1 + $0x118] sm:$0xf]
  %v128 = vld [vmem:[%s1 + $0x11c] sm:$0xf]
  %v129 = vld [vmem:[%s2] sm:$0x1]
  %v131 = vperm.slane %v129, 0
  %v175 = vunpack.c.l.b16 %v15
  %v176 = vunpack.c.h.b16 %v15
  %v177 = vunpack.c.l.b16 %v16
  %v178 = vunpack.c.h.b16 %v16
  %v179 = vunpack.c.l.b16 %v17
  %v180 = vunpack.c.l.b16 %v18
  %v181 = vunpack.c.h.b16 %v18
  %v182 = vunpack.c.l.b16 %v19
  %v183 = vunpack.c.h.b16 %v19
  %v184 = vunpack.c.l.b16 %v20
  %v185 = vunpack.c.l.b16 %v21
  %v186 = vunpack.c.h.b16 %v21
  %v187 = vunpack.c.l.b16 %v22
  %v188 = vunpack.c.h.b16 %v22
  %v189 = vunpack.c.l.b16 %v23
  %v190 = vunpack.c.l.b16 %v24
  %v191 = vunpack.c.h.b16 %v24
  %v192 = vunpack.c.l.b16 %v25
  %v193 = vunpack.c.h.b16 %v25
  %v194 = vunpack.c.l.b16 %v26
  %v195 = vunpack.c.l.b16 %v27
  %v196 = vunpack.c.h.b16 %v27
  %v197 = vunpack.c.l.b16 %v28
  %v198 = vunpack.c.h.b16 %v28
  %v199 = vunpack.c.l.b16 %v29
  %v200 = vunpack.c.l.b16 %v30
  %v201 = vunpack.c.h.b16 %v30
  %v202 = vunpack.c.l.b16 %v31
  %v203 = vunpack.c.h.b16 %v31
  %v204 = vunpack.c.l.b16 %v32
  %v205 = vunpack.c.l.b16 %v33
  %v206 = vunpack.c.h.b16 %v33
  %v207 = vunpack.c.l.b16 %v34
  %v208 = vunpack.c.h.b16 %v34
  %v209 = vunpack.c.l.b16 %v35
  %v210 = vunpack.c.l.b16 %v36
  %v211 = vunpack.c.h.b16 %v36
  %v212 = vunpack.c.l.b16 %v37
  %v213 = vunpack.c.h.b16 %v37
  %v214 = vunpack.c.l.b16 %v38
  %v215 = vunpack.c.l.b16 %v39
  %v216 = vunpack.c.h.b16 %v39
  %v217 = vunpack.c.l.b16 %v40
  %v218 = vunpack.c.h.b16 %v40
  %v219 = vunpack.c.l.b16 %v41
  %v220 = vunpack.c.l.b16 %v42
  %v221 = vunpack.c.h.b16 %v42
  %v222 = vunpack.c.l.b16 %v43
  %v223 = vunpack.c.h.b16 %v43
  %v224 = vunpack.c.l.b16 %v44
  %v225 = vunpack.c.l.b16 %v45
  %v226 = vunpack.c.h.b16 %v45
  %v227 = vunpack.c.l.b16 %v46
  %v228 = vunpack.c.h.b16 %v46
  %v229 = vunpack.c.l.b16 %v47
  %v230 = vunpack.c.l.b16 %v48
  %v231 = vunpack.c.h.b16 %v48
  %v232 = vunpack.c.l.b16 %v49
  %v233 = vunpack.c.h.b16 %v49
  %v234 = vunpack.c.l.b16 %v50
  %v235 = vunpack.c.l.b16 %v51
  %v236 = vunpack.c.h.b16 %v51
  %v237 = vunpack.c.l.b16 %v52
  %v238 = vunpack.c.h.b16 %v52
  %v239 = vunpack.c.l.b16 %v53
  %v240 = vunpack.c.l.b16 %v54
  %v241 = vunpack.c.h.b16 %v54
  %v242 = vunpack.c.l.b16 %v55
  %v243 = vunpack.c.h.b16 %v55
  %v244 = vunpack.c.l.b16 %v56
  %v245 = vpack.c.b16 %v180, %v175
  %v246 = vpack.c.b16 %v181, %v176
  %v247 = vpack.c.b16 %v182, %v177
  %v248 = vpack.c.b16 %v183, %v178
  %v249 = vpack.c.b16 %v184, %v179
  %v250 = vpack.c.b16 %v190, %v185
  %v251 = vpack.c.b16 %v191, %v186
  %v252 = vpack.c.b16 %v192, %v187
  %v253 = vpack.c.b16 %v193, %v188
  %v254 = vpack.c.b16 %v194, %v189
  %v255 = vpack.c.b16 %v200, %v195
  %v256 = vpack.c.b16 %v201, %v196
  %v257 = vpack.c.b16 %v202, %v197
  %v258 = vpack.c.b16 %v203, %v198
  %v259 = vpack.c.b16 %v204, %v199
  %v260 = vpack.c.b16 %v210, %v205
  %v261 = vpack.c.b16 %v211, %v206
  %v262 = vpack.c.b16 %v212, %v207
  %v263 = vpack.c.b16 %v213, %v208
  %v264 = vpack.c.b16 %v214, %v209
  %v265 = vpack.c.b16 %v220, %v215
  %v266 = vpack.c.b16 %v221, %v216
  %v267 = vpack.c.b16 %v222, %v217
  %v268 = vpack.c.b16 %v223, %v218
  %v269 = vpack.c.b16 %v224, %v219
  %v270 = vpack.c.b16 %v230, %v225
  %v271 = vpack.c.b16 %v231, %v226
  %v272 = vpack.c.b16 %v232, %v227
  %v273 = vpack.c.b16 %v233, %v228
  %v274 = vpack.c.b16 %v234, %v229
  %v275 = vpack.c.b16 %v240, %v235
  %v276 = vpack.c.b16 %v241, %v236
  %v277 = vpack.c.b16 %v242, %v237
  %v278 = vpack.c.b16 %v243, %v238
  %v279 = vpack.c.b16 %v244, %v239
  %v380 = vunpack.c.l.b16 %v57
  %v381 = vunpack.c.l.b16 %v58
  %v382 = vunpack.c.l.b16 %v59
  %v383 = vunpack.c.l.b16 %v60
  %v384 = vunpack.c.l.b16 %v61
  %v385 = vunpack.c.l.b16 %v62
  %v386 = vunpack.c.l.b16 %v63
  %v387 = vunpack.c.l.b16 %v64
  %v388 = vunpack.c.l.b16 %v65
  %v389 = vunpack.c.l.b16 %v66
  %v390 = vunpack.c.l.b16 %v67
  %v391 = vunpack.c.l.b16 %v68
  %v392 = vunpack.c.l.b16 %v69
  %v393 = vunpack.c.l.b16 %v70
  %v394 = vunpack.c.l.b16 %v71
  %v395 = vunpack.c.l.b16 %v72
  %v396 = vunpack.c.l.b16 %v73
  %v397 = vunpack.c.l.b16 %v74
  %v398 = vunpack.c.l.b16 %v75
  %v399 = vunpack.c.l.b16 %v76
  %v400 = vunpack.c.l.b16 %v77
  %v401 = vunpack.c.l.b16 %v78
  %v402 = vunpack.c.l.b16 %v79
  %v403 = vunpack.c.l.b16 %v80
  %v404 = vunpack.c.l.b16 %v81
  %v405 = vunpack.c.l.b16 %v82
  %v406 = vunpack.c.l.b16 %v83
  %v407 = vunpack.c.l.b16 %v84
  %v408 = vunpack.c.l.b16 %v85
  %v409 = vunpack.c.l.b16 %v86
  %v410 = vunpack.c.l.b16 %v87
  %v411 = vunpack.c.l.b16 %v88
  %v412 = vunpack.c.l.b16 %v89
  %v413 = vunpack.c.l.b16 %v90
  %v414 = vunpack.c.l.b16 %v91
  %v415 = vunpack.c.l.b16 %v92
  %v416 = vunpack.c.l.b16 %v93
  %v417 = vunpack.c.l.b16 %v94
  %v418 = vunpack.c.l.b16 %v95
  %v419 = vunpack.c.l.b16 %v96
  %v420 = vunpack.c.l.b16 %v97
  %v421 = vunpack.c.l.b16 %v98
  %v422 = vunpack.c.l.b16 %v99
  %v423 = vunpack.c.l.b16 %v100
  %v424 = vunpack.c.l.b16 %v101
  %v425 = vunpack.c.l.b16 %v102
  %v426 = vunpack.c.l.b16 %v103
  %v427 = vunpack.c.l.b16 %v104
  %v428 = vunpack.c.l.b16 %v105
  %v429 = vunpack.c.l.b16 %v106
  %v430 = vunpack.c.l.b16 %v107
  %v431 = vunpack.c.l.b16 %v108
  %v432 = vunpack.c.l.b16 %v109
  %v433 = vunpack.c.l.b16 %v110
  %v434 = vunpack.c.l.b16 %v111
  %v435 = vunpack.c.l.b16 %v112
  %v436 = vunpack.c.l.b16 %v113
  %v437 = vunpack.c.l.b16 %v114
  %v438 = vunpack.c.l.b16 %v115
  %v439 = vunpack.c.l.b16 %v116
  %v440 = vunpack.c.l.b16 %v117
  %v441 = vunpack.c.l.b16 %v118
  %v442 = vunpack.c.l.b16 %v119
  %v443 = vunpack.c.l.b16 %v120
  %v444 = vunpack.c.l.b16 %v121
  %v445 = vunpack.c.l.b16 %v122
  %v446 = vunpack.c.l.b16 %v123
  %v447 = vunpack.c.l.b16 %v124
  %v448 = vunpack.c.l.b16 %v125
  %v449 = vunpack.c.l.b16 %v126
  %v450 = vunpack.c.l.b16 %v127
  %v451 = vunpack.c.l.b16 %v128
  %v452 = vpack.c.b16 %v381, %v380
  %v453 = vpack.c.b16 %v383, %v382
  %v454 = vpack.c.b16 %v385, %v384
  %v455 = vpack.c.b16 %v387, %v386
  %v456 = vpack.c.b16 %v389, %v388
  %v457 = vpack.c.b16 %v391, %v390
  %v458 = vpack.c.b16 %v393, %v392
  %v459 = vpack.c.b16 %v395, %v394
  %v460 = vpack.c.b16 %v397, %v396
  %v461 = vpack.c.b16 %v399, %v398
  %v462 = vpack.c.b16 %v401, %v400
  %v463 = vpack.c.b16 %v403, %v402
  %v464 = vpack.c.b16 %v405, %v404
  %v465 = vpack.c.b16 %v407, %v406
  %v466 = vpack.c.b16 %v409, %v408
  %v467 = vpack.c.b16 %v411, %v410
  %v468 = vpack.c.b16 %v413, %v412
  %v469 = vpack.c.b16 %v415, %v414
  %v470 = vpack.c.b16 %v417, %v416
  %v471 = vpack.c.b16 %v419, %v418
  %v472 = vpack.c.b16 %v421, %v420
  %v473 = vpack.c.b16 %v423, %v422
  %v474 = vpack.c.b16 %v425, %v424
  %v475 = vpack.c.b16 %v427, %v426
  %v476 = vpack.c.b16 %v429, %v428
  %v477 = vpack.c.b16 %v431, %v430
  %v478 = vpack.c.b16 %v433, %v432
  %v479 = vpack.c.b16 %v435, %v434
  %v480 = vpack.c.b16 %v437, %v436
  %v481 = vpack.c.b16 %v439, %v438
  %v482 = vpack.c.b16 %v441, %v440
  %v483 = vpack.c.b16 %v443, %v442
  %v484 = vpack.c.b16 %v445, %v444
  %v485 = vpack.c.b16 %v447, %v446
  %v486 = vpack.c.b16 %v449, %v448
  %v487 = vpack.c.b16 %v451, %v450
  %vm524 = vcmask 523264
  %v526 = vsel %vm524, %v249, 0
  %v529 = vsel %vm524, %v254, 0
  %v532 = vsel %vm524, %v259, 0
  %v535 = vsel %vm524, %v264, 0
  %v538 = vsel %vm524, %v269, 0
  %v541 = vsel %vm524, %v274, 0
  %v544 = vsel %vm524, %v279, 0
  %546 = vmatpush.bf16.msra.mxu0 %v459
  %547 = vmatpush.bf16.msra.mxu0 %v458
  %548 = vmatpush.bf16.msra.mxu0 %v457
  %549 = vmatpush.bf16.msra.mxu0 %v456
  %550 = vmatpush.bf16.msra.mxu0 %v455
  %551 = vmatpush.bf16.msra.mxu0 %v454
  %552 = vmatpush.bf16.msra.mxu0 %v453
  %553 = vmatpush.bf16.msra.mxu0 %v452
  %554 = vmatmul.bf16.gmra.mxu0 %v245
  %v555 = vpop.f32.mrf.mxu0
  %v556 = vadd.f32 %v131, %v555
  %v557 = vpop.f32.mrf.mxu0
  %v558 = vadd.f32 %v131, %v557
  %559 = vmatmul.bf16.gmra.mxu0 %v250
  %v560 = vpop.f32.mrf.mxu0
  %v561 = vadd.f32 %v131, %v560
  %v562 = vpop.f32.mrf.mxu0
  %v563 = vadd.f32 %v131, %v562
  %564 = vmatmul.bf16.gmra.mxu0 %v255
  %v565 = vpop.f32.mrf.mxu0
  %v566 = vadd.f32 %v131, %v565
  %v567 = vpop.f32.mrf.mxu0
  %v568 = vadd.f32 %v131, %v567
  %569 = vmatmul.bf16.gmra.mxu0 %v260
  %v570 = vpop.f32.mrf.mxu0
  %v571 = vadd.f32 %v131, %v570
  %v572 = vpop.f32.mrf.mxu0
  %v573 = vadd.f32 %v131, %v572
  %574 = vmatmul.bf16.gmra.mxu0 %v265
  %v575 = vpop.f32.mrf.mxu0
  %v576 = vadd.f32 %v131, %v575
  %v577 = vpop.f32.mrf.mxu0
  %v578 = vadd.f32 %v131, %v577
  %579 = vmatmul.bf16.gmra.mxu0 %v270
  %v580 = vpop.f32.mrf.mxu0
  %v581 = vadd.f32 %v131, %v580
  %v582 = vpop.f32.mrf.mxu0
  %v583 = vadd.f32 %v131, %v582
  %584 = vmatmul.bf16.gmra.mxu0 %v275
  %v585 = vpop.f32.mrf.mxu0
  %v586 = vadd.f32 %v131, %v585
  %v587 = vpop.f32.mrf.mxu0
  %v588 = vadd.f32 %v131, %v587
  %589 = vdwg.mxu0
  %590 = vmatpush.bf16.msra.mxu0 %v467
  %591 = vmatpush.bf16.msra.mxu0 %v466
  %592 = vmatpush.bf16.msra.mxu0 %v465
  %593 = vmatpush.bf16.msra.mxu0 %v464
  %594 = vmatpush.bf16.msra.mxu0 %v463
  %595 = vmatpush.bf16.msra.mxu0 %v462
  %596 = vmatpush.bf16.msra.mxu0 %v461
  %597 = vmatpush.bf16.msra.mxu0 %v460
  %598 = vmatmul.bf16.gmra.mxu0 %v246
  %v599 = vpop.f32.mrf.mxu0
  %v600 = vadd.f32 %v556, %v599
  %v601 = vpop.f32.mrf.mxu0
  %v602 = vadd.f32 %v558, %v601
  %603 = vmatmul.bf16.gmra.mxu0 %v251
  %v604 = vpop.f32.mrf.mxu0
  %v605 = vadd.f32 %v561, %v604
  %v606 = vpop.f32.mrf.mxu0
  %v607 = vadd.f32 %v563, %v606
  %608 = vmatmul.bf16.gmra.mxu0 %v256
  %v609 = vpop.f32.mrf.mxu0
  %v610 = vadd.f32 %v566, %v609
  %v611 = vpop.f32.mrf.mxu0
  %v612 = vadd.f32 %v568, %v611
  %613 = vmatmul.bf16.gmra.mxu0 %v261
  %v614 = vpop.f32.mrf.mxu0
  %v615 = vadd.f32 %v571, %v614
  %v616 = vpop.f32.mrf.mxu0
  %v617 = vadd.f32 %v573, %v616
  %618 = vmatmul.bf16.gmra.mxu0 %v266
  %v619 = vpop.f32.mrf.mxu0
  %v620 = vadd.f32 %v576, %v619
  %v621 = vpop.f32.mrf.mxu0
  %v622 = vadd.f32 %v578, %v621
  %623 = vmatmul.bf16.gmra.mxu0 %v271
  %v624 = vpop.f32.mrf.mxu0
  %v625 = vadd.f32 %v581, %v624
  %v626 = vpop.f32.mrf.mxu0
  %v627 = vadd.f32 %v583, %v626
  %628 = vmatmul.bf16.gmra.mxu0 %v276
  %v629 = vpop.f32.mrf.mxu0
  %v630 = vadd.f32 %v586, %v629
  %v631 = vpop.f32.mrf.mxu0
  %v632 = vadd.f32 %v588, %v631
  %633 = vdwg.mxu0
  %634 = vmatpush.bf16.msra.mxu0 %v475
  %635 = vmatpush.bf16.msra.mxu0 %v474
  %636 = vmatpush.bf16.msra.mxu0 %v473
  %637 = vmatpush.bf16.msra.mxu0 %v472
  %638 = vmatpush.bf16.msra.mxu0 %v471
  %639 = vmatpush.bf16.msra.mxu0 %v470
  %640 = vmatpush.bf16.msra.mxu0 %v469
  %641 = vmatpush.bf16.msra.mxu0 %v468
  %642 = vmatmul.bf16.gmra.mxu0 %v247
  %v643 = vpop.f32.mrf.mxu0
  %v644 = vadd.f32 %v600, %v643
  %v645 = vpop.f32.mrf.mxu0
  %v646 = vadd.f32 %v602, %v645
  %647 = vmatmul.bf16.gmra.mxu0 %v252
  %v648 = vpop.f32.mrf.mxu0
  %v649 = vadd.f32 %v605, %v648
  %v650 = vpop.f32.mrf.mxu0
  %v651 = vadd.f32 %v607, %v650
  %652 = vmatmul.bf16.gmra.mxu0 %v257
  %v653 = vpop.f32.mrf.mxu0
  %v654 = vadd.f32 %v610, %v653
  %v655 = vpop.f32.mrf.mxu0
  %v656 = vadd.f32 %v612, %v655
  %657 = vmatmul.bf16.gmra.mxu0 %v262
  %v658 = vpop.f32.mrf.mxu0
  %v659 = vadd.f32 %v615, %v658
  %v660 = vpop.f32.mrf.mxu0
  %v661 = vadd.f32 %v617, %v660
  %662 = vmatmul.bf16.gmra.mxu0 %v267
  %v663 = vpop.f32.mrf.mxu0
  %v664 = vadd.f32 %v620, %v663
  %v665 = vpop.f32.mrf.mxu0
  %v666 = vadd.f32 %v622, %v665
  %667 = vmatmul.bf16.gmra.mxu0 %v272
  %v668 = vpop.f32.mrf.mxu0
  %v669 = vadd.f32 %v625, %v668
  %v670 = vpop.f32.mrf.mxu0
  %v671 = vadd.f32 %v627, %v670
  %672 = vmatmul.bf16.gmra.mxu0 %v277
  %v673 = vpop.f32.mrf.mxu0
  %v674 = vadd.f32 %v630, %v673
  %v675 = vpop.f32.mrf.mxu0
  %v676 = vadd.f32 %v632, %v675
  %677 = vdwg.mxu0
  %678 = vmatpush.bf16.msra.mxu0 %v483
  %679 = vmatpush.bf16.msra.mxu0 %v482
  %680 = vmatpush.bf16.msra.mxu0 %v481
  %681 = vmatpush.bf16.msra.mxu0 %v480
  %682 = vmatpush.bf16.msra.mxu0 %v479
  %683 = vmatpush.bf16.msra.mxu0 %v478
  %684 = vmatpush.bf16.msra.mxu0 %v477
  %685 = vmatpush.bf16.msra.mxu0 %v476
  %686 = vmatmul.bf16.gmra.mxu0 %v248
  %v687 = vpop.f32.mrf.mxu0
  %v688 = vadd.f32 %v644, %v687
  %v689 = vpop.f32.mrf.mxu0
  %v690 = vadd.f32 %v646, %v689
  %691 = vmatmul.bf16.gmra.mxu0 %v253
  %v692 = vpop.f32.mrf.mxu0
  %v693 = vadd.f32 %v649, %v692
  %v694 = vpop.f32.mrf.mxu0
  %v695 = vadd.f32 %v651, %v694
  %696 = vmatmul.bf16.gmra.mxu0 %v258
  %v697 = vpop.f32.mrf.mxu0
  %v698 = vadd.f32 %v654, %v697
  %v699 = vpop.f32.mrf.mxu0
  %v700 = vadd.f32 %v656, %v699
  %701 = vmatmul.bf16.gmra.mxu0 %v263
  %v702 = vpop.f32.mrf.mxu0
  %v703 = vadd.f32 %v659, %v702
  %v704 = vpop.f32.mrf.mxu0
  %v705 = vadd.f32 %v661, %v704
  %706 = vmatmul.bf16.gmra.mxu0 %v268
  %v707 = vpop.f32.mrf.mxu0
  %v708 = vadd.f32 %v664, %v707
  %v709 = vpop.f32.mrf.mxu0
  %v710 = vadd.f32 %v666, %v709
  %711 = vmatmul.bf16.gmra.mxu0 %v273
  %v712 = vpop.f32.mrf.mxu0
  %v713 = vadd.f32 %v669, %v712
  %v714 = vpop.f32.mrf.mxu0
  %v715 = vadd.f32 %v671, %v714
  %716 = vmatmul.bf16.gmra.mxu0 %v278
  %v717 = vpop.f32.mrf.mxu0
  %v718 = vadd.f32 %v674, %v717
  %v719 = vpop.f32.mrf.mxu0
  %v720 = vadd.f32 %v676, %v719
  %721 = vdwg.mxu0
  %722 = vmatpush.bf16.msra.mxu0 0
  %723 = vmatpush.bf16.msra.mxu0 0
  %724 = vmatpush.bf16.msra.mxu0 0
  %725 = vmatpush.bf16.msra.mxu0 0
  %726 = vmatpush.bf16.msra.mxu0 %v487
  %727 = vmatpush.bf16.msra.mxu0 %v486
  %728 = vmatpush.bf16.msra.mxu0 %v485
  %729 = vmatpush.bf16.msra.mxu0 %v484
  %730 = vmatmul.bf16.gmra.mxu0 %v526
  %v731 = vpop.f32.mrf.mxu0
  %v732 = vadd.f32 %v688, %v731
  %v733 = vpop.f32.mrf.mxu0
  %v734 = vadd.f32 %v690, %v733
  %735 = vmatmul.bf16.gmra.mxu0 %v529
  %v736 = vpop.f32.mrf.mxu0
  %v737 = vadd.f32 %v693, %v736
  %v738 = vpop.f32.mrf.mxu0
  %v739 = vadd.f32 %v695, %v738
  %740 = vmatmul.bf16.gmra.mxu0 %v532
  %v741 = vpop.f32.mrf.mxu0
  %v742 = vadd.f32 %v698, %v741
  %v743 = vpop.f32.mrf.mxu0
  %v744 = vadd.f32 %v700, %v743
  %745 = vmatmul.bf16.gmra.mxu0 %v535
  %v746 = vpop.f32.mrf.mxu0
  %v747 = vadd.f32 %v703, %v746
  %v748 = vpop.f32.mrf.mxu0
  %v749 = vadd.f32 %v705, %v748
  %750 = vmatmul.bf16.gmra.mxu0 %v538
  %v751 = vpop.f32.mrf.mxu0
  %v752 = vadd.f32 %v708, %v751
  %v753 = vpop.f32.mrf.mxu0
  %v754 = vadd.f32 %v710, %v753
  %755 = vmatmul.bf16.gmra.mxu0 %v541
  %v756 = vpop.f32.mrf.mxu0
  %v757 = vadd.f32 %v713, %v756
  %v758 = vpop.f32.mrf.mxu0
  %v759 = vadd.f32 %v715, %v758
  %760 = vmatmul.bf16.gmra.mxu0 %v544
  %v761 = vpop.f32.mrf.mxu0
  %v762 = vadd.f32 %v718, %v761
  %v763 = vpop.f32.mrf.mxu0
  %v764 = vadd.f32 %v720, %v763
  %765 = vdwg.mxu0
  %v766 = vmax.f32 %v732, 0.0
  %v767 = vmax.f32 %v734, 0.0
  %v768 = vmax.f32 %v737, 0.0
  %v769 = vmax.f32 %v739, 0.0
  %v770 = vmax.f32 %v742, 0.0
  %v771 = vmax.f32 %v744, 0.0
  %v772 = vmax.f32 %v747, 0.0
  %v773 = vmax.f32 %v749, 0.0
  %v774 = vmax.f32 %v752, 0.0
  %v775 = vmax.f32 %v754, 0.0
  %v776 = vmax.f32 %v757, 0.0
  %v777 = vmax.f32 %v759, 0.0
  %v778 = vmax.f32 %v762, 0.0
  %v779 = vmax.f32 %v764, 0.0
  %v780 = vpack.c.bf16 %v766, %v766
  %v781 = vpack.c.bf16 %v767, %v767
  %v782 = vpack.c.bf16 %v768, %v768
  %v783 = vpack.c.bf16 %v769, %v769
  %v784 = vpack.c.bf16 %v770, %v770
  %v785 = vpack.c.bf16 %v771, %v771
  %v786 = vpack.c.bf16 %v772, %v772
  %v787 = vpack.c.bf16 %v773, %v773
  %v788 = vpack.c.bf16 %v774, %v774
  %v789 = vpack.c.bf16 %v775, %v775
  %v790 = vpack.c.bf16 %v776, %v776
  %v791 = vpack.c.bf16 %v777, %v777
  %v792 = vpack.c.bf16 %v778, %v778
  %v793 = vpack.c.bf16 %v779, %v779
  %vm794 = vcmask 519168
  %795 = vst.msk [vmem:[%s3] sm:$0xf] %vm794, %v780
  %796 = vst.msk [vmem:[%s3 + $0x4] sm:$0xf] %vm794, %v781
  %797 = vst.msk [vmem:[%s3 + $0x8] sm:$0xf] %vm794, %v782
  %798 = vst.msk [vmem:[%s3 + $0xc] sm:$0xf] %vm794, %v783
  %799 = vst.msk [vmem:[%s3 + $0x10] sm:$0xf] %vm794, %v784
  %800 = vst.msk [vmem:[%s3 + $0x14] sm:$0xf] %vm794, %v785
  %801 = vst.msk [vmem:[%s3 + $0x18] sm:$0xf] %vm794, %v786
  %802 = vst.msk [vmem:[%s3 + $0x1c] sm:$0xf] %vm794, %v787
  %803 = vst.msk [vmem:[%s3 + $0x20] sm:$0xf] %vm794, %v788
  %804 = vst.msk [vmem:[%s3 + $0x24] sm:$0xf] %vm794, %v789
  %805 = vst.msk [vmem:[%s3 + $0x28] sm:$0xf] %vm794, %v790
  %806 = vst.msk [vmem:[%s3 + $0x2c] sm:$0xf] %vm794, %v791
  %807 = vst.msk [vmem:[%s3 + $0x30] sm:$0xf] %vm794, %v792
  %808 = vst.msk [vmem:[%s3 + $0x34] sm:$0xf] %vm794, %v793
  // Predicated region
  $region14: #{deepmind_cnn.6} parent=0 // pred_check
    _
  $region15: #{deepmind_cnn.6} parent=0 // pred_check_branch
    %810 = sbr.rel (0) target = $region17
  $region16: #{deepmind_cnn.6} parent=0 // pred_region
    _
  $region17: #{deepmind_cnn.6} parent=0 // pred_fallthru
    _
  // Predicated region
  $region18: #{deepmind_cnn.6} parent=0 // pred_check
    _
  $region19: #{deepmind_cnn.6} parent=0 // pred_check_branch
    %812 = sbr.rel (0) target = $region21
  $region20: #{deepmind_cnn.6} parent=0 // pred_region
    _
  $region21: #{deepmind_cnn.6} parent=0 // pred_fallthru
    _

// kernel: deepmind_cnn.7
$region0: #{deepmind_cnn.7}
  #allocation0 [shape = 'u32[]', space=smem, size = 0x4, offset = 0x4, fixed_abs, tag = 'smem constant byte address 0x4 - core index']
  #allocation1 [shape = 'u32[72,128]{1,0:T(1,128)}', space=vmem, size = 0x9000, scoped, tag = 'internal scratch']
  %s0 = inlined_call_operand.vmem [shape: bf16[16,3136], index: 0, kind: input, shape index: {}]
  %s1 = inlined_call_operand.vmem [shape: bf16[3136,512], index: 1, kind: input, shape index: {}]
  %s2 = inlined_call_operand.vmem [shape: f32[1,512], index: 2, kind: input, shape index: {}]
  %s3 = inlined_call_operand.vmem [shape: bf16[512,4], index: 3, kind: input, shape index: {}]
  %s4 = inlined_call_operand.vmem [shape: f32[1,4], index: 4, kind: input, shape index: {}]
  %s5 = inlined_call_operand.vmem [shape: f32[16,4], index: 5, kind: output, shape index: {}]
  %s6 = sld [smem:[#allocation0]]
  $region30: #{deepmind_cnn.7} parent=0
    _
  %s8 = ssub.s32 1, %s6
  %s9 = scalar_select 0, %s8, %s6
  // Predicated region
  $region2: #{deepmind_cnn.7} parent=0 // pred_check
    _
  $region3: #{deepmind_cnn.7} parent=0 // pred_check_branch
    %11 = sbr.rel (0) target = $region5
  $region4: #{deepmind_cnn.7} parent=0 // pred_region
    _
  $region5: #{deepmind_cnn.7} parent=0 // pred_fallthru
    _
  // Predicated region
  $region6: #{deepmind_cnn.7} parent=0 // pred_check
    _
  $region7: #{deepmind_cnn.7} parent=0 // pred_check_branch
    %13 = sbr.rel (0) target = $region9
  $region8: #{deepmind_cnn.7} parent=0 // pred_region
    _
  $region9: #{deepmind_cnn.7} parent=0 // pred_fallthru
    _
  // Predicated region
  $region10: #{deepmind_cnn.7} parent=0 // pred_check
    _
  $region11: #{deepmind_cnn.7} parent=0 // pred_check_branch
    %15 = sbr.rel (0) target = $region13
  $region12: #{deepmind_cnn.7} parent=0 // pred_region
    _
  $region13: #{deepmind_cnn.7} parent=0 // pred_fallthru
    _
  // Predicated region
  $region14: #{deepmind_cnn.7} parent=0 // pred_check
    _
  $region15: #{deepmind_cnn.7} parent=0 // pred_check_branch
    %17 = sbr.rel (0) target = $region17
  $region16: #{deepmind_cnn.7} parent=0 // pred_region
    _
  $region17: #{deepmind_cnn.7} parent=0 // pred_fallthru
    _
  // Predicated region
  $region18: #{deepmind_cnn.7} parent=0 // pred_check
    _
  $region19: #{deepmind_cnn.7} parent=0 // pred_check_branch
    %19 = sbr.rel (0) target = $region21
  $region20: #{deepmind_cnn.7} parent=0 // pred_region
    _
  $region21: #{deepmind_cnn.7} parent=0 // pred_fallthru
    _
  %v21 = vld [vmem:[%s0] sm:$0xff]
  %v22 = vld [vmem:[%s0 + $0x8] sm:$0xff]
  %v23 = vld [vmem:[%s0 + $0x10] sm:$0xff]
  %v24 = vld [vmem:[%s0 + $0x18] sm:$0xff]
  %v25 = vld [vmem:[%s0 + $0x20] sm:$0xff]
  %v26 = vld [vmem:[%s0 + $0x28] sm:$0xff]
  %v27 = vld [vmem:[%s0 + $0x30] sm:$0xff]
  %v28 = vld [vmem:[%s0 + $0x38] sm:$0xff]
  %v29 = vld [vmem:[%s0 + $0x40] sm:$0xff]
  %v30 = vld [vmem:[%s0 + $0x48] sm:$0xff]
  %v31 = vld [vmem:[%s0 + $0x50] sm:$0xff]
  %v32 = vld [vmem:[%s0 + $0x58] sm:$0xff]
  %v33 = vld [vmem:[%s0 + $0x60] sm:$0xf]
  %v34 = vld [vmem:[%s0 + $0x64] sm:$0xff]
  %v35 = vld [vmem:[%s0 + $0x6c] sm:$0xff]
  %v36 = vld [vmem:[%s0 + $0x74] sm:$0xff]
  %v37 = vld [vmem:[%s0 + $0x7c] sm:$0xff]
  %v38 = vld [vmem:[%s0 + $0x84] sm:$0xff]
  %v39 = vld [vmem:[%s0 + $0x8c] sm:$0xff]
  %v40 = vld [vmem:[%s0 + $0x94] sm:$0xff]
  %v41 = vld [vmem:[%s0 + $0x9c] sm:$0xff]
  %v42 = vld [vmem:[%s0 + $0xa4] sm:$0xff]
  %v43 = vld [vmem:[%s0 + $0xac] sm:$0xff]
  %v44 = vld [vmem:[%s0 + $0xb4] sm:$0xff]
  %v45 = vld [vmem:[%s0 + $0xbc] sm:$0xff]
  %v46 = vld [vmem:[%s0 + $0xc4] sm:$0xf]
  %v47 = vld [vmem:[%s1] sm:$0xff]
  %v48 = vld [vmem:[%s1 + $0x8] sm:$0xff]
  %v49 = vld [vmem:[%s1 + $0x10] sm:$0xff]
  %v50 = vld [vmem:[%s1 + $0x18] sm:$0xff]
  %v51 = vld [vmem:[%s1 + $0x20] sm:$0xff]
  %v52 = vld [vmem:[%s1 + $0x28] sm:$0xff]
  %v53 = vld [vmem:[%s1 + $0x30] sm:$0xff]
  %v54 = vld [vmem:[%s1 + $0x38] sm:$0xff]
  %v55 = vld [vmem:[%s1 + $0x40] sm:$0xff]
  %v56 = vld [vmem:[%s1 + $0x48] sm:$0xff]
  %v57 = vld [vmem:[%s1 + $0x50] sm:$0xff]
  %v58 = vld [vmem:[%s1 + $0x58] sm:$0xff]
  %v59 = vld [vmem:[%s1 + $0x60] sm:$0xff]
  %v60 = vld [vmem:[%s1 + $0x68] sm:$0xff]
  %v61 = vld [vmem:[%s1 + $0x70] sm:$0xff]
  %v62 = vld [vmem:[%s1 + $0x78] sm:$0xff]
  %v63 = vld [vmem:[%s1 + $0x80] sm:$0xff]
  %v64 = vld [vmem:[%s1 + $0x88] sm:$0xff]
  %v65 = vld [vmem:[%s1 + $0x90] sm:$0xff]
  %v66 = vld [vmem:[%s1 + $0x98] sm:$0xff]
  %v67 = vld [vmem:[%s1 + $0xa0] sm:$0xff]
  %v68 = vld [vmem:[%s1 + $0xa8] sm:$0xff]
  %v69 = vld [vmem:[%s1 + $0xb0] sm:$0xff]
  %v70 = vld [vmem:[%s1 + $0xb8] sm:$0xff]
  %v71 = vld [vmem:[%s1 + $0xc0] sm:$0xff]
  %v72 = vld [vmem:[%s1 + $0xc8] sm:$0xff]
  %v73 = vld [vmem:[%s1 + $0xd0] sm:$0xff]
  %v74 = vld [vmem:[%s1 + $0xd8] sm:$0xff]
  %v75 = vld [vmem:[%s1 + $0xe0] sm:$0xff]
  %v76 = vld [vmem:[%s1 + $0xe8] sm:$0xff]
  %v77 = vld [vmem:[%s1 + $0xf0] sm:$0xff]
  %v78 = vld [vmem:[%s1 + $0xf8] sm:$0xff]
  %v79 = vld [vmem:[%s1 + $0x100] sm:$0xff]
  %v80 = vld [vmem:[%s1 + $0x108] sm:$0xff]
  %v81 = vld [vmem:[%s1 + $0x110] sm:$0xff]
  %v82 = vld [vmem:[%s1 + $0x118] sm:$0xff]
  %v83 = vld [vmem:[%s1 + $0x120] sm:$0xff]
  %v84 = vld [vmem:[%s1 + $0x128] sm:$0xff]
  %v85 = vld [vmem:[%s1 + $0x130] sm:$0xff]
  %v86 = vld [vmem:[%s1 + $0x138] sm:$0xff]
  %v87 = vld [vmem:[%s1 + $0x140] sm:$0xff]
  %v88 = vld [vmem:[%s1 + $0x148] sm:$0xff]
  %v89 = vld [vmem:[%s1 + $0x150] sm:$0xff]
  %v90 = vld [vmem:[%s1 + $0x158] sm:$0xff]
  %v91 = vld [vmem:[%s1 + $0x160] sm:$0xff]
  %v92 = vld [vmem:[%s1 + $0x168] sm:$0xff]
  %v93 = vld [vmem:[%s1 + $0x170] sm:$0xff]
  %v94 = vld [vmem:[%s1 + $0x178] sm:$0xff]
  %v95 = vld [vmem:[%s1 + $0x180] sm:$0xff]
  %v96 = vld [vmem:[%s1 + $0x188] sm:$0xff]
  %v97 = vld [vmem:[%s1 + $0x190] sm:$0xff]
  %v98 = vld [vmem:[%s1 + $0x198] sm:$0xff]
  %v99 = vld [vmem:[%s1 + $0x1a0] sm:$0xff]
  %v100 = vld [vmem:[%s1 + $0x1a8] sm:$0xff]
  %v101 = vld [vmem:[%s1 + $0x1b0] sm:$0xff]
  %v102 = vld [vmem:[%s1 + $0x1b8] sm:$0xff]
  %v103 = vld [vmem:[%s1 + $0x1c0] sm:$0xff]
  %v104 = vld [vmem:[%s1 + $0x1c8] sm:$0xff]
  %v105 = vld [vmem:[%s1 + $0x1d0] sm:$0xff]
  %v106 = vld [vmem:[%s1 + $0x1d8] sm:$0xff]
  %v107 = vld [vmem:[%s1 + $0x1e0] sm:$0xff]
  %v108 = vld [vmem:[%s1 + $0x1e8] sm:$0xff]
  %v109 = vld [vmem:[%s1 + $0x1f0] sm:$0xff]
  %v110 = vld [vmem:[%s1 + $0x1f8] sm:$0xff]
  %v111 = vld [vmem:[%s1 + $0x200] sm:$0xff]
  %v112 = vld [vmem:[%s1 + $0x208] sm:$0xff]
  %v113 = vld [vmem:[%s1 + $0x210] sm:$0xff]
  %v114 = vld [vmem:[%s1 + $0x218] sm:$0xff]
  %v115 = vld [vmem:[%s1 + $0x220] sm:$0xff]
  %v116 = vld [vmem:[%s1 + $0x228] sm:$0xff]
  %v117 = vld [vmem:[%s1 + $0x230] sm:$0xff]
  %v118 = vld [vmem:[%s1 + $0x238] sm:$0xff]
  %v119 = vld [vmem:[%s1 + $0x240] sm:$0xff]
  %v120 = vld [vmem:[%s1 + $0x248] sm:$0xff]
  %v121 = vld [vmem:[%s1 + $0x250] sm:$0xff]
  %v122 = vld [vmem:[%s1 + $0x258] sm:$0xff]
  %v123 = vld [vmem:[%s1 + $0x260] sm:$0xff]
  %v124 = vld [vmem:[%s1 + $0x268] sm:$0xff]
  %v125 = vld [vmem:[%s1 + $0x270] sm:$0xff]
  %v126 = vld [vmem:[%s1 + $0x278] sm:$0xff]
  %v127 = vld [vmem:[%s1 + $0x280] sm:$0xff]
  %v128 = vld [vmem:[%s1 + $0x288] sm:$0xff]
  %v129 = vld [vmem:[%s1 + $0x290] sm:$0xff]
  %v130 = vld [vmem:[%s1 + $0x298] sm:$0xff]
  %v131 = vld [vmem:[%s1 + $0x2a0] sm:$0xff]
  %v132 = vld [vmem:[%s1 + $0x2a8] sm:$0xff]
  %v133 = vld [vmem:[%s1 + $0x2b0] sm:$0xff]
  %v134 = vld [vmem:[%s1 + $0x2b8] sm:$0xff]
  %v135 = vld [vmem:[%s1 + $0x2c0] sm:$0xff]
  %v136 = vld [vmem:[%s1 + $0x2c8] sm:$0xff]
  %v137 = vld [vmem:[%s1 + $0x2d0] sm:$0xff]
  %v138 = vld [vmem:[%s1 + $0x2d8] sm:$0xff]
  %v139 = vld [vmem:[%s1 + $0x2e0] sm:$0xff]
  %v140 = vld [vmem:[%s1 + $0x2e8] sm:$0xff]
  %v141 = vld [vmem:[%s1 + $0x2f0] sm:$0xff]
  %v142 = vld [vmem:[%s1 + $0x2f8] sm:$0xff]
  %v143 = vld [vmem:[%s1 + $0x300] sm:$0xff]
  %v144 = vld [vmem:[%s1 + $0x308] sm:$0xff]
  %v145 = vld [vmem:[%s1 + $0x310] sm:$0xff]
  %v146 = vld [vmem:[%s1 + $0x318] sm:$0xff]
  %v147 = vld [vmem:[%s1 + $0x320] sm:$0xff]
  %v148 = vld [vmem:[%s1 + $0x328] sm:$0xff]
  %v149 = vld [vmem:[%s1 + $0x330] sm:$0xff]
  %v150 = vld [vmem:[%s1 + $0x338] sm:$0xff]
  %v151 = vld [vmem:[%s1 + $0x340] sm:$0xff]
  %v152 = vld [vmem:[%s1 + $0x348] sm:$0xff]
  %v153 = vld [vmem:[%s1 + $0x350] sm:$0xff]
  %v154 = vld [vmem:[%s1 + $0x358] sm:$0xff]
  %v155 = vld [vmem:[%s1 + $0x360] sm:$0xff]
  %v156 = vld [vmem:[%s1 + $0x368] sm:$0xff]
  %v157 = vld [vmem:[%s1 + $0x370] sm:$0xff]
  %v158 = vld [vmem:[%s1 + $0x378] sm:$0xff]
  %v159 = vld [vmem:[%s1 + $0x380] sm:$0xff]
  %v160 = vld [vmem:[%s1 + $0x388] sm:$0xff]
  %v161 = vld [vmem:[%s1 + $0x390] sm:$0xff]
  %v162 = vld [vmem:[%s1 + $0x398] sm:$0xff]
  %v163 = vld [vmem:[%s1 + $0x3a0] sm:$0xff]
  %v164 = vld [vmem:[%s1 + $0x3a8] sm:$0xff]
  %v165 = vld [vmem:[%s1 + $0x3b0] sm:$0xff]
  %v166 = vld [vmem:[%s1 + $0x3b8] sm:$0xff]
  %v167 = vld [vmem:[%s1 + $0x3c0] sm:$0xff]
  %v168 = vld [vmem:[%s1 + $0x3c8] sm:$0xff]
  %v169 = vld [vmem:[%s1 + $0x3d0] sm:$0xff]
  %v170 = vld [vmem:[%s1 + $0x3d8] sm:$0xff]
  %v171 = vld [vmem:[%s1 + $0x3e0] sm:$0xff]
  %v172 = vld [vmem:[%s1 + $0x3e8] sm:$0xff]
  %v173 = vld [vmem:[%s1 + $0x3f0] sm:$0xff]
  %v174 = vld [vmem:[%s1 + $0x3f8] sm:$0xff]
  %v175 = vld [vmem:[%s1 + $0x400] sm:$0xff]
  %v176 = vld [vmem:[%s1 + $0x408] sm:$0xff]
  %v177 = vld [vmem:[%s1 + $0x410] sm:$0xff]
  %v178 = vld [vmem:[%s1 + $0x418] sm:$0xff]
  %v179 = vld [vmem:[%s1 + $0x420] sm:$0xff]
  %v180 = vld [vmem:[%s1 + $0x428] sm:$0xff]
  %v181 = vld [vmem:[%s1 + $0x430] sm:$0xff]
  %v182 = vld [vmem:[%s1 + $0x438] sm:$0xff]
  %v183 = vld [vmem:[%s1 + $0x440] sm:$0xff]
  %v184 = vld [vmem:[%s1 + $0x448] sm:$0xff]
  %v185 = vld [vmem:[%s1 + $0x450] sm:$0xff]
  %v186 = vld [vmem:[%s1 + $0x458] sm:$0xff]
  %v187 = vld [vmem:[%s1 + $0x460] sm:$0xff]
  %v188 = vld [vmem:[%s1 + $0x468] sm:$0xff]
  %v189 = vld [vmem:[%s1 + $0x470] sm:$0xff]
  %v190 = vld [vmem:[%s1 + $0x478] sm:$0xff]
  %v191 = vld [vmem:[%s1 + $0x480] sm:$0xff]
  %v192 = vld [vmem:[%s1 + $0x488] sm:$0xff]
  %v193 = vld [vmem:[%s1 + $0x490] sm:$0xff]
  %v194 = vld [vmem:[%s1 + $0x498] sm:$0xff]
  %v195 = vld [vmem:[%s1 + $0x4a0] sm:$0xff]
  %v196 = vld [vmem:[%s1 + $0x4a8] sm:$0xff]
  %v197 = vld [vmem:[%s1 + $0x4b0] sm:$0xff]
  %v198 = vld [vmem:[%s1 + $0x4b8] sm:$0xff]
  %v199 = vld [vmem:[%s1 + $0x4c0] sm:$0xff]
  %v200 = vld [vmem:[%s1 + $0x4c8] sm:$0xff]
  %v201 = vld [vmem:[%s1 + $0x4d0] sm:$0xff]
  %v202 = vld [vmem:[%s1 + $0x4d8] sm:$0xff]
  %v203 = vld [vmem:[%s1 + $0x4e0] sm:$0xff]
  %v204 = vld [vmem:[%s1 + $0x4e8] sm:$0xff]
  %v205 = vld [vmem:[%s1 + $0x4f0] sm:$0xff]
  %v206 = vld [vmem:[%s1 + $0x4f8] sm:$0xff]
  %v207 = vld [vmem:[%s1 + $0x500] sm:$0xff]
  %v208 = vld [vmem:[%s1 + $0x508] sm:$0xff]
  %v209 = vld [vmem:[%s1 + $0x510] sm:$0xff]
  %v210 = vld [vmem:[%s1 + $0x518] sm:$0xff]
  %v211 = vld [vmem:[%s1 + $0x520] sm:$0xff]
  %v212 = vld [vmem:[%s1 + $0x528] sm:$0xff]
  %v213 = vld [vmem:[%s1 + $0x530] sm:$0xff]
  %v214 = vld [vmem:[%s1 + $0x538] sm:$0xff]
  %v215 = vld [vmem:[%s1 + $0x540] sm:$0xff]
  %v216 = vld [vmem:[%s1 + $0x548] sm:$0xff]
  %v217 = vld [vmem:[%s1 + $0x550] sm:$0xff]
  %v218 = vld [vmem:[%s1 + $0x558] sm:$0xff]
  %v219 = vld [vmem:[%s1 + $0x560] sm:$0xff]
  %v220 = vld [vmem:[%s1 + $0x568] sm:$0xff]
  %v221 = vld [vmem:[%s1 + $0x570] sm:$0xff]
  %v222 = vld [vmem:[%s1 + $0x578] sm:$0xff]
  %v223 = vld [vmem:[%s1 + $0x580] sm:$0xff]
  %v224 = vld [vmem:[%s1 + $0x588] sm:$0xff]
  %v225 = vld [vmem:[%s1 + $0x590] sm:$0xff]
  %v226 = vld [vmem:[%s1 + $0x598] sm:$0xff]
  %v227 = vld [vmem:[%s1 + $0x5a0] sm:$0xff]
  %v228 = vld [vmem:[%s1 + $0x5a8] sm:$0xff]
  %v229 = vld [vmem:[%s1 + $0x5b0] sm:$0xff]
  %v230 = vld [vmem:[%s1 + $0x5b8] sm:$0xff]
  %v231 = vld [vmem:[%s1 + $0x5c0] sm:$0xff]
  %v232 = vld [vmem:[%s1 + $0x5c8] sm:$0xff]
  %v233 = vld [vmem:[%s1 + $0x5d0] sm:$0xff]
  %v234 = vld [vmem:[%s1 + $0x5d8] sm:$0xff]
  %v235 = vld [vmem:[%s1 + $0x5e0] sm:$0xff]
  %v236 = vld [vmem:[%s1 + $0x5e8] sm:$0xff]
  %v237 = vld [vmem:[%s1 + $0x5f0] sm:$0xff]
  %v238 = vld [vmem:[%s1 + $0x5f8] sm:$0xff]
  %v239 = vld [vmem:[%s1 + $0x600] sm:$0xff]
  %v240 = vld [vmem:[%s1 + $0x608] sm:$0xff]
  %v241 = vld [vmem:[%s1 + $0x610] sm:$0xff]
  %v242 = vld [vmem:[%s1 + $0x618] sm:$0xff]
  %v243 = vld [vmem:[%s1 + $0x620] sm:$0xff]
  %v244 = vld [vmem:[%s1 + $0x628] sm:$0xff]
  %v245 = vld [vmem:[%s1 + $0x630] sm:$0xff]
  %v246 = vld [vmem:[%s1 + $0x638] sm:$0xff]
  %v247 = vld [vmem:[%s1 + $0x640] sm:$0xff]
  %v248 = vld [vmem:[%s1 + $0x648] sm:$0xff]
  %v249 = vld [vmem:[%s1 + $0x650] sm:$0xff]
  %v250 = vld [vmem:[%s1 + $0x658] sm:$0xff]
  %v251 = vld [vmem:[%s1 + $0x660] sm:$0xff]
  %v252 = vld [vmem:[%s1 + $0x668] sm:$0xff]
  %v253 = vld [vmem:[%s1 + $0x670] sm:$0xff]
  %v254 = vld [vmem:[%s1 + $0x678] sm:$0xff]
  %v255 = vld [vmem:[%s1 + $0x680] sm:$0xff]
  %v256 = vld [vmem:[%s1 + $0x688] sm:$0xff]
  %v257 = vld [vmem:[%s1 + $0x690] sm:$0xff]
  %v258 = vld [vmem:[%s1 + $0x698] sm:$0xff]
  %v259 = vld [vmem:[%s1 + $0x6a0] sm:$0xff]
  %v260 = vld [vmem:[%s1 + $0x6a8] sm:$0xff]
  %v261 = vld [vmem:[%s1 + $0x6b0] sm:$0xff]
  %v262 = vld [vmem:[%s1 + $0x6b8] sm:$0xff]
  %v263 = vld [vmem:[%s1 + $0x6c0] sm:$0xff]
  %v264 = vld [vmem:[%s1 + $0x6c8] sm:$0xff]
  %v265 = vld [vmem:[%s1 + $0x6d0] sm:$0xff]
  %v266 = vld [vmem:[%s1 + $0x6d8] sm:$0xff]
  %v267 = vld [vmem:[%s1 + $0x6e0] sm:$0xff]
  %v268 = vld [vmem:[%s1 + $0x6e8] sm:$0xff]
  %v269 = vld [vmem:[%s1 + $0x6f0] sm:$0xff]
  %v270 = vld [vmem:[%s1 + $0x6f8] sm:$0xff]
  %v271 = vld [vmem:[%s1 + $0x700] sm:$0xff]
  %v272 = vld [vmem:[%s1 + $0x708] sm:$0xff]
  %v273 = vld [vmem:[%s1 + $0x710] sm:$0xff]
  %v274 = vld [vmem:[%s1 + $0x718] sm:$0xff]
  %v275 = vld [vmem:[%s1 + $0x720] sm:$0xff]
  %v276 = vld [vmem:[%s1 + $0x728] sm:$0xff]
  %v277 = vld [vmem:[%s1 + $0x730] sm:$0xff]
  %v278 = vld [vmem:[%s1 + $0x738] sm:$0xff]
  %v279 = vld [vmem:[%s1 + $0x740] sm:$0xff]
  %v280 = vld [vmem:[%s1 + $0x748] sm:$0xff]
  %v281 = vld [vmem:[%s1 + $0x750] sm:$0xff]
  %v282 = vld [vmem:[%s1 + $0x758] sm:$0xff]
  %v283 = vld [vmem:[%s1 + $0x760] sm:$0xff]
  %v284 = vld [vmem:[%s1 + $0x768] sm:$0xff]
  %v285 = vld [vmem:[%s1 + $0x770] sm:$0xff]
  %v286 = vld [vmem:[%s1 + $0x778] sm:$0xff]
  %v287 = vld [vmem:[%s1 + $0x780] sm:$0xff]
  %v288 = vld [vmem:[%s1 + $0x788] sm:$0xff]
  %v289 = vld [vmem:[%s1 + $0x790] sm:$0xff]
  %v290 = vld [vmem:[%s1 + $0x798] sm:$0xff]
  %v291 = vld [vmem:[%s1 + $0x7a0] sm:$0xff]
  %v292 = vld [vmem:[%s1 + $0x7a8] sm:$0xff]
  %v293 = vld [vmem:[%s1 + $0x7b0] sm:$0xff]
  %v294 = vld [vmem:[%s1 + $0x7b8] sm:$0xff]
  %v295 = vld [vmem:[%s1 + $0x7c0] sm:$0xff]
  %v296 = vld [vmem:[%s1 + $0x7c8] sm:$0xff]
  %v297 = vld [vmem:[%s1 + $0x7d0] sm:$0xff]
  %v298 = vld [vmem:[%s1 + $0x7d8] sm:$0xff]
  %v299 = vld [vmem:[%s1 + $0x7e0] sm:$0xff]
  %v300 = vld [vmem:[%s1 + $0x7e8] sm:$0xff]
  %v301 = vld [vmem:[%s1 + $0x7f0] sm:$0xff]
  %v302 = vld [vmem:[%s1 + $0x7f8] sm:$0xff]
  %v303 = vld [vmem:[%s1 + $0x800] sm:$0xff]
  %v304 = vld [vmem:[%s1 + $0x808] sm:$0xff]
  %v305 = vld [vmem:[%s1 + $0x810] sm:$0xff]
  %v306 = vld [vmem:[%s1 + $0x818] sm:$0xff]
  %v307 = vld [vmem:[%s1 + $0x820] sm:$0xff]
  %v308 = vld [vmem:[%s1 + $0x828] sm:$0xff]
  %v309 = vld [vmem:[%s1 + $0x830] sm:$0xff]
  %v310 = vld [vmem:[%s1 + $0x838] sm:$0xff]
  %v311 = vld [vmem:[%s1 + $0x840] sm:$0xff]
  %v312 = vld [vmem:[%s1 + $0x848] sm:$0xff]
  %v313 = vld [vmem:[%s1 + $0x850] sm:$0xff]
  %v314 = vld [vmem:[%s1 + $0x858] sm:$0xff]
  %v315 = vld [vmem:[%s1 + $0x860] sm:$0xff]
  %v316 = vld [vmem:[%s1 + $0x868] sm:$0xff]
  %v317 = vld [vmem:[%s1 + $0x870] sm:$0xff]
  %v318 = vld [vmem:[%s1 + $0x878] sm:$0xff]
  %v319 = vld [vmem:[%s1 + $0x880] sm:$0xff]
  %v320 = vld [vmem:[%s1 + $0x888] sm:$0xff]
  %v321 = vld [vmem:[%s1 + $0x890] sm:$0xff]
  %v322 = vld [vmem:[%s1 + $0x898] sm:$0xff]
  %v323 = vld [vmem:[%s1 + $0x8a0] sm:$0xff]
  %v324 = vld [vmem:[%s1 + $0x8a8] sm:$0xff]
  %v325 = vld [vmem:[%s1 + $0x8b0] sm:$0xff]
  %v326 = vld [vmem:[%s1 + $0x8b8] sm:$0xff]
  %v327 = vld [vmem:[%s1 + $0x8c0] sm:$0xff]
  %v328 = vld [vmem:[%s1 + $0x8c8] sm:$0xff]
  %v329 = vld [vmem:[%s1 + $0x8d0] sm:$0xff]
  %v330 = vld [vmem:[%s1 + $0x8d8] sm:$0xff]
  %v331 = vld [vmem:[%s1 + $0x8e0] sm:$0xff]
  %v332 = vld [vmem:[%s1 + $0x8e8] sm:$0xff]
  %v333 = vld [vmem:[%s1 + $0x8f0] sm:$0xff]
  %v334 = vld [vmem:[%s1 + $0x8f8] sm:$0xff]
  %v335 = vld [vmem:[%s1 + $0x900] sm:$0xff]
  %v336 = vld [vmem:[%s1 + $0x908] sm:$0xff]
  %v337 = vld [vmem:[%s1 + $0x910] sm:$0xff]
  %v338 = vld [vmem:[%s1 + $0x918] sm:$0xff]
  %v339 = vld [vmem:[%s1 + $0x920] sm:$0xff]
  %v340 = vld [vmem:[%s1 + $0x928] sm:$0xff]
  %v341 = vld [vmem:[%s1 + $0x930] sm:$0xff]
  %v342 = vld [vmem:[%s1 + $0x938] sm:$0xff]
  %v343 = vld [vmem:[%s1 + $0x940] sm:$0xff]
  %v344 = vld [vmem:[%s1 + $0x948] sm:$0xff]
  %v345 = vld [vmem:[%s1 + $0x950] sm:$0xff]
  %v346 = vld [vmem:[%s1 + $0x958] sm:$0xff]
  %v347 = vld [vmem:[%s1 + $0x960] sm:$0xff]
  %v348 = vld [vmem:[%s1 + $0x968] sm:$0xff]
  %v349 = vld [vmem:[%s1 + $0x970] sm:$0xff]
  %v350 = vld [vmem:[%s1 + $0x978] sm:$0xff]
  %v351 = vld [vmem:[%s1 + $0x980] sm:$0xff]
  %v352 = vld [vmem:[%s1 + $0x988] sm:$0xff]
  %v353 = vld [vmem:[%s1 + $0x990] sm:$0xff]
  %v354 = vld [vmem:[%s1 + $0x998] sm:$0xff]
  %v355 = vld [vmem:[%s1 + $0x9a0] sm:$0xff]
  %v356 = vld [vmem:[%s1 + $0x9a8] sm:$0xff]
  %v357 = vld [vmem:[%s1 + $0x9b0] sm:$0xff]
  %v358 = vld [vmem:[%s1 + $0x9b8] sm:$0xff]
  %v359 = vld [vmem:[%s1 + $0x9c0] sm:$0xff]
  %v360 = vld [vmem:[%s1 + $0x9c8] sm:$0xff]
  %v361 = vld [vmem:[%s1 + $0x9d0] sm:$0xff]
  %v362 = vld [vmem:[%s1 + $0x9d8] sm:$0xff]
  %v363 = vld [vmem:[%s1 + $0x9e0] sm:$0xff]
  %v364 = vld [vmem:[%s1 + $0x9e8] sm:$0xff]
  %v365 = vld [vmem:[%s1 + $0x9f0] sm:$0xff]
  %v366 = vld [vmem:[%s1 + $0x9f8] sm:$0xff]
  %v367 = vld [vmem:[%s1 + $0xa00] sm:$0xff]
  %v368 = vld [vmem:[%s1 + $0xa08] sm:$0xff]
  %v369 = vld [vmem:[%s1 + $0xa10] sm:$0xff]
  %v370 = vld [vmem:[%s1 + $0xa18] sm:$0xff]
  %v371 = vld [vmem:[%s1 + $0xa20] sm:$0xff]
  %v372 = vld [vmem:[%s1 + $0xa28] sm:$0xff]
  %v373 = vld [vmem:[%s1 + $0xa30] sm:$0xff]
  %v374 = vld [vmem:[%s1 + $0xa38] sm:$0xff]
  %v375 = vld [vmem:[%s1 + $0xa40] sm:$0xff]
  %v376 = vld [vmem:[%s1 + $0xa48] sm:$0xff]
  %v377 = vld [vmem:[%s1 + $0xa50] sm:$0xff]
  %v378 = vld [vmem:[%s1 + $0xa58] sm:$0xff]
  %v379 = vld [vmem:[%s1 + $0xa60] sm:$0xff]
  %v380 = vld [vmem:[%s1 + $0xa68] sm:$0xff]
  %v381 = vld [vmem:[%s1 + $0xa70] sm:$0xff]
  %v382 = vld [vmem:[%s1 + $0xa78] sm:$0xff]
  %v383 = vld [vmem:[%s1 + $0xa80] sm:$0xff]
  %v384 = vld [vmem:[%s1 + $0xa88] sm:$0xff]
  %v385 = vld [vmem:[%s1 + $0xa90] sm:$0xff]
  %v386 = vld [vmem:[%s1 + $0xa98] sm:$0xff]
  %v387 = vld [vmem:[%s1 + $0xaa0] sm:$0xff]
  %v388 = vld [vmem:[%s1 + $0xaa8] sm:$0xff]
  %v389 = vld [vmem:[%s1 + $0xab0] sm:$0xff]
  %v390 = vld [vmem:[%s1 + $0xab8] sm:$0xff]
  %v391 = vld [vmem:[%s1 + $0xac0] sm:$0xff]
  %v392 = vld [vmem:[%s1 + $0xac8] sm:$0xff]
  %v393 = vld [vmem:[%s1 + $0xad0] sm:$0xff]
  %v394 = vld [vmem:[%s1 + $0xad8] sm:$0xff]
  %v395 = vld [vmem:[%s1 + $0xae0] sm:$0xff]
  %v396 = vld [vmem:[%s1 + $0xae8] sm:$0xff]
  %v397 = vld [vmem:[%s1 + $0xaf0] sm:$0xff]
  %v398 = vld [vmem:[%s1 + $0xaf8] sm:$0xff]
  %v399 = vld [vmem:[%s1 + $0xb00] sm:$0xff]
  %v400 = vld [vmem:[%s1 + $0xb08] sm:$0xff]
  %v401 = vld [vmem:[%s1 + $0xb10] sm:$0xff]
  %v402 = vld [vmem:[%s1 + $0xb18] sm:$0xff]
  %v403 = vld [vmem:[%s1 + $0xb20] sm:$0xff]
  %v404 = vld [vmem:[%s1 + $0xb28] sm:$0xff]
  %v405 = vld [vmem:[%s1 + $0xb30] sm:$0xff]
  %v406 = vld [vmem:[%s1 + $0xb38] sm:$0xff]
  %v407 = vld [vmem:[%s1 + $0xb40] sm:$0xff]
  %v408 = vld [vmem:[%s1 + $0xb48] sm:$0xff]
  %v409 = vld [vmem:[%s1 + $0xb50] sm:$0xff]
  %v410 = vld [vmem:[%s1 + $0xb58] sm:$0xff]
  %v411 = vld [vmem:[%s1 + $0xb60] sm:$0xff]
  %v412 = vld [vmem:[%s1 + $0xb68] sm:$0xff]
  %v413 = vld [vmem:[%s1 + $0xb70] sm:$0xff]
  %v414 = vld [vmem:[%s1 + $0xb78] sm:$0xff]
  %v415 = vld [vmem:[%s1 + $0xb80] sm:$0xff]
  %v416 = vld [vmem:[%s1 + $0xb88] sm:$0xff]
  %v417 = vld [vmem:[%s1 + $0xb90] sm:$0xff]
  %v418 = vld [vmem:[%s1 + $0xb98] sm:$0xff]
  %v419 = vld [vmem:[%s1 + $0xba0] sm:$0xff]
  %v420 = vld [vmem:[%s1 + $0xba8] sm:$0xff]
  %v421 = vld [vmem:[%s1 + $0xbb0] sm:$0xff]
  %v422 = vld [vmem:[%s1 + $0xbb8] sm:$0xff]
  %v423 = vld [vmem:[%s1 + $0xbc0] sm:$0xff]
  %v424 = vld [vmem:[%s1 + $0xbc8] sm:$0xff]
  %v425 = vld [vmem:[%s1 + $0xbd0] sm:$0xff]
  %v426 = vld [vmem:[%s1 + $0xbd8] sm:$0xff]
  %v427 = vld [vmem:[%s1 + $0xbe0] sm:$0xff]
  %v428 = vld [vmem:[%s1 + $0xbe8] sm:$0xff]
  %v429 = vld [vmem:[%s1 + $0xbf0] sm:$0xff]
  %v430 = vld [vmem:[%s1 + $0xbf8] sm:$0xff]
  %v431 = vld [vmem:[%s1 + $0xc00] sm:$0xff]
  %v432 = vld [vmem:[%s1 + $0xc08] sm:$0xff]
  %v433 = vld [vmem:[%s1 + $0xc10] sm:$0xff]
  %v434 = vld [vmem:[%s1 + $0xc18] sm:$0xff]
  %v435 = vld [vmem:[%s1 + $0xc20] sm:$0xff]
  %v436 = vld [vmem:[%s1 + $0xc28] sm:$0xff]
  %v437 = vld [vmem:[%s1 + $0xc30] sm:$0xff]
  %v438 = vld [vmem:[%s1 + $0xc38] sm:$0xff]
  %v439 = vld [vmem:[%s1 + $0xc40] sm:$0xff]
  %v440 = vld [vmem:[%s1 + $0xc48] sm:$0xff]
  %v441 = vld [vmem:[%s1 + $0xc50] sm:$0xff]
  %v442 = vld [vmem:[%s1 + $0xc58] sm:$0xff]
  %v443 = vld [vmem:[%s1 + $0xc60] sm:$0xff]
  %v444 = vld [vmem:[%s1 + $0xc68] sm:$0xff]
  %v445 = vld [vmem:[%s1 + $0xc70] sm:$0xff]
  %v446 = vld [vmem:[%s1 + $0xc78] sm:$0xff]
  %v447 = vld [vmem:[%s1 + $0xc80] sm:$0xff]
  %v448 = vld [vmem:[%s1 + $0xc88] sm:$0xff]
  %v449 = vld [vmem:[%s1 + $0xc90] sm:$0xff]
  %v450 = vld [vmem:[%s1 + $0xc98] sm:$0xff]
  %v451 = vld [vmem:[%s1 + $0xca0] sm:$0xff]
  %v452 = vld [vmem:[%s1 + $0xca8] sm:$0xff]
  %v453 = vld [vmem:[%s1 + $0xcb0] sm:$0xff]
  %v454 = vld [vmem:[%s1 + $0xcb8] sm:$0xff]
  %v455 = vld [vmem:[%s1 + $0xcc0] sm:$0xff]
  %v456 = vld [vmem:[%s1 + $0xcc8] sm:$0xff]
  %v457 = vld [vmem:[%s1 + $0xcd0] sm:$0xff]
  %v458 = vld [vmem:[%s1 + $0xcd8] sm:$0xff]
  %v459 = vld [vmem:[%s1 + $0xce0] sm:$0xff]
  %v460 = vld [vmem:[%s1 + $0xce8] sm:$0xff]
  %v461 = vld [vmem:[%s1 + $0xcf0] sm:$0xff]
  %v462 = vld [vmem:[%s1 + $0xcf8] sm:$0xff]
  %v463 = vld [vmem:[%s1 + $0xd00] sm:$0xff]
  %v464 = vld [vmem:[%s1 + $0xd08] sm:$0xff]
  %v465 = vld [vmem:[%s1 + $0xd10] sm:$0xff]
  %v466 = vld [vmem:[%s1 + $0xd18] sm:$0xff]
  %v467 = vld [vmem:[%s1 + $0xd20] sm:$0xff]
  %v468 = vld [vmem:[%s1 + $0xd28] sm:$0xff]
  %v469 = vld [vmem:[%s1 + $0xd30] sm:$0xff]
  %v470 = vld [vmem:[%s1 + $0xd38] sm:$0xff]
  %v471 = vld [vmem:[%s1 + $0xd40] sm:$0xff]
  %v472 = vld [vmem:[%s1 + $0xd48] sm:$0xff]
  %v473 = vld [vmem:[%s1 + $0xd50] sm:$0xff]
  %v474 = vld [vmem:[%s1 + $0xd58] sm:$0xff]
  %v475 = vld [vmem:[%s1 + $0xd60] sm:$0xff]
  %v476 = vld [vmem:[%s1 + $0xd68] sm:$0xff]
  %v477 = vld [vmem:[%s1 + $0xd70] sm:$0xff]
  %v478 = vld [vmem:[%s1 + $0xd78] sm:$0xff]
  %v479 = vld [vmem:[%s1 + $0xd80] sm:$0xff]
  %v480 = vld [vmem:[%s1 + $0xd88] sm:$0xff]
  %v481 = vld [vmem:[%s1 + $0xd90] sm:$0xff]
  %v482 = vld [vmem:[%s1 + $0xd98] sm:$0xff]
  %v483 = vld [vmem:[%s1 + $0xda0] sm:$0xff]
  %v484 = vld [vmem:[%s1 + $0xda8] sm:$0xff]
  %v485 = vld [vmem:[%s1 + $0xdb0] sm:$0xff]
  %v486 = vld [vmem:[%s1 + $0xdb8] sm:$0xff]
  %v487 = vld [vmem:[%s1 + $0xdc0] sm:$0xff]
  %v488 = vld [vmem:[%s1 + $0xdc8] sm:$0xff]
  %v489 = vld [vmem:[%s1 + $0xdd0] sm:$0xff]
  %v490 = vld [vmem:[%s1 + $0xdd8] sm:$0xff]
  %v491 = vld [vmem:[%s1 + $0xde0] sm:$0xff]
  %v492 = vld [vmem:[%s1 + $0xde8] sm:$0xff]
  %v493 = vld [vmem:[%s1 + $0xdf0] sm:$0xff]
  %v494 = vld [vmem:[%s1 + $0xdf8] sm:$0xff]
  %v495 = vld [vmem:[%s1 + $0xe00] sm:$0xff]
  %v496 = vld [vmem:[%s1 + $0xe08] sm:$0xff]
  %v497 = vld [vmem:[%s1 + $0xe10] sm:$0xff]
  %v498 = vld [vmem:[%s1 + $0xe18] sm:$0xff]
  %v499 = vld [vmem:[%s1 + $0xe20] sm:$0xff]
  %v500 = vld [vmem:[%s1 + $0xe28] sm:$0xff]
  %v501 = vld [vmem:[%s1 + $0xe30] sm:$0xff]
  %v502 = vld [vmem:[%s1 + $0xe38] sm:$0xff]
  %v503 = vld [vmem:[%s1 + $0xe40] sm:$0xff]
  %v504 = vld [vmem:[%s1 + $0xe48] sm:$0xff]
  %v505 = vld [vmem:[%s1 + $0xe50] sm:$0xff]
  %v506 = vld [vmem:[%s1 + $0xe58] sm:$0xff]
  %v507 = vld [vmem:[%s1 + $0xe60] sm:$0xff]
  %v508 = vld [vmem:[%s1 + $0xe68] sm:$0xff]
  %v509 = vld [vmem:[%s1 + $0xe70] sm:$0xff]
  %v510 = vld [vmem:[%s1 + $0xe78] sm:$0xff]
  %v511 = vld [vmem:[%s1 + $0xe80] sm:$0xff]
  %v512 = vld [vmem:[%s1 + $0xe88] sm:$0xff]
  %v513 = vld [vmem:[%s1 + $0xe90] sm:$0xff]
  %v514 = vld [vmem:[%s1 + $0xe98] sm:$0xff]
  %v515 = vld [vmem:[%s1 + $0xea0] sm:$0xff]
  %v516 = vld [vmem:[%s1 + $0xea8] sm:$0xff]
  %v517 = vld [vmem:[%s1 + $0xeb0] sm:$0xff]
  %v518 = vld [vmem:[%s1 + $0xeb8] sm:$0xff]
  %v519 = vld [vmem:[%s1 + $0xec0] sm:$0xff]
  %v520 = vld [vmem:[%s1 + $0xec8] sm:$0xff]
  %v521 = vld [vmem:[%s1 + $0xed0] sm:$0xff]
  %v522 = vld [vmem:[%s1 + $0xed8] sm:$0xff]
  %v523 = vld [vmem:[%s1 + $0xee0] sm:$0xff]
  %v524 = vld [vmem:[%s1 + $0xee8] sm:$0xff]
  %v525 = vld [vmem:[%s1 + $0xef0] sm:$0xff]
  %v526 = vld [vmem:[%s1 + $0xef8] sm:$0xff]
  %v527 = vld [vmem:[%s1 + $0xf00] sm:$0xff]
  %v528 = vld [vmem:[%s1 + $0xf08] sm:$0xff]
  %v529 = vld [vmem:[%s1 + $0xf10] sm:$0xff]
  %v530 = vld [vmem:[%s1 + $0xf18] sm:$0xff]
  %v531 = vld [vmem:[%s1 + $0xf20] sm:$0xff]
  %v532 = vld [vmem:[%s1 + $0xf28] sm:$0xff]
  %v533 = vld [vmem:[%s1 + $0xf30] sm:$0xff]
  %v534 = vld [vmem:[%s1 + $0xf38] sm:$0xff]
  %v535 = vld [vmem:[%s1 + $0xf40] sm:$0xff]
  %v536 = vld [vmem:[%s1 + $0xf48] sm:$0xff]
  %v537 = vld [vmem:[%s1 + $0xf50] sm:$0xff]
  %v538 = vld [vmem:[%s1 + $0xf58] sm:$0xff]
  %v539 = vld [vmem:[%s1 + $0xf60] sm:$0xff]
  %v540 = vld [vmem:[%s1 + $0xf68] sm:$0xff]
  %v541 = vld [vmem:[%s1 + $0xf70] sm:$0xff]
  %v542 = vld [vmem:[%s1 + $0xf78] sm:$0xff]
  %v543 = vld [vmem:[%s1 + $0xf80] sm:$0xff]
  %v544 = vld [vmem:[%s1 + $0xf88] sm:$0xff]
  %v545 = vld [vmem:[%s1 + $0xf90] sm:$0xff]
  %v546 = vld [vmem:[%s1 + $0xf98] sm:$0xff]
  %v547 = vld [vmem:[%s1 + $0xfa0] sm:$0xff]
  %v548 = vld [vmem:[%s1 + $0xfa8] sm:$0xff]
  %v549 = vld [vmem:[%s1 + $0xfb0] sm:$0xff]
  %v550 = vld [vmem:[%s1 + $0xfb8] sm:$0xff]
  %v551 = vld [vmem:[%s1 + $0xfc0] sm:$0xff]
  %v552 = vld [vmem:[%s1 + $0xfc8] sm:$0xff]
  %v553 = vld [vmem:[%s1 + $0xfd0] sm:$0xff]
  %v554 = vld [vmem:[%s1 + $0xfd8] sm:$0xff]
  %v555 = vld [vmem:[%s1 + $0xfe0] sm:$0xff]
  %v556 = vld [vmem:[%s1 + $0xfe8] sm:$0xff]
  %v557 = vld [vmem:[%s1 + $0xff0] sm:$0xff]
  %v558 = vld [vmem:[%s1 + $0xff8] sm:$0xff]
  %v559 = vld [vmem:[%s1 + $0x1000] sm:$0xff]
  %v560 = vld [vmem:[%s1 + $0x1008] sm:$0xff]
  %v561 = vld [vmem:[%s1 + $0x1010] sm:$0xff]
  %v562 = vld [vmem:[%s1 + $0x1018] sm:$0xff]
  %v563 = vld [vmem:[%s1 + $0x1020] sm:$0xff]
  %v564 = vld [vmem:[%s1 + $0x1028] sm:$0xff]
  %v565 = vld [vmem:[%s1 + $0x1030] sm:$0xff]
  %v566 = vld [vmem:[%s1 + $0x1038] sm:$0xff]
  %v567 = vld [vmem:[%s1 + $0x1040] sm:$0xff]
  %v568 = vld [vmem:[%s1 + $0x1048] sm:$0xff]
  %v569 = vld [vmem:[%s1 + $0x1050] sm:$0xff]
  %v570 = vld [vmem:[%s1 + $0x1058] sm:$0xff]
  %v571 = vld [vmem:[%s1 + $0x1060] sm:$0xff]
  %v572 = vld [vmem:[%s1 + $0x1068] sm:$0xff]
  %v573 = vld [vmem:[%s1 + $0x1070] sm:$0xff]
  %v574 = vld [vmem:[%s1 + $0x1078] sm:$0xff]
  %v575 = vld [vmem:[%s1 + $0x1080] sm:$0xff]
  %v576 = vld [vmem:[%s1 + $0x1088] sm:$0xff]
  %v577 = vld [vmem:[%s1 + $0x1090] sm:$0xff]
  %v578 = vld [vmem:[%s1 + $0x1098] sm:$0xff]
  %v579 = vld [vmem:[%s1 + $0x10a0] sm:$0xff]
  %v580 = vld [vmem:[%s1 + $0x10a8] sm:$0xff]
  %v581 = vld [vmem:[%s1 + $0x10b0] sm:$0xff]
  %v582 = vld [vmem:[%s1 + $0x10b8] sm:$0xff]
  %v583 = vld [vmem:[%s1 + $0x10c0] sm:$0xff]
  %v584 = vld [vmem:[%s1 + $0x10c8] sm:$0xff]
  %v585 = vld [vmem:[%s1 + $0x10d0] sm:$0xff]
  %v586 = vld [vmem:[%s1 + $0x10d8] sm:$0xff]
  %v587 = vld [vmem:[%s1 + $0x10e0] sm:$0xff]
  %v588 = vld [vmem:[%s1 + $0x10e8] sm:$0xff]
  %v589 = vld [vmem:[%s1 + $0x10f0] sm:$0xff]
  %v590 = vld [vmem:[%s1 + $0x10f8] sm:$0xff]
  %v591 = vld [vmem:[%s1 + $0x1100] sm:$0xff]
  %v592 = vld [vmem:[%s1 + $0x1108] sm:$0xff]
  %v593 = vld [vmem:[%s1 + $0x1110] sm:$0xff]
  %v594 = vld [vmem:[%s1 + $0x1118] sm:$0xff]
  %v595 = vld [vmem:[%s1 + $0x1120] sm:$0xff]
  %v596 = vld [vmem:[%s1 + $0x1128] sm:$0xff]
  %v597 = vld [vmem:[%s1 + $0x1130] sm:$0xff]
  %v598 = vld [vmem:[%s1 + $0x1138] sm:$0xff]
  %v599 = vld [vmem:[%s1 + $0x1140] sm:$0xff]
  %v600 = vld [vmem:[%s1 + $0x1148] sm:$0xff]
  %v601 = vld [vmem:[%s1 + $0x1150] sm:$0xff]
  %v602 = vld [vmem:[%s1 + $0x1158] sm:$0xff]
  %v603 = vld [vmem:[%s1 + $0x1160] sm:$0xff]
  %v604 = vld [vmem:[%s1 + $0x1168] sm:$0xff]
  %v605 = vld [vmem:[%s1 + $0x1170] sm:$0xff]
  %v606 = vld [vmem:[%s1 + $0x1178] sm:$0xff]
  %v607 = vld [vmem:[%s1 + $0x1180] sm:$0xff]
  %v608 = vld [vmem:[%s1 + $0x1188] sm:$0xff]
  %v609 = vld [vmem:[%s1 + $0x1190] sm:$0xff]
  %v610 = vld [vmem:[%s1 + $0x1198] sm:$0xff]
  %v611 = vld [vmem:[%s1 + $0x11a0] sm:$0xff]
  %v612 = vld [vmem:[%s1 + $0x11a8] sm:$0xff]
  %v613 = vld [vmem:[%s1 + $0x11b0] sm:$0xff]
  %v614 = vld [vmem:[%s1 + $0x11b8] sm:$0xff]
  %v615 = vld [vmem:[%s1 + $0x11c0] sm:$0xff]
  %v616 = vld [vmem:[%s1 + $0x11c8] sm:$0xff]
  %v617 = vld [vmem:[%s1 + $0x11d0] sm:$0xff]
  %v618 = vld [vmem:[%s1 + $0x11d8] sm:$0xff]
  %v619 = vld [vmem:[%s1 + $0x11e0] sm:$0xff]
  %v620 = vld [vmem:[%s1 + $0x11e8] sm:$0xff]
  %v621 = vld [vmem:[%s1 + $0x11f0] sm:$0xff]
  %v622 = vld [vmem:[%s1 + $0x11f8] sm:$0xff]
  %v623 = vld [vmem:[%s1 + $0x1200] sm:$0xff]
  %v624 = vld [vmem:[%s1 + $0x1208] sm:$0xff]
  %v625 = vld [vmem:[%s1 + $0x1210] sm:$0xff]
  %v626 = vld [vmem:[%s1 + $0x1218] sm:$0xff]
  %v627 = vld [vmem:[%s1 + $0x1220] sm:$0xff]
  %v628 = vld [vmem:[%s1 + $0x1228] sm:$0xff]
  %v629 = vld [vmem:[%s1 + $0x1230] sm:$0xff]
  %v630 = vld [vmem:[%s1 + $0x1238] sm:$0xff]
  %v631 = vld [vmem:[%s1 + $0x1240] sm:$0xff]
  %v632 = vld [vmem:[%s1 + $0x1248] sm:$0xff]
  %v633 = vld [vmem:[%s1 + $0x1250] sm:$0xff]
  %v634 = vld [vmem:[%s1 + $0x1258] sm:$0xff]
  %v635 = vld [vmem:[%s1 + $0x1260] sm:$0xff]
  %v636 = vld [vmem:[%s1 + $0x1268] sm:$0xff]
  %v637 = vld [vmem:[%s1 + $0x1270] sm:$0xff]
  %v638 = vld [vmem:[%s1 + $0x1278] sm:$0xff]
  %v639 = vld [vmem:[%s1 + $0x1280] sm:$0xff]
  %v640 = vld [vmem:[%s1 + $0x1288] sm:$0xff]
  %v641 = vld [vmem:[%s1 + $0x1290] sm:$0xff]
  %v642 = vld [vmem:[%s1 + $0x1298] sm:$0xff]
  %v643 = vld [vmem:[%s1 + $0x12a0] sm:$0xff]
  %v644 = vld [vmem:[%s1 + $0x12a8] sm:$0xff]
  %v645 = vld [vmem:[%s1 + $0x12b0] sm:$0xff]
  %v646 = vld [vmem:[%s1 + $0x12b8] sm:$0xff]
  %v647 = vld [vmem:[%s1 + $0x12c0] sm:$0xff]
  %v648 = vld [vmem:[%s1 + $0x12c8] sm:$0xff]
  %v649 = vld [vmem:[%s1 + $0x12d0] sm:$0xff]
  %v650 = vld [vmem:[%s1 + $0x12d8] sm:$0xff]
  %v651 = vld [vmem:[%s1 + $0x12e0] sm:$0xff]
  %v652 = vld [vmem:[%s1 + $0x12e8] sm:$0xff]
  %v653 = vld [vmem:[%s1 + $0x12f0] sm:$0xff]
  %v654 = vld [vmem:[%s1 + $0x12f8] sm:$0xff]
  %v655 = vld [vmem:[%s1 + $0x1300] sm:$0xff]
  %v656 = vld [vmem:[%s1 + $0x1308] sm:$0xff]
  %v657 = vld [vmem:[%s1 + $0x1310] sm:$0xff]
  %v658 = vld [vmem:[%s1 + $0x1318] sm:$0xff]
  %v659 = vld [vmem:[%s1 + $0x1320] sm:$0xff]
  %v660 = vld [vmem:[%s1 + $0x1328] sm:$0xff]
  %v661 = vld [vmem:[%s1 + $0x1330] sm:$0xff]
  %v662 = vld [vmem:[%s1 + $0x1338] sm:$0xff]
  %v663 = vld [vmem:[%s1 + $0x1340] sm:$0xff]
  %v664 = vld [vmem:[%s1 + $0x1348] sm:$0xff]
  %v665 = vld [vmem:[%s1 + $0x1350] sm:$0xff]
  %v666 = vld [vmem:[%s1 + $0x1358] sm:$0xff]
  %v667 = vld [vmem:[%s1 + $0x1360] sm:$0xff]
  %v668 = vld [vmem:[%s1 + $0x1368] sm:$0xff]
  %v669 = vld [vmem:[%s1 + $0x1370] sm:$0xff]
  %v670 = vld [vmem:[%s1 + $0x1378] sm:$0xff]
  %v671 = vld [vmem:[%s1 + $0x1380] sm:$0xff]
  %v672 = vld [vmem:[%s1 + $0x1388] sm:$0xff]
  %v673 = vld [vmem:[%s1 + $0x1390] sm:$0xff]
  %v674 = vld [vmem:[%s1 + $0x1398] sm:$0xff]
  %v675 = vld [vmem:[%s1 + $0x13a0] sm:$0xff]
  %v676 = vld [vmem:[%s1 + $0x13a8] sm:$0xff]
  %v677 = vld [vmem:[%s1 + $0x13b0] sm:$0xff]
  %v678 = vld [vmem:[%s1 + $0x13b8] sm:$0xff]
  %v679 = vld [vmem:[%s1 + $0x13c0] sm:$0xff]
  %v680 = vld [vmem:[%s1 + $0x13c8] sm:$0xff]
  %v681 = vld [vmem:[%s1 + $0x13d0] sm:$0xff]
  %v682 = vld [vmem:[%s1 + $0x13d8] sm:$0xff]
  %v683 = vld [vmem:[%s1 + $0x13e0] sm:$0xff]
  %v684 = vld [vmem:[%s1 + $0x13e8] sm:$0xff]
  %v685 = vld [vmem:[%s1 + $0x13f0] sm:$0xff]
  %v686 = vld [vmem:[%s1 + $0x13f8] sm:$0xff]
  %v687 = vld [vmem:[%s1 + $0x1400] sm:$0xff]
  %v688 = vld [vmem:[%s1 + $0x1408] sm:$0xff]
  %v689 = vld [vmem:[%s1 + $0x1410] sm:$0xff]
  %v690 = vld [vmem:[%s1 + $0x1418] sm:$0xff]
  %v691 = vld [vmem:[%s1 + $0x1420] sm:$0xff]
  %v692 = vld [vmem:[%s1 + $0x1428] sm:$0xff]
  %v693 = vld [vmem:[%s1 + $0x1430] sm:$0xff]
  %v694 = vld [vmem:[%s1 + $0x1438] sm:$0xff]
  %v695 = vld [vmem:[%s1 + $0x1440] sm:$0xff]
  %v696 = vld [vmem:[%s1 + $0x1448] sm:$0xff]
  %v697 = vld [vmem:[%s1 + $0x1450] sm:$0xff]
  %v698 = vld [vmem:[%s1 + $0x1458] sm:$0xff]
  %v699 = vld [vmem:[%s1 + $0x1460] sm:$0xff]
  %v700 = vld [vmem:[%s1 + $0x1468] sm:$0xff]
  %v701 = vld [vmem:[%s1 + $0x1470] sm:$0xff]
  %v702 = vld [vmem:[%s1 + $0x1478] sm:$0xff]
  %v703 = vld [vmem:[%s1 + $0x1480] sm:$0xff]
  %v704 = vld [vmem:[%s1 + $0x1488] sm:$0xff]
  %v705 = vld [vmem:[%s1 + $0x1490] sm:$0xff]
  %v706 = vld [vmem:[%s1 + $0x1498] sm:$0xff]
  %v707 = vld [vmem:[%s1 + $0x14a0] sm:$0xff]
  %v708 = vld [vmem:[%s1 + $0x14a8] sm:$0xff]
  %v709 = vld [vmem:[%s1 + $0x14b0] sm:$0xff]
  %v710 = vld [vmem:[%s1 + $0x14b8] sm:$0xff]
  %v711 = vld [vmem:[%s1 + $0x14c0] sm:$0xff]
  %v712 = vld [vmem:[%s1 + $0x14c8] sm:$0xff]
  %v713 = vld [vmem:[%s1 + $0x14d0] sm:$0xff]
  %v714 = vld [vmem:[%s1 + $0x14d8] sm:$0xff]
  %v715 = vld [vmem:[%s1 + $0x14e0] sm:$0xff]
  %v716 = vld [vmem:[%s1 + $0x14e8] sm:$0xff]
  %v717 = vld [vmem:[%s1 + $0x14f0] sm:$0xff]
  %v718 = vld [vmem:[%s1 + $0x14f8] sm:$0xff]
  %v719 = vld [vmem:[%s1 + $0x1500] sm:$0xff]
  %v720 = vld [vmem:[%s1 + $0x1508] sm:$0xff]
  %v721 = vld [vmem:[%s1 + $0x1510] sm:$0xff]
  %v722 = vld [vmem:[%s1 + $0x1518] sm:$0xff]
  %v723 = vld [vmem:[%s1 + $0x1520] sm:$0xff]
  %v724 = vld [vmem:[%s1 + $0x1528] sm:$0xff]
  %v725 = vld [vmem:[%s1 + $0x1530] sm:$0xff]
  %v726 = vld [vmem:[%s1 + $0x1538] sm:$0xff]
  %v727 = vld [vmem:[%s1 + $0x1540] sm:$0xff]
  %v728 = vld [vmem:[%s1 + $0x1548] sm:$0xff]
  %v729 = vld [vmem:[%s1 + $0x1550] sm:$0xff]
  %v730 = vld [vmem:[%s1 + $0x1558] sm:$0xff]
  %v731 = vld [vmem:[%s1 + $0x1560] sm:$0xff]
  %v732 = vld [vmem:[%s1 + $0x1568] sm:$0xff]
  %v733 = vld [vmem:[%s1 + $0x1570] sm:$0xff]
  %v734 = vld [vmem:[%s1 + $0x1578] sm:$0xff]
  %v735 = vld [vmem:[%s1 + $0x1580] sm:$0xff]
  %v736 = vld [vmem:[%s1 + $0x1588] sm:$0xff]
  %v737 = vld [vmem:[%s1 + $0x1590] sm:$0xff]
  %v738 = vld [vmem:[%s1 + $0x1598] sm:$0xff]
  %v739 = vld [vmem:[%s1 + $0x15a0] sm:$0xff]
  %v740 = vld [vmem:[%s1 + $0x15a8] sm:$0xff]
  %v741 = vld [vmem:[%s1 + $0x15b0] sm:$0xff]
  %v742 = vld [vmem:[%s1 + $0x15b8] sm:$0xff]
  %v743 = vld [vmem:[%s1 + $0x15c0] sm:$0xff]
  %v744 = vld [vmem:[%s1 + $0x15c8] sm:$0xff]
  %v745 = vld [vmem:[%s1 + $0x15d0] sm:$0xff]
  %v746 = vld [vmem:[%s1 + $0x15d8] sm:$0xff]
  %v747 = vld [vmem:[%s1 + $0x15e0] sm:$0xff]
  %v748 = vld [vmem:[%s1 + $0x15e8] sm:$0xff]
  %v749 = vld [vmem:[%s1 + $0x15f0] sm:$0xff]
  %v750 = vld [vmem:[%s1 + $0x15f8] sm:$0xff]
  %v751 = vld [vmem:[%s1 + $0x1600] sm:$0xff]
  %v752 = vld [vmem:[%s1 + $0x1608] sm:$0xff]
  %v753 = vld [vmem:[%s1 + $0x1610] sm:$0xff]
  %v754 = vld [vmem:[%s1 + $0x1618] sm:$0xff]
  %v755 = vld [vmem:[%s1 + $0x1620] sm:$0xff]
  %v756 = vld [vmem:[%s1 + $0x1628] sm:$0xff]
  %v757 = vld [vmem:[%s1 + $0x1630] sm:$0xff]
  %v758 = vld [vmem:[%s1 + $0x1638] sm:$0xff]
  %v759 = vld [vmem:[%s1 + $0x1640] sm:$0xff]
  %v760 = vld [vmem:[%s1 + $0x1648] sm:$0xff]
  %v761 = vld [vmem:[%s1 + $0x1650] sm:$0xff]
  %v762 = vld [vmem:[%s1 + $0x1658] sm:$0xff]
  %v763 = vld [vmem:[%s1 + $0x1660] sm:$0xff]
  %v764 = vld [vmem:[%s1 + $0x1668] sm:$0xff]
  %v765 = vld [vmem:[%s1 + $0x1670] sm:$0xff]
  %v766 = vld [vmem:[%s1 + $0x1678] sm:$0xff]
  %v767 = vld [vmem:[%s1 + $0x1680] sm:$0xff]
  %v768 = vld [vmem:[%s1 + $0x1688] sm:$0xff]
  %v769 = vld [vmem:[%s1 + $0x1690] sm:$0xff]
  %v770 = vld [vmem:[%s1 + $0x1698] sm:$0xff]
  %v771 = vld [vmem:[%s1 + $0x16a0] sm:$0xff]
  %v772 = vld [vmem:[%s1 + $0x16a8] sm:$0xff]
  %v773 = vld [vmem:[%s1 + $0x16b0] sm:$0xff]
  %v774 = vld [vmem:[%s1 + $0x16b8] sm:$0xff]
  %v775 = vld [vmem:[%s1 + $0x16c0] sm:$0xff]
  %v776 = vld [vmem:[%s1 + $0x16c8] sm:$0xff]
  %v777 = vld [vmem:[%s1 + $0x16d0] sm:$0xff]
  %v778 = vld [vmem:[%s1 + $0x16d8] sm:$0xff]
  %v779 = vld [vmem:[%s1 + $0x16e0] sm:$0xff]
  %v780 = vld [vmem:[%s1 + $0x16e8] sm:$0xff]
  %v781 = vld [vmem:[%s1 + $0x16f0] sm:$0xff]
  %v782 = vld [vmem:[%s1 + $0x16f8] sm:$0xff]
  %v783 = vld [vmem:[%s1 + $0x1700] sm:$0xff]
  %v784 = vld [vmem:[%s1 + $0x1708] sm:$0xff]
  %v785 = vld [vmem:[%s1 + $0x1710] sm:$0xff]
  %v786 = vld [vmem:[%s1 + $0x1718] sm:$0xff]
  %v787 = vld [vmem:[%s1 + $0x1720] sm:$0xff]
  %v788 = vld [vmem:[%s1 + $0x1728] sm:$0xff]
  %v789 = vld [vmem:[%s1 + $0x1730] sm:$0xff]
  %v790 = vld [vmem:[%s1 + $0x1738] sm:$0xff]
  %v791 = vld [vmem:[%s1 + $0x1740] sm:$0xff]
  %v792 = vld [vmem:[%s1 + $0x1748] sm:$0xff]
  %v793 = vld [vmem:[%s1 + $0x1750] sm:$0xff]
  %v794 = vld [vmem:[%s1 + $0x1758] sm:$0xff]
  %v795 = vld [vmem:[%s1 + $0x1760] sm:$0xff]
  %v796 = vld [vmem:[%s1 + $0x1768] sm:$0xff]
  %v797 = vld [vmem:[%s1 + $0x1770] sm:$0xff]
  %v798 = vld [vmem:[%s1 + $0x1778] sm:$0xff]
  %v799 = vld [vmem:[%s1 + $0x1780] sm:$0xff]
  %v800 = vld [vmem:[%s1 + $0x1788] sm:$0xff]
  %v801 = vld [vmem:[%s1 + $0x1790] sm:$0xff]
  %v802 = vld [vmem:[%s1 + $0x1798] sm:$0xff]
  %v803 = vld [vmem:[%s1 + $0x17a0] sm:$0xff]
  %v804 = vld [vmem:[%s1 + $0x17a8] sm:$0xff]
  %v805 = vld [vmem:[%s1 + $0x17b0] sm:$0xff]
  %v806 = vld [vmem:[%s1 + $0x17b8] sm:$0xff]
  %v807 = vld [vmem:[%s1 + $0x17c0] sm:$0xff]
  %v808 = vld [vmem:[%s1 + $0x17c8] sm:$0xff]
  %v809 = vld [vmem:[%s1 + $0x17d0] sm:$0xff]
  %v810 = vld [vmem:[%s1 + $0x17d8] sm:$0xff]
  %v811 = vld [vmem:[%s1 + $0x17e0] sm:$0xff]
  %v812 = vld [vmem:[%s1 + $0x17e8] sm:$0xff]
  %v813 = vld [vmem:[%s1 + $0x17f0] sm:$0xff]
  %v814 = vld [vmem:[%s1 + $0x17f8] sm:$0xff]
  %v815 = vld [vmem:[%s1 + $0x1800] sm:$0xff]
  %v816 = vld [vmem:[%s1 + $0x1808] sm:$0xff]
  %v817 = vld [vmem:[%s1 + $0x1810] sm:$0xff]
  %v818 = vld [vmem:[%s1 + $0x1818] sm:$0xff]
  %v819 = vld [vmem:[%s1 + $0x1820] sm:$0xff]
  %v820 = vld [vmem:[%s1 + $0x1828] sm:$0xff]
  %v821 = vld [vmem:[%s1 + $0x1830] sm:$0xff]
  %v822 = vld [vmem:[%s1 + $0x1838] sm:$0xff]
  %v823 = vld [vmem:[%s1 + $0x1840] sm:$0xff]
  %v824 = vld [vmem:[%s1 + $0x1848] sm:$0xff]
  %v825 = vld [vmem:[%s1 + $0x1850] sm:$0xff]
  %v826 = vld [vmem:[%s1 + $0x1858] sm:$0xff]
  %v827 = vld [vmem:[%s1 + $0x1860] sm:$0xff]
  %v828 = vld [vmem:[%s1 + $0x1868] sm:$0xff]
  %v829 = vld [vmem:[%s1 + $0x1870] sm:$0xff]
  %v830 = vld [vmem:[%s1 + $0x1878] sm:$0xff]
  %v831 = vld [vmem:[%s2] sm:$0xf]
  %v833 = vperm.slane %v831, 0
  %v834 = vperm.slane %v831, 1
  %v835 = vperm.slane %v831, 2
  %v836 = vperm.slane %v831, 3
  %v867 = vunpack.c.l.b16 %v21
  %v868 = vunpack.c.h.b16 %v21
  %v869 = vunpack.c.l.b16 %v22
  %v870 = vunpack.c.h.b16 %v22
  %v871 = vunpack.c.l.b16 %v23
  %v872 = vunpack.c.h.b16 %v23
  %v873 = vunpack.c.l.b16 %v24
  %v874 = vunpack.c.h.b16 %v24
  %v875 = vunpack.c.l.b16 %v25
  %v876 = vunpack.c.h.b16 %v25
  %v877 = vunpack.c.l.b16 %v26
  %v878 = vunpack.c.h.b16 %v26
  %v879 = vunpack.c.l.b16 %v27
  %v880 = vunpack.c.h.b16 %v27
  %v881 = vunpack.c.l.b16 %v28
  %v882 = vunpack.c.h.b16 %v28
  %v883 = vunpack.c.l.b16 %v29
  %v884 = vunpack.c.h.b16 %v29
  %v885 = vunpack.c.l.b16 %v30
  %v886 = vunpack.c.h.b16 %v30
  %v887 = vunpack.c.l.b16 %v31
  %v888 = vunpack.c.h.b16 %v31
  %v889 = vunpack.c.l.b16 %v32
  %v890 = vunpack.c.h.b16 %v32
  %v891 = vunpack.c.l.b16 %v33
  %v892 = vunpack.c.l.b16 %v34
  %v893 = vunpack.c.h.b16 %v34
  %v894 = vunpack.c.l.b16 %v35
  %v895 = vunpack.c.h.b16 %v35
  %v896 = vunpack.c.l.b16 %v36
  %v897 = vunpack.c.h.b16 %v36
  %v898 = vunpack.c.l.b16 %v37
  %v899 = vunpack.c.h.b16 %v37
  %v900 = vunpack.c.l.b16 %v38
  %v901 = vunpack.c.h.b16 %v38
  %v902 = vunpack.c.l.b16 %v39
  %v903 = vunpack.c.h.b16 %v39
  %v904 = vunpack.c.l.b16 %v40
  %v905 = vunpack.c.h.b16 %v40
  %v906 = vunpack.c.l.b16 %v41
  %v907 = vunpack.c.h.b16 %v41
  %v908 = vunpack.c.l.b16 %v42
  %v909 = vunpack.c.h.b16 %v42
  %v910 = vunpack.c.l.b16 %v43
  %v911 = vunpack.c.h.b16 %v43
  %v912 = vunpack.c.l.b16 %v44
  %v913 = vunpack.c.h.b16 %v44
  %v914 = vunpack.c.l.b16 %v45
  %v915 = vunpack.c.h.b16 %v45
  %v916 = vunpack.c.l.b16 %v46
  %v917 = vpack.c.b16 %v892, %v867
  %v918 = vpack.c.b16 %v893, %v868
  %v919 = vpack.c.b16 %v894, %v869
  %v920 = vpack.c.b16 %v895, %v870
  %v921 = vpack.c.b16 %v896, %v871
  %v922 = vpack.c.b16 %v897, %v872
  %v923 = vpack.c.b16 %v898, %v873
  %v924 = vpack.c.b16 %v899, %v874
  %v925 = vpack.c.b16 %v900, %v875
  %v926 = vpack.c.b16 %v901, %v876
  %v927 = vpack.c.b16 %v902, %v877
  %v928 = vpack.c.b16 %v903, %v878
  %v929 = vpack.c.b16 %v904, %v879
  %v930 = vpack.c.b16 %v905, %v880
  %v931 = vpack.c.b16 %v906, %v881
  %v932 = vpack.c.b16 %v907, %v882
  %v933 = vpack.c.b16 %v908, %v883
  %v934 = vpack.c.b16 %v909, %v884
  %v935 = vpack.c.b16 %v910, %v885
  %v936 = vpack.c.b16 %v911, %v886
  %v937 = vpack.c.b16 %v912, %v887
  %v938 = vpack.c.b16 %v913, %v888
  %v939 = vpack.c.b16 %v914, %v889
  %v940 = vpack.c.b16 %v915, %v890
  %v941 = vpack.c.b16 %v916, %v891
  %v1750 = vunpack.c.l.b16 %v47
  %v1751 = vunpack.c.h.b16 %v47
  %v1752 = vunpack.c.l.b16 %v48
  %v1753 = vunpack.c.h.b16 %v48
  %v1754 = vunpack.c.l.b16 %v49
  %v1755 = vunpack.c.h.b16 %v49
  %v1756 = vunpack.c.l.b16 %v50
  %v1757 = vunpack.c.h.b16 %v50
  %v1758 = vunpack.c.l.b16 %v51
  %v1759 = vunpack.c.h.b16 %v51
  %v1760 = vunpack.c.l.b16 %v52
  %v1761 = vunpack.c.h.b16 %v52
  %v1762 = vunpack.c.l.b16 %v53
  %v1763 = vunpack.c.h.b16 %v53
  %v1764 = vunpack.c.l.b16 %v54
  %v1765 = vunpack.c.h.b16 %v54
  %v1766 = vunpack.c.l.b16 %v55
  %v1767 = vunpack.c.h.b16 %v55
  %v1768 = vunpack.c.l.b16 %v56
  %v1769 = vunpack.c.h.b16 %v56
  %v1770 = vunpack.c.l.b16 %v57
  %v1771 = vunpack.c.h.b16 %v57
  %v1772 = vunpack.c.l.b16 %v58
  %v1773 = vunpack.c.h.b16 %v58
  %v1774 = vunpack.c.l.b16 %v59
  %v1775 = vunpack.c.h.b16 %v59
  %v1776 = vunpack.c.l.b16 %v60
  %v1777 = vunpack.c.h.b16 %v60
  %v1778 = vunpack.c.l.b16 %v61
  %v1779 = vunpack.c.h.b16 %v61
  %v1780 = vunpack.c.l.b16 %v62
  %v1781 = vunpack.c.h.b16 %v62
  %v1782 = vunpack.c.l.b16 %v63
  %v1783 = vunpack.c.h.b16 %v63
  %v1784 = vunpack.c.l.b16 %v64
  %v1785 = vunpack.c.h.b16 %v64
  %v1786 = vunpack.c.l.b16 %v65
  %v1787 = vunpack.c.h.b16 %v65
  %v1788 = vunpack.c.l.b16 %v66
  %v1789 = vunpack.c.h.b16 %v66
  %v1790 = vunpack.c.l.b16 %v67
  %v1791 = vunpack.c.h.b16 %v67
  %v1792 = vunpack.c.l.b16 %v68
  %v1793 = vunpack.c.h.b16 %v68
  %v1794 = vunpack.c.l.b16 %v69
  %v1795 = vunpack.c.h.b16 %v69
  %v1796 = vunpack.c.l.b16 %v70
  %v1797 = vunpack.c.h.b16 %v70
  %v1798 = vunpack.c.l.b16 %v71
  %v1799 = vunpack.c.h.b16 %v71
  %v1800 = vunpack.c.l.b16 %v72
  %v1801 = vunpack.c.h.b16 %v72
  %v1802 = vunpack.c.l.b16 %v73
  %v1803 = vunpack.c.h.b16 %v73
  %v1804 = vunpack.c.l.b16 %v74
  %v1805 = vunpack.c.h.b16 %v74
  %v1806 = vunpack.c.l.b16 %v75
  %v1807 = vunpack.c.h.b16 %v75
  %v1808 = vunpack.c.l.b16 %v76
  %v1809 = vunpack.c.h.b16 %v76
  %v1810 = vunpack.c.l.b16 %v77
  %v1811 = vunpack.c.h.b16 %v77
  %v1812 = vunpack.c.l.b16 %v78
  %v1813 = vunpack.c.h.b16 %v78
  %v1814 = vunpack.c.l.b16 %v79
  %v1815 = vunpack.c.h.b16 %v79
  %v1816 = vunpack.c.l.b16 %v80
  %v1817 = vunpack.c.h.b16 %v80
  %v1818 = vunpack.c.l.b16 %v81
  %v1819 = vunpack.c.h.b16 %v81
  %v1820 = vunpack.c.l.b16 %v82
  %v1821 = vunpack.c.h.b16 %v82
  %v1822 = vunpack.c.l.b16 %v83
  %v1823 = vunpack.c.h.b16 %v83
  %v1824 = vunpack.c.l.b16 %v84
  %v1825 = vunpack.c.h.b16 %v84
  %v1826 = vunpack.c.l.b16 %v85
  %v1827 = vunpack.c.h.b16 %v85
  %v1828 = vunpack.c.l.b16 %v86
  %v1829 = vunpack.c.h.b16 %v86
  %v1830 = vunpack.c.l.b16 %v87
  %v1831 = vunpack.c.h.b16 %v87
  %v1832 = vunpack.c.l.b16 %v88
  %v1833 = vunpack.c.h.b16 %v88
  %v1834 = vunpack.c.l.b16 %v89
  %v1835 = vunpack.c.h.b16 %v89
  %v1836 = vunpack.c.l.b16 %v90
  %v1837 = vunpack.c.h.b16 %v90
  %v1838 = vunpack.c.l.b16 %v91
  %v1839 = vunpack.c.h.b16 %v91
  %v1840 = vunpack.c.l.b16 %v92
  %v1841 = vunpack.c.h.b16 %v92
  %v1842 = vunpack.c.l.b16 %v93
  %v1843 = vunpack.c.h.b16 %v93
  %v1844 = vunpack.c.l.b16 %v94
  %v1845 = vunpack.c.h.b16 %v94
  %v1846 = vunpack.c.l.b16 %v95
  %v1847 = vunpack.c.h.b16 %v95
  %v1848 = vunpack.c.l.b16 %v96
  %v1849 = vunpack.c.h.b16 %v96
  %v1850 = vunpack.c.l.b16 %v97
  %v1851 = vunpack.c.h.b16 %v97
  %v1852 = vunpack.c.l.b16 %v98
  %v1853 = vunpack.c.h.b16 %v98
  %v1854 = vunpack.c.l.b16 %v99
  %v1855 = vunpack.c.h.b16 %v99
  %v1856 = vunpack.c.l.b16 %v100
  %v1857 = vunpack.c.h.b16 %v100
  %v1858 = vunpack.c.l.b16 %v101
  %v1859 = vunpack.c.h.b16 %v101
  %v1860 = vunpack.c.l.b16 %v102
  %v1861 = vunpack.c.h.b16 %v102
  %v1862 = vunpack.c.l.b16 %v103
  %v1863 = vunpack.c.h.b16 %v103
  %v1864 = vunpack.c.l.b16 %v104
  %v1865 = vunpack.c.h.b16 %v104
  %v1866 = vunpack.c.l.b16 %v105
  %v1867 = vunpack.c.h.b16 %v105
  %v1868 = vunpack.c.l.b16 %v106
  %v1869 = vunpack.c.h.b16 %v106
  %v1870 = vunpack.c.l.b16 %v107
  %v1871 = vunpack.c.h.b16 %v107
  %v1872 = vunpack.c.l.b16 %v108
  %v1873 = vunpack.c.h.b16 %v108
  %v1874 = vunpack.c.l.b16 %v109
  %v1875 = vunpack.c.h.b16 %v109
  %v1876 = vunpack.c.l.b16 %v110
  %v1877 = vunpack.c.h.b16 %v110
  %v1878 = vunpack.c.l.b16 %v111
  %v1879 = vunpack.c.h.b16 %v111
  %v1880 = vunpack.c.l.b16 %v112
  %v1881 = vunpack.c.h.b16 %v112
  %v1882 = vunpack.c.l.b16 %v113
  %v1883 = vunpack.c.h.b16 %v113
  %v1884 = vunpack.c.l.b16 %v114
  %v1885 = vunpack.c.h.b16 %v114
  %v1886 = vunpack.c.l.b16 %v115
  %v1887 = vunpack.c.h.b16 %v115
  %v1888 = vunpack.c.l.b16 %v116
  %v1889 = vunpack.c.h.b16 %v116
  %v1890 = vunpack.c.l.b16 %v117
  %v1891 = vunpack.c.h.b16 %v117
  %v1892 = vunpack.c.l.b16 %v118
  %v1893 = vunpack.c.h.b16 %v118
  %v1894 = vunpack.c.l.b16 %v119
  %v1895 = vunpack.c.h.b16 %v119
  %v1896 = vunpack.c.l.b16 %v120
  %v1897 = vunpack.c.h.b16 %v120
  %v1898 = vunpack.c.l.b16 %v121
  %v1899 = vunpack.c.h.b16 %v121
  %v1900 = vunpack.c.l.b16 %v122
  %v1901 = vunpack.c.h.b16 %v122
  %v1902 = vunpack.c.l.b16 %v123
  %v1903 = vunpack.c.h.b16 %v123
  %v1904 = vunpack.c.l.b16 %v124
  %v1905 = vunpack.c.h.b16 %v124
  %v1906 = vunpack.c.l.b16 %v125
  %v1907 = vunpack.c.h.b16 %v125
  %v1908 = vunpack.c.l.b16 %v126
  %v1909 = vunpack.c.h.b16 %v126
  %v1910 = vunpack.c.l.b16 %v127
  %v1911 = vunpack.c.h.b16 %v127
  %v1912 = vunpack.c.l.b16 %v128
  %v1913 = vunpack.c.h.b16 %v128
  %v1914 = vunpack.c.l.b16 %v129
  %v1915 = vunpack.c.h.b16 %v129
  %v1916 = vunpack.c.l.b16 %v130
  %v1917 = vunpack.c.h.b16 %v130
  %v1918 = vunpack.c.l.b16 %v131
  %v1919 = vunpack.c.h.b16 %v131
  %v1920 = vunpack.c.l.b16 %v132
  %v1921 = vunpack.c.h.b16 %v132
  %v1922 = vunpack.c.l.b16 %v133
  %v1923 = vunpack.c.h.b16 %v133
  %v1924 = vunpack.c.l.b16 %v134
  %v1925 = vunpack.c.h.b16 %v134
  %v1926 = vunpack.c.l.b16 %v135
  %v1927 = vunpack.c.h.b16 %v135
  %v1928 = vunpack.c.l.b16 %v136
  %v1929 = vunpack.c.h.b16 %v136
  %v1930 = vunpack.c.l.b16 %v137
  %v1931 = vunpack.c.h.b16 %v137
  %v1932 = vunpack.c.l.b16 %v138
  %v1933 = vunpack.c.h.b16 %v138
  %v1934 = vunpack.c.l.b16 %v139
  %v1935 = vunpack.c.h.b16 %v139
  %v1936 = vunpack.c.l.b16 %v140
  %v1937 = vunpack.c.h.b16 %v140
  %v1938 = vunpack.c.l.b16 %v141
  %v1939 = vunpack.c.h.b16 %v141
  %v1940 = vunpack.c.l.b16 %v142
  %v1941 = vunpack.c.h.b16 %v142
  %v1942 = vunpack.c.l.b16 %v143
  %v1943 = vunpack.c.h.b16 %v143
  %v1944 = vunpack.c.l.b16 %v144
  %v1945 = vunpack.c.h.b16 %v144
  %v1946 = vunpack.c.l.b16 %v145
  %v1947 = vunpack.c.h.b16 %v145
  %v1948 = vunpack.c.l.b16 %v146
  %v1949 = vunpack.c.h.b16 %v146
  %v1950 = vunpack.c.l.b16 %v147
  %v1951 = vunpack.c.h.b16 %v147
  %v1952 = vunpack.c.l.b16 %v148
  %v1953 = vunpack.c.h.b16 %v148
  %v1954 = vunpack.c.l.b16 %v149
  %v1955 = vunpack.c.h.b16 %v149
  %v1956 = vunpack.c.l.b16 %v150
  %v1957 = vunpack.c.h.b16 %v150
  %v1958 = vunpack.c.l.b16 %v151
  %v1959 = vunpack.c.h.b16 %v151
  %v1960 = vunpack.c.l.b16 %v152
  %v1961 = vunpack.c.h.b16 %v152
  %v1962 = vunpack.c.l.b16 %v153
  %v1963 = vunpack.c.h.b16 %v153
  %v1964 = vunpack.c.l.b16 %v154
  %v1965 = vunpack.c.h.b16 %v154
  %v1966 = vunpack.c.l.b16 %v155
  %v1967 = vunpack.c.h.b16 %v155
  %v1968 = vunpack.c.l.b16 %v156
  %v1969 = vunpack.c.h.b16 %v156
  %v1970 = vunpack.c.l.b16 %v157
  %v1971 = vunpack.c.h.b16 %v157
  %v1972 = vunpack.c.l.b16 %v158
  %v1973 = vunpack.c.h.b16 %v158
  %v1974 = vunpack.c.l.b16 %v159
  %v1975 = vunpack.c.h.b16 %v159
  %v1976 = vunpack.c.l.b16 %v160
  %v1977 = vunpack.c.h.b16 %v160
  %v1978 = vunpack.c.l.b16 %v161
  %v1979 = vunpack.c.h.b16 %v161
  %v1980 = vunpack.c.l.b16 %v162
  %v1981 = vunpack.c.h.b16 %v162
  %v1982 = vunpack.c.l.b16 %v163
  %v1983 = vunpack.c.h.b16 %v163
  %v1984 = vunpack.c.l.b16 %v164
  %v1985 = vunpack.c.h.b16 %v164
  %v1986 = vunpack.c.l.b16 %v165
  %v1987 = vunpack.c.h.b16 %v165
  %v1988 = vunpack.c.l.b16 %v166
  %v1989 = vunpack.c.h.b16 %v166
  %v1990 = vunpack.c.l.b16 %v167
  %v1991 = vunpack.c.h.b16 %v167
  %v1992 = vunpack.c.l.b16 %v168
  %v1993 = vunpack.c.h.b16 %v168
  %v1994 = vunpack.c.l.b16 %v169
  %v1995 = vunpack.c.h.b16 %v169
  %v1996 = vunpack.c.l.b16 %v170
  %v1997 = vunpack.c.h.b16 %v170
  %v1998 = vunpack.c.l.b16 %v171
  %v1999 = vunpack.c.h.b16 %v171
  %v2000 = vunpack.c.l.b16 %v172
  %v2001 = vunpack.c.h.b16 %v172
  %v2002 = vunpack.c.l.b16 %v173
  %v2003 = vunpack.c.h.b16 %v173
  %v2004 = vunpack.c.l.b16 %v174
  %v2005 = vunpack.c.h.b16 %v174
  %v2006 = vunpack.c.l.b16 %v175
  %v2007 = vunpack.c.h.b16 %v175
  %v2008 = vunpack.c.l.b16 %v176
  %v2009 = vunpack.c.h.b16 %v176
  %v2010 = vunpack.c.l.b16 %v177
  %v2011 = vunpack.c.h.b16 %v177
  %v2012 = vunpack.c.l.b16 %v178
  %v2013 = vunpack.c.h.b16 %v178
  %v2014 = vunpack.c.l.b16 %v179
  %v2015 = vunpack.c.h.b16 %v179
  %v2016 = vunpack.c.l.b16 %v180
  %v2017 = vunpack.c.h.b16 %v180
  %v2018 = vunpack.c.l.b16 %v181
  %v2019 = vunpack.c.h.b16 %v181
  %v2020 = vunpack.c.l.b16 %v182
  %v2021 = vunpack.c.h.b16 %v182
  %v2022 = vunpack.c.l.b16 %v183
  %v2023 = vunpack.c.h.b16 %v183
  %v2024 = vunpack.c.l.b16 %v184
  %v2025 = vunpack.c.h.b16 %v184
  %v2026 = vunpack.c.l.b16 %v185
  %v2027 = vunpack.c.h.b16 %v185
  %v2028 = vunpack.c.l.b16 %v186
  %v2029 = vunpack.c.h.b16 %v186
  %v2030 = vunpack.c.l.b16 %v187
  %v2031 = vunpack.c.h.b16 %v187
  %v2032 = vunpack.c.l.b16 %v188
  %v2033 = vunpack.c.h.b16 %v188
  %v2034 = vunpack.c.l.b16 %v189
  %v2035 = vunpack.c.h.b16 %v189
  %v2036 = vunpack.c.l.b16 %v190
  %v2037 = vunpack.c.h.b16 %v190
  %v2038 = vunpack.c.l.b16 %v191
  %v2039 = vunpack.c.h.b16 %v191
  %v2040 = vunpack.c.l.b16 %v192
  %v2041 = vunpack.c.h.b16 %v192
  %v2042 = vunpack.c.l.b16 %v193
  %v2043 = vunpack.c.h.b16 %v193
  %v2044 = vunpack.c.l.b16 %v194
  %v2045 = vunpack.c.h.b16 %v194
  %v2046 = vunpack.c.l.b16 %v195
  %v2047 = vunpack.c.h.b16 %v195
  %v2048 = vunpack.c.l.b16 %v196
  %v2049 = vunpack.c.h.b16 %v196
  %v2050 = vunpack.c.l.b16 %v197
  %v2051 = vunpack.c.h.b16 %v197
  %v2052 = vunpack.c.l.b16 %v198
  %v2053 = vunpack.c.h.b16 %v198
  %v2054 = vunpack.c.l.b16 %v199
  %v2055 = vunpack.c.h.b16 %v199
  %v2056 = vunpack.c.l.b16 %v200
  %v2057 = vunpack.c.h.b16 %v200
  %v2058 = vunpack.c.l.b16 %v201
  %v2059 = vunpack.c.h.b16 %v201
  %v2060 = vunpack.c.l.b16 %v202
  %v2061 = vunpack.c.h.b16 %v202
  %v2062 = vunpack.c.l.b16 %v203
  %v2063 = vunpack.c.h.b16 %v203
  %v2064 = vunpack.c.l.b16 %v204
  %v2065 = vunpack.c.h.b16 %v204
  %v2066 = vunpack.c.l.b16 %v205
  %v2067 = vunpack.c.h.b16 %v205
  %v2068 = vunpack.c.l.b16 %v206
  %v2069 = vunpack.c.h.b16 %v206
  %v2070 = vunpack.c.l.b16 %v207
  %v2071 = vunpack.c.h.b16 %v207
  %v2072 = vunpack.c.l.b16 %v208
  %v2073 = vunpack.c.h.b16 %v208
  %v2074 = vunpack.c.l.b16 %v209
  %v2075 = vunpack.c.h.b16 %v209
  %v2076 = vunpack.c.l.b16 %v210
  %v2077 = vunpack.c.h.b16 %v210
  %v2078 = vunpack.c.l.b16 %v211
  %v2079 = vunpack.c.h.b16 %v211
  %v2080 = vunpack.c.l.b16 %v212
  %v2081 = vunpack.c.h.b16 %v212
  %v2082 = vunpack.c.l.b16 %v213
  %v2083 = vunpack.c.h.b16 %v213
  %v2084 = vunpack.c.l.b16 %v214
  %v2085 = vunpack.c.h.b16 %v214
  %v2086 = vunpack.c.l.b16 %v215
  %v2087 = vunpack.c.h.b16 %v215
  %v2088 = vunpack.c.l.b16 %v216
  %v2089 = vunpack.c.h.b16 %v216
  %v2090 = vunpack.c.l.b16 %v217
  %v2091 = vunpack.c.h.b16 %v217
  %v2092 = vunpack.c.l.b16 %v218
  %v2093 = vunpack.c.h.b16 %v218
  %v2094 = vunpack.c.l.b16 %v219
  %v2095 = vunpack.c.h.b16 %v219
  %v2096 = vunpack.c.l.b16 %v220
  %v2097 = vunpack.c.h.b16 %v220
  %v2098 = vunpack.c.l.b16 %v221
  %v2099 = vunpack.c.h.b16 %v221
  %v2100 = vunpack.c.l.b16 %v222
  %v2101 = vunpack.c.h.b16 %v222
  %v2102 = vunpack.c.l.b16 %v223
  %v2103 = vunpack.c.h.b16 %v223
  %v2104 = vunpack.c.l.b16 %v224
  %v2105 = vunpack.c.h.b16 %v224
  %v2106 = vunpack.c.l.b16 %v225
  %v2107 = vunpack.c.h.b16 %v225
  %v2108 = vunpack.c.l.b16 %v226
  %v2109 = vunpack.c.h.b16 %v226
  %v2110 = vunpack.c.l.b16 %v227
  %v2111 = vunpack.c.h.b16 %v227
  %v2112 = vunpack.c.l.b16 %v228
  %v2113 = vunpack.c.h.b16 %v228
  %v2114 = vunpack.c.l.b16 %v229
  %v2115 = vunpack.c.h.b16 %v229
  %v2116 = vunpack.c.l.b16 %v230
  %v2117 = vunpack.c.h.b16 %v230
  %v2118 = vunpack.c.l.b16 %v231
  %v2119 = vunpack.c.h.b16 %v231
  %v2120 = vunpack.c.l.b16 %v232
  %v2121 = vunpack.c.h.b16 %v232
  %v2122 = vunpack.c.l.b16 %v233
  %v2123 = vunpack.c.h.b16 %v233
  %v2124 = vunpack.c.l.b16 %v234
  %v2125 = vunpack.c.h.b16 %v234
  %v2126 = vunpack.c.l.b16 %v235
  %v2127 = vunpack.c.h.b16 %v235
  %v2128 = vunpack.c.l.b16 %v236
  %v2129 = vunpack.c.h.b16 %v236
  %v2130 = vunpack.c.l.b16 %v237
  %v2131 = vunpack.c.h.b16 %v237
  %v2132 = vunpack.c.l.b16 %v238
  %v2133 = vunpack.c.h.b16 %v238
  %v2134 = vunpack.c.l.b16 %v239
  %v2135 = vunpack.c.h.b16 %v239
  %v2136 = vunpack.c.l.b16 %v240
  %v2137 = vunpack.c.h.b16 %v240
  %v2138 = vunpack.c.l.b16 %v241
  %v2139 = vunpack.c.h.b16 %v241
  %v2140 = vunpack.c.l.b16 %v242
  %v2141 = vunpack.c.h.b16 %v242
  %v2142 = vunpack.c.l.b16 %v243
  %v2143 = vunpack.c.h.b16 %v243
  %v2144 = vunpack.c.l.b16 %v244
  %v2145 = vunpack.c.h.b16 %v244
  %v2146 = vunpack.c.l.b16 %v245
  %v2147 = vunpack.c.h.b16 %v245
  %v2148 = vunpack.c.l.b16 %v246
  %v2149 = vunpack.c.h.b16 %v246
  %v2150 = vunpack.c.l.b16 %v247
  %v2151 = vunpack.c.h.b16 %v247
  %v2152 = vunpack.c.l.b16 %v248
  %v2153 = vunpack.c.h.b16 %v248
  %v2154 = vunpack.c.l.b16 %v249
  %v2155 = vunpack.c.h.b16 %v249
  %v2156 = vunpack.c.l.b16 %v250
  %v2157 = vunpack.c.h.b16 %v250
  %v2158 = vunpack.c.l.b16 %v251
  %v2159 = vunpack.c.h.b16 %v251
  %v2160 = vunpack.c.l.b16 %v252
  %v2161 = vunpack.c.h.b16 %v252
  %v2162 = vunpack.c.l.b16 %v253
  %v2163 = vunpack.c.h.b16 %v253
  %v2164 = vunpack.c.l.b16 %v254
  %v2165 = vunpack.c.h.b16 %v254
  %v2166 = vunpack.c.l.b16 %v255
  %v2167 = vunpack.c.h.b16 %v255
  %v2168 = vunpack.c.l.b16 %v256
  %v2169 = vunpack.c.h.b16 %v256
  %v2170 = vunpack.c.l.b16 %v257
  %v2171 = vunpack.c.h.b16 %v257
  %v2172 = vunpack.c.l.b16 %v258
  %v2173 = vunpack.c.h.b16 %v258
  %v2174 = vunpack.c.l.b16 %v259
  %v2175 = vunpack.c.h.b16 %v259
  %v2176 = vunpack.c.l.b16 %v260
  %v2177 = vunpack.c.h.b16 %v260
  %v2178 = vunpack.c.l.b16 %v261
  %v2179 = vunpack.c.h.b16 %v261
  %v2180 = vunpack.c.l.b16 %v262
  %v2181 = vunpack.c.h.b16 %v262
  %v2182 = vunpack.c.l.b16 %v263
  %v2183 = vunpack.c.h.b16 %v263
  %v2184 = vunpack.c.l.b16 %v264
  %v2185 = vunpack.c.h.b16 %v264
  %v2186 = vunpack.c.l.b16 %v265
  %v2187 = vunpack.c.h.b16 %v265
  %v2188 = vunpack.c.l.b16 %v266
  %v2189 = vunpack.c.h.b16 %v266
  %v2190 = vunpack.c.l.b16 %v267
  %v2191 = vunpack.c.h.b16 %v267
  %v2192 = vunpack.c.l.b16 %v268
  %v2193 = vunpack.c.h.b16 %v268
  %v2194 = vunpack.c.l.b16 %v269
  %v2195 = vunpack.c.h.b16 %v269
  %v2196 = vunpack.c.l.b16 %v270
  %v2197 = vunpack.c.h.b16 %v270
  %v2198 = vunpack.c.l.b16 %v271
  %v2199 = vunpack.c.h.b16 %v271
  %v2200 = vunpack.c.l.b16 %v272
  %v2201 = vunpack.c.h.b16 %v272
  %v2202 = vunpack.c.l.b16 %v273
  %v2203 = vunpack.c.h.b16 %v273
  %v2204 = vunpack.c.l.b16 %v274
  %v2205 = vunpack.c.h.b16 %v274
  %v2206 = vunpack.c.l.b16 %v275
  %v2207 = vunpack.c.h.b16 %v275
  %v2208 = vunpack.c.l.b16 %v276
  %v2209 = vunpack.c.h.b16 %v276
  %v2210 = vunpack.c.l.b16 %v277
  %v2211 = vunpack.c.h.b16 %v277
  %v2212 = vunpack.c.l.b16 %v278
  %v2213 = vunpack.c.h.b16 %v278
  %v2214 = vunpack.c.l.b16 %v279
  %v2215 = vunpack.c.h.b16 %v279
  %v2216 = vunpack.c.l.b16 %v280
  %v2217 = vunpack.c.h.b16 %v280
  %v2218 = vunpack.c.l.b16 %v281
  %v2219 = vunpack.c.h.b16 %v281
  %v2220 = vunpack.c.l.b16 %v282
  %v2221 = vunpack.c.h.b16 %v282
  %v2222 = vunpack.c.l.b16 %v283
  %v2223 = vunpack.c.h.b16 %v283
  %v2224 = vunpack.c.l.b16 %v284
  %v2225 = vunpack.c.h.b16 %v284
  %v2226 = vunpack.c.l.b16 %v285
  %v2227 = vunpack.c.h.b16 %v285
  %v2228 = vunpack.c.l.b16 %v286
  %v2229 = vunpack.c.h.b16 %v286
  %v2230 = vunpack.c.l.b16 %v287
  %v2231 = vunpack.c.h.b16 %v287
  %v2232 = vunpack.c.l.b16 %v288
  %v2233 = vunpack.c.h.b16 %v288
  %v2234 = vunpack.c.l.b16 %v289
  %v2235 = vunpack.c.h.b16 %v289
  %v2236 = vunpack.c.l.b16 %v290
  %v2237 = vunpack.c.h.b16 %v290
  %v2238 = vunpack.c.l.b16 %v291
  %v2239 = vunpack.c.h.b16 %v291
  %v2240 = vunpack.c.l.b16 %v292
  %v2241 = vunpack.c.h.b16 %v292
  %v2242 = vunpack.c.l.b16 %v293
  %v2243 = vunpack.c.h.b16 %v293
  %v2244 = vunpack.c.l.b16 %v294
  %v2245 = vunpack.c.h.b16 %v294
  %v2246 = vunpack.c.l.b16 %v295
  %v2247 = vunpack.c.h.b16 %v295
  %v2248 = vunpack.c.l.b16 %v296
  %v2249 = vunpack.c.h.b16 %v296
  %v2250 = vunpack.c.l.b16 %v297
  %v2251 = vunpack.c.h.b16 %v297
  %v2252 = vunpack.c.l.b16 %v298
  %v2253 = vunpack.c.h.b16 %v298
  %v2254 = vunpack.c.l.b16 %v299
  %v2255 = vunpack.c.h.b16 %v299
  %v2256 = vunpack.c.l.b16 %v300
  %v2257 = vunpack.c.h.b16 %v300
  %v2258 = vunpack.c.l.b16 %v301
  %v2259 = vunpack.c.h.b16 %v301
  %v2260 = vunpack.c.l.b16 %v302
  %v2261 = vunpack.c.h.b16 %v302
  %v2262 = vunpack.c.l.b16 %v303
  %v2263 = vunpack.c.h.b16 %v303
  %v2264 = vunpack.c.l.b16 %v304
  %v2265 = vunpack.c.h.b16 %v304
  %v2266 = vunpack.c.l.b16 %v305
  %v2267 = vunpack.c.h.b16 %v305
  %v2268 = vunpack.c.l.b16 %v306
  %v2269 = vunpack.c.h.b16 %v306
  %v2270 = vunpack.c.l.b16 %v307
  %v2271 = vunpack.c.h.b16 %v307
  %v2272 = vunpack.c.l.b16 %v308
  %v2273 = vunpack.c.h.b16 %v308
  %v2274 = vunpack.c.l.b16 %v309
  %v2275 = vunpack.c.h.b16 %v309
  %v2276 = vunpack.c.l.b16 %v310
  %v2277 = vunpack.c.h.b16 %v310
  %v2278 = vunpack.c.l.b16 %v311
  %v2279 = vunpack.c.h.b16 %v311
  %v2280 = vunpack.c.l.b16 %v312
  %v2281 = vunpack.c.h.b16 %v312
  %v2282 = vunpack.c.l.b16 %v313
  %v2283 = vunpack.c.h.b16 %v313
  %v2284 = vunpack.c.l.b16 %v314
  %v2285 = vunpack.c.h.b16 %v314
  %v2286 = vunpack.c.l.b16 %v315
  %v2287 = vunpack.c.h.b16 %v315
  %v2288 = vunpack.c.l.b16 %v316
  %v2289 = vunpack.c.h.b16 %v316
  %v2290 = vunpack.c.l.b16 %v317
  %v2291 = vunpack.c.h.b16 %v317
  %v2292 = vunpack.c.l.b16 %v318
  %v2293 = vunpack.c.h.b16 %v318
  %v2294 = vunpack.c.l.b16 %v319
  %v2295 = vunpack.c.h.b16 %v319
  %v2296 = vunpack.c.l.b16 %v320
  %v2297 = vunpack.c.h.b16 %v320
  %v2298 = vunpack.c.l.b16 %v321
  %v2299 = vunpack.c.h.b16 %v321
  %v2300 = vunpack.c.l.b16 %v322
  %v2301 = vunpack.c.h.b16 %v322
  %v2302 = vunpack.c.l.b16 %v323
  %v2303 = vunpack.c.h.b16 %v323
  %v2304 = vunpack.c.l.b16 %v324
  %v2305 = vunpack.c.h.b16 %v324
  %v2306 = vunpack.c.l.b16 %v325
  %v2307 = vunpack.c.h.b16 %v325
  %v2308 = vunpack.c.l.b16 %v326
  %v2309 = vunpack.c.h.b16 %v326
  %v2310 = vunpack.c.l.b16 %v327
  %v2311 = vunpack.c.h.b16 %v327
  %v2312 = vunpack.c.l.b16 %v328
  %v2313 = vunpack.c.h.b16 %v328
  %v2314 = vunpack.c.l.b16 %v329
  %v2315 = vunpack.c.h.b16 %v329
  %v2316 = vunpack.c.l.b16 %v330
  %v2317 = vunpack.c.h.b16 %v330
  %v2318 = vunpack.c.l.b16 %v331
  %v2319 = vunpack.c.h.b16 %v331
  %v2320 = vunpack.c.l.b16 %v332
  %v2321 = vunpack.c.h.b16 %v332
  %v2322 = vunpack.c.l.b16 %v333
  %v2323 = vunpack.c.h.b16 %v333
  %v2324 = vunpack.c.l.b16 %v334
  %v2325 = vunpack.c.h.b16 %v334
  %v2326 = vunpack.c.l.b16 %v335
  %v2327 = vunpack.c.h.b16 %v335
  %v2328 = vunpack.c.l.b16 %v336
  %v2329 = vunpack.c.h.b16 %v336
  %v2330 = vunpack.c.l.b16 %v337
  %v2331 = vunpack.c.h.b16 %v337
  %v2332 = vunpack.c.l.b16 %v338
  %v2333 = vunpack.c.h.b16 %v338
  %v2334 = vunpack.c.l.b16 %v339
  %v2335 = vunpack.c.h.b16 %v339
  %v2336 = vunpack.c.l.b16 %v340
  %v2337 = vunpack.c.h.b16 %v340
  %v2338 = vunpack.c.l.b16 %v341
  %v2339 = vunpack.c.h.b16 %v341
  %v2340 = vunpack.c.l.b16 %v342
  %v2341 = vunpack.c.h.b16 %v342
  %v2342 = vunpack.c.l.b16 %v343
  %v2343 = vunpack.c.h.b16 %v343
  %v2344 = vunpack.c.l.b16 %v344
  %v2345 = vunpack.c.h.b16 %v344
  %v2346 = vunpack.c.l.b16 %v345
  %v2347 = vunpack.c.h.b16 %v345
  %v2348 = vunpack.c.l.b16 %v346
  %v2349 = vunpack.c.h.b16 %v346
  %v2350 = vunpack.c.l.b16 %v347
  %v2351 = vunpack.c.h.b16 %v347
  %v2352 = vunpack.c.l.b16 %v348
  %v2353 = vunpack.c.h.b16 %v348
  %v2354 = vunpack.c.l.b16 %v349
  %v2355 = vunpack.c.h.b16 %v349
  %v2356 = vunpack.c.l.b16 %v350
  %v2357 = vunpack.c.h.b16 %v350
  %v2358 = vunpack.c.l.b16 %v351
  %v2359 = vunpack.c.h.b16 %v351
  %v2360 = vunpack.c.l.b16 %v352
  %v2361 = vunpack.c.h.b16 %v352
  %v2362 = vunpack.c.l.b16 %v353
  %v2363 = vunpack.c.h.b16 %v353
  %v2364 = vunpack.c.l.b16 %v354
  %v2365 = vunpack.c.h.b16 %v354
  %v2366 = vunpack.c.l.b16 %v355
  %v2367 = vunpack.c.h.b16 %v355
  %v2368 = vunpack.c.l.b16 %v356
  %v2369 = vunpack.c.h.b16 %v356
  %v2370 = vunpack.c.l.b16 %v357
  %v2371 = vunpack.c.h.b16 %v357
  %v2372 = vunpack.c.l.b16 %v358
  %v2373 = vunpack.c.h.b16 %v358
  %v2374 = vunpack.c.l.b16 %v359
  %v2375 = vunpack.c.h.b16 %v359
  %v2376 = vunpack.c.l.b16 %v360
  %v2377 = vunpack.c.h.b16 %v360
  %v2378 = vunpack.c.l.b16 %v361
  %v2379 = vunpack.c.h.b16 %v361
  %v2380 = vunpack.c.l.b16 %v362
  %v2381 = vunpack.c.h.b16 %v362
  %v2382 = vunpack.c.l.b16 %v363
  %v2383 = vunpack.c.h.b16 %v363
  %v2384 = vunpack.c.l.b16 %v364
  %v2385 = vunpack.c.h.b16 %v364
  %v2386 = vunpack.c.l.b16 %v365
  %v2387 = vunpack.c.h.b16 %v365
  %v2388 = vunpack.c.l.b16 %v366
  %v2389 = vunpack.c.h.b16 %v366
  %v2390 = vunpack.c.l.b16 %v367
  %v2391 = vunpack.c.h.b16 %v367
  %v2392 = vunpack.c.l.b16 %v368
  %v2393 = vunpack.c.h.b16 %v368
  %v2394 = vunpack.c.l.b16 %v369
  %v2395 = vunpack.c.h.b16 %v369
  %v2396 = vunpack.c.l.b16 %v370
  %v2397 = vunpack.c.h.b16 %v370
  %v2398 = vunpack.c.l.b16 %v371
  %v2399 = vunpack.c.h.b16 %v371
  %v2400 = vunpack.c.l.b16 %v372
  %v2401 = vunpack.c.h.b16 %v372
  %v2402 = vunpack.c.l.b16 %v373
  %v2403 = vunpack.c.h.b16 %v373
  %v2404 = vunpack.c.l.b16 %v374
  %v2405 = vunpack.c.h.b16 %v374
  %v2406 = vunpack.c.l.b16 %v375
  %v2407 = vunpack.c.h.b16 %v375
  %v2408 = vunpack.c.l.b16 %v376
  %v2409 = vunpack.c.h.b16 %v376
  %v2410 = vunpack.c.l.b16 %v377
  %v2411 = vunpack.c.h.b16 %v377
  %v2412 = vunpack.c.l.b16 %v378
  %v2413 = vunpack.c.h.b16 %v378
  %v2414 = vunpack.c.l.b16 %v379
  %v2415 = vunpack.c.h.b16 %v379
  %v2416 = vunpack.c.l.b16 %v380
  %v2417 = vunpack.c.h.b16 %v380
  %v2418 = vunpack.c.l.b16 %v381
  %v2419 = vunpack.c.h.b16 %v381
  %v2420 = vunpack.c.l.b16 %v382
  %v2421 = vunpack.c.h.b16 %v382
  %v2422 = vunpack.c.l.b16 %v383
  %v2423 = vunpack.c.h.b16 %v383
  %v2424 = vunpack.c.l.b16 %v384
  %v2425 = vunpack.c.h.b16 %v384
  %v2426 = vunpack.c.l.b16 %v385
  %v2427 = vunpack.c.h.b16 %v385
  %v2428 = vunpack.c.l.b16 %v386
  %v2429 = vunpack.c.h.b16 %v386
  %v2430 = vunpack.c.l.b16 %v387
  %v2431 = vunpack.c.h.b16 %v387
  %v2432 = vunpack.c.l.b16 %v388
  %v2433 = vunpack.c.h.b16 %v388
  %v2434 = vunpack.c.l.b16 %v389
  %v2435 = vunpack.c.h.b16 %v389
  %v2436 = vunpack.c.l.b16 %v390
  %v2437 = vunpack.c.h.b16 %v390
  %v2438 = vunpack.c.l.b16 %v391
  %v2439 = vunpack.c.h.b16 %v391
  %v2440 = vunpack.c.l.b16 %v392
  %v2441 = vunpack.c.h.b16 %v392
  %v2442 = vunpack.c.l.b16 %v393
  %v2443 = vunpack.c.h.b16 %v393
  %v2444 = vunpack.c.l.b16 %v394
  %v2445 = vunpack.c.h.b16 %v394
  %v2446 = vunpack.c.l.b16 %v395
  %v2447 = vunpack.c.h.b16 %v395
  %v2448 = vunpack.c.l.b16 %v396
  %v2449 = vunpack.c.h.b16 %v396
  %v2450 = vunpack.c.l.b16 %v397
  %v2451 = vunpack.c.h.b16 %v397
  %v2452 = vunpack.c.l.b16 %v398
  %v2453 = vunpack.c.h.b16 %v398
  %v2454 = vunpack.c.l.b16 %v399
  %v2455 = vunpack.c.h.b16 %v399
  %v2456 = vunpack.c.l.b16 %v400
  %v2457 = vunpack.c.h.b16 %v400
  %v2458 = vunpack.c.l.b16 %v401
  %v2459 = vunpack.c.h.b16 %v401
  %v2460 = vunpack.c.l.b16 %v402
  %v2461 = vunpack.c.h.b16 %v402
  %v2462 = vunpack.c.l.b16 %v403
  %v2463 = vunpack.c.h.b16 %v403
  %v2464 = vunpack.c.l.b16 %v404
  %v2465 = vunpack.c.h.b16 %v404
  %v2466 = vunpack.c.l.b16 %v405
  %v2467 = vunpack.c.h.b16 %v405
  %v2468 = vunpack.c.l.b16 %v406
  %v2469 = vunpack.c.h.b16 %v406
  %v2470 = vunpack.c.l.b16 %v407
  %v2471 = vunpack.c.h.b16 %v407
  %v2472 = vunpack.c.l.b16 %v408
  %v2473 = vunpack.c.h.b16 %v408
  %v2474 = vunpack.c.l.b16 %v409
  %v2475 = vunpack.c.h.b16 %v409
  %v2476 = vunpack.c.l.b16 %v410
  %v2477 = vunpack.c.h.b16 %v410
  %v2478 = vunpack.c.l.b16 %v411
  %v2479 = vunpack.c.h.b16 %v411
  %v2480 = vunpack.c.l.b16 %v412
  %v2481 = vunpack.c.h.b16 %v412
  %v2482 = vunpack.c.l.b16 %v413
  %v2483 = vunpack.c.h.b16 %v413
  %v2484 = vunpack.c.l.b16 %v414
  %v2485 = vunpack.c.h.b16 %v414
  %v2486 = vunpack.c.l.b16 %v415
  %v2487 = vunpack.c.h.b16 %v415
  %v2488 = vunpack.c.l.b16 %v416
  %v2489 = vunpack.c.h.b16 %v416
  %v2490 = vunpack.c.l.b16 %v417
  %v2491 = vunpack.c.h.b16 %v417
  %v2492 = vunpack.c.l.b16 %v418
  %v2493 = vunpack.c.h.b16 %v418
  %v2494 = vunpack.c.l.b16 %v419
  %v2495 = vunpack.c.h.b16 %v419
  %v2496 = vunpack.c.l.b16 %v420
  %v2497 = vunpack.c.h.b16 %v420
  %v2498 = vunpack.c.l.b16 %v421
  %v2499 = vunpack.c.h.b16 %v421
  %v2500 = vunpack.c.l.b16 %v422
  %v2501 = vunpack.c.h.b16 %v422
  %v2502 = vunpack.c.l.b16 %v423
  %v2503 = vunpack.c.h.b16 %v423
  %v2504 = vunpack.c.l.b16 %v424
  %v2505 = vunpack.c.h.b16 %v424
  %v2506 = vunpack.c.l.b16 %v425
  %v2507 = vunpack.c.h.b16 %v425
  %v2508 = vunpack.c.l.b16 %v426
  %v2509 = vunpack.c.h.b16 %v426
  %v2510 = vunpack.c.l.b16 %v427
  %v2511 = vunpack.c.h.b16 %v427
  %v2512 = vunpack.c.l.b16 %v428
  %v2513 = vunpack.c.h.b16 %v428
  %v2514 = vunpack.c.l.b16 %v429
  %v2515 = vunpack.c.h.b16 %v429
  %v2516 = vunpack.c.l.b16 %v430
  %v2517 = vunpack.c.h.b16 %v430
  %v2518 = vunpack.c.l.b16 %v431
  %v2519 = vunpack.c.h.b16 %v431
  %v2520 = vunpack.c.l.b16 %v432
  %v2521 = vunpack.c.h.b16 %v432
  %v2522 = vunpack.c.l.b16 %v433
  %v2523 = vunpack.c.h.b16 %v433
  %v2524 = vunpack.c.l.b16 %v434
  %v2525 = vunpack.c.h.b16 %v434
  %v2526 = vunpack.c.l.b16 %v435
  %v2527 = vunpack.c.h.b16 %v435
  %v2528 = vunpack.c.l.b16 %v436
  %v2529 = vunpack.c.h.b16 %v436
  %v2530 = vunpack.c.l.b16 %v437
  %v2531 = vunpack.c.h.b16 %v437
  %v2532 = vunpack.c.l.b16 %v438
  %v2533 = vunpack.c.h.b16 %v438
  %v2534 = vunpack.c.l.b16 %v439
  %v2535 = vunpack.c.h.b16 %v439
  %v2536 = vunpack.c.l.b16 %v440
  %v2537 = vunpack.c.h.b16 %v440
  %v2538 = vunpack.c.l.b16 %v441
  %v2539 = vunpack.c.h.b16 %v441
  %v2540 = vunpack.c.l.b16 %v442
  %v2541 = vunpack.c.h.b16 %v442
  %v2542 = vunpack.c.l.b16 %v443
  %v2543 = vunpack.c.h.b16 %v443
  %v2544 = vunpack.c.l.b16 %v444
  %v2545 = vunpack.c.h.b16 %v444
  %v2546 = vunpack.c.l.b16 %v445
  %v2547 = vunpack.c.h.b16 %v445
  %v2548 = vunpack.c.l.b16 %v446
  %v2549 = vunpack.c.h.b16 %v446
  %v2550 = vunpack.c.l.b16 %v447
  %v2551 = vunpack.c.h.b16 %v447
  %v2552 = vunpack.c.l.b16 %v448
  %v2553 = vunpack.c.h.b16 %v448
  %v2554 = vunpack.c.l.b16 %v449
  %v2555 = vunpack.c.h.b16 %v449
  %v2556 = vunpack.c.l.b16 %v450
  %v2557 = vunpack.c.h.b16 %v450
  %v2558 = vunpack.c.l.b16 %v451
  %v2559 = vunpack.c.h.b16 %v451
  %v2560 = vunpack.c.l.b16 %v452
  %v2561 = vunpack.c.h.b16 %v452
  %v2562 = vunpack.c.l.b16 %v453
  %v2563 = vunpack.c.h.b16 %v453
  %v2564 = vunpack.c.l.b16 %v454
  %v2565 = vunpack.c.h.b16 %v454
  %v2566 = vunpack.c.l.b16 %v455
  %v2567 = vunpack.c.h.b16 %v455
  %v2568 = vunpack.c.l.b16 %v456
  %v2569 = vunpack.c.h.b16 %v456
  %v2570 = vunpack.c.l.b16 %v457
  %v2571 = vunpack.c.h.b16 %v457
  %v2572 = vunpack.c.l.b16 %v458
  %v2573 = vunpack.c.h.b16 %v458
  %v2574 = vunpack.c.l.b16 %v459
  %v2575 = vunpack.c.h.b16 %v459
  %v2576 = vunpack.c.l.b16 %v460
  %v2577 = vunpack.c.h.b16 %v460
  %v2578 = vunpack.c.l.b16 %v461
  %v2579 = vunpack.c.h.b16 %v461
  %v2580 = vunpack.c.l.b16 %v462
  %v2581 = vunpack.c.h.b16 %v462
  %v2582 = vunpack.c.l.b16 %v463
  %v2583 = vunpack.c.h.b16 %v463
  %v2584 = vunpack.c.l.b16 %v464
  %v2585 = vunpack.c.h.b16 %v464
  %v2586 = vunpack.c.l.b16 %v465
  %v2587 = vunpack.c.h.b16 %v465
  %v2588 = vunpack.c.l.b16 %v466
  %v2589 = vunpack.c.h.b16 %v466
  %v2590 = vunpack.c.l.b16 %v467
  %v2591 = vunpack.c.h.b16 %v467
  %v2592 = vunpack.c.l.b16 %v468
  %v2593 = vunpack.c.h.b16 %v468
  %v2594 = vunpack.c.l.b16 %v469
  %v2595 = vunpack.c.h.b16 %v469
  %v2596 = vunpack.c.l.b16 %v470
  %v2597 = vunpack.c.h.b16 %v470
  %v2598 = vunpack.c.l.b16 %v471
  %v2599 = vunpack.c.h.b16 %v471
  %v2600 = vunpack.c.l.b16 %v472
  %v2601 = vunpack.c.h.b16 %v472
  %v2602 = vunpack.c.l.b16 %v473
  %v2603 = vunpack.c.h.b16 %v473
  %v2604 = vunpack.c.l.b16 %v474
  %v2605 = vunpack.c.h.b16 %v474
  %v2606 = vunpack.c.l.b16 %v475
  %v2607 = vunpack.c.h.b16 %v475
  %v2608 = vunpack.c.l.b16 %v476
  %v2609 = vunpack.c.h.b16 %v476
  %v2610 = vunpack.c.l.b16 %v477
  %v2611 = vunpack.c.h.b16 %v477
  %v2612 = vunpack.c.l.b16 %v478
  %v2613 = vunpack.c.h.b16 %v478
  %v2614 = vunpack.c.l.b16 %v479
  %v2615 = vunpack.c.h.b16 %v479
  %v2616 = vunpack.c.l.b16 %v480
  %v2617 = vunpack.c.h.b16 %v480
  %v2618 = vunpack.c.l.b16 %v481
  %v2619 = vunpack.c.h.b16 %v481
  %v2620 = vunpack.c.l.b16 %v482
  %v2621 = vunpack.c.h.b16 %v482
  %v2622 = vunpack.c.l.b16 %v483
  %v2623 = vunpack.c.h.b16 %v483
  %v2624 = vunpack.c.l.b16 %v484
  %v2625 = vunpack.c.h.b16 %v484
  %v2626 = vunpack.c.l.b16 %v485
  %v2627 = vunpack.c.h.b16 %v485
  %v2628 = vunpack.c.l.b16 %v486
  %v2629 = vunpack.c.h.b16 %v486
  %v2630 = vunpack.c.l.b16 %v487
  %v2631 = vunpack.c.h.b16 %v487
  %v2632 = vunpack.c.l.b16 %v488
  %v2633 = vunpack.c.h.b16 %v488
  %v2634 = vunpack.c.l.b16 %v489
  %v2635 = vunpack.c.h.b16 %v489
  %v2636 = vunpack.c.l.b16 %v490
  %v2637 = vunpack.c.h.b16 %v490
  %v2638 = vunpack.c.l.b16 %v491
  %v2639 = vunpack.c.h.b16 %v491
  %v2640 = vunpack.c.l.b16 %v492
  %v2641 = vunpack.c.h.b16 %v492
  %v2642 = vunpack.c.l.b16 %v493
  %v2643 = vunpack.c.h.b16 %v493
  %v2644 = vunpack.c.l.b16 %v494
  %v2645 = vunpack.c.h.b16 %v494
  %v2646 = vunpack.c.l.b16 %v495
  %v2647 = vunpack.c.h.b16 %v495
  %v2648 = vunpack.c.l.b16 %v496
  %v2649 = vunpack.c.h.b16 %v496
  %v2650 = vunpack.c.l.b16 %v497
  %v2651 = vunpack.c.h.b16 %v497
  %v2652 = vunpack.c.l.b16 %v498
  %v2653 = vunpack.c.h.b16 %v498
  %v2654 = vunpack.c.l.b16 %v499
  %v2655 = vunpack.c.h.b16 %v499
  %v2656 = vunpack.c.l.b16 %v500
  %v2657 = vunpack.c.h.b16 %v500
  %v2658 = vunpack.c.l.b16 %v501
  %v2659 = vunpack.c.h.b16 %v501
  %v2660 = vunpack.c.l.b16 %v502
  %v2661 = vunpack.c.h.b16 %v502
  %v2662 = vunpack.c.l.b16 %v503
  %v2663 = vunpack.c.h.b16 %v503
  %v2664 = vunpack.c.l.b16 %v504
  %v2665 = vunpack.c.h.b16 %v504
  %v2666 = vunpack.c.l.b16 %v505
  %v2667 = vunpack.c.h.b16 %v505
  %v2668 = vunpack.c.l.b16 %v506
  %v2669 = vunpack.c.h.b16 %v506
  %v2670 = vunpack.c.l.b16 %v507
  %v2671 = vunpack.c.h.b16 %v507
  %v2672 = vunpack.c.l.b16 %v508
  %v2673 = vunpack.c.h.b16 %v508
  %v2674 = vunpack.c.l.b16 %v509
  %v2675 = vunpack.c.h.b16 %v509
  %v2676 = vunpack.c.l.b16 %v510
  %v2677 = vunpack.c.h.b16 %v510
  %v2678 = vunpack.c.l.b16 %v511
  %v2679 = vunpack.c.h.b16 %v511
  %v2680 = vunpack.c.l.b16 %v512
  %v2681 = vunpack.c.h.b16 %v512
  %v2682 = vunpack.c.l.b16 %v513
  %v2683 = vunpack.c.h.b16 %v513
  %v2684 = vunpack.c.l.b16 %v514
  %v2685 = vunpack.c.h.b16 %v514
  %v2686 = vunpack.c.l.b16 %v515
  %v2687 = vunpack.c.h.b16 %v515
  %v2688 = vunpack.c.l.b16 %v516
  %v2689 = vunpack.c.h.b16 %v516
  %v2690 = vunpack.c.l.b16 %v517
  %v2691 = vunpack.c.h.b16 %v517
  %v2692 = vunpack.c.l.b16 %v518
  %v2693 = vunpack.c.h.b16 %v518
  %v2694 = vunpack.c.l.b16 %v519
  %v2695 = vunpack.c.h.b16 %v519
  %v2696 = vunpack.c.l.b16 %v520
  %v2697 = vunpack.c.h.b16 %v520
  %v2698 = vunpack.c.l.b16 %v521
  %v2699 = vunpack.c.h.b16 %v521
  %v2700 = vunpack.c.l.b16 %v522
  %v2701 = vunpack.c.h.b16 %v522
  %v2702 = vunpack.c.l.b16 %v523
  %v2703 = vunpack.c.h.b16 %v523
  %v2704 = vunpack.c.l.b16 %v524
  %v2705 = vunpack.c.h.b16 %v524
  %v2706 = vunpack.c.l.b16 %v525
  %v2707 = vunpack.c.h.b16 %v525
  %v2708 = vunpack.c.l.b16 %v526
  %v2709 = vunpack.c.h.b16 %v526
  %v2710 = vunpack.c.l.b16 %v527
  %v2711 = vunpack.c.h.b16 %v527
  %v2712 = vunpack.c.l.b16 %v528
  %v2713 = vunpack.c.h.b16 %v528
  %v2714 = vunpack.c.l.b16 %v529
  %v2715 = vunpack.c.h.b16 %v529
  %v2716 = vunpack.c.l.b16 %v530
  %v2717 = vunpack.c.h.b16 %v530
  %v2718 = vunpack.c.l.b16 %v531
  %v2719 = vunpack.c.h.b16 %v531
  %v2720 = vunpack.c.l.b16 %v532
  %v2721 = vunpack.c.h.b16 %v532
  %v2722 = vunpack.c.l.b16 %v533
  %v2723 = vunpack.c.h.b16 %v533
  %v2724 = vunpack.c.l.b16 %v534
  %v2725 = vunpack.c.h.b16 %v534
  %v2726 = vunpack.c.l.b16 %v535
  %v2727 = vunpack.c.h.b16 %v535
  %v2728 = vunpack.c.l.b16 %v536
  %v2729 = vunpack.c.h.b16 %v536
  %v2730 = vunpack.c.l.b16 %v537
  %v2731 = vunpack.c.h.b16 %v537
  %v2732 = vunpack.c.l.b16 %v538
  %v2733 = vunpack.c.h.b16 %v538
  %v2734 = vunpack.c.l.b16 %v539
  %v2735 = vunpack.c.h.b16 %v539
  %v2736 = vunpack.c.l.b16 %v540
  %v2737 = vunpack.c.h.b16 %v540
  %v2738 = vunpack.c.l.b16 %v541
  %v2739 = vunpack.c.h.b16 %v541
  %v2740 = vunpack.c.l.b16 %v542
  %v2741 = vunpack.c.h.b16 %v542
  %v2742 = vunpack.c.l.b16 %v543
  %v2743 = vunpack.c.h.b16 %v543
  %v2744 = vunpack.c.l.b16 %v544
  %v2745 = vunpack.c.h.b16 %v544
  %v2746 = vunpack.c.l.b16 %v545
  %v2747 = vunpack.c.h.b16 %v545
  %v2748 = vunpack.c.l.b16 %v546
  %v2749 = vunpack.c.h.b16 %v546
  %v2750 = vunpack.c.l.b16 %v547
  %v2751 = vunpack.c.h.b16 %v547
  %v2752 = vunpack.c.l.b16 %v548
  %v2753 = vunpack.c.h.b16 %v548
  %v2754 = vunpack.c.l.b16 %v549
  %v2755 = vunpack.c.h.b16 %v549
  %v2756 = vunpack.c.l.b16 %v550
  %v2757 = vunpack.c.h.b16 %v550
  %v2758 = vunpack.c.l.b16 %v551
  %v2759 = vunpack.c.h.b16 %v551
  %v2760 = vunpack.c.l.b16 %v552
  %v2761 = vunpack.c.h.b16 %v552
  %v2762 = vunpack.c.l.b16 %v553
  %v2763 = vunpack.c.h.b16 %v553
  %v2764 = vunpack.c.l.b16 %v554
  %v2765 = vunpack.c.h.b16 %v554
  %v2766 = vunpack.c.l.b16 %v555
  %v2767 = vunpack.c.h.b16 %v555
  %v2768 = vunpack.c.l.b16 %v556
  %v2769 = vunpack.c.h.b16 %v556
  %v2770 = vunpack.c.l.b16 %v557
  %v2771 = vunpack.c.h.b16 %v557
  %v2772 = vunpack.c.l.b16 %v558
  %v2773 = vunpack.c.h.b16 %v558
  %v2774 = vunpack.c.l.b16 %v559
  %v2775 = vunpack.c.h.b16 %v559
  %v2776 = vunpack.c.l.b16 %v560
  %v2777 = vunpack.c.h.b16 %v560
  %v2778 = vunpack.c.l.b16 %v561
  %v2779 = vunpack.c.h.b16 %v561
  %v2780 = vunpack.c.l.b16 %v562
  %v2781 = vunpack.c.h.b16 %v562
  %v2782 = vunpack.c.l.b16 %v563
  %v2783 = vunpack.c.h.b16 %v563
  %v2784 = vunpack.c.l.b16 %v564
  %v2785 = vunpack.c.h.b16 %v564
  %v2786 = vunpack.c.l.b16 %v565
  %v2787 = vunpack.c.h.b16 %v565
  %v2788 = vunpack.c.l.b16 %v566
  %v2789 = vunpack.c.h.b16 %v566
  %v2790 = vunpack.c.l.b16 %v567
  %v2791 = vunpack.c.h.b16 %v567
  %v2792 = vunpack.c.l.b16 %v568
  %v2793 = vunpack.c.h.b16 %v568
  %v2794 = vunpack.c.l.b16 %v569
  %v2795 = vunpack.c.h.b16 %v569
  %v2796 = vunpack.c.l.b16 %v570
  %v2797 = vunpack.c.h.b16 %v570
  %v2798 = vunpack.c.l.b16 %v571
  %v2799 = vunpack.c.h.b16 %v571
  %v2800 = vunpack.c.l.b16 %v572
  %v2801 = vunpack.c.h.b16 %v572
  %v2802 = vunpack.c.l.b16 %v573
  %v2803 = vunpack.c.h.b16 %v573
  %v2804 = vunpack.c.l.b16 %v574
  %v2805 = vunpack.c.h.b16 %v574
  %v2806 = vunpack.c.l.b16 %v575
  %v2807 = vunpack.c.h.b16 %v575
  %v2808 = vunpack.c.l.b16 %v576
  %v2809 = vunpack.c.h.b16 %v576
  %v2810 = vunpack.c.l.b16 %v577
  %v2811 = vunpack.c.h.b16 %v577
  %v2812 = vunpack.c.l.b16 %v578
  %v2813 = vunpack.c.h.b16 %v578
  %v2814 = vunpack.c.l.b16 %v579
  %v2815 = vunpack.c.h.b16 %v579
  %v2816 = vunpack.c.l.b16 %v580
  %v2817 = vunpack.c.h.b16 %v580
  %v2818 = vunpack.c.l.b16 %v581
  %v2819 = vunpack.c.h.b16 %v581
  %v2820 = vunpack.c.l.b16 %v582
  %v2821 = vunpack.c.h.b16 %v582
  %v2822 = vunpack.c.l.b16 %v583
  %v2823 = vunpack.c.h.b16 %v583
  %v2824 = vunpack.c.l.b16 %v584
  %v2825 = vunpack.c.h.b16 %v584
  %v2826 = vunpack.c.l.b16 %v585
  %v2827 = vunpack.c.h.b16 %v585
  %v2828 = vunpack.c.l.b16 %v586
  %v2829 = vunpack.c.h.b16 %v586
  %v2830 = vunpack.c.l.b16 %v587
  %v2831 = vunpack.c.h.b16 %v587
  %v2832 = vunpack.c.l.b16 %v588
  %v2833 = vunpack.c.h.b16 %v588
  %v2834 = vunpack.c.l.b16 %v589
  %v2835 = vunpack.c.h.b16 %v589
  %v2836 = vunpack.c.l.b16 %v590
  %v2837 = vunpack.c.h.b16 %v590
  %v2838 = vunpack.c.l.b16 %v591
  %v2839 = vunpack.c.h.b16 %v591
  %v2840 = vunpack.c.l.b16 %v592
  %v2841 = vunpack.c.h.b16 %v592
  %v2842 = vunpack.c.l.b16 %v593
  %v2843 = vunpack.c.h.b16 %v593
  %v2844 = vunpack.c.l.b16 %v594
  %v2845 = vunpack.c.h.b16 %v594
  %v2846 = vunpack.c.l.b16 %v595
  %v2847 = vunpack.c.h.b16 %v595
  %v2848 = vunpack.c.l.b16 %v596
  %v2849 = vunpack.c.h.b16 %v596
  %v2850 = vunpack.c.l.b16 %v597
  %v2851 = vunpack.c.h.b16 %v597
  %v2852 = vunpack.c.l.b16 %v598
  %v2853 = vunpack.c.h.b16 %v598
  %v2854 = vunpack.c.l.b16 %v599
  %v2855 = vunpack.c.h.b16 %v599
  %v2856 = vunpack.c.l.b16 %v600
  %v2857 = vunpack.c.h.b16 %v600
  %v2858 = vunpack.c.l.b16 %v601
  %v2859 = vunpack.c.h.b16 %v601
  %v2860 = vunpack.c.l.b16 %v602
  %v2861 = vunpack.c.h.b16 %v602
  %v2862 = vunpack.c.l.b16 %v603
  %v2863 = vunpack.c.h.b16 %v603
  %v2864 = vunpack.c.l.b16 %v604
  %v2865 = vunpack.c.h.b16 %v604
  %v2866 = vunpack.c.l.b16 %v605
  %v2867 = vunpack.c.h.b16 %v605
  %v2868 = vunpack.c.l.b16 %v606
  %v2869 = vunpack.c.h.b16 %v606
  %v2870 = vunpack.c.l.b16 %v607
  %v2871 = vunpack.c.h.b16 %v607
  %v2872 = vunpack.c.l.b16 %v608
  %v2873 = vunpack.c.h.b16 %v608
  %v2874 = vunpack.c.l.b16 %v609
  %v2875 = vunpack.c.h.b16 %v609
  %v2876 = vunpack.c.l.b16 %v610
  %v2877 = vunpack.c.h.b16 %v610
  %v2878 = vunpack.c.l.b16 %v611
  %v2879 = vunpack.c.h.b16 %v611
  %v2880 = vunpack.c.l.b16 %v612
  %v2881 = vunpack.c.h.b16 %v612
  %v2882 = vunpack.c.l.b16 %v613
  %v2883 = vunpack.c.h.b16 %v613
  %v2884 = vunpack.c.l.b16 %v614
  %v2885 = vunpack.c.h.b16 %v614
  %v2886 = vunpack.c.l.b16 %v615
  %v2887 = vunpack.c.h.b16 %v615
  %v2888 = vunpack.c.l.b16 %v616
  %v2889 = vunpack.c.h.b16 %v616
  %v2890 = vunpack.c.l.b16 %v617
  %v2891 = vunpack.c.h.b16 %v617
  %v2892 = vunpack.c.l.b16 %v618
  %v2893 = vunpack.c.h.b16 %v618
  %v2894 = vunpack.c.l.b16 %v619
  %v2895 = vunpack.c.h.b16 %v619
  %v2896 = vunpack.c.l.b16 %v620
  %v2897 = vunpack.c.h.b16 %v620
  %v2898 = vunpack.c.l.b16 %v621
  %v2899 = vunpack.c.h.b16 %v621
  %v2900 = vunpack.c.l.b16 %v622
  %v2901 = vunpack.c.h.b16 %v622
  %v2902 = vunpack.c.l.b16 %v623
  %v2903 = vunpack.c.h.b16 %v623
  %v2904 = vunpack.c.l.b16 %v624
  %v2905 = vunpack.c.h.b16 %v624
  %v2906 = vunpack.c.l.b16 %v625
  %v2907 = vunpack.c.h.b16 %v625
  %v2908 = vunpack.c.l.b16 %v626
  %v2909 = vunpack.c.h.b16 %v626
  %v2910 = vunpack.c.l.b16 %v627
  %v2911 = vunpack.c.h.b16 %v627
  %v2912 = vunpack.c.l.b16 %v628
  %v2913 = vunpack.c.h.b16 %v628
  %v2914 = vunpack.c.l.b16 %v629
  %v2915 = vunpack.c.h.b16 %v629
  %v2916 = vunpack.c.l.b16 %v630
  %v2917 = vunpack.c.h.b16 %v630
  %v2918 = vunpack.c.l.b16 %v631
  %v2919 = vunpack.c.h.b16 %v631
  %v2920 = vunpack.c.l.b16 %v632
  %v2921 = vunpack.c.h.b16 %v632
  %v2922 = vunpack.c.l.b16 %v633
  %v2923 = vunpack.c.h.b16 %v633
  %v2924 = vunpack.c.l.b16 %v634
  %v2925 = vunpack.c.h.b16 %v634
  %v2926 = vunpack.c.l.b16 %v635
  %v2927 = vunpack.c.h.b16 %v635
  %v2928 = vunpack.c.l.b16 %v636
  %v2929 = vunpack.c.h.b16 %v636
  %v2930 = vunpack.c.l.b16 %v637
  %v2931 = vunpack.c.h.b16 %v637
  %v2932 = vunpack.c.l.b16 %v638
  %v2933 = vunpack.c.h.b16 %v638
  %v2934 = vunpack.c.l.b16 %v639
  %v2935 = vunpack.c.h.b16 %v639
  %v2936 = vunpack.c.l.b16 %v640
  %v2937 = vunpack.c.h.b16 %v640
  %v2938 = vunpack.c.l.b16 %v641
  %v2939 = vunpack.c.h.b16 %v641
  %v2940 = vunpack.c.l.b16 %v642
  %v2941 = vunpack.c.h.b16 %v642
  %v2942 = vunpack.c.l.b16 %v643
  %v2943 = vunpack.c.h.b16 %v643
  %v2944 = vunpack.c.l.b16 %v644
  %v2945 = vunpack.c.h.b16 %v644
  %v2946 = vunpack.c.l.b16 %v645
  %v2947 = vunpack.c.h.b16 %v645
  %v2948 = vunpack.c.l.b16 %v646
  %v2949 = vunpack.c.h.b16 %v646
  %v2950 = vunpack.c.l.b16 %v647
  %v2951 = vunpack.c.h.b16 %v647
  %v2952 = vunpack.c.l.b16 %v648
  %v2953 = vunpack.c.h.b16 %v648
  %v2954 = vunpack.c.l.b16 %v649
  %v2955 = vunpack.c.h.b16 %v649
  %v2956 = vunpack.c.l.b16 %v650
  %v2957 = vunpack.c.h.b16 %v650
  %v2958 = vunpack.c.l.b16 %v651
  %v2959 = vunpack.c.h.b16 %v651
  %v2960 = vunpack.c.l.b16 %v652
  %v2961 = vunpack.c.h.b16 %v652
  %v2962 = vunpack.c.l.b16 %v653
  %v2963 = vunpack.c.h.b16 %v653
  %v2964 = vunpack.c.l.b16 %v654
  %v2965 = vunpack.c.h.b16 %v654
  %v2966 = vunpack.c.l.b16 %v655
  %v2967 = vunpack.c.h.b16 %v655
  %v2968 = vunpack.c.l.b16 %v656
  %v2969 = vunpack.c.h.b16 %v656
  %v2970 = vunpack.c.l.b16 %v657
  %v2971 = vunpack.c.h.b16 %v657
  %v2972 = vunpack.c.l.b16 %v658
  %v2973 = vunpack.c.h.b16 %v658
  %v2974 = vunpack.c.l.b16 %v659
  %v2975 = vunpack.c.h.b16 %v659
  %v2976 = vunpack.c.l.b16 %v660
  %v2977 = vunpack.c.h.b16 %v660
  %v2978 = vunpack.c.l.b16 %v661
  %v2979 = vunpack.c.h.b16 %v661
  %v2980 = vunpack.c.l.b16 %v662
  %v2981 = vunpack.c.h.b16 %v662
  %v2982 = vunpack.c.l.b16 %v663
  %v2983 = vunpack.c.h.b16 %v663
  %v2984 = vunpack.c.l.b16 %v664
  %v2985 = vunpack.c.h.b16 %v664
  %v2986 = vunpack.c.l.b16 %v665
  %v2987 = vunpack.c.h.b16 %v665
  %v2988 = vunpack.c.l.b16 %v666
  %v2989 = vunpack.c.h.b16 %v666
  %v2990 = vunpack.c.l.b16 %v667
  %v2991 = vunpack.c.h.b16 %v667
  %v2992 = vunpack.c.l.b16 %v668
  %v2993 = vunpack.c.h.b16 %v668
  %v2994 = vunpack.c.l.b16 %v669
  %v2995 = vunpack.c.h.b16 %v669
  %v2996 = vunpack.c.l.b16 %v670
  %v2997 = vunpack.c.h.b16 %v670
  %v2998 = vunpack.c.l.b16 %v671
  %v2999 = vunpack.c.h.b16 %v671
  %v3000 = vunpack.c.l.b16 %v672
  %v3001 = vunpack.c.h.b16 %v672
  %v3002 = vunpack.c.l.b16 %v673
  %v3003 = vunpack.c.h.b16 %v673
  %v3004 = vunpack.c.l.b16 %v674
  %v3005 = vunpack.c.h.b16 %v674
  %v3006 = vunpack.c.l.b16 %v675
  %v3007 = vunpack.c.h.b16 %v675
  %v3008 = vunpack.c.l.b16 %v676
  %v3009 = vunpack.c.h.b16 %v676
  %v3010 = vunpack.c.l.b16 %v677
  %v3011 = vunpack.c.h.b16 %v677
  %v3012 = vunpack.c.l.b16 %v678
  %v3013 = vunpack.c.h.b16 %v678
  %v3014 = vunpack.c.l.b16 %v679
  %v3015 = vunpack.c.h.b16 %v679
  %v3016 = vunpack.c.l.b16 %v680
  %v3017 = vunpack.c.h.b16 %v680
  %v3018 = vunpack.c.l.b16 %v681
  %v3019 = vunpack.c.h.b16 %v681
  %v3020 = vunpack.c.l.b16 %v682
  %v3021 = vunpack.c.h.b16 %v682
  %v3022 = vunpack.c.l.b16 %v683
  %v3023 = vunpack.c.h.b16 %v683
  %v3024 = vunpack.c.l.b16 %v684
  %v3025 = vunpack.c.h.b16 %v684
  %v3026 = vunpack.c.l.b16 %v685
  %v3027 = vunpack.c.h.b16 %v685
  %v3028 = vunpack.c.l.b16 %v686
  %v3029 = vunpack.c.h.b16 %v686
  %v3030 = vunpack.c.l.b16 %v687
  %v3031 = vunpack.c.h.b16 %v687
  %v3032 = vunpack.c.l.b16 %v688
  %v3033 = vunpack.c.h.b16 %v688
  %v3034 = vunpack.c.l.b16 %v689
  %v3035 = vunpack.c.h.b16 %v689
  %v3036 = vunpack.c.l.b16 %v690
  %v3037 = vunpack.c.h.b16 %v690
  %v3038 = vunpack.c.l.b16 %v691
  %v3039 = vunpack.c.h.b16 %v691
  %v3040 = vunpack.c.l.b16 %v692
  %v3041 = vunpack.c.h.b16 %v692
  %v3042 = vunpack.c.l.b16 %v693
  %v3043 = vunpack.c.h.b16 %v693
  %v3044 = vunpack.c.l.b16 %v694
  %v3045 = vunpack.c.h.b16 %v694
  %v3046 = vunpack.c.l.b16 %v695
  %v3047 = vunpack.c.h.b16 %v695
  %v3048 = vunpack.c.l.b16 %v696
  %v3049 = vunpack.c.h.b16 %v696
  %v3050 = vunpack.c.l.b16 %v697
  %v3051 = vunpack.c.h.b16 %v697
  %v3052 = vunpack.c.l.b16 %v698
  %v3053 = vunpack.c.h.b16 %v698
  %v3054 = vunpack.c.l.b16 %v699
  %v3055 = vunpack.c.h.b16 %v699
  %v3056 = vunpack.c.l.b16 %v700
  %v3057 = vunpack.c.h.b16 %v700
  %v3058 = vunpack.c.l.b16 %v701
  %v3059 = vunpack.c.h.b16 %v701
  %v3060 = vunpack.c.l.b16 %v702
  %v3061 = vunpack.c.h.b16 %v702
  %v3062 = vunpack.c.l.b16 %v703
  %v3063 = vunpack.c.h.b16 %v703
  %v3064 = vunpack.c.l.b16 %v704
  %v3065 = vunpack.c.h.b16 %v704
  %v3066 = vunpack.c.l.b16 %v705
  %v3067 = vunpack.c.h.b16 %v705
  %v3068 = vunpack.c.l.b16 %v706
  %v3069 = vunpack.c.h.b16 %v706
  %v3070 = vunpack.c.l.b16 %v707
  %v3071 = vunpack.c.h.b16 %v707
  %v3072 = vunpack.c.l.b16 %v708
  %v3073 = vunpack.c.h.b16 %v708
  %v3074 = vunpack.c.l.b16 %v709
  %v3075 = vunpack.c.h.b16 %v709
  %v3076 = vunpack.c.l.b16 %v710
  %v3077 = vunpack.c.h.b16 %v710
  %v3078 = vunpack.c.l.b16 %v711
  %v3079 = vunpack.c.h.b16 %v711
  %v3080 = vunpack.c.l.b16 %v712
  %v3081 = vunpack.c.h.b16 %v712
  %v3082 = vunpack.c.l.b16 %v713
  %v3083 = vunpack.c.h.b16 %v713
  %v3084 = vunpack.c.l.b16 %v714
  %v3085 = vunpack.c.h.b16 %v714
  %v3086 = vunpack.c.l.b16 %v715
  %v3087 = vunpack.c.h.b16 %v715
  %v3088 = vunpack.c.l.b16 %v716
  %v3089 = vunpack.c.h.b16 %v716
  %v3090 = vunpack.c.l.b16 %v717
  %v3091 = vunpack.c.h.b16 %v717
  %v3092 = vunpack.c.l.b16 %v718
  %v3093 = vunpack.c.h.b16 %v718
  %v3094 = vunpack.c.l.b16 %v719
  %v3095 = vunpack.c.h.b16 %v719
  %v3096 = vunpack.c.l.b16 %v720
  %v3097 = vunpack.c.h.b16 %v720
  %v3098 = vunpack.c.l.b16 %v721
  %v3099 = vunpack.c.h.b16 %v721
  %v3100 = vunpack.c.l.b16 %v722
  %v3101 = vunpack.c.h.b16 %v722
  %v3102 = vunpack.c.l.b16 %v723
  %v3103 = vunpack.c.h.b16 %v723
  %v3104 = vunpack.c.l.b16 %v724
  %v3105 = vunpack.c.h.b16 %v724
  %v3106 = vunpack.c.l.b16 %v725
  %v3107 = vunpack.c.h.b16 %v725
  %v3108 = vunpack.c.l.b16 %v726
  %v3109 = vunpack.c.h.b16 %v726
  %v3110 = vunpack.c.l.b16 %v727
  %v3111 = vunpack.c.h.b16 %v727
  %v3112 = vunpack.c.l.b16 %v728
  %v3113 = vunpack.c.h.b16 %v728
  %v3114 = vunpack.c.l.b16 %v729
  %v3115 = vunpack.c.h.b16 %v729
  %v3116 = vunpack.c.l.b16 %v730
  %v3117 = vunpack.c.h.b16 %v730
  %v3118 = vunpack.c.l.b16 %v731
  %v3119 = vunpack.c.h.b16 %v731
  %v3120 = vunpack.c.l.b16 %v732
  %v3121 = vunpack.c.h.b16 %v732
  %v3122 = vunpack.c.l.b16 %v733
  %v3123 = vunpack.c.h.b16 %v733
  %v3124 = vunpack.c.l.b16 %v734
  %v3125 = vunpack.c.h.b16 %v734
  %v3126 = vunpack.c.l.b16 %v735
  %v3127 = vunpack.c.h.b16 %v735
  %v3128 = vunpack.c.l.b16 %v736
  %v3129 = vunpack.c.h.b16 %v736
  %v3130 = vunpack.c.l.b16 %v737
  %v3131 = vunpack.c.h.b16 %v737
  %v3132 = vunpack.c.l.b16 %v738
  %v3133 = vunpack.c.h.b16 %v738
  %v3134 = vunpack.c.l.b16 %v739
  %v3135 = vunpack.c.h.b16 %v739
  %v3136 = vunpack.c.l.b16 %v740
  %v3137 = vunpack.c.h.b16 %v740
  %v3138 = vunpack.c.l.b16 %v741
  %v3139 = vunpack.c.h.b16 %v741
  %v3140 = vunpack.c.l.b16 %v742
  %v3141 = vunpack.c.h.b16 %v742
  %v3142 = vunpack.c.l.b16 %v743
  %v3143 = vunpack.c.h.b16 %v743
  %v3144 = vunpack.c.l.b16 %v744
  %v3145 = vunpack.c.h.b16 %v744
  %v3146 = vunpack.c.l.b16 %v745
  %v3147 = vunpack.c.h.b16 %v745
  %v3148 = vunpack.c.l.b16 %v746
  %v3149 = vunpack.c.h.b16 %v746
  %v3150 = vunpack.c.l.b16 %v747
  %v3151 = vunpack.c.h.b16 %v747
  %v3152 = vunpack.c.l.b16 %v748
  %v3153 = vunpack.c.h.b16 %v748
  %v3154 = vunpack.c.l.b16 %v749
  %v3155 = vunpack.c.h.b16 %v749
  %v3156 = vunpack.c.l.b16 %v750
  %v3157 = vunpack.c.h.b16 %v750
  %v3158 = vunpack.c.l.b16 %v751
  %v3159 = vunpack.c.h.b16 %v751
  %v3160 = vunpack.c.l.b16 %v752
  %v3161 = vunpack.c.h.b16 %v752
  %v3162 = vunpack.c.l.b16 %v753
  %v3163 = vunpack.c.h.b16 %v753
  %v3164 = vunpack.c.l.b16 %v754
  %v3165 = vunpack.c.h.b16 %v754
  %v3166 = vunpack.c.l.b16 %v755
  %v3167 = vunpack.c.h.b16 %v755
  %v3168 = vunpack.c.l.b16 %v756
  %v3169 = vunpack.c.h.b16 %v756
  %v3170 = vunpack.c.l.b16 %v757
  %v3171 = vunpack.c.h.b16 %v757
  %v3172 = vunpack.c.l.b16 %v758
  %v3173 = vunpack.c.h.b16 %v758
  %v3174 = vunpack.c.l.b16 %v759
  %v3175 = vunpack.c.h.b16 %v759
  %v3176 = vunpack.c.l.b16 %v760
  %v3177 = vunpack.c.h.b16 %v760
  %v3178 = vunpack.c.l.b16 %v761
  %v3179 = vunpack.c.h.b16 %v761
  %v3180 = vunpack.c.l.b16 %v762
  %v3181 = vunpack.c.h.b16 %v762
  %v3182 = vunpack.c.l.b16 %v763
  %v3183 = vunpack.c.h.b16 %v763
  %v3184 = vunpack.c.l.b16 %v764
  %v3185 = vunpack.c.h.b16 %v764
  %v3186 = vunpack.c.l.b16 %v765
  %v3187 = vunpack.c.h.b16 %v765
  %v3188 = vunpack.c.l.b16 %v766
  %v3189 = vunpack.c.h.b16 %v766
  %v3190 = vunpack.c.l.b16 %v767
  %v3191 = vunpack.c.h.b16 %v767
  %v3192 = vunpack.c.l.b16 %v768
  %v3193 = vunpack.c.h.b16 %v768
  %v3194 = vunpack.c.l.b16 %v769
  %v3195 = vunpack.c.h.b16 %v769
  %v3196 = vunpack.c.l.b16 %v770
  %v3197 = vunpack.c.h.b16 %v770
  %v3198 = vunpack.c.l.b16 %v771
  %v3199 = vunpack.c.h.b16 %v771
  %v3200 = vunpack.c.l.b16 %v772
  %v3201 = vunpack.c.h.b16 %v772
  %v3202 = vunpack.c.l.b16 %v773
  %v3203 = vunpack.c.h.b16 %v773
  %v3204 = vunpack.c.l.b16 %v774
  %v3205 = vunpack.c.h.b16 %v774
  %v3206 = vunpack.c.l.b16 %v775
  %v3207 = vunpack.c.h.b16 %v775
  %v3208 = vunpack.c.l.b16 %v776
  %v3209 = vunpack.c.h.b16 %v776
  %v3210 = vunpack.c.l.b16 %v777
  %v3211 = vunpack.c.h.b16 %v777
  %v3212 = vunpack.c.l.b16 %v778
  %v3213 = vunpack.c.h.b16 %v778
  %v3214 = vunpack.c.l.b16 %v779
  %v3215 = vunpack.c.h.b16 %v779
  %v3216 = vunpack.c.l.b16 %v780
  %v3217 = vunpack.c.h.b16 %v780
  %v3218 = vunpack.c.l.b16 %v781
  %v3219 = vunpack.c.h.b16 %v781
  %v3220 = vunpack.c.l.b16 %v782
  %v3221 = vunpack.c.h.b16 %v782
  %v3222 = vunpack.c.l.b16 %v783
  %v3223 = vunpack.c.h.b16 %v783
  %v3224 = vunpack.c.l.b16 %v784
  %v3225 = vunpack.c.h.b16 %v784
  %v3226 = vunpack.c.l.b16 %v785
  %v3227 = vunpack.c.h.b16 %v785
  %v3228 = vunpack.c.l.b16 %v786
  %v3229 = vunpack.c.h.b16 %v786
  %v3230 = vunpack.c.l.b16 %v787
  %v3231 = vunpack.c.h.b16 %v787
  %v3232 = vunpack.c.l.b16 %v788
  %v3233 = vunpack.c.h.b16 %v788
  %v3234 = vunpack.c.l.b16 %v789
  %v3235 = vunpack.c.h.b16 %v789
  %v3236 = vunpack.c.l.b16 %v790
  %v3237 = vunpack.c.h.b16 %v790
  %v3238 = vunpack.c.l.b16 %v791
  %v3239 = vunpack.c.h.b16 %v791
  %v3240 = vunpack.c.l.b16 %v792
  %v3241 = vunpack.c.h.b16 %v792
  %v3242 = vunpack.c.l.b16 %v793
  %v3243 = vunpack.c.h.b16 %v793
  %v3244 = vunpack.c.l.b16 %v794
  %v3245 = vunpack.c.h.b16 %v794
  %v3246 = vunpack.c.l.b16 %v795
  %v3247 = vunpack.c.h.b16 %v795
  %v3248 = vunpack.c.l.b16 %v796
  %v3249 = vunpack.c.h.b16 %v796
  %v3250 = vunpack.c.l.b16 %v797
  %v3251 = vunpack.c.h.b16 %v797
  %v3252 = vunpack.c.l.b16 %v798
  %v3253 = vunpack.c.h.b16 %v798
  %v3254 = vunpack.c.l.b16 %v799
  %v3255 = vunpack.c.h.b16 %v799
  %v3256 = vunpack.c.l.b16 %v800
  %v3257 = vunpack.c.h.b16 %v800
  %v3258 = vunpack.c.l.b16 %v801
  %v3259 = vunpack.c.h.b16 %v801
  %v3260 = vunpack.c.l.b16 %v802
  %v3261 = vunpack.c.h.b16 %v802
  %v3262 = vunpack.c.l.b16 %v803
  %v3263 = vunpack.c.h.b16 %v803
  %v3264 = vunpack.c.l.b16 %v804
  %v3265 = vunpack.c.h.b16 %v804
  %v3266 = vunpack.c.l.b16 %v805
  %v3267 = vunpack.c.h.b16 %v805
  %v3268 = vunpack.c.l.b16 %v806
  %v3269 = vunpack.c.h.b16 %v806
  %v3270 = vunpack.c.l.b16 %v807
  %v3271 = vunpack.c.h.b16 %v807
  %v3272 = vunpack.c.l.b16 %v808
  %v3273 = vunpack.c.h.b16 %v808
  %v3274 = vunpack.c.l.b16 %v809
  %v3275 = vunpack.c.h.b16 %v809
  %v3276 = vunpack.c.l.b16 %v810
  %v3277 = vunpack.c.h.b16 %v810
  %v3278 = vunpack.c.l.b16 %v811
  %v3279 = vunpack.c.h.b16 %v811
  %v3280 = vunpack.c.l.b16 %v812
  %v3281 = vunpack.c.h.b16 %v812
  %v3282 = vunpack.c.l.b16 %v813
  %v3283 = vunpack.c.h.b16 %v813
  %v3284 = vunpack.c.l.b16 %v814
  %v3285 = vunpack.c.h.b16 %v814
  %v3286 = vunpack.c.l.b16 %v815
  %v3287 = vunpack.c.h.b16 %v815
  %v3288 = vunpack.c.l.b16 %v816
  %v3289 = vunpack.c.h.b16 %v816
  %v3290 = vunpack.c.l.b16 %v817
  %v3291 = vunpack.c.h.b16 %v817
  %v3292 = vunpack.c.l.b16 %v818
  %v3293 = vunpack.c.h.b16 %v818
  %v3294 = vunpack.c.l.b16 %v819
  %v3295 = vunpack.c.h.b16 %v819
  %v3296 = vunpack.c.l.b16 %v820
  %v3297 = vunpack.c.h.b16 %v820
  %v3298 = vunpack.c.l.b16 %v821
  %v3299 = vunpack.c.h.b16 %v821
  %v3300 = vunpack.c.l.b16 %v822
  %v3301 = vunpack.c.h.b16 %v822
  %v3302 = vunpack.c.l.b16 %v823
  %v3303 = vunpack.c.h.b16 %v823
  %v3304 = vunpack.c.l.b16 %v824
  %v3305 = vunpack.c.h.b16 %v824
  %v3306 = vunpack.c.l.b16 %v825
  %v3307 = vunpack.c.h.b16 %v825
  %v3308 = vunpack.c.l.b16 %v826
  %v3309 = vunpack.c.h.b16 %v826
  %v3310 = vunpack.c.l.b16 %v827
  %v3311 = vunpack.c.h.b16 %v827
  %v3312 = vunpack.c.l.b16 %v828
  %v3313 = vunpack.c.h.b16 %v828
  %v3314 = vunpack.c.l.b16 %v829
  %v3315 = vunpack.c.h.b16 %v829
  %v3316 = vunpack.c.l.b16 %v830
  %v3317 = vunpack.c.h.b16 %v830
  %v3318 = vpack.c.b16 %v1754, %v1750
  %v3319 = vpack.c.b16 %v1755, %v1751
  %v3320 = vpack.c.b16 %v1756, %v1752
  %v3321 = vpack.c.b16 %v1757, %v1753
  %v3322 = vpack.c.b16 %v1762, %v1758
  %v3323 = vpack.c.b16 %v1763, %v1759
  %v3324 = vpack.c.b16 %v1764, %v1760
  %v3325 = vpack.c.b16 %v1765, %v1761
  %v3326 = vpack.c.b16 %v1770, %v1766
  %v3327 = vpack.c.b16 %v1771, %v1767
  %v3328 = vpack.c.b16 %v1772, %v1768
  %v3329 = vpack.c.b16 %v1773, %v1769
  %v3330 = vpack.c.b16 %v1778, %v1774
  %v3331 = vpack.c.b16 %v1779, %v1775
  %v3332 = vpack.c.b16 %v1780, %v1776
  %v3333 = vpack.c.b16 %v1781, %v1777
  %v3334 = vpack.c.b16 %v1786, %v1782
  %v3335 = vpack.c.b16 %v1787, %v1783
  %v3336 = vpack.c.b16 %v1788, %v1784
  %v3337 = vpack.c.b16 %v1789, %v1785
  %v3338 = vpack.c.b16 %v1794, %v1790
  %v3339 = vpack.c.b16 %v1795, %v1791
  %v3340 = vpack.c.b16 %v1796, %v1792
  %v3341 = vpack.c.b16 %v1797, %v1793
  %v3342 = vpack.c.b16 %v1802, %v1798
  %v3343 = vpack.c.b16 %v1803, %v1799
  %v3344 = vpack.c.b16 %v1804, %v1800
  %v3345 = vpack.c.b16 %v1805, %v1801
  %v3346 = vpack.c.b16 %v1810, %v1806
  %v3347 = vpack.c.b16 %v1811, %v1807
  %v3348 = vpack.c.b16 %v1812, %v1808
  %v3349 = vpack.c.b16 %v1813, %v1809
  %v3350 = vpack.c.b16 %v1818, %v1814
  %v3351 = vpack.c.b16 %v1819, %v1815
  %v3352 = vpack.c.b16 %v1820, %v1816
  %v3353 = vpack.c.b16 %v1821, %v1817
  %v3354 = vpack.c.b16 %v1826, %v1822
  %v3355 = vpack.c.b16 %v1827, %v1823
  %v3356 = vpack.c.b16 %v1828, %v1824
  %v3357 = vpack.c.b16 %v1829, %v1825
  %v3358 = vpack.c.b16 %v1834, %v1830
  %v3359 = vpack.c.b16 %v1835, %v1831
  %v3360 = vpack.c.b16 %v1836, %v1832
  %v3361 = vpack.c.b16 %v1837, %v1833
  %v3362 = vpack.c.b16 %v1842, %v1838
  %v3363 = vpack.c.b16 %v1843, %v1839
  %v3364 = vpack.c.b16 %v1844, %v1840
  %v3365 = vpack.c.b16 %v1845, %v1841
  %v3366 = vpack.c.b16 %v1850, %v1846
  %v3367 = vpack.c.b16 %v1851, %v1847
  %v3368 = vpack.c.b16 %v1852, %v1848
  %v3369 = vpack.c.b16 %v1853, %v1849
  %v3370 = vpack.c.b16 %v1858, %v1854
  %v3371 = vpack.c.b16 %v1859, %v1855
  %v3372 = vpack.c.b16 %v1860, %v1856
  %v3373 = vpack.c.b16 %v1861, %v1857
  %v3374 = vpack.c.b16 %v1866, %v1862
  %v3375 = vpack.c.b16 %v1867, %v1863
  %v3376 = vpack.c.b16 %v1868, %v1864
  %v3377 = vpack.c.b16 %v1869, %v1865
  %v3378 = vpack.c.b16 %v1874, %v1870
  %v3379 = vpack.c.b16 %v1875, %v1871
  %v3380 = vpack.c.b16 %v1876, %v1872
  %v3381 = vpack.c.b16 %v1877, %v1873
  %v3382 = vpack.c.b16 %v1882, %v1878
  %v3383 = vpack.c.b16 %v1883, %v1879
  %v3384 = vpack.c.b16 %v1884, %v1880
  %v3385 = vpack.c.b16 %v1885, %v1881
  %v3386 = vpack.c.b16 %v1890, %v1886
  %v3387 = vpack.c.b16 %v1891, %v1887
  %v3388 = vpack.c.b16 %v1892, %v1888
  %v3389 = vpack.c.b16 %v1893, %v1889
  %v3390 = vpack.c.b16 %v1898, %v1894
  %v3391 = vpack.c.b16 %v1899, %v1895
  %v3392 = vpack.c.b16 %v1900, %v1896
  %v3393 = vpack.c.b16 %v1901, %v1897
  %v3394 = vpack.c.b16 %v1906, %v1902
  %v3395 = vpack.c.b16 %v1907, %v1903
  %v3396 = vpack.c.b16 %v1908, %v1904
  %v3397 = vpack.c.b16 %v1909, %v1905
  %v3398 = vpack.c.b16 %v1914, %v1910
  %v3399 = vpack.c.b16 %v1915, %v1911
  %v3400 = vpack.c.b16 %v1916, %v1912
  %v3401 = vpack.c.b16 %v1917, %v1913
  %v3402 = vpack.c.b16 %v1922, %v1918
  %v3403 = vpack.c.b16 %v1923, %v1919
  %v3404 = vpack.c.b16 %v1924, %v1920
  %v3405 = vpack.c.b16 %v1925, %v1921
  %v3406 = vpack.c.b16 %v1930, %v1926
  %v3407 = vpack.c.b16 %v1931, %v1927
  %v3408 = vpack.c.b16 %v1932, %v1928
  %v3409 = vpack.c.b16 %v1933, %v1929
  %v3410 = vpack.c.b16 %v1938, %v1934
  %v3411 = vpack.c.b16 %v1939, %v1935
  %v3412 = vpack.c.b16 %v1940, %v1936
  %v3413 = vpack.c.b16 %v1941, %v1937
  %v3414 = vpack.c.b16 %v1946, %v1942
  %v3415 = vpack.c.b16 %v1947, %v1943
  %v3416 = vpack.c.b16 %v1948, %v1944
  %v3417 = vpack.c.b16 %v1949, %v1945
  %v3418 = vpack.c.b16 %v1954, %v1950
  %v3419 = vpack.c.b16 %v1955, %v1951
  %v3420 = vpack.c.b16 %v1956, %v1952
  %v3421 = vpack.c.b16 %v1957, %v1953
  %v3422 = vpack.c.b16 %v1962, %v1958
  %v3423 = vpack.c.b16 %v1963, %v1959
  %v3424 = vpack.c.b16 %v1964, %v1960
  %v3425 = vpack.c.b16 %v1965, %v1961
  %v3426 = vpack.c.b16 %v1970, %v1966
  %v3427 = vpack.c.b16 %v1971, %v1967
  %v3428 = vpack.c.b16 %v1972, %v1968
  %v3429 = vpack.c.b16 %v1973, %v1969
  %v3430 = vpack.c.b16 %v1978, %v1974
  %v3431 = vpack.c.b16 %v1979, %v1975
  %v3432 = vpack.c.b16 %v1980, %v1976
  %v3433 = vpack.c.b16 %v1981, %v1977
  %v3434 = vpack.c.b16 %v1986, %v1982
  %v3435 = vpack.c.b16 %v1987, %v1983
  %v3436 = vpack.c.b16 %v1988, %v1984
  %v3437 = vpack.c.b16 %v1989, %v1985
  %v3438 = vpack.c.b16 %v1994, %v1990
  %v3439 = vpack.c.b16 %v1995, %v1991
  %v3440 = vpack.c.b16 %v1996, %v1992
  %v3441 = vpack.c.b16 %v1997, %v1993
  %v3442 = vpack.c.b16 %v2002, %v1998
  %v3443 = vpack.c.b16 %v2003, %v1999
  %v3444 = vpack.c.b16 %v2004, %v2000
  %v3445 = vpack.c.b16 %v2005, %v2001
  %v3446 = vpack.c.b16 %v2010, %v2006
  %v3447 = vpack.c.b16 %v2011, %v2007
  %v3448 = vpack.c.b16 %v2012, %v2008
  %v3449 = vpack.c.b16 %v2013, %v2009
  %v3450 = vpack.c.b16 %v2018, %v2014
  %v3451 = vpack.c.b16 %v2019, %v2015
  %v3452 = vpack.c.b16 %v2020, %v2016
  %v3453 = vpack.c.b16 %v2021, %v2017
  %v3454 = vpack.c.b16 %v2026, %v2022
  %v3455 = vpack.c.b16 %v2027, %v2023
  %v3456 = vpack.c.b16 %v2028, %v2024
  %v3457 = vpack.c.b16 %v2029, %v2025
  %v3458 = vpack.c.b16 %v2034, %v2030
  %v3459 = vpack.c.b16 %v2035, %v2031
  %v3460 = vpack.c.b16 %v2036, %v2032
  %v3461 = vpack.c.b16 %v2037, %v2033
  %v3462 = vpack.c.b16 %v2042, %v2038
  %v3463 = vpack.c.b16 %v2043, %v2039
  %v3464 = vpack.c.b16 %v2044, %v2040
  %v3465 = vpack.c.b16 %v2045, %v2041
  %v3466 = vpack.c.b16 %v2050, %v2046
  %v3467 = vpack.c.b16 %v2051, %v2047
  %v3468 = vpack.c.b16 %v2052, %v2048
  %v3469 = vpack.c.b16 %v2053, %v2049
  %v3470 = vpack.c.b16 %v2058, %v2054
  %v3471 = vpack.c.b16 %v2059, %v2055
  %v3472 = vpack.c.b16 %v2060, %v2056
  %v3473 = vpack.c.b16 %v2061, %v2057
  %v3474 = vpack.c.b16 %v2066, %v2062
  %v3475 = vpack.c.b16 %v2067, %v2063
  %v3476 = vpack.c.b16 %v2068, %v2064
  %v3477 = vpack.c.b16 %v2069, %v2065
  %v3478 = vpack.c.b16 %v2074, %v2070
  %v3479 = vpack.c.b16 %v2075, %v2071
  %v3480 = vpack.c.b16 %v2076, %v2072
  %v3481 = vpack.c.b16 %v2077, %v2073
  %v3482 = vpack.c.b16 %v2082, %v2078
  %v3483 = vpack.c.b16 %v2083, %v2079
  %v3484 = vpack.c.b16 %v2084, %v2080
  %v3485 = vpack.c.b16 %v2085, %v2081
  %v3486 = vpack.c.b16 %v2090, %v2086
  %v3487 = vpack.c.b16 %v2091, %v2087
  %v3488 = vpack.c.b16 %v2092, %v2088
  %v3489 = vpack.c.b16 %v2093, %v2089
  %v3490 = vpack.c.b16 %v2098, %v2094
  %v3491 = vpack.c.b16 %v2099, %v2095
  %v3492 = vpack.c.b16 %v2100, %v2096
  %v3493 = vpack.c.b16 %v2101, %v2097
  %v3494 = vpack.c.b16 %v2106, %v2102
  %v3495 = vpack.c.b16 %v2107, %v2103
  %v3496 = vpack.c.b16 %v2108, %v2104
  %v3497 = vpack.c.b16 %v2109, %v2105
  %v3498 = vpack.c.b16 %v2114, %v2110
  %v3499 = vpack.c.b16 %v2115, %v2111
  %v3500 = vpack.c.b16 %v2116, %v2112
  %v3501 = vpack.c.b16 %v2117, %v2113
  %v3502 = vpack.c.b16 %v2122, %v2118
  %v3503 = vpack.c.b16 %v2123, %v2119
  %v3504 = vpack.c.b16 %v2124, %v2120
  %v3505 = vpack.c.b16 %v2125, %v2121
  %v3506 = vpack.c.b16 %v2130, %v2126
  %v3507 = vpack.c.b16 %v2131, %v2127
  %v3508 = vpack.c.b16 %v2132, %v2128
  %v3509 = vpack.c.b16 %v2133, %v2129
  %v3510 = vpack.c.b16 %v2138, %v2134
  %v3511 = vpack.c.b16 %v2139, %v2135
  %v3512 = vpack.c.b16 %v2140, %v2136
  %v3513 = vpack.c.b16 %v2141, %v2137
  %v3514 = vpack.c.b16 %v2146, %v2142
  %v3515 = vpack.c.b16 %v2147, %v2143
  %v3516 = vpack.c.b16 %v2148, %v2144
  %v3517 = vpack.c.b16 %v2149, %v2145
  %v3518 = vpack.c.b16 %v2154, %v2150
  %v3519 = vpack.c.b16 %v2155, %v2151
  %v3520 = vpack.c.b16 %v2156, %v2152
  %v3521 = vpack.c.b16 %v2157, %v2153
  %v3522 = vpack.c.b16 %v2162, %v2158
  %v3523 = vpack.c.b16 %v2163, %v2159
  %v3524 = vpack.c.b16 %v2164, %v2160
  %v3525 = vpack.c.b16 %v2165, %v2161
  %v3526 = vpack.c.b16 %v2170, %v2166
  %v3527 = vpack.c.b16 %v2171, %v2167
  %v3528 = vpack.c.b16 %v2172, %v2168
  %v3529 = vpack.c.b16 %v2173, %v2169
  %v3530 = vpack.c.b16 %v2178, %v2174
  %v3531 = vpack.c.b16 %v2179, %v2175
  %v3532 = vpack.c.b16 %v2180, %v2176
  %v3533 = vpack.c.b16 %v2181, %v2177
  %v3534 = vpack.c.b16 %v2186, %v2182
  %v3535 = vpack.c.b16 %v2187, %v2183
  %v3536 = vpack.c.b16 %v2188, %v2184
  %v3537 = vpack.c.b16 %v2189, %v2185
  %v3538 = vpack.c.b16 %v2194, %v2190
  %v3539 = vpack.c.b16 %v2195, %v2191
  %v3540 = vpack.c.b16 %v2196, %v2192
  %v3541 = vpack.c.b16 %v2197, %v2193
  %v3542 = vpack.c.b16 %v2202, %v2198
  %v3543 = vpack.c.b16 %v2203, %v2199
  %v3544 = vpack.c.b16 %v2204, %v2200
  %v3545 = vpack.c.b16 %v2205, %v2201
  %v3546 = vpack.c.b16 %v2210, %v2206
  %v3547 = vpack.c.b16 %v2211, %v2207
  %v3548 = vpack.c.b16 %v2212, %v2208
  %v3549 = vpack.c.b16 %v2213, %v2209
  %v3550 = vpack.c.b16 %v2218, %v2214
  %v3551 = vpack.c.b16 %v2219, %v2215
  %v3552 = vpack.c.b16 %v2220, %v2216
  %v3553 = vpack.c.b16 %v2221, %v2217
  %v3554 = vpack.c.b16 %v2226, %v2222
  %v3555 = vpack.c.b16 %v2227, %v2223
  %v3556 = vpack.c.b16 %v2228, %v2224
  %v3557 = vpack.c.b16 %v2229, %v2225
  %v3558 = vpack.c.b16 %v2234, %v2230
  %v3559 = vpack.c.b16 %v2235, %v2231
  %v3560 = vpack.c.b16 %v2236, %v2232
  %v3561 = vpack.c.b16 %v2237, %v2233
  %v3562 = vpack.c.b16 %v2242, %v2238
  %v3563 = vpack.c.b16 %v2243, %v2239
  %v3564 = vpack.c.b16 %v2244, %v2240
  %v3565 = vpack.c.b16 %v2245, %v2241
  %v3566 = vpack.c.b16 %v2250, %v2246
  %v3567 = vpack.c.b16 %v2251, %v2247
  %v3568 = vpack.c.b16 %v2252, %v2248
  %v3569 = vpack.c.b16 %v2253, %v2249
  %v3570 = vpack.c.b16 %v2258, %v2254
  %v3571 = vpack.c.b16 %v2259, %v2255
  %v3572 = vpack.c.b16 %v2260, %v2256
  %v3573 = vpack.c.b16 %v2261, %v2257
  %v3574 = vpack.c.b16 %v2266, %v2262
  %v3575 = vpack.c.b16 %v2267, %v2263
  %v3576 = vpack.c.b16 %v2268, %v2264
  %v3577 = vpack.c.b16 %v2269, %v2265
  %v3578 = vpack.c.b16 %v2274, %v2270
  %v3579 = vpack.c.b16 %v2275, %v2271
  %v3580 = vpack.c.b16 %v2276, %v2272
  %v3581 = vpack.c.b16 %v2277, %v2273
  %v3582 = vpack.c.b16 %v2282, %v2278
  %v3583 = vpack.c.b16 %v2283, %v2279
  %v3584 = vpack.c.b16 %v2284, %v2280
  %v3585 = vpack.c.b16 %v2285, %v2281
  %v3586 = vpack.c.b16 %v2290, %v2286
  %v3587 = vpack.c.b16 %v2291, %v2287
  %v3588 = vpack.c.b16 %v2292, %v2288
  %v3589 = vpack.c.b16 %v2293, %v2289
  %v3590 = vpack.c.b16 %v2298, %v2294
  %v3591 = vpack.c.b16 %v2299, %v2295
  %v3592 = vpack.c.b16 %v2300, %v2296
  %v3593 = vpack.c.b16 %v2301, %v2297
  %v3594 = vpack.c.b16 %v2306, %v2302
  %v3595 = vpack.c.b16 %v2307, %v2303
  %v3596 = vpack.c.b16 %v2308, %v2304
  %v3597 = vpack.c.b16 %v2309, %v2305
  %v3598 = vpack.c.b16 %v2314, %v2310
  %v3599 = vpack.c.b16 %v2315, %v2311
  %v3600 = vpack.c.b16 %v2316, %v2312
  %v3601 = vpack.c.b16 %v2317, %v2313
  %v3602 = vpack.c.b16 %v2322, %v2318
  %v3603 = vpack.c.b16 %v2323, %v2319
  %v3604 = vpack.c.b16 %v2324, %v2320
  %v3605 = vpack.c.b16 %v2325, %v2321
  %v3606 = vpack.c.b16 %v2330, %v2326
  %v3607 = vpack.c.b16 %v2331, %v2327
  %v3608 = vpack.c.b16 %v2332, %v2328
  %v3609 = vpack.c.b16 %v2333, %v2329
  %v3610 = vpack.c.b16 %v2338, %v2334
  %v3611 = vpack.c.b16 %v2339, %v2335
  %v3612 = vpack.c.b16 %v2340, %v2336
  %v3613 = vpack.c.b16 %v2341, %v2337
  %v3614 = vpack.c.b16 %v2346, %v2342
  %v3615 = vpack.c.b16 %v2347, %v2343
  %v3616 = vpack.c.b16 %v2348, %v2344
  %v3617 = vpack.c.b16 %v2349, %v2345
  %v3618 = vpack.c.b16 %v2354, %v2350
  %v3619 = vpack.c.b16 %v2355, %v2351
  %v3620 = vpack.c.b16 %v2356, %v2352
  %v3621 = vpack.c.b16 %v2357, %v2353
  %v3622 = vpack.c.b16 %v2362, %v2358
  %v3623 = vpack.c.b16 %v2363, %v2359
  %v3624 = vpack.c.b16 %v2364, %v2360
  %v3625 = vpack.c.b16 %v2365, %v2361
  %v3626 = vpack.c.b16 %v2370, %v2366
  %v3627 = vpack.c.b16 %v2371, %v2367
  %v3628 = vpack.c.b16 %v2372, %v2368
  %v3629 = vpack.c.b16 %v2373, %v2369
  %v3630 = vpack.c.b16 %v2378, %v2374
  %v3631 = vpack.c.b16 %v2379, %v2375
  %v3632 = vpack.c.b16 %v2380, %v2376
  %v3633 = vpack.c.b16 %v2381, %v2377
  %v3634 = vpack.c.b16 %v2386, %v2382
  %v3635 = vpack.c.b16 %v2387, %v2383
  %v3636 = vpack.c.b16 %v2388, %v2384
  %v3637 = vpack.c.b16 %v2389, %v2385
  %v3638 = vpack.c.b16 %v2394, %v2390
  %v3639 = vpack.c.b16 %v2395, %v2391
  %v3640 = vpack.c.b16 %v2396, %v2392
  %v3641 = vpack.c.b16 %v2397, %v2393
  %v3642 = vpack.c.b16 %v2402, %v2398
  %v3643 = vpack.c.b16 %v2403, %v2399
  %v3644 = vpack.c.b16 %v2404, %v2400
  %v3645 = vpack.c.b16 %v2405, %v2401
  %v3646 = vpack.c.b16 %v2410, %v2406
  %v3647 = vpack.c.b16 %v2411, %v2407
  %v3648 = vpack.c.b16 %v2412, %v2408
  %v3649 = vpack.c.b16 %v2413, %v2409
  %v3650 = vpack.c.b16 %v2418, %v2414
  %v3651 = vpack.c.b16 %v2419, %v2415
  %v3652 = vpack.c.b16 %v2420, %v2416
  %v3653 = vpack.c.b16 %v2421, %v2417
  %v3654 = vpack.c.b16 %v2426, %v2422
  %v3655 = vpack.c.b16 %v2427, %v2423
  %v3656 = vpack.c.b16 %v2428, %v2424
  %v3657 = vpack.c.b16 %v2429, %v2425
  %v3658 = vpack.c.b16 %v2434, %v2430
  %v3659 = vpack.c.b16 %v2435, %v2431
  %v3660 = vpack.c.b16 %v2436, %v2432
  %v3661 = vpack.c.b16 %v2437, %v2433
  %v3662 = vpack.c.b16 %v2442, %v2438
  %v3663 = vpack.c.b16 %v2443, %v2439
  %v3664 = vpack.c.b16 %v2444, %v2440
  %v3665 = vpack.c.b16 %v2445, %v2441
  %v3666 = vpack.c.b16 %v2450, %v2446
  %v3667 = vpack.c.b16 %v2451, %v2447
  %v3668 = vpack.c.b16 %v2452, %v2448
  %v3669 = vpack.c.b16 %v2453, %v2449
  %v3670 = vpack.c.b16 %v2458, %v2454
  %v3671 = vpack.c.b16 %v2459, %v2455
  %v3672 = vpack.c.b16 %v2460, %v2456
  %v3673 = vpack.c.b16 %v2461, %v2457
  %v3674 = vpack.c.b16 %v2466, %v2462
  %v3675 = vpack.c.b16 %v2467, %v2463
  %v3676 = vpack.c.b16 %v2468, %v2464
  %v3677 = vpack.c.b16 %v2469, %v2465
  %v3678 = vpack.c.b16 %v2474, %v2470
  %v3679 = vpack.c.b16 %v2475, %v2471
  %v3680 = vpack.c.b16 %v2476, %v2472
  %v3681 = vpack.c.b16 %v2477, %v2473
  %v3682 = vpack.c.b16 %v2482, %v2478
  %v3683 = vpack.c.b16 %v2483, %v2479
  %v3684 = vpack.c.b16 %v2484, %v2480
  %v3685 = vpack.c.b16 %v2485, %v2481
  %v3686 = vpack.c.b16 %v2490, %v2486
  %v3687 = vpack.c.b16 %v2491, %v2487
  %v3688 = vpack.c.b16 %v2492, %v2488
  %v3689 = vpack.c.b16 %v2493, %v2489
  %v3690 = vpack.c.b16 %v2498, %v2494
  %v3691 = vpack.c.b16 %v2499, %v2495
  %v3692 = vpack.c.b16 %v2500, %v2496
  %v3693 = vpack.c.b16 %v2501, %v2497
  %v3694 = vpack.c.b16 %v2506, %v2502
  %v3695 = vpack.c.b16 %v2507, %v2503
  %v3696 = vpack.c.b16 %v2508, %v2504
  %v3697 = vpack.c.b16 %v2509, %v2505
  %v3698 = vpack.c.b16 %v2514, %v2510
  %v3699 = vpack.c.b16 %v2515, %v2511
  %v3700 = vpack.c.b16 %v2516, %v2512
  %v3701 = vpack.c.b16 %v2517, %v2513
  %v3702 = vpack.c.b16 %v2522, %v2518
  %v3703 = vpack.c.b16 %v2523, %v2519
  %v3704 = vpack.c.b16 %v2524, %v2520
  %v3705 = vpack.c.b16 %v2525, %v2521
  %v3706 = vpack.c.b16 %v2530, %v2526
  %v3707 = vpack.c.b16 %v2531, %v2527
  %v3708 = vpack.c.b16 %v2532, %v2528
  %v3709 = vpack.c.b16 %v2533, %v2529
  %v3710 = vpack.c.b16 %v2538, %v2534
  %v3711 = vpack.c.b16 %v2539, %v2535
  %v3712 = vpack.c.b16 %v2540, %v2536
  %v3713 = vpack.c.b16 %v2541, %v2537
  %v3714 = vpack.c.b16 %v2546, %v2542
  %v3715 = vpack.c.b16 %v2547, %v2543
  %v3716 = vpack.c.b16 %v2548, %v2544
  %v3717 = vpack.c.b16 %v2549, %v2545
  %v3718 = vpack.c.b16 %v2554, %v2550
  %v3719 = vpack.c.b16 %v2555, %v2551
  %v3720 = vpack.c.b16 %v2556, %v2552
  %v3721 = vpack.c.b16 %v2557, %v2553
  %v3722 = vpack.c.b16 %v2562, %v2558
  %v3723 = vpack.c.b16 %v2563, %v2559
  %v3724 = vpack.c.b16 %v2564, %v2560
  %v3725 = vpack.c.b16 %v2565, %v2561
  %v3726 = vpack.c.b16 %v2570, %v2566
  %v3727 = vpack.c.b16 %v2571, %v2567
  %v3728 = vpack.c.b16 %v2572, %v2568
  %v3729 = vpack.c.b16 %v2573, %v2569
  %v3730 = vpack.c.b16 %v2578, %v2574
  %v3731 = vpack.c.b16 %v2579, %v2575
  %v3732 = vpack.c.b16 %v2580, %v2576
  %v3733 = vpack.c.b16 %v2581, %v2577
  %v3734 = vpack.c.b16 %v2586, %v2582
  %v3735 = vpack.c.b16 %v2587, %v2583
  %v3736 = vpack.c.b16 %v2588, %v2584
  %v3737 = vpack.c.b16 %v2589, %v2585
  %v3738 = vpack.c.b16 %v2594, %v2590
  %v3739 = vpack.c.b16 %v2595, %v2591
  %v3740 = vpack.c.b16 %v2596, %v2592
  %v3741 = vpack.c.b16 %v2597, %v2593
  %v3742 = vpack.c.b16 %v2602, %v2598
  %v3743 = vpack.c.b16 %v2603, %v2599
  %v3744 = vpack.c.b16 %v2604, %v2600
  %v3745 = vpack.c.b16 %v2605, %v2601
  %v3746 = vpack.c.b16 %v2610, %v2606
  %v3747 = vpack.c.b16 %v2611, %v2607
  %v3748 = vpack.c.b16 %v2612, %v2608
  %v3749 = vpack.c.b16 %v2613, %v2609
  %v3750 = vpack.c.b16 %v2618, %v2614
  %v3751 = vpack.c.b16 %v2619, %v2615
  %v3752 = vpack.c.b16 %v2620, %v2616
  %v3753 = vpack.c.b16 %v2621, %v2617
  %v3754 = vpack.c.b16 %v2626, %v2622
  %v3755 = vpack.c.b16 %v2627, %v2623
  %v3756 = vpack.c.b16 %v2628, %v2624
  %v3757 = vpack.c.b16 %v2629, %v2625
  %v3758 = vpack.c.b16 %v2634, %v2630
  %v3759 = vpack.c.b16 %v2635, %v2631
  %v3760 = vpack.c.b16 %v2636, %v2632
  %v3761 = vpack.c.b16 %v2637, %v2633
  %v3762 = vpack.c.b16 %v2642, %v2638
  %v3763 = vpack.c.b16 %v2643, %v2639
  %v3764 = vpack.c.b16 %v2644, %v2640
  %v3765 = vpack.c.b16 %v2645, %v2641
  %v3766 = vpack.c.b16 %v2650, %v2646
  %v3767 = vpack.c.b16 %v2651, %v2647
  %v3768 = vpack.c.b16 %v2652, %v2648
  %v3769 = vpack.c.b16 %v2653, %v2649
  %v3770 = vpack.c.b16 %v2658, %v2654
  %v3771 = vpack.c.b16 %v2659, %v2655
  %v3772 = vpack.c.b16 %v2660, %v2656
  %v3773 = vpack.c.b16 %v2661, %v2657
  %v3774 = vpack.c.b16 %v2666, %v2662
  %v3775 = vpack.c.b16 %v2667, %v2663
  %v3776 = vpack.c.b16 %v2668, %v2664
  %v3777 = vpack.c.b16 %v2669, %v2665
  %v3778 = vpack.c.b16 %v2674, %v2670
  %v3779 = vpack.c.b16 %v2675, %v2671
  %v3780 = vpack.c.b16 %v2676, %v2672
  %v3781 = vpack.c.b16 %v2677, %v2673
  %v3782 = vpack.c.b16 %v2682, %v2678
  %v3783 = vpack.c.b16 %v2683, %v2679
  %v3784 = vpack.c.b16 %v2684, %v2680
  %v3785 = vpack.c.b16 %v2685, %v2681
  %v3786 = vpack.c.b16 %v2690, %v2686
  %v3787 = vpack.c.b16 %v2691, %v2687
  %v3788 = vpack.c.b16 %v2692, %v2688
  %v3789 = vpack.c.b16 %v2693, %v2689
  %v3790 = vpack.c.b16 %v2698, %v2694
  %v3791 = vpack.c.b16 %v2699, %v2695
  %v3792 = vpack.c.b16 %v2700, %v2696
  %v3793 = vpack.c.b16 %v2701, %v2697
  %v3794 = vpack.c.b16 %v2706, %v2702
  %v3795 = vpack.c.b16 %v2707, %v2703
  %v3796 = vpack.c.b16 %v2708, %v2704
  %v3797 = vpack.c.b16 %v2709, %v2705
  %v3798 = vpack.c.b16 %v2714, %v2710
  %v3799 = vpack.c.b16 %v2715, %v2711
  %v3800 = vpack.c.b16 %v2716, %v2712
  %v3801 = vpack.c.b16 %v2717, %v2713
  %v3802 = vpack.c.b16 %v2722, %v2718
  %v3803 = vpack.c.b16 %v2723, %v2719
  %v3804 = vpack.c.b16 %v2724, %v2720
  %v3805 = vpack.c.b16 %v2725, %v2721
  %v3806 = vpack.c.b16 %v2730, %v2726
  %v3807 = vpack.c.b16 %v2731, %v2727
  %v3808 = vpack.c.b16 %v2732, %v2728
  %v3809 = vpack.c.b16 %v2733, %v2729
  %v3810 = vpack.c.b16 %v2738, %v2734
  %v3811 = vpack.c.b16 %v2739, %v2735
  %v3812 = vpack.c.b16 %v2740, %v2736
  %v3813 = vpack.c.b16 %v2741, %v2737
  %v3814 = vpack.c.b16 %v2746, %v2742
  %v3815 = vpack.c.b16 %v2747, %v2743
  %v3816 = vpack.c.b16 %v2748, %v2744
  %v3817 = vpack.c.b16 %v2749, %v2745
  %v3818 = vpack.c.b16 %v2754, %v2750
  %v3819 = vpack.c.b16 %v2755, %v2751
  %v3820 = vpack.c.b16 %v2756, %v2752
  %v3821 = vpack.c.b16 %v2757, %v2753
  %v3822 = vpack.c.b16 %v2762, %v2758
  %v3823 = vpack.c.b16 %v2763, %v2759
  %v3824 = vpack.c.b16 %v2764, %v2760
  %v3825 = vpack.c.b16 %v2765, %v2761
  %v3826 = vpack.c.b16 %v2770, %v2766
  %v3827 = vpack.c.b16 %v2771, %v2767
  %v3828 = vpack.c.b16 %v2772, %v2768
  %v3829 = vpack.c.b16 %v2773, %v2769
  %v3830 = vpack.c.b16 %v2778, %v2774
  %v3831 = vpack.c.b16 %v2779, %v2775
  %v3832 = vpack.c.b16 %v2780, %v2776
  %v3833 = vpack.c.b16 %v2781, %v2777
  %v3834 = vpack.c.b16 %v2786, %v2782
  %v3835 = vpack.c.b16 %v2787, %v2783
  %v3836 = vpack.c.b16 %v2788, %v2784
  %v3837 = vpack.c.b16 %v2789, %v2785
  %v3838 = vpack.c.b16 %v2794, %v2790
  %v3839 = vpack.c.b16 %v2795, %v2791
  %v3840 = vpack.c.b16 %v2796, %v2792
  %v3841 = vpack.c.b16 %v2797, %v2793
  %v3842 = vpack.c.b16 %v2802, %v2798
  %v3843 = vpack.c.b16 %v2803, %v2799
  %v3844 = vpack.c.b16 %v2804, %v2800
  %v3845 = vpack.c.b16 %v2805, %v2801
  %v3846 = vpack.c.b16 %v2810, %v2806
  %v3847 = vpack.c.b16 %v2811, %v2807
  %v3848 = vpack.c.b16 %v2812, %v2808
  %v3849 = vpack.c.b16 %v2813, %v2809
  %v3850 = vpack.c.b16 %v2818, %v2814
  %v3851 = vpack.c.b16 %v2819, %v2815
  %v3852 = vpack.c.b16 %v2820, %v2816
  %v3853 = vpack.c.b16 %v2821, %v2817
  %v3854 = vpack.c.b16 %v2826, %v2822
  %v3855 = vpack.c.b16 %v2827, %v2823
  %v3856 = vpack.c.b16 %v2828, %v2824
  %v3857 = vpack.c.b16 %v2829, %v2825
  %v3858 = vpack.c.b16 %v2834, %v2830
  %v3859 = vpack.c.b16 %v2835, %v2831
  %v3860 = vpack.c.b16 %v2836, %v2832
  %v3861 = vpack.c.b16 %v2837, %v2833
  %v3862 = vpack.c.b16 %v2842, %v2838
  %v3863 = vpack.c.b16 %v2843, %v2839
  %v3864 = vpack.c.b16 %v2844, %v2840
  %v3865 = vpack.c.b16 %v2845, %v2841
  %v3866 = vpack.c.b16 %v2850, %v2846
  %v3867 = vpack.c.b16 %v2851, %v2847
  %v3868 = vpack.c.b16 %v2852, %v2848
  %v3869 = vpack.c.b16 %v2853, %v2849
  %v3870 = vpack.c.b16 %v2858, %v2854
  %v3871 = vpack.c.b16 %v2859, %v2855
  %v3872 = vpack.c.b16 %v2860, %v2856
  %v3873 = vpack.c.b16 %v2861, %v2857
  %v3874 = vpack.c.b16 %v2866, %v2862
  %v3875 = vpack.c.b16 %v2867, %v2863
  %v3876 = vpack.c.b16 %v2868, %v2864
  %v3877 = vpack.c.b16 %v2869, %v2865
  %v3878 = vpack.c.b16 %v2874, %v2870
  %v3879 = vpack.c.b16 %v2875, %v2871
  %v3880 = vpack.c.b16 %v2876, %v2872
  %v3881 = vpack.c.b16 %v2877, %v2873
  %v3882 = vpack.c.b16 %v2882, %v2878
  %v3883 = vpack.c.b16 %v2883, %v2879
  %v3884 = vpack.c.b16 %v2884, %v2880
  %v3885 = vpack.c.b16 %v2885, %v2881
  %v3886 = vpack.c.b16 %v2890, %v2886
  %v3887 = vpack.c.b16 %v2891, %v2887
  %v3888 = vpack.c.b16 %v2892, %v2888
  %v3889 = vpack.c.b16 %v2893, %v2889
  %v3890 = vpack.c.b16 %v2898, %v2894
  %v3891 = vpack.c.b16 %v2899, %v2895
  %v3892 = vpack.c.b16 %v2900, %v2896
  %v3893 = vpack.c.b16 %v2901, %v2897
  %v3894 = vpack.c.b16 %v2906, %v2902
  %v3895 = vpack.c.b16 %v2907, %v2903
  %v3896 = vpack.c.b16 %v2908, %v2904
  %v3897 = vpack.c.b16 %v2909, %v2905
  %v3898 = vpack.c.b16 %v2914, %v2910
  %v3899 = vpack.c.b16 %v2915, %v2911
  %v3900 = vpack.c.b16 %v2916, %v2912
  %v3901 = vpack.c.b16 %v2917, %v2913
  %v3902 = vpack.c.b16 %v2922, %v2918
  %v3903 = vpack.c.b16 %v2923, %v2919
  %v3904 = vpack.c.b16 %v2924, %v2920
  %v3905 = vpack.c.b16 %v2925, %v2921
  %v3906 = vpack.c.b16 %v2930, %v2926
  %v3907 = vpack.c.b16 %v2931, %v2927
  %v3908 = vpack.c.b16 %v2932, %v2928
  %v3909 = vpack.c.b16 %v2933, %v2929
  %v3910 = vpack.c.b16 %v2938, %v2934
  %v3911 = vpack.c.b16 %v2939, %v2935
  %v3912 = vpack.c.b16 %v2940, %v2936
  %v3913 = vpack.c.b16 %v2941, %v2937
  %v3914 = vpack.c.b16 %v2946, %v2942
  %v3915 = vpack.c.b16 %v2947, %v2943
  %v3916 = vpack.c.b16 %v2948, %v2944
  %v3917 = vpack.c.b16 %v2949, %v2945
  %v3918 = vpack.c.b16 %v2954, %v2950
  %v3919 = vpack.c.b16 %v2955, %v2951
  %v3920 = vpack.c.b16 %v2956, %v2952
  %v3921 = vpack.c.b16 %v2957, %v2953
  %v3922 = vpack.c.b16 %v2962, %v2958
  %v3923 = vpack.c.b16 %v2963, %v2959
  %v3924 = vpack.c.b16 %v2964, %v2960
  %v3925 = vpack.c.b16 %v2965, %v2961
  %v3926 = vpack.c.b16 %v2970, %v2966
  %v3927 = vpack.c.b16 %v2971, %v2967
  %v3928 = vpack.c.b16 %v2972, %v2968
  %v3929 = vpack.c.b16 %v2973, %v2969
  %v3930 = vpack.c.b16 %v2978, %v2974
  %v3931 = vpack.c.b16 %v2979, %v2975
  %v3932 = vpack.c.b16 %v2980, %v2976
  %v3933 = vpack.c.b16 %v2981, %v2977
  %v3934 = vpack.c.b16 %v2986, %v2982
  %v3935 = vpack.c.b16 %v2987, %v2983
  %v3936 = vpack.c.b16 %v2988, %v2984
  %v3937 = vpack.c.b16 %v2989, %v2985
  %v3938 = vpack.c.b16 %v2994, %v2990
  %v3939 = vpack.c.b16 %v2995, %v2991
  %v3940 = vpack.c.b16 %v2996, %v2992
  %v3941 = vpack.c.b16 %v2997, %v2993
  %v3942 = vpack.c.b16 %v3002, %v2998
  %v3943 = vpack.c.b16 %v3003, %v2999
  %v3944 = vpack.c.b16 %v3004, %v3000
  %v3945 = vpack.c.b16 %v3005, %v3001
  %v3946 = vpack.c.b16 %v3010, %v3006
  %v3947 = vpack.c.b16 %v3011, %v3007
  %v3948 = vpack.c.b16 %v3012, %v3008
  %v3949 = vpack.c.b16 %v3013, %v3009
  %v3950 = vpack.c.b16 %v3018, %v3014
  %v3951 = vpack.c.b16 %v3019, %v3015
  %v3952 = vpack.c.b16 %v3020, %v3016
  %v3953 = vpack.c.b16 %v3021, %v3017
  %v3954 = vpack.c.b16 %v3026, %v3022
  %v3955 = vpack.c.b16 %v3027, %v3023
  %v3956 = vpack.c.b16 %v3028, %v3024
  %v3957 = vpack.c.b16 %v3029, %v3025
  %v3958 = vpack.c.b16 %v3034, %v3030
  %v3959 = vpack.c.b16 %v3035, %v3031
  %v3960 = vpack.c.b16 %v3036, %v3032
  %v3961 = vpack.c.b16 %v3037, %v3033
  %v3962 = vpack.c.b16 %v3042, %v3038
  %v3963 = vpack.c.b16 %v3043, %v3039
  %v3964 = vpack.c.b16 %v3044, %v3040
  %v3965 = vpack.c.b16 %v3045, %v3041
  %v3966 = vpack.c.b16 %v3050, %v3046
  %v3967 = vpack.c.b16 %v3051, %v3047
  %v3968 = vpack.c.b16 %v3052, %v3048
  %v3969 = vpack.c.b16 %v3053, %v3049
  %v3970 = vpack.c.b16 %v3058, %v3054
  %v3971 = vpack.c.b16 %v3059, %v3055
  %v3972 = vpack.c.b16 %v3060, %v3056
  %v3973 = vpack.c.b16 %v3061, %v3057
  %v3974 = vpack.c.b16 %v3066, %v3062
  %v3975 = vpack.c.b16 %v3067, %v3063
  %v3976 = vpack.c.b16 %v3068, %v3064
  %v3977 = vpack.c.b16 %v3069, %v3065
  %v3978 = vpack.c.b16 %v3074, %v3070
  %v3979 = vpack.c.b16 %v3075, %v3071
  %v3980 = vpack.c.b16 %v3076, %v3072
  %v3981 = vpack.c.b16 %v3077, %v3073
  %v3982 = vpack.c.b16 %v3082, %v3078
  %v3983 = vpack.c.b16 %v3083, %v3079
  %v3984 = vpack.c.b16 %v3084, %v3080
  %v3985 = vpack.c.b16 %v3085, %v3081
  %v3986 = vpack.c.b16 %v3090, %v3086
  %v3987 = vpack.c.b16 %v3091, %v3087
  %v3988 = vpack.c.b16 %v3092, %v3088
  %v3989 = vpack.c.b16 %v3093, %v3089
  %v3990 = vpack.c.b16 %v3098, %v3094
  %v3991 = vpack.c.b16 %v3099, %v3095
  %v3992 = vpack.c.b16 %v3100, %v3096
  %v3993 = vpack.c.b16 %v3101, %v3097
  %v3994 = vpack.c.b16 %v3106, %v3102
  %v3995 = vpack.c.b16 %v3107, %v3103
  %v3996 = vpack.c.b16 %v3108, %v3104
  %v3997 = vpack.c.b16 %v3109, %v3105
  %v3998 = vpack.c.b16 %v3114, %v3110
  %v3999 = vpack.c.b16 %v3115, %v3111
  %v4000 = vpack.c.b16 %v3116, %v3112
  %v4001 = vpack.c.b16 %v3117, %v3113
  %v4002 = vpack.c.b16 %v3122, %v3118
  %v4003 = vpack.c.b16 %v3123, %v3119
  %v4004 = vpack.c.b16 %v3124, %v3120
  %v4005 = vpack.c.b16 %v3125, %v3121
  %v4006 = vpack.c.b16 %v3130, %v3126
  %v4007 = vpack.c.b16 %v3131, %v3127
  %v4008 = vpack.c.b16 %v3132, %v3128
  %v4009 = vpack.c.b16 %v3133, %v3129
  %v4010 = vpack.c.b16 %v3138, %v3134
  %v4011 = vpack.c.b16 %v3139, %v3135
  %v4012 = vpack.c.b16 %v3140, %v3136
  %v4013 = vpack.c.b16 %v3141, %v3137
  %v4014 = vpack.c.b16 %v3146, %v3142
  %v4015 = vpack.c.b16 %v3147, %v3143
  %v4016 = vpack.c.b16 %v3148, %v3144
  %v4017 = vpack.c.b16 %v3149, %v3145
  %v4018 = vpack.c.b16 %v3154, %v3150
  %v4019 = vpack.c.b16 %v3155, %v3151
  %v4020 = vpack.c.b16 %v3156, %v3152
  %v4021 = vpack.c.b16 %v3157, %v3153
  %v4022 = vpack.c.b16 %v3162, %v3158
  %v4023 = vpack.c.b16 %v3163, %v3159
  %v4024 = vpack.c.b16 %v3164, %v3160
  %v4025 = vpack.c.b16 %v3165, %v3161
  %v4026 = vpack.c.b16 %v3170, %v3166
  %v4027 = vpack.c.b16 %v3171, %v3167
  %v4028 = vpack.c.b16 %v3172, %v3168
  %v4029 = vpack.c.b16 %v3173, %v3169
  %v4030 = vpack.c.b16 %v3178, %v3174
  %v4031 = vpack.c.b16 %v3179, %v3175
  %v4032 = vpack.c.b16 %v3180, %v3176
  %v4033 = vpack.c.b16 %v3181, %v3177
  %v4034 = vpack.c.b16 %v3186, %v3182
  %v4035 = vpack.c.b16 %v3187, %v3183
  %v4036 = vpack.c.b16 %v3188, %v3184
  %v4037 = vpack.c.b16 %v3189, %v3185
  %v4038 = vpack.c.b16 %v3194, %v3190
  %v4039 = vpack.c.b16 %v3195, %v3191
  %v4040 = vpack.c.b16 %v3196, %v3192
  %v4041 = vpack.c.b16 %v3197, %v3193
  %v4042 = vpack.c.b16 %v3202, %v3198
  %v4043 = vpack.c.b16 %v3203, %v3199
  %v4044 = vpack.c.b16 %v3204, %v3200
  %v4045 = vpack.c.b16 %v3205, %v3201
  %v4046 = vpack.c.b16 %v3210, %v3206
  %v4047 = vpack.c.b16 %v3211, %v3207
  %v4048 = vpack.c.b16 %v3212, %v3208
  %v4049 = vpack.c.b16 %v3213, %v3209
  %v4050 = vpack.c.b16 %v3218, %v3214
  %v4051 = vpack.c.b16 %v3219, %v3215
  %v4052 = vpack.c.b16 %v3220, %v3216
  %v4053 = vpack.c.b16 %v3221, %v3217
  %v4054 = vpack.c.b16 %v3226, %v3222
  %v4055 = vpack.c.b16 %v3227, %v3223
  %v4056 = vpack.c.b16 %v3228, %v3224
  %v4057 = vpack.c.b16 %v3229, %v3225
  %v4058 = vpack.c.b16 %v3234, %v3230
  %v4059 = vpack.c.b16 %v3235, %v3231
  %v4060 = vpack.c.b16 %v3236, %v3232
  %v4061 = vpack.c.b16 %v3237, %v3233
  %v4062 = vpack.c.b16 %v3242, %v3238
  %v4063 = vpack.c.b16 %v3243, %v3239
  %v4064 = vpack.c.b16 %v3244, %v3240
  %v4065 = vpack.c.b16 %v3245, %v3241
  %v4066 = vpack.c.b16 %v3250, %v3246
  %v4067 = vpack.c.b16 %v3251, %v3247
  %v4068 = vpack.c.b16 %v3252, %v3248
  %v4069 = vpack.c.b16 %v3253, %v3249
  %v4070 = vpack.c.b16 %v3258, %v3254
  %v4071 = vpack.c.b16 %v3259, %v3255
  %v4072 = vpack.c.b16 %v3260, %v3256
  %v4073 = vpack.c.b16 %v3261, %v3257
  %v4074 = vpack.c.b16 %v3266, %v3262
  %v4075 = vpack.c.b16 %v3267, %v3263
  %v4076 = vpack.c.b16 %v3268, %v3264
  %v4077 = vpack.c.b16 %v3269, %v3265
  %v4078 = vpack.c.b16 %v3274, %v3270
  %v4079 = vpack.c.b16 %v3275, %v3271
  %v4080 = vpack.c.b16 %v3276, %v3272
  %v4081 = vpack.c.b16 %v3277, %v3273
  %v4082 = vpack.c.b16 %v3282, %v3278
  %v4083 = vpack.c.b16 %v3283, %v3279
  %v4084 = vpack.c.b16 %v3284, %v3280
  %v4085 = vpack.c.b16 %v3285, %v3281
  %v4086 = vpack.c.b16 %v3290, %v3286
  %v4087 = vpack.c.b16 %v3291, %v3287
  %v4088 = vpack.c.b16 %v3292, %v3288
  %v4089 = vpack.c.b16 %v3293, %v3289
  %v4090 = vpack.c.b16 %v3298, %v3294
  %v4091 = vpack.c.b16 %v3299, %v3295
  %v4092 = vpack.c.b16 %v3300, %v3296
  %v4093 = vpack.c.b16 %v3301, %v3297
  %v4094 = vpack.c.b16 %v3306, %v3302
  %v4095 = vpack.c.b16 %v3307, %v3303
  %v4096 = vpack.c.b16 %v3308, %v3304
  %v4097 = vpack.c.b16 %v3309, %v3305
  %v4098 = vpack.c.b16 %v3314, %v3310
  %v4099 = vpack.c.b16 %v3315, %v3311
  %v4100 = vpack.c.b16 %v3316, %v3312
  %v4101 = vpack.c.b16 %v3317, %v3313
  %vm4886 = vcmask 523264
  %v4888 = vsel %vm4886, %v941, 0
  %4890 = vmatpush.bf16.msra.mxu0 %v3346
  %4891 = vmatpush.bf16.msra.mxu0 %v3342
  %4892 = vmatpush.bf16.msra.mxu0 %v3338
  %4893 = vmatpush.bf16.msra.mxu0 %v3334
  %4894 = vmatpush.bf16.msra.mxu0 %v3330
  %4895 = vmatpush.bf16.msra.mxu0 %v3326
  %4896 = vmatpush.bf16.msra.mxu0 %v3322
  %4897 = vmatpush.bf16.msra.mxu0 %v3318
  %4898 = vmatmul.bf16.gmra.mxu0 %v917
  %v4899 = vpop.f32.mrf.mxu0
  %v4900 = vadd.f32 %v833, %v4899
  %v4901 = vpop.f32.mrf.mxu0
  %v4902 = vadd.f32 %v833, %v4901
  %4903 = vdwg.mxu0
  %4904 = vmatpush.bf16.msra.mxu0 %v3378
  %4905 = vmatpush.bf16.msra.mxu0 %v3374
  %4906 = vmatpush.bf16.msra.mxu0 %v3370
  %4907 = vmatpush.bf16.msra.mxu0 %v3366
  %4908 = vmatpush.bf16.msra.mxu0 %v3362
  %4909 = vmatpush.bf16.msra.mxu0 %v3358
  %4910 = vmatpush.bf16.msra.mxu0 %v3354
  %4911 = vmatpush.bf16.msra.mxu0 %v3350
  %4912 = vmatmul.bf16.gmra.mxu0 %v918
  %v4913 = vpop.f32.mrf.mxu0
  %v4914 = vadd.f32 %v4900, %v4913
  %v4915 = vpop.f32.mrf.mxu0
  %v4916 = vadd.f32 %v4902, %v4915
  %4917 = vdwg.mxu0
  %4918 = vmatpush.bf16.msra.mxu0 %v3410
  %4919 = vmatpush.bf16.msra.mxu0 %v3406
  %4920 = vmatpush.bf16.msra.mxu0 %v3402
  %4921 = vmatpush.bf16.msra.mxu0 %v3398
  %4922 = vmatpush.bf16.msra.mxu0 %v3394
  %4923 = vmatpush.bf16.msra.mxu0 %v3390
  %4924 = vmatpush.bf16.msra.mxu0 %v3386
  %4925 = vmatpush.bf16.msra.mxu0 %v3382
  %4926 = vmatmul.bf16.gmra.mxu0 %v919
  %v4927 = vpop.f32.mrf.mxu0
  %v4928 = vadd.f32 %v4914, %v4927
  %v4929 = vpop.f32.mrf.mxu0
  %v4930 = vadd.f32 %v4916, %v4929
  %4931 = vdwg.mxu0
  %4932 = vmatpush.bf16.msra.mxu0 %v3442
  %4933 = vmatpush.bf16.msra.mxu0 %v3438
  %4934 = vmatpush.bf16.msra.mxu0 %v3434
  %4935 = vmatpush.bf16.msra.mxu0 %v3430
  %4936 = vmatpush.bf16.msra.mxu0 %v3426
  %4937 = vmatpush.bf16.msra.mxu0 %v3422
  %4938 = vmatpush.bf16.msra.mxu0 %v3418
  %4939 = vmatpush.bf16.msra.mxu0 %v3414
  %4940 = vmatmul.bf16.gmra.mxu0 %v920
  %v4941 = vpop.f32.mrf.mxu0
  %v4942 = vadd.f32 %v4928, %v4941
  %v4943 = vpop.f32.mrf.mxu0
  %v4944 = vadd.f32 %v4930, %v4943
  %4945 = vdwg.mxu0
  %4946 = vmatpush.bf16.msra.mxu0 %v3474
  %4947 = vmatpush.bf16.msra.mxu0 %v3470
  %4948 = vmatpush.bf16.msra.mxu0 %v3466
  %4949 = vmatpush.bf16.msra.mxu0 %v3462
  %4950 = vmatpush.bf16.msra.mxu0 %v3458
  %4951 = vmatpush.bf16.msra.mxu0 %v3454
  %4952 = vmatpush.bf16.msra.mxu0 %v3450
  %4953 = vmatpush.bf16.msra.mxu0 %v3446
  %4954 = vmatmul.bf16.gmra.mxu0 %v921
  %v4955 = vpop.f32.mrf.mxu0
  %v4956 = vadd.f32 %v4942, %v4955
  %v4957 = vpop.f32.mrf.mxu0
  %v4958 = vadd.f32 %v4944, %v4957
  %4959 = vdwg.mxu0
  %4960 = vmatpush.bf16.msra.mxu0 %v3506
  %4961 = vmatpush.bf16.msra.mxu0 %v3502
  %4962 = vmatpush.bf16.msra.mxu0 %v3498
  %4963 = vmatpush.bf16.msra.mxu0 %v3494
  %4964 = vmatpush.bf16.msra.mxu0 %v3490
  %4965 = vmatpush.bf16.msra.mxu0 %v3486
  %4966 = vmatpush.bf16.msra.mxu0 %v3482
  %4967 = vmatpush.bf16.msra.mxu0 %v3478
  %4968 = vmatmul.bf16.gmra.mxu0 %v922
  %v4969 = vpop.f32.mrf.mxu0
  %v4970 = vadd.f32 %v4956, %v4969
  %v4971 = vpop.f32.mrf.mxu0
  %v4972 = vadd.f32 %v4958, %v4971
  %4973 = vdwg.mxu0
  %4974 = vmatpush.bf16.msra.mxu0 %v3538
  %4975 = vmatpush.bf16.msra.mxu0 %v3534
  %4976 = vmatpush.bf16.msra.mxu0 %v3530
  %4977 = vmatpush.bf16.msra.mxu0 %v3526
  %4978 = vmatpush.bf16.msra.mxu0 %v3522
  %4979 = vmatpush.bf16.msra.mxu0 %v3518
  %4980 = vmatpush.bf16.msra.mxu0 %v3514
  %4981 = vmatpush.bf16.msra.mxu0 %v3510
  %4982 = vmatmul.bf16.gmra.mxu0 %v923
  %v4983 = vpop.f32.mrf.mxu0
  %v4984 = vadd.f32 %v4970, %v4983
  %v4985 = vpop.f32.mrf.mxu0
  %v4986 = vadd.f32 %v4972, %v4985
  %4987 = vdwg.mxu0
  %4988 = vmatpush.bf16.msra.mxu0 %v3570
  %4989 = vmatpush.bf16.msra.mxu0 %v3566
  %4990 = vmatpush.bf16.msra.mxu0 %v3562
  %4991 = vmatpush.bf16.msra.mxu0 %v3558
  %4992 = vmatpush.bf16.msra.mxu0 %v3554
  %4993 = vmatpush.bf16.msra.mxu0 %v3550
  %4994 = vmatpush.bf16.msra.mxu0 %v3546
  %4995 = vmatpush.bf16.msra.mxu0 %v3542
  %4996 = vmatmul.bf16.gmra.mxu0 %v924
  %v4997 = vpop.f32.mrf.mxu0
  %v4998 = vadd.f32 %v4984, %v4997
  %v4999 = vpop.f32.mrf.mxu0
  %v5000 = vadd.f32 %v4986, %v4999
  %5001 = vdwg.mxu0
  %5002 = vmatpush.bf16.msra.mxu0 %v3602
  %5003 = vmatpush.bf16.msra.mxu0 %v3598
  %5004 = vmatpush.bf16.msra.mxu0 %v3594
  %5005 = vmatpush.bf16.msra.mxu0 %v3590
  %5006 = vmatpush.bf16.msra.mxu0 %v3586
  %5007 = vmatpush.bf16.msra.mxu0 %v3582
  %5008 = vmatpush.bf16.msra.mxu0 %v3578
  %5009 = vmatpush.bf16.msra.mxu0 %v3574
  %5010 = vmatmul.bf16.gmra.mxu0 %v925
  %v5011 = vpop.f32.mrf.mxu0
  %v5012 = vadd.f32 %v4998, %v5011
  %v5013 = vpop.f32.mrf.mxu0
  %v5014 = vadd.f32 %v5000, %v5013
  %5015 = vdwg.mxu0
  %5016 = vmatpush.bf16.msra.mxu0 %v3634
  %5017 = vmatpush.bf16.msra.mxu0 %v3630
  %5018 = vmatpush.bf16.msra.mxu0 %v3626
  %5019 = vmatpush.bf16.msra.mxu0 %v3622
  %5020 = vmatpush.bf16.msra.mxu0 %v3618
  %5021 = vmatpush.bf16.msra.mxu0 %v3614
  %5022 = vmatpush.bf16.msra.mxu0 %v3610
  %5023 = vmatpush.bf16.msra.mxu0 %v3606
  %5024 = vmatmul.bf16.gmra.mxu0 %v926
  %v5025 = vpop.f32.mrf.mxu0
  %v5026 = vadd.f32 %v5012, %v5025
  %v5027 = vpop.f32.mrf.mxu0
  %v5028 = vadd.f32 %v5014, %v5027
  %5029 = vdwg.mxu0
  %5030 = vmatpush.bf16.msra.mxu0 %v3666
  %5031 = vmatpush.bf16.msra.mxu0 %v3662
  %5032 = vmatpush.bf16.msra.mxu0 %v3658
  %5033 = vmatpush.bf16.msra.mxu0 %v3654
  %5034 = vmatpush.bf16.msra.mxu0 %v3650
  %5035 = vmatpush.bf16.msra.mxu0 %v3646
  %5036 = vmatpush.bf16.msra.mxu0 %v3642
  %5037 = vmatpush.bf16.msra.mxu0 %v3638
  %5038 = vmatmul.bf16.gmra.mxu0 %v927
  %v5039 = vpop.f32.mrf.mxu0
  %v5040 = vadd.f32 %v5026, %v5039
  %v5041 = vpop.f32.mrf.mxu0
  %v5042 = vadd.f32 %v5028, %v5041
  %5043 = vdwg.mxu0
  %5044 = vmatpush.bf16.msra.mxu0 %v3698
  %5045 = vmatpush.bf16.msra.mxu0 %v3694
  %5046 = vmatpush.bf16.msra.mxu0 %v3690
  %5047 = vmatpush.bf16.msra.mxu0 %v3686
  %5048 = vmatpush.bf16.msra.mxu0 %v3682
  %5049 = vmatpush.bf16.msra.mxu0 %v3678
  %5050 = vmatpush.bf16.msra.mxu0 %v3674
  %5051 = vmatpush.bf16.msra.mxu0 %v3670
  %5052 = vmatmul.bf16.gmra.mxu0 %v928
  %v5053 = vpop.f32.mrf.mxu0
  %v5054 = vadd.f32 %v5040, %v5053
  %v5055 = vpop.f32.mrf.mxu0
  %v5056 = vadd.f32 %v5042, %v5055
  %5057 = vdwg.mxu0
  %5058 = vmatpush.bf16.msra.mxu0 %v3730
  %5059 = vmatpush.bf16.msra.mxu0 %v3726
  %5060 = vmatpush.bf16.msra.mxu0 %v3722
  %5061 = vmatpush.bf16.msra.mxu0 %v3718
  %5062 = vmatpush.bf16.msra.mxu0 %v3714
  %5063 = vmatpush.bf16.msra.mxu0 %v3710
  %5064 = vmatpush.bf16.msra.mxu0 %v3706
  %5065 = vmatpush.bf16.msra.mxu0 %v3702
  %5066 = vmatmul.bf16.gmra.mxu0 %v929
  %v5067 = vpop.f32.mrf.mxu0
  %v5068 = vadd.f32 %v5054, %v5067
  %v5069 = vpop.f32.mrf.mxu0
  %v5070 = vadd.f32 %v5056, %v5069
  %5071 = vdwg.mxu0
  %5072 = vmatpush.bf16.msra.mxu0 %v3762
  %5073 = vmatpush.bf16.msra.mxu0 %v3758
  %5074 = vmatpush.bf16.msra.mxu0 %v3754
  %5075 = vmatpush.bf16.msra.mxu0 %v3750
  %5076 = vmatpush.bf16.msra.mxu0 %v3746
  %5077 = vmatpush.bf16.msra.mxu0 %v3742
  %5078 = vmatpush.bf16.msra.mxu0 %v3738
  %5079 = vmatpush.bf16.msra.mxu0 %v3734
  %5080 = vmatmul.bf16.gmra.mxu0 %v930
  %v5081 = vpop.f32.mrf.mxu0
  %v5082 = vadd.f32 %v5068, %v5081
  %v5083 = vpop.f32.mrf.mxu0
  %v5084 = vadd.f32 %v5070, %v5083
  %5085 = vdwg.mxu0
  %5086 = vmatpush.bf16.msra.mxu0 %v3794
  %5087 = vmatpush.bf16.msra.mxu0 %v3790
  %5088 = vmatpush.bf16.msra.mxu0 %v3786
  %5089 = vmatpush.bf16.msra.mxu0 %v3782
  %5090 = vmatpush.bf16.msra.mxu0 %v3778
  %5091 = vmatpush.bf16.msra.mxu0 %v3774
  %5092 = vmatpush.bf16.msra.mxu0 %v3770
  %5093 = vmatpush.bf16.msra.mxu0 %v3766
  %5094 = vmatmul.bf16.gmra.mxu0 %v931
  %v5095 = vpop.f32.mrf.mxu0
  %v5096 = vadd.f32 %v5082, %v5095
  %v5097 = vpop.f32.mrf.mxu0
  %v5098 = vadd.f32 %v5084, %v5097
  %5099 = vdwg.mxu0
  %5100 = vmatpush.bf16.msra.mxu0 %v3826
  %5101 = vmatpush.bf16.msra.mxu0 %v3822
  %5102 = vmatpush.bf16.msra.mxu0 %v3818
  %5103 = vmatpush.bf16.msra.mxu0 %v3814
  %5104 = vmatpush.bf16.msra.mxu0 %v3810
  %5105 = vmatpush.bf16.msra.mxu0 %v3806
  %5106 = vmatpush.bf16.msra.mxu0 %v3802
  %5107 = vmatpush.bf16.msra.mxu0 %v3798
  %5108 = vmatmul.bf16.gmra.mxu0 %v932
  %v5109 = vpop.f32.mrf.mxu0
  %v5110 = vadd.f32 %v5096, %v5109
  %v5111 = vpop.f32.mrf.mxu0
  %v5112 = vadd.f32 %v5098, %v5111
  %5113 = vdwg.mxu0
  %5114 = vmatpush.bf16.msra.mxu0 %v3858
  %5115 = vmatpush.bf16.msra.mxu0 %v3854
  %5116 = vmatpush.bf16.msra.mxu0 %v3850
  %5117 = vmatpush.bf16.msra.mxu0 %v3846
  %5118 = vmatpush.bf16.msra.mxu0 %v3842
  %5119 = vmatpush.bf16.msra.mxu0 %v3838
  %5120 = vmatpush.bf16.msra.mxu0 %v3834
  %5121 = vmatpush.bf16.msra.mxu0 %v3830
  %5122 = vmatmul.bf16.gmra.mxu0 %v933
  %v5123 = vpop.f32.mrf.mxu0
  %v5124 = vadd.f32 %v5110, %v5123
  %v5125 = vpop.f32.mrf.mxu0
  %v5126 = vadd.f32 %v5112, %v5125
  %5127 = vdwg.mxu0
  %5128 = vmatpush.bf16.msra.mxu0 %v3890
  %5129 = vmatpush.bf16.msra.mxu0 %v3886
  %5130 = vmatpush.bf16.msra.mxu0 %v3882
  %5131 = vmatpush.bf16.msra.mxu0 %v3878
  %5132 = vmatpush.bf16.msra.mxu0 %v3874
  %5133 = vmatpush.bf16.msra.mxu0 %v3870
  %5134 = vmatpush.bf16.msra.mxu0 %v3866
  %5135 = vmatpush.bf16.msra.mxu0 %v3862
  %5136 = vmatmul.bf16.gmra.mxu0 %v934
  %v5137 = vpop.f32.mrf.mxu0
  %v5138 = vadd.f32 %v5124, %v5137
  %v5139 = vpop.f32.mrf.mxu0
  %v5140 = vadd.f32 %v5126, %v5139
  %5141 = vdwg.mxu0
  %5142 = vmatpush.bf16.msra.mxu0 %v3922
  %5143 = vmatpush.bf16.msra.mxu0 %v3918
  %5144 = vmatpush.bf16.msra.mxu0 %v3914
  %5145 = vmatpush.bf16.msra.mxu0 %v3910
  %5146 = vmatpush.bf16.msra.mxu0 %v3906
  %5147 = vmatpush.bf16.msra.mxu0 %v3902
  %5148 = vmatpush.bf16.msra.mxu0 %v3898
  %5149 = vmatpush.bf16.msra.mxu0 %v3894
  %5150 = vmatmul.bf16.gmra.mxu0 %v935
  %v5151 = vpop.f32.mrf.mxu0
  %v5152 = vadd.f32 %v5138, %v5151
  %v5153 = vpop.f32.mrf.mxu0
  %v5154 = vadd.f32 %v5140, %v5153
  %5155 = vdwg.mxu0
  %5156 = vmatpush.bf16.msra.mxu0 %v3954
  %5157 = vmatpush.bf16.msra.mxu0 %v3950
  %5158 = vmatpush.bf16.msra.mxu0 %v3946
  %5159 = vmatpush.bf16.msra.mxu0 %v3942
  %5160 = vmatpush.bf16.msra.mxu0 %v3938
  %5161 = vmatpush.bf16.msra.mxu0 %v3934
  %5162 = vmatpush.bf16.msra.mxu0 %v3930
  %5163 = vmatpush.bf16.msra.mxu0 %v3926
  %5164 = vmatmul.bf16.gmra.mxu0 %v936
  %v5165 = vpop.f32.mrf.mxu0
  %v5166 = vadd.f32 %v5152, %v5165
  %v5167 = vpop.f32.mrf.mxu0
  %v5168 = vadd.f32 %v5154, %v5167
  %5169 = vdwg.mxu0
  %5170 = vmatpush.bf16.msra.mxu0 %v3986
  %5171 = vmatpush.bf16.msra.mxu0 %v3982
  %5172 = vmatpush.bf16.msra.mxu0 %v3978
  %5173 = vmatpush.bf16.msra.mxu0 %v3974
  %5174 = vmatpush.bf16.msra.mxu0 %v3970
  %5175 = vmatpush.bf16.msra.mxu0 %v3966
  %5176 = vmatpush.bf16.msra.mxu0 %v3962
  %5177 = vmatpush.bf16.msra.mxu0 %v3958
  %5178 = vmatmul.bf16.gmra.mxu0 %v937
  %v5179 = vpop.f32.mrf.mxu0
  %v5180 = vadd.f32 %v5166, %v5179
  %v5181 = vpop.f32.mrf.mxu0
  %v5182 = vadd.f32 %v5168, %v5181
  %5183 = vdwg.mxu0
  %5184 = vmatpush.bf16.msra.mxu0 %v4018
  %5185 = vmatpush.bf16.msra.mxu0 %v4014
  %5186 = vmatpush.bf16.msra.mxu0 %v4010
  %5187 = vmatpush.bf16.msra.mxu0 %v4006
  %5188 = vmatpush.bf16.msra.mxu0 %v4002
  %5189 = vmatpush.bf16.msra.mxu0 %v3998
  %5190 = vmatpush.bf16.msra.mxu0 %v3994
  %5191 = vmatpush.bf16.msra.mxu0 %v3990
  %5192 = vmatmul.bf16.gmra.mxu0 %v938
  %v5193 = vpop.f32.mrf.mxu0
  %v5194 = vadd.f32 %v5180, %v5193
  %v5195 = vpop.f32.mrf.mxu0
  %v5196 = vadd.f32 %v5182, %v5195
  %5197 = vdwg.mxu0
  %5198 = vmatpush.bf16.msra.mxu0 %v4050
  %5199 = vmatpush.bf16.msra.mxu0 %v4046
  %5200 = vmatpush.bf16.msra.mxu0 %v4042
  %5201 = vmatpush.bf16.msra.mxu0 %v4038
  %5202 = vmatpush.bf16.msra.mxu0 %v4034
  %5203 = vmatpush.bf16.msra.mxu0 %v4030
  %5204 = vmatpush.bf16.msra.mxu0 %v4026
  %5205 = vmatpush.bf16.msra.mxu0 %v4022
  %5206 = vmatmul.bf16.gmra.mxu0 %v939
  %v5207 = vpop.f32.mrf.mxu0
  %v5208 = vadd.f32 %v5194, %v5207
  %v5209 = vpop.f32.mrf.mxu0
  %v5210 = vadd.f32 %v5196, %v5209
  %5211 = vdwg.mxu0
  %5212 = vmatpush.bf16.msra.mxu0 %v4082
  %5213 = vmatpush.bf16.msra.mxu0 %v4078
  %5214 = vmatpush.bf16.msra.mxu0 %v4074
  %5215 = vmatpush.bf16.msra.mxu0 %v4070
  %5216 = vmatpush.bf16.msra.mxu0 %v4066
  %5217 = vmatpush.bf16.msra.mxu0 %v4062
  %5218 = vmatpush.bf16.msra.mxu0 %v4058
  %5219 = vmatpush.bf16.msra.mxu0 %v4054
  %5220 = vmatmul.bf16.gmra.mxu0 %v940
  %v5221 = vpop.f32.mrf.mxu0
  %v5222 = vadd.f32 %v5208, %v5221
  %v5223 = vpop.f32.mrf.mxu0
  %v5224 = vadd.f32 %v5210, %v5223
  %5225 = vdwg.mxu0
  %5226 = vmatpush.bf16.msra.mxu0 0
  %5227 = vmatpush.bf16.msra.mxu0 0
  %5228 = vmatpush.bf16.msra.mxu0 0
  %5229 = vmatpush.bf16.msra.mxu0 0
  %5230 = vmatpush.bf16.msra.mxu0 %v4098
  %5231 = vmatpush.bf16.msra.mxu0 %v4094
  %5232 = vmatpush.bf16.msra.mxu0 %v4090
  %5233 = vmatpush.bf16.msra.mxu0 %v4086
  %5234 = vmatmul.bf16.gmra.mxu0 %v4888
  %v5235 = vpop.f32.mrf.mxu0
  %v5236 = vadd.f32 %v5222, %v5235
  %v5237 = vpop.f32.mrf.mxu0
  %v5238 = vadd.f32 %v5224, %v5237
  %5239 = vdwg.mxu0
  %5240 = vmatpush.bf16.msra.mxu0 %v3347
  %5241 = vmatpush.bf16.msra.mxu0 %v3343
  %5242 = vmatpush.bf16.msra.mxu0 %v3339
  %5243 = vmatpush.bf16.msra.mxu0 %v3335
  %5244 = vmatpush.bf16.msra.mxu0 %v3331
  %5245 = vmatpush.bf16.msra.mxu0 %v3327
  %5246 = vmatpush.bf16.msra.mxu0 %v3323
  %5247 = vmatpush.bf16.msra.mxu0 %v3319
  %5248 = vmatmul.bf16.gmra.mxu0 %v917
  %v5249 = vpop.f32.mrf.mxu0
  %v5250 = vadd.f32 %v834, %v5249
  %v5251 = vpop.f32.mrf.mxu0
  %v5252 = vadd.f32 %v834, %v5251
  %5253 = vdwg.mxu0
  %5254 = vmatpush.bf16.msra.mxu0 %v3379
  %5255 = vmatpush.bf16.msra.mxu0 %v3375
  %5256 = vmatpush.bf16.msra.mxu0 %v3371
  %5257 = vmatpush.bf16.msra.mxu0 %v3367
  %5258 = vmatpush.bf16.msra.mxu0 %v3363
  %5259 = vmatpush.bf16.msra.mxu0 %v3359
  %5260 = vmatpush.bf16.msra.mxu0 %v3355
  %5261 = vmatpush.bf16.msra.mxu0 %v3351
  %5262 = vmatmul.bf16.gmra.mxu0 %v918
  %v5263 = vpop.f32.mrf.mxu0
  %v5264 = vadd.f32 %v5250, %v5263
  %v5265 = vpop.f32.mrf.mxu0
  %v5266 = vadd.f32 %v5252, %v5265
  %5267 = vdwg.mxu0
  %5268 = vmatpush.bf16.msra.mxu0 %v3411
  %5269 = vmatpush.bf16.msra.mxu0 %v3407
  %5270 = vmatpush.bf16.msra.mxu0 %v3403
  %5271 = vmatpush.bf16.msra.mxu0 %v3399
  %5272 = vmatpush.bf16.msra.mxu0 %v3395
  %5273 = vmatpush.bf16.msra.mxu0 %v3391
  %5274 = vmatpush.bf16.msra.mxu0 %v3387
  %5275 = vmatpush.bf16.msra.mxu0 %v3383
  %5276 = vmatmul.bf16.gmra.mxu0 %v919
  %v5277 = vpop.f32.mrf.mxu0
  %v5278 = vadd.f32 %v5264, %v5277
  %v5279 = vpop.f32.mrf.mxu0
  %v5280 = vadd.f32 %v5266, %v5279
  %5281 = vdwg.mxu0
  %5282 = vmatpush.bf16.msra.mxu0 %v3443
  %5283 = vmatpush.bf16.msra.mxu0 %v3439
  %5284 = vmatpush.bf16.msra.mxu0 %v3435
  %5285 = vmatpush.bf16.msra.mxu0 %v3431
  %5286 = vmatpush.bf16.msra.mxu0 %v3427
  %5287 = vmatpush.bf16.msra.mxu0 %v3423
  %5288 = vmatpush.bf16.msra.mxu0 %v3419
  %5289 = vmatpush.bf16.msra.mxu0 %v3415
  %5290 = vmatmul.bf16.gmra.mxu0 %v920
  %v5291 = vpop.f32.mrf.mxu0
  %v5292 = vadd.f32 %v5278, %v5291
  %v5293 = vpop.f32.mrf.mxu0
  %v5294 = vadd.f32 %v5280, %v5293
  %5295 = vdwg.mxu0
  %5296 = vmatpush.bf16.msra.mxu0 %v3475
  %5297 = vmatpush.bf16.msra.mxu0 %v3471
  %5298 = vmatpush.bf16.msra.mxu0 %v3467
  %5299 = vmatpush.bf16.msra.mxu0 %v3463
  %5300 = vmatpush.bf16.msra.mxu0 %v3459
  %5301 = vmatpush.bf16.msra.mxu0 %v3455
  %5302 = vmatpush.bf16.msra.mxu0 %v3451
  %5303 = vmatpush.bf16.msra.mxu0 %v3447
  %5304 = vmatmul.bf16.gmra.mxu0 %v921
  %v5305 = vpop.f32.mrf.mxu0
  %v5306 = vadd.f32 %v5292, %v5305
  %v5307 = vpop.f32.mrf.mxu0
  %v5308 = vadd.f32 %v5294, %v5307
  %5309 = vdwg.mxu0
  %5310 = vmatpush.bf16.msra.mxu0 %v3507
  %5311 = vmatpush.bf16.msra.mxu0 %v3503
  %5312 = vmatpush.bf16.msra.mxu0 %v3499
  %5313 = vmatpush.bf16.msra.mxu0 %v3495
  %5314 = vmatpush.bf16.msra.mxu0 %v3491
  %5315 = vmatpush.bf16.msra.mxu0 %v3487
  %5316 = vmatpush.bf16.msra.mxu0 %v3483
  %5317 = vmatpush.bf16.msra.mxu0 %v3479
  %5318 = vmatmul.bf16.gmra.mxu0 %v922
  %v5319 = vpop.f32.mrf.mxu0
  %v5320 = vadd.f32 %v5306, %v5319
  %v5321 = vpop.f32.mrf.mxu0
  %v5322 = vadd.f32 %v5308, %v5321
  %5323 = vdwg.mxu0
  %5324 = vmatpush.bf16.msra.mxu0 %v3539
  %5325 = vmatpush.bf16.msra.mxu0 %v3535
  %5326 = vmatpush.bf16.msra.mxu0 %v3531
  %5327 = vmatpush.bf16.msra.mxu0 %v3527
  %5328 = vmatpush.bf16.msra.mxu0 %v3523
  %5329 = vmatpush.bf16.msra.mxu0 %v3519
  %5330 = vmatpush.bf16.msra.mxu0 %v3515
  %5331 = vmatpush.bf16.msra.mxu0 %v3511
  %5332 = vmatmul.bf16.gmra.mxu0 %v923
  %v5333 = vpop.f32.mrf.mxu0
  %v5334 = vadd.f32 %v5320, %v5333
  %v5335 = vpop.f32.mrf.mxu0
  %v5336 = vadd.f32 %v5322, %v5335
  %5337 = vdwg.mxu0
  %5338 = vmatpush.bf16.msra.mxu0 %v3571
  %5339 = vmatpush.bf16.msra.mxu0 %v3567
  %5340 = vmatpush.bf16.msra.mxu0 %v3563
  %5341 = vmatpush.bf16.msra.mxu0 %v3559
  %5342 = vmatpush.bf16.msra.mxu0 %v3555
  %5343 = vmatpush.bf16.msra.mxu0 %v3551
  %5344 = vmatpush.bf16.msra.mxu0 %v3547
  %5345 = vmatpush.bf16.msra.mxu0 %v3543
  %5346 = vmatmul.bf16.gmra.mxu0 %v924
  %v5347 = vpop.f32.mrf.mxu0
  %v5348 = vadd.f32 %v5334, %v5347
  %v5349 = vpop.f32.mrf.mxu0
  %v5350 = vadd.f32 %v5336, %v5349
  %5351 = vdwg.mxu0
  %5352 = vmatpush.bf16.msra.mxu0 %v3603
  %5353 = vmatpush.bf16.msra.mxu0 %v3599
  %5354 = vmatpush.bf16.msra.mxu0 %v3595
  %5355 = vmatpush.bf16.msra.mxu0 %v3591
  %5356 = vmatpush.bf16.msra.mxu0 %v3587
  %5357 = vmatpush.bf16.msra.mxu0 %v3583
  %5358 = vmatpush.bf16.msra.mxu0 %v3579
  %5359 = vmatpush.bf16.msra.mxu0 %v3575
  %5360 = vmatmul.bf16.gmra.mxu0 %v925
  %v5361 = vpop.f32.mrf.mxu0
  %v5362 = vadd.f32 %v5348, %v5361
  %v5363 = vpop.f32.mrf.mxu0
  %v5364 = vadd.f32 %v5350, %v5363
  %5365 = vdwg.mxu0
  %5366 = vmatpush.bf16.msra.mxu0 %v3635
  %5367 = vmatpush.bf16.msra.mxu0 %v3631
  %5368 = vmatpush.bf16.msra.mxu0 %v3627
  %5369 = vmatpush.bf16.msra.mxu0 %v3623
  %5370 = vmatpush.bf16.msra.mxu0 %v3619
  %5371 = vmatpush.bf16.msra.mxu0 %v3615
  %5372 = vmatpush.bf16.msra.mxu0 %v3611
  %5373 = vmatpush.bf16.msra.mxu0 %v3607
  %5374 = vmatmul.bf16.gmra.mxu0 %v926
  %v5375 = vpop.f32.mrf.mxu0
  %v5376 = vadd.f32 %v5362, %v5375
  %v5377 = vpop.f32.mrf.mxu0
  %v5378 = vadd.f32 %v5364, %v5377
  %5379 = vdwg.mxu0
  %5380 = vmatpush.bf16.msra.mxu0 %v3667
  %5381 = vmatpush.bf16.msra.mxu0 %v3663
  %5382 = vmatpush.bf16.msra.mxu0 %v3659
  %5383 = vmatpush.bf16.msra.mxu0 %v3655
  %5384 = vmatpush.bf16.msra.mxu0 %v3651
  %5385 = vmatpush.bf16.msra.mxu0 %v3647
  %5386 = vmatpush.bf16.msra.mxu0 %v3643
  %5387 = vmatpush.bf16.msra.mxu0 %v3639
  %5388 = vmatmul.bf16.gmra.mxu0 %v927
  %v5389 = vpop.f32.mrf.mxu0
  %v5390 = vadd.f32 %v5376, %v5389
  %v5391 = vpop.f32.mrf.mxu0
  %v5392 = vadd.f32 %v5378, %v5391
  %5393 = vdwg.mxu0
  %5394 = vmatpush.bf16.msra.mxu0 %v3699
  %5395 = vmatpush.bf16.msra.mxu0 %v3695
  %5396 = vmatpush.bf16.msra.mxu0 %v3691
  %5397 = vmatpush.bf16.msra.mxu0 %v3687
  %5398 = vmatpush.bf16.msra.mxu0 %v3683
  %5399 = vmatpush.bf16.msra.mxu0 %v3679
  %5400 = vmatpush.bf16.msra.mxu0 %v3675
  %5401 = vmatpush.bf16.msra.mxu0 %v3671
  %5402 = vmatmul.bf16.gmra.mxu0 %v928
  %v5403 = vpop.f32.mrf.mxu0
  %v5404 = vadd.f32 %v5390, %v5403
  %v5405 = vpop.f32.mrf.mxu0
  %v5406 = vadd.f32 %v5392, %v5405
  %5407 = vdwg.mxu0
  %5408 = vmatpush.bf16.msra.mxu0 %v3731
  %5409 = vmatpush.bf16.msra.mxu0 %v3727
  %5410 = vmatpush.bf16.msra.mxu0 %v3723
  %5411 = vmatpush.bf16.msra.mxu0 %v3719
  %5412 = vmatpush.bf16.msra.mxu0 %v3715
  %5413 = vmatpush.bf16.msra.mxu0 %v3711
  %5414 = vmatpush.bf16.msra.mxu0 %v3707
  %5415 = vmatpush.bf16.msra.mxu0 %v3703
  %5416 = vmatmul.bf16.gmra.mxu0 %v929
  %v5417 = vpop.f32.mrf.mxu0
  %v5418 = vadd.f32 %v5404, %v5417
  %v5419 = vpop.f32.mrf.mxu0
  %v5420 = vadd.f32 %v5406, %v5419
  %5421 = vdwg.mxu0
  %5422 = vmatpush.bf16.msra.mxu0 %v3763
  %5423 = vmatpush.bf16.msra.mxu0 %v3759
  %5424 = vmatpush.bf16.msra.mxu0 %v3755
  %5425 = vmatpush.bf16.msra.mxu0 %v3751
  %5426 = vmatpush.bf16.msra.mxu0 %v3747
  %5427 = vmatpush.bf16.msra.mxu0 %v3743
  %5428 = vmatpush.bf16.msra.mxu0 %v3739
  %5429 = vmatpush.bf16.msra.mxu0 %v3735
  %5430 = vmatmul.bf16.gmra.mxu0 %v930
  %v5431 = vpop.f32.mrf.mxu0
  %v5432 = vadd.f32 %v5418, %v5431
  %v5433 = vpop.f32.mrf.mxu0
  %v5434 = vadd.f32 %v5420, %v5433
  %5435 = vdwg.mxu0
  %5436 = vmatpush.bf16.msra.mxu0 %v3795
  %5437 = vmatpush.bf16.msra.mxu0 %v3791
  %5438 = vmatpush.bf16.msra.mxu0 %v3787
  %5439 = vmatpush.bf16.msra.mxu0 %v3783
  %5440 = vmatpush.bf16.msra.mxu0 %v3779
  %5441 = vmatpush.bf16.msra.mxu0 %v3775
  %5442 = vmatpush.bf16.msra.mxu0 %v3771
  %5443 = vmatpush.bf16.msra.mxu0 %v3767
  %5444 = vmatmul.bf16.gmra.mxu0 %v931
  %v5445 = vpop.f32.mrf.mxu0
  %v5446 = vadd.f32 %v5432, %v5445
  %v5447 = vpop.f32.mrf.mxu0
  %v5448 = vadd.f32 %v5434, %v5447
  %5449 = vdwg.mxu0
  %5450 = vmatpush.bf16.msra.mxu0 %v3827
  %5451 = vmatpush.bf16.msra.mxu0 %v3823
  %5452 = vmatpush.bf16.msra.mxu0 %v3819
  %5453 = vmatpush.bf16.msra.mxu0 %v3815
  %5454 = vmatpush.bf16.msra.mxu0 %v3811
  %5455 = vmatpush.bf16.msra.mxu0 %v3807
  %5456 = vmatpush.bf16.msra.mxu0 %v3803
  %5457 = vmatpush.bf16.msra.mxu0 %v3799
  %5458 = vmatmul.bf16.gmra.mxu0 %v932
  %v5459 = vpop.f32.mrf.mxu0
  %v5460 = vadd.f32 %v5446, %v5459
  %v5461 = vpop.f32.mrf.mxu0
  %v5462 = vadd.f32 %v5448, %v5461
  %5463 = vdwg.mxu0
  %5464 = vmatpush.bf16.msra.mxu0 %v3859
  %5465 = vmatpush.bf16.msra.mxu0 %v3855
  %5466 = vmatpush.bf16.msra.mxu0 %v3851
  %5467 = vmatpush.bf16.msra.mxu0 %v3847
  %5468 = vmatpush.bf16.msra.mxu0 %v3843
  %5469 = vmatpush.bf16.msra.mxu0 %v3839
  %5470 = vmatpush.bf16.msra.mxu0 %v3835
  %5471 = vmatpush.bf16.msra.mxu0 %v3831
  %5472 = vmatmul.bf16.gmra.mxu0 %v933
  %v5473 = vpop.f32.mrf.mxu0
  %v5474 = vadd.f32 %v5460, %v5473
  %v5475 = vpop.f32.mrf.mxu0
  %v5476 = vadd.f32 %v5462, %v5475
  %5477 = vdwg.mxu0
  %5478 = vmatpush.bf16.msra.mxu0 %v3891
  %5479 = vmatpush.bf16.msra.mxu0 %v3887
  %5480 = vmatpush.bf16.msra.mxu0 %v3883
  %5481 = vmatpush.bf16.msra.mxu0 %v3879
  %5482 = vmatpush.bf16.msra.mxu0 %v3875
  %5483 = vmatpush.bf16.msra.mxu0 %v3871
  %5484 = vmatpush.bf16.msra.mxu0 %v3867
  %5485 = vmatpush.bf16.msra.mxu0 %v3863
  %5486 = vmatmul.bf16.gmra.mxu0 %v934
  %v5487 = vpop.f32.mrf.mxu0
  %v5488 = vadd.f32 %v5474, %v5487
  %v5489 = vpop.f32.mrf.mxu0
  %v5490 = vadd.f32 %v5476, %v5489
  %5491 = vdwg.mxu0
  %5492 = vmatpush.bf16.msra.mxu0 %v3923
  %5493 = vmatpush.bf16.msra.mxu0 %v3919
  %5494 = vmatpush.bf16.msra.mxu0 %v3915
  %5495 = vmatpush.bf16.msra.mxu0 %v3911
  %5496 = vmatpush.bf16.msra.mxu0 %v3907
  %5497 = vmatpush.bf16.msra.mxu0 %v3903
  %5498 = vmatpush.bf16.msra.mxu0 %v3899
  %5499 = vmatpush.bf16.msra.mxu0 %v3895
  %5500 = vmatmul.bf16.gmra.mxu0 %v935
  %v5501 = vpop.f32.mrf.mxu0
  %v5502 = vadd.f32 %v5488, %v5501
  %v5503 = vpop.f32.mrf.mxu0
  %v5504 = vadd.f32 %v5490, %v5503
  %5505 = vdwg.mxu0
  %5506 = vmatpush.bf16.msra.mxu0 %v3955
  %5507 = vmatpush.bf16.msra.mxu0 %v3951
  %5508 = vmatpush.bf16.msra.mxu0 %v3947
  %5509 = vmatpush.bf16.msra.mxu0 %v3943
  %5510 = vmatpush.bf16.msra.mxu0 %v3939
  %5511 = vmatpush.bf16.msra.mxu0 %v3935
  %5512 = vmatpush.bf16.msra.mxu0 %v3931
  %5513 = vmatpush.bf16.msra.mxu0 %v3927
  %5514 = vmatmul.bf16.gmra.mxu0 %v936
  %v5515 = vpop.f32.mrf.mxu0
  %v5516 = vadd.f32 %v5502, %v5515
  %v5517 = vpop.f32.mrf.mxu0
  %v5518 = vadd.f32 %v5504, %v5517
  %5519 = vdwg.mxu0
  %5520 = vmatpush.bf16.msra.mxu0 %v3987
  %5521 = vmatpush.bf16.msra.mxu0 %v3983
  %5522 = vmatpush.bf16.msra.mxu0 %v3979
  %5523 = vmatpush.bf16.msra.mxu0 %v3975
  %5524 = vmatpush.bf16.msra.mxu0 %v3971
  %5525 = vmatpush.bf16.msra.mxu0 %v3967
  %5526 = vmatpush.bf16.msra.mxu0 %v3963
  %5527 = vmatpush.bf16.msra.mxu0 %v3959
  %5528 = vmatmul.bf16.gmra.mxu0 %v937
  %v5529 = vpop.f32.mrf.mxu0
  %v5530 = vadd.f32 %v5516, %v5529
  %v5531 = vpop.f32.mrf.mxu0
  %v5532 = vadd.f32 %v5518, %v5531
  %5533 = vdwg.mxu0
  %5534 = vmatpush.bf16.msra.mxu0 %v4019
  %5535 = vmatpush.bf16.msra.mxu0 %v4015
  %5536 = vmatpush.bf16.msra.mxu0 %v4011
  %5537 = vmatpush.bf16.msra.mxu0 %v4007
  %5538 = vmatpush.bf16.msra.mxu0 %v4003
  %5539 = vmatpush.bf16.msra.mxu0 %v3999
  %5540 = vmatpush.bf16.msra.mxu0 %v3995
  %5541 = vmatpush.bf16.msra.mxu0 %v3991
  %5542 = vmatmul.bf16.gmra.mxu0 %v938
  %v5543 = vpop.f32.mrf.mxu0
  %v5544 = vadd.f32 %v5530, %v5543
  %v5545 = vpop.f32.mrf.mxu0
  %v5546 = vadd.f32 %v5532, %v5545
  %5547 = vdwg.mxu0
  %5548 = vmatpush.bf16.msra.mxu0 %v4051
  %5549 = vmatpush.bf16.msra.mxu0 %v4047
  %5550 = vmatpush.bf16.msra.mxu0 %v4043
  %5551 = vmatpush.bf16.msra.mxu0 %v4039
  %5552 = vmatpush.bf16.msra.mxu0 %v4035
  %5553 = vmatpush.bf16.msra.mxu0 %v4031
  %5554 = vmatpush.bf16.msra.mxu0 %v4027
  %5555 = vmatpush.bf16.msra.mxu0 %v4023
  %5556 = vmatmul.bf16.gmra.mxu0 %v939
  %v5557 = vpop.f32.mrf.mxu0
  %v5558 = vadd.f32 %v5544, %v5557
  %v5559 = vpop.f32.mrf.mxu0
  %v5560 = vadd.f32 %v5546, %v5559
  %5561 = vdwg.mxu0
  %5562 = vmatpush.bf16.msra.mxu0 %v4083
  %5563 = vmatpush.bf16.msra.mxu0 %v4079
  %5564 = vmatpush.bf16.msra.mxu0 %v4075
  %5565 = vmatpush.bf16.msra.mxu0 %v4071
  %5566 = vmatpush.bf16.msra.mxu0 %v4067
  %5567 = vmatpush.bf16.msra.mxu0 %v4063
  %5568 = vmatpush.bf16.msra.mxu0 %v4059
  %5569 = vmatpush.bf16.msra.mxu0 %v4055
  %5570 = vmatmul.bf16.gmra.mxu0 %v940
  %v5571 = vpop.f32.mrf.mxu0
  %v5572 = vadd.f32 %v5558, %v5571
  %v5573 = vpop.f32.mrf.mxu0
  %v5574 = vadd.f32 %v5560, %v5573
  %5575 = vdwg.mxu0
  %5576 = vmatpush.bf16.msra.mxu0 0
  %5577 = vmatpush.bf16.msra.mxu0 0
  %5578 = vmatpush.bf16.msra.mxu0 0
  %5579 = vmatpush.bf16.msra.mxu0 0
  %5580 = vmatpush.bf16.msra.mxu0 %v4099
  %5581 = vmatpush.bf16.msra.mxu0 %v4095
  %5582 = vmatpush.bf16.msra.mxu0 %v4091
  %5583 = vmatpush.bf16.msra.mxu0 %v4087
  %5584 = vmatmul.bf16.gmra.mxu0 %v4888
  %v5585 = vpop.f32.mrf.mxu0
  %v5586 = vadd.f32 %v5572, %v5585
  %v5587 = vpop.f32.mrf.mxu0
  %v5588 = vadd.f32 %v5574, %v5587
  %5589 = vdwg.mxu0
  %5590 = vmatpush.bf16.msra.mxu0 %v3348
  %5591 = vmatpush.bf16.msra.mxu0 %v3344
  %5592 = vmatpush.bf16.msra.mxu0 %v3340
  %5593 = vmatpush.bf16.msra.mxu0 %v3336
  %5594 = vmatpush.bf16.msra.mxu0 %v3332
  %5595 = vmatpush.bf16.msra.mxu0 %v3328
  %5596 = vmatpush.bf16.msra.mxu0 %v3324
  %5597 = vmatpush.bf16.msra.mxu0 %v3320
  %5598 = vmatmul.bf16.gmra.mxu0 %v917
  %v5599 = vpop.f32.mrf.mxu0
  %v5600 = vadd.f32 %v835, %v5599
  %v5601 = vpop.f32.mrf.mxu0
  %v5602 = vadd.f32 %v835, %v5601
  %5603 = vdwg.mxu0
  %5604 = vmatpush.bf16.msra.mxu0 %v3380
  %5605 = vmatpush.bf16.msra.mxu0 %v3376
  %5606 = vmatpush.bf16.msra.mxu0 %v3372
  %5607 = vmatpush.bf16.msra.mxu0 %v3368
  %5608 = vmatpush.bf16.msra.mxu0 %v3364
  %5609 = vmatpush.bf16.msra.mxu0 %v3360
  %5610 = vmatpush.bf16.msra.mxu0 %v3356
  %5611 = vmatpush.bf16.msra.mxu0 %v3352
  %5612 = vmatmul.bf16.gmra.mxu0 %v918
  %v5613 = vpop.f32.mrf.mxu0
  %v5614 = vadd.f32 %v5600, %v5613
  %v5615 = vpop.f32.mrf.mxu0
  %v5616 = vadd.f32 %v5602, %v5615
  %5617 = vdwg.mxu0
  %5618 = vmatpush.bf16.msra.mxu0 %v3412
  %5619 = vmatpush.bf16.msra.mxu0 %v3408
  %5620 = vmatpush.bf16.msra.mxu0 %v3404
  %5621 = vmatpush.bf16.msra.mxu0 %v3400
  %5622 = vmatpush.bf16.msra.mxu0 %v3396
  %5623 = vmatpush.bf16.msra.mxu0 %v3392
  %5624 = vmatpush.bf16.msra.mxu0 %v3388
  %5625 = vmatpush.bf16.msra.mxu0 %v3384
  %5626 = vmatmul.bf16.gmra.mxu0 %v919
  %v5627 = vpop.f32.mrf.mxu0
  %v5628 = vadd.f32 %v5614, %v5627
  %v5629 = vpop.f32.mrf.mxu0
  %v5630 = vadd.f32 %v5616, %v5629
  %5631 = vdwg.mxu0
  %5632 = vmatpush.bf16.msra.mxu0 %v3444
  %5633 = vmatpush.bf16.msra.mxu0 %v3440
  %5634 = vmatpush.bf16.msra.mxu0 %v3436
  %5635 = vmatpush.bf16.msra.mxu0 %v3432
  %5636 = vmatpush.bf16.msra.mxu0 %v3428
  %5637 = vmatpush.bf16.msra.mxu0 %v3424
  %5638 = vmatpush.bf16.msra.mxu0 %v3420
  %5639 = vmatpush.bf16.msra.mxu0 %v3416
  %5640 = vmatmul.bf16.gmra.mxu0 %v920
  %v5641 = vpop.f32.mrf.mxu0
  %v5642 = vadd.f32 %v5628, %v5641
  %v5643 = vpop.f32.mrf.mxu0
  %v5644 = vadd.f32 %v5630, %v5643
  %5645 = vdwg.mxu0
  %5646 = vmatpush.bf16.msra.mxu0 %v3476
  %5647 = vmatpush.bf16.msra.mxu0 %v3472
  %5648 = vmatpush.bf16.msra.mxu0 %v3468
  %5649 = vmatpush.bf16.msra.mxu0 %v3464
  %5650 = vmatpush.bf16.msra.mxu0 %v3460
  %5651 = vmatpush.bf16.msra.mxu0 %v3456
  %5652 = vmatpush.bf16.msra.mxu0 %v3452
  %5653 = vmatpush.bf16.msra.mxu0 %v3448
  %5654 = vmatmul.bf16.gmra.mxu0 %v921
  %v5655 = vpop.f32.mrf.mxu0
  %v5656 = vadd.f32 %v5642, %v5655
  %v5657 = vpop.f32.mrf.mxu0
  %v5658 = vadd.f32 %v5644, %v5657
  %5659 = vdwg.mxu0
  %5660 = vmatpush.bf16.msra.mxu0 %v3508
  %5661 = vmatpush.bf16.msra.mxu0 %v3504
  %5662 = vmatpush.bf16.msra.mxu0 %v3500
  %5663 = vmatpush.bf16.msra.mxu0 %v3496
  %5664 = vmatpush.bf16.msra.mxu0 %v3492
  %5665 = vmatpush.bf16.msra.mxu0 %v3488
  %5666 = vmatpush.bf16.msra.mxu0 %v3484
  %5667 = vmatpush.bf16.msra.mxu0 %v3480
  %5668 = vmatmul.bf16.gmra.mxu0 %v922
  %v5669 = vpop.f32.mrf.mxu0
  %v5670 = vadd.f32 %v5656, %v5669
  %v5671 = vpop.f32.mrf.mxu0
  %v5672 = vadd.f32 %v5658, %v5671
  %5673 = vdwg.mxu0
  %5674 = vmatpush.bf16.msra.mxu0 %v3540
  %5675 = vmatpush.bf16.msra.mxu0 %v3536
  %5676 = vmatpush.bf16.msra.mxu0 %v3532
  %5677 = vmatpush.bf16.msra.mxu0 %v3528
  %5678 = vmatpush.bf16.msra.mxu0 %v3524
  %5679 = vmatpush.bf16.msra.mxu0 %v3520
  %5680 = vmatpush.bf16.msra.mxu0 %v3516
  %5681 = vmatpush.bf16.msra.mxu0 %v3512
  %5682 = vmatmul.bf16.gmra.mxu0 %v923
  %v5683 = vpop.f32.mrf.mxu0
  %v5684 = vadd.f32 %v5670, %v5683
  %v5685 = vpop.f32.mrf.mxu0
  %v5686 = vadd.f32 %v5672, %v5685
  %5687 = vdwg.mxu0
  %5688 = vmatpush.bf16.msra.mxu0 %v3572
  %5689 = vmatpush.bf16.msra.mxu0 %v3568
  %5690 = vmatpush.bf16.msra.mxu0 %v3564
  %5691 = vmatpush.bf16.msra.mxu0 %v3560
  %5692 = vmatpush.bf16.msra.mxu0 %v3556
  %5693 = vmatpush.bf16.msra.mxu0 %v3552
  %5694 = vmatpush.bf16.msra.mxu0 %v3548
  %5695 = vmatpush.bf16.msra.mxu0 %v3544
  %5696 = vmatmul.bf16.gmra.mxu0 %v924
  %v5697 = vpop.f32.mrf.mxu0
  %v5698 = vadd.f32 %v5684, %v5697
  %v5699 = vpop.f32.mrf.mxu0
  %v5700 = vadd.f32 %v5686, %v5699
  %5701 = vdwg.mxu0
  %5702 = vmatpush.bf16.msra.mxu0 %v3604
  %5703 = vmatpush.bf16.msra.mxu0 %v3600
  %5704 = vmatpush.bf16.msra.mxu0 %v3596
  %5705 = vmatpush.bf16.msra.mxu0 %v3592
  %5706 = vmatpush.bf16.msra.mxu0 %v3588
  %5707 = vmatpush.bf16.msra.mxu0 %v3584
  %5708 = vmatpush.bf16.msra.mxu0 %v3580
  %5709 = vmatpush.bf16.msra.mxu0 %v3576
  %5710 = vmatmul.bf16.gmra.mxu0 %v925
  %v5711 = vpop.f32.mrf.mxu0
  %v5712 = vadd.f32 %v5698, %v5711
  %v5713 = vpop.f32.mrf.mxu0
  %v5714 = vadd.f32 %v5700, %v5713
  %5715 = vdwg.mxu0
  %5716 = vmatpush.bf16.msra.mxu0 %v3636
  %5717 = vmatpush.bf16.msra.mxu0 %v3632
  %5718 = vmatpush.bf16.msra.mxu0 %v3628
  %5719 = vmatpush.bf16.msra.mxu0 %v3624
  %5720 = vmatpush.bf16.msra.mxu0 %v3620
  %5721 = vmatpush.bf16.msra.mxu0 %v3616
  %5722 = vmatpush.bf16.msra.mxu0 %v3612
  %5723 = vmatpush.bf16.msra.mxu0 %v3608
  %5724 = vmatmul.bf16.gmra.mxu0 %v926
  %v5725 = vpop.f32.mrf.mxu0
  %v5726 = vadd.f32 %v5712, %v5725
  %v5727 = vpop.f32.mrf.mxu0
  %v5728 = vadd.f32 %v5714, %v5727
  %5729 = vdwg.mxu0
  %5730 = vmatpush.bf16.msra.mxu0 %v3668
  %5731 = vmatpush.bf16.msra.mxu0 %v3664
  %5732 = vmatpush.bf16.msra.mxu0 %v3660
  %5733 = vmatpush.bf16.msra.mxu0 %v3656
  %5734 = vmatpush.bf16.msra.mxu0 %v3652
  %5735 = vmatpush.bf16.msra.mxu0 %v3648
  %5736 = vmatpush.bf16.msra.mxu0 %v3644
  %5737 = vmatpush.bf16.msra.mxu0 %v3640
  %5738 = vmatmul.bf16.gmra.mxu0 %v927
  %v5739 = vpop.f32.mrf.mxu0
  %v5740 = vadd.f32 %v5726, %v5739
  %v5741 = vpop.f32.mrf.mxu0
  %v5742 = vadd.f32 %v5728, %v5741
  %5743 = vdwg.mxu0
  %5744 = vmatpush.bf16.msra.mxu0 %v3700
  %5745 = vmatpush.bf16.msra.mxu0 %v3696
  %5746 = vmatpush.bf16.msra.mxu0 %v3692
  %5747 = vmatpush.bf16.msra.mxu0 %v3688
  %5748 = vmatpush.bf16.msra.mxu0 %v3684
  %5749 = vmatpush.bf16.msra.mxu0 %v3680
  %5750 = vmatpush.bf16.msra.mxu0 %v3676
  %5751 = vmatpush.bf16.msra.mxu0 %v3672
  %5752 = vmatmul.bf16.gmra.mxu0 %v928
  %v5753 = vpop.f32.mrf.mxu0
  %v5754 = vadd.f32 %v5740, %v5753
  %v5755 = vpop.f32.mrf.mxu0
  %v5756 = vadd.f32 %v5742, %v5755
  %5757 = vdwg.mxu0
  %5758 = vmatpush.bf16.msra.mxu0 %v3732
  %5759 = vmatpush.bf16.msra.mxu0 %v3728
  %5760 = vmatpush.bf16.msra.mxu0 %v3724
  %5761 = vmatpush.bf16.msra.mxu0 %v3720
  %5762 = vmatpush.bf16.msra.mxu0 %v3716
  %5763 = vmatpush.bf16.msra.mxu0 %v3712
  %5764 = vmatpush.bf16.msra.mxu0 %v3708
  %5765 = vmatpush.bf16.msra.mxu0 %v3704
  %5766 = vmatmul.bf16.gmra.mxu0 %v929
  %v5767 = vpop.f32.mrf.mxu0
  %v5768 = vadd.f32 %v5754, %v5767
  %v5769 = vpop.f32.mrf.mxu0
  %v5770 = vadd.f32 %v5756, %v5769
  %5771 = vdwg.mxu0
  %5772 = vmatpush.bf16.msra.mxu0 %v3764
  %5773 = vmatpush.bf16.msra.mxu0 %v3760
  %5774 = vmatpush.bf16.msra.mxu0 %v3756
  %5775 = vmatpush.bf16.msra.mxu0 %v3752
  %5776 = vmatpush.bf16.msra.mxu0 %v3748
  %5777 = vmatpush.bf16.msra.mxu0 %v3744
  %5778 = vmatpush.bf16.msra.mxu0 %v3740
  %5779 = vmatpush.bf16.msra.mxu0 %v3736
  %5780 = vmatmul.bf16.gmra.mxu0 %v930
  %v5781 = vpop.f32.mrf.mxu0
  %v5782 = vadd.f32 %v5768, %v5781
  %v5783 = vpop.f32.mrf.mxu0
  %v5784 = vadd.f32 %v5770, %v5783
  %5785 = vdwg.mxu0
  %5786 = vmatpush.bf16.msra.mxu0 %v3796
  %5787 = vmatpush.bf16.msra.mxu0 %v3792
  %5788 = vmatpush.bf16.msra.mxu0 %v3788
  %5789 = vmatpush.bf16.msra.mxu0 %v3784
  %5790 = vmatpush.bf16.msra.mxu0 %v3780
  %5791 = vmatpush.bf16.msra.mxu0 %v3776
  %5792 = vmatpush.bf16.msra.mxu0 %v3772
  %5793 = vmatpush.bf16.msra.mxu0 %v3768
  %5794 = vmatmul.bf16.gmra.mxu0 %v931
  %v5795 = vpop.f32.mrf.mxu0
  %v5796 = vadd.f32 %v5782, %v5795
  %v5797 = vpop.f32.mrf.mxu0
  %v5798 = vadd.f32 %v5784, %v5797
  %5799 = vdwg.mxu0
  %5800 = vmatpush.bf16.msra.mxu0 %v3828
  %5801 = vmatpush.bf16.msra.mxu0 %v3824
  %5802 = vmatpush.bf16.msra.mxu0 %v3820
  %5803 = vmatpush.bf16.msra.mxu0 %v3816
  %5804 = vmatpush.bf16.msra.mxu0 %v3812
  %5805 = vmatpush.bf16.msra.mxu0 %v3808
  %5806 = vmatpush.bf16.msra.mxu0 %v3804
  %5807 = vmatpush.bf16.msra.mxu0 %v3800
  %5808 = vmatmul.bf16.gmra.mxu0 %v932
  %v5809 = vpop.f32.mrf.mxu0
  %v5810 = vadd.f32 %v5796, %v5809
  %v5811 = vpop.f32.mrf.mxu0
  %v5812 = vadd.f32 %v5798, %v5811
  %5813 = vdwg.mxu0
  %5814 = vmatpush.bf16.msra.mxu0 %v3860
  %5815 = vmatpush.bf16.msra.mxu0 %v3856
  %5816 = vmatpush.bf16.msra.mxu0 %v3852
  %5817 = vmatpush.bf16.msra.mxu0 %v3848
  %5818 = vmatpush.bf16.msra.mxu0 %v3844
  %5819 = vmatpush.bf16.msra.mxu0 %v3840
  %5820 = vmatpush.bf16.msra.mxu0 %v3836
  %5821 = vmatpush.bf16.msra.mxu0 %v3832
  %5822 = vmatmul.bf16.gmra.mxu0 %v933
  %v5823 = vpop.f32.mrf.mxu0
  %v5824 = vadd.f32 %v5810, %v5823
  %v5825 = vpop.f32.mrf.mxu0
  %v5826 = vadd.f32 %v5812, %v5825
  %5827 = vdwg.mxu0
  %5828 = vmatpush.bf16.msra.mxu0 %v3892
  %5829 = vmatpush.bf16.msra.mxu0 %v3888
  %5830 = vmatpush.bf16.msra.mxu0 %v3884
  %5831 = vmatpush.bf16.msra.mxu0 %v3880
  %5832 = vmatpush.bf16.msra.mxu0 %v3876
  %5833 = vmatpush.bf16.msra.mxu0 %v3872
  %5834 = vmatpush.bf16.msra.mxu0 %v3868
  %5835 = vmatpush.bf16.msra.mxu0 %v3864
  %5836 = vmatmul.bf16.gmra.mxu0 %v934
  %v5837 = vpop.f32.mrf.mxu0
  %v5838 = vadd.f32 %v5824, %v5837
  %v5839 = vpop.f32.mrf.mxu0
  %v5840 = vadd.f32 %v5826, %v5839
  %5841 = vdwg.mxu0
  %5842 = vmatpush.bf16.msra.mxu0 %v3924
  %5843 = vmatpush.bf16.msra.mxu0 %v3920
  %5844 = vmatpush.bf16.msra.mxu0 %v3916
  %5845 = vmatpush.bf16.msra.mxu0 %v3912
  %5846 = vmatpush.bf16.msra.mxu0 %v3908
  %5847 = vmatpush.bf16.msra.mxu0 %v3904
  %5848 = vmatpush.bf16.msra.mxu0 %v3900
  %5849 = vmatpush.bf16.msra.mxu0 %v3896
  %5850 = vmatmul.bf16.gmra.mxu0 %v935
  %v5851 = vpop.f32.mrf.mxu0
  %v5852 = vadd.f32 %v5838, %v5851
  %v5853 = vpop.f32.mrf.mxu0
  %v5854 = vadd.f32 %v5840, %v5853
  %5855 = vdwg.mxu0
  %5856 = vmatpush.bf16.msra.mxu0 %v3956
  %5857 = vmatpush.bf16.msra.mxu0 %v3952
  %5858 = vmatpush.bf16.msra.mxu0 %v3948
  %5859 = vmatpush.bf16.msra.mxu0 %v3944
  %5860 = vmatpush.bf16.msra.mxu0 %v3940
  %5861 = vmatpush.bf16.msra.mxu0 %v3936
  %5862 = vmatpush.bf16.msra.mxu0 %v3932
  %5863 = vmatpush.bf16.msra.mxu0 %v3928
  %5864 = vmatmul.bf16.gmra.mxu0 %v936
  %v5865 = vpop.f32.mrf.mxu0
  %v5866 = vadd.f32 %v5852, %v5865
  %v5867 = vpop.f32.mrf.mxu0
  %v5868 = vadd.f32 %v5854, %v5867
  %5869 = vdwg.mxu0
  %5870 = vmatpush.bf16.msra.mxu0 %v3988
  %5871 = vmatpush.bf16.msra.mxu0 %v3984
  %5872 = vmatpush.bf16.msra.mxu0 %v3980
  %5873 = vmatpush.bf16.msra.mxu0 %v3976
  %5874 = vmatpush.bf16.msra.mxu0 %v3972
  %5875 = vmatpush.bf16.msra.mxu0 %v3968
  %5876 = vmatpush.bf16.msra.mxu0 %v3964
  %5877 = vmatpush.bf16.msra.mxu0 %v3960
  %5878 = vmatmul.bf16.gmra.mxu0 %v937
  %v5879 = vpop.f32.mrf.mxu0
  %v5880 = vadd.f32 %v5866, %v5879
  %v5881 = vpop.f32.mrf.mxu0
  %v5882 = vadd.f32 %v5868, %v5881
  %5883 = vdwg.mxu0
  %5884 = vmatpush.bf16.msra.mxu0 %v4020
  %5885 = vmatpush.bf16.msra.mxu0 %v4016
  %5886 = vmatpush.bf16.msra.mxu0 %v4012
  %5887 = vmatpush.bf16.msra.mxu0 %v4008
  %5888 = vmatpush.bf16.msra.mxu0 %v4004
  %5889 = vmatpush.bf16.msra.mxu0 %v4000
  %5890 = vmatpush.bf16.msra.mxu0 %v3996
  %5891 = vmatpush.bf16.msra.mxu0 %v3992
  %5892 = vmatmul.bf16.gmra.mxu0 %v938
  %v5893 = vpop.f32.mrf.mxu0
  %v5894 = vadd.f32 %v5880, %v5893
  %v5895 = vpop.f32.mrf.mxu0
  %v5896 = vadd.f32 %v5882, %v5895
  %5897 = vdwg.mxu0
  %5898 = vmatpush.bf16.msra.mxu0 %v4052
  %5899 = vmatpush.bf16.msra.mxu0 %v4048
  %5900 = vmatpush.bf16.msra.mxu0 %v4044
  %5901 = vmatpush.bf16.msra.mxu0 %v4040
  %5902 = vmatpush.bf16.msra.mxu0 %v4036
  %5903 = vmatpush.bf16.msra.mxu0 %v4032
  %5904 = vmatpush.bf16.msra.mxu0 %v4028
  %5905 = vmatpush.bf16.msra.mxu0 %v4024
  %5906 = vmatmul.bf16.gmra.mxu0 %v939
  %v5907 = vpop.f32.mrf.mxu0
  %v5908 = vadd.f32 %v5894, %v5907
  %v5909 = vpop.f32.mrf.mxu0
  %v5910 = vadd.f32 %v5896, %v5909
  %5911 = vdwg.mxu0
  %5912 = vmatpush.bf16.msra.mxu0 %v4084
  %5913 = vmatpush.bf16.msra.mxu0 %v4080
  %5914 = vmatpush.bf16.msra.mxu0 %v4076
  %5915 = vmatpush.bf16.msra.mxu0 %v4072
  %5916 = vmatpush.bf16.msra.mxu0 %v4068
  %5917 = vmatpush.bf16.msra.mxu0 %v4064
  %5918 = vmatpush.bf16.msra.mxu0 %v4060
  %5919 = vmatpush.bf16.msra.mxu0 %v4056
  %5920 = vmatmul.bf16.gmra.mxu0 %v940
  %v5921 = vpop.f32.mrf.mxu0
  %v5922 = vadd.f32 %v5908, %v5921
  %v5923 = vpop.f32.mrf.mxu0
  %v5924 = vadd.f32 %v5910, %v5923
  %5925 = vdwg.mxu0
  %5926 = vmatpush.bf16.msra.mxu0 0
  %5927 = vmatpush.bf16.msra.mxu0 0
  %5928 = vmatpush.bf16.msra.mxu0 0
  %5929 = vmatpush.bf16.msra.mxu0 0
  %5930 = vmatpush.bf16.msra.mxu0 %v4100
  %5931 = vmatpush.bf16.msra.mxu0 %v4096
  %5932 = vmatpush.bf16.msra.mxu0 %v4092
  %5933 = vmatpush.bf16.msra.mxu0 %v4088
  %5934 = vmatmul.bf16.gmra.mxu0 %v4888
  %v5935 = vpop.f32.mrf.mxu0
  %v5936 = vadd.f32 %v5922, %v5935
  %v5937 = vpop.f32.mrf.mxu0
  %v5938 = vadd.f32 %v5924, %v5937
  %5939 = vdwg.mxu0
  %5940 = vmatpush.bf16.msra.mxu0 %v3349
  %5941 = vmatpush.bf16.msra.mxu0 %v3345
  %5942 = vmatpush.bf16.msra.mxu0 %v3341
  %5943 = vmatpush.bf16.msra.mxu0 %v3337
  %5944 = vmatpush.bf16.msra.mxu0 %v3333
  %5945 = vmatpush.bf16.msra.mxu0 %v3329
  %5946 = vmatpush.bf16.msra.mxu0 %v3325
  %5947 = vmatpush.bf16.msra.mxu0 %v3321
  %5948 = vmatmul.bf16.gmra.mxu0 %v917
  %v5949 = vpop.f32.mrf.mxu0
  %v5950 = vadd.f32 %v836, %v5949
  %v5951 = vpop.f32.mrf.mxu0
  %v5952 = vadd.f32 %v836, %v5951
  %5953 = vdwg.mxu0
  %5954 = vmatpush.bf16.msra.mxu0 %v3381
  %5955 = vmatpush.bf16.msra.mxu0 %v3377
  %5956 = vmatpush.bf16.msra.mxu0 %v3373
  %5957 = vmatpush.bf16.msra.mxu0 %v3369
  %5958 = vmatpush.bf16.msra.mxu0 %v3365
  %5959 = vmatpush.bf16.msra.mxu0 %v3361
  %5960 = vmatpush.bf16.msra.mxu0 %v3357
  %5961 = vmatpush.bf16.msra.mxu0 %v3353
  %5962 = vmatmul.bf16.gmra.mxu0 %v918
  %v5963 = vpop.f32.mrf.mxu0
  %v5964 = vadd.f32 %v5950, %v5963
  %v5965 = vpop.f32.mrf.mxu0
  %v5966 = vadd.f32 %v5952, %v5965
  %5967 = vdwg.mxu0
  %5968 = vmatpush.bf16.msra.mxu0 %v3413
  %5969 = vmatpush.bf16.msra.mxu0 %v3409
  %5970 = vmatpush.bf16.msra.mxu0 %v3405
  %5971 = vmatpush.bf16.msra.mxu0 %v3401
  %5972 = vmatpush.bf16.msra.mxu0 %v3397
  %5973 = vmatpush.bf16.msra.mxu0 %v3393
  %5974 = vmatpush.bf16.msra.mxu0 %v3389
  %5975 = vmatpush.bf16.msra.mxu0 %v3385
  %5976 = vmatmul.bf16.gmra.mxu0 %v919
  %v5977 = vpop.f32.mrf.mxu0
  %v5978 = vadd.f32 %v5964, %v5977
  %v5979 = vpop.f32.mrf.mxu0
  %v5980 = vadd.f32 %v5966, %v5979
  %5981 = vdwg.mxu0
  %5982 = vmatpush.bf16.msra.mxu0 %v3445
  %5983 = vmatpush.bf16.msra.mxu0 %v3441
  %5984 = vmatpush.bf16.msra.mxu0 %v3437
  %5985 = vmatpush.bf16.msra.mxu0 %v3433
  %5986 = vmatpush.bf16.msra.mxu0 %v3429
  %5987 = vmatpush.bf16.msra.mxu0 %v3425
  %5988 = vmatpush.bf16.msra.mxu0 %v3421
  %5989 = vmatpush.bf16.msra.mxu0 %v3417
  %5990 = vmatmul.bf16.gmra.mxu0 %v920
  %v5991 = vpop.f32.mrf.mxu0
  %v5992 = vadd.f32 %v5978, %v5991
  %v5993 = vpop.f32.mrf.mxu0
  %v5994 = vadd.f32 %v5980, %v5993
  %5995 = vdwg.mxu0
  %5996 = vmatpush.bf16.msra.mxu0 %v3477
  %5997 = vmatpush.bf16.msra.mxu0 %v3473
  %5998 = vmatpush.bf16.msra.mxu0 %v3469
  %5999 = vmatpush.bf16.msra.mxu0 %v3465
  %6000 = vmatpush.bf16.msra.mxu0 %v3461
  %6001 = vmatpush.bf16.msra.mxu0 %v3457
  %6002 = vmatpush.bf16.msra.mxu0 %v3453
  %6003 = vmatpush.bf16.msra.mxu0 %v3449
  %6004 = vmatmul.bf16.gmra.mxu0 %v921
  %v6005 = vpop.f32.mrf.mxu0
  %v6006 = vadd.f32 %v5992, %v6005
  %v6007 = vpop.f32.mrf.mxu0
  %v6008 = vadd.f32 %v5994, %v6007
  %6009 = vdwg.mxu0
  %6010 = vmatpush.bf16.msra.mxu0 %v3509
  %6011 = vmatpush.bf16.msra.mxu0 %v3505
  %6012 = vmatpush.bf16.msra.mxu0 %v3501
  %6013 = vmatpush.bf16.msra.mxu0 %v3497
  %6014 = vmatpush.bf16.msra.mxu0 %v3493
  %6015 = vmatpush.bf16.msra.mxu0 %v3489
  %6016 = vmatpush.bf16.msra.mxu0 %v3485
  %6017 = vmatpush.bf16.msra.mxu0 %v3481
  %6018 = vmatmul.bf16.gmra.mxu0 %v922
  %v6019 = vpop.f32.mrf.mxu0
  %v6020 = vadd.f32 %v6006, %v6019
  %v6021 = vpop.f32.mrf.mxu0
  %v6022 = vadd.f32 %v6008, %v6021
  %6023 = vdwg.mxu0
  %6024 = vmatpush.bf16.msra.mxu0 %v3541
  %6025 = vmatpush.bf16.msra.mxu0 %v3537
  %6026 = vmatpush.bf16.msra.mxu0 %v3533
  %6027 = vmatpush.bf16.msra.mxu0 %v3529
  %6028 = vmatpush.bf16.msra.mxu0 %v3525
  %6029 = vmatpush.bf16.msra.mxu0 %v3521
  %6030 = vmatpush.bf16.msra.mxu0 %v3517
  %6031 = vmatpush.bf16.msra.mxu0 %v3513
  %6032 = vmatmul.bf16.gmra.mxu0 %v923
  %v6033 = vpop.f32.mrf.mxu0
  %v6034 = vadd.f32 %v6020, %v6033
  %v6035 = vpop.f32.mrf.mxu0
  %v6036 = vadd.f32 %v6022, %v6035
  %6037 = vdwg.mxu0
  %6038 = vmatpush.bf16.msra.mxu0 %v3573
  %6039 = vmatpush.bf16.msra.mxu0 %v3569
  %6040 = vmatpush.bf16.msra.mxu0 %v3565
  %6041 = vmatpush.bf16.msra.mxu0 %v3561
  %6042 = vmatpush.bf16.msra.mxu0 %v3557
  %6043 = vmatpush.bf16.msra.mxu0 %v3553
  %6044 = vmatpush.bf16.msra.mxu0 %v3549
  %6045 = vmatpush.bf16.msra.mxu0 %v3545
  %6046 = vmatmul.bf16.gmra.mxu0 %v924
  %v6047 = vpop.f32.mrf.mxu0
  %v6048 = vadd.f32 %v6034, %v6047
  %v6049 = vpop.f32.mrf.mxu0
  %v6050 = vadd.f32 %v6036, %v6049
  %6051 = vdwg.mxu0
  %6052 = vmatpush.bf16.msra.mxu0 %v3605
  %6053 = vmatpush.bf16.msra.mxu0 %v3601
  %6054 = vmatpush.bf16.msra.mxu0 %v3597
  %6055 = vmatpush.bf16.msra.mxu0 %v3593
  %6056 = vmatpush.bf16.msra.mxu0 %v3589
  %6057 = vmatpush.bf16.msra.mxu0 %v3585
  %6058 = vmatpush.bf16.msra.mxu0 %v3581
  %6059 = vmatpush.bf16.msra.mxu0 %v3577
  %6060 = vmatmul.bf16.gmra.mxu0 %v925
  %v6061 = vpop.f32.mrf.mxu0
  %v6062 = vadd.f32 %v6048, %v6061
  %v6063 = vpop.f32.mrf.mxu0
  %v6064 = vadd.f32 %v6050, %v6063
  %6065 = vdwg.mxu0
  %6066 = vmatpush.bf16.msra.mxu0 %v3637
  %6067 = vmatpush.bf16.msra.mxu0 %v3633
  %6068 = vmatpush.bf16.msra.mxu0 %v3629
  %6069 = vmatpush.bf16.msra.mxu0 %v3625
  %6070 = vmatpush.bf16.msra.mxu0 %v3621
  %6071 = vmatpush.bf16.msra.mxu0 %v3617
  %6072 = vmatpush.bf16.msra.mxu0 %v3613
  %6073 = vmatpush.bf16.msra.mxu0 %v3609
  %6074 = vmatmul.bf16.gmra.mxu0 %v926
  %v6075 = vpop.f32.mrf.mxu0
  %v6076 = vadd.f32 %v6062, %v6075
  %v6077 = vpop.f32.mrf.mxu0
  %v6078 = vadd.f32 %v6064, %v6077
  %6079 = vdwg.mxu0
  %6080 = vmatpush.bf16.msra.mxu0 %v3669
  %6081 = vmatpush.bf16.msra.mxu0 %v3665
  %6082 = vmatpush.bf16.msra.mxu0 %v3661
  %6083 = vmatpush.bf16.msra.mxu0 %v3657
  %6084 = vmatpush.bf16.msra.mxu0 %v3653
  %6085 = vmatpush.bf16.msra.mxu0 %v3649
  %6086 = vmatpush.bf16.msra.mxu0 %v3645
  %6087 = vmatpush.bf16.msra.mxu0 %v3641
  %6088 = vmatmul.bf16.gmra.mxu0 %v927
  %v6089 = vpop.f32.mrf.mxu0
  %v6090 = vadd.f32 %v6076, %v6089
  %v6091 = vpop.f32.mrf.mxu0
  %v6092 = vadd.f32 %v6078, %v6091
  %6093 = vdwg.mxu0
  %6094 = vmatpush.bf16.msra.mxu0 %v3701
  %6095 = vmatpush.bf16.msra.mxu0 %v3697
  %6096 = vmatpush.bf16.msra.mxu0 %v3693
  %6097 = vmatpush.bf16.msra.mxu0 %v3689
  %6098 = vmatpush.bf16.msra.mxu0 %v3685
  %6099 = vmatpush.bf16.msra.mxu0 %v3681
  %6100 = vmatpush.bf16.msra.mxu0 %v3677
  %6101 = vmatpush.bf16.msra.mxu0 %v3673
  %6102 = vmatmul.bf16.gmra.mxu0 %v928
  %v6103 = vpop.f32.mrf.mxu0
  %v6104 = vadd.f32 %v6090, %v6103
  %v6105 = vpop.f32.mrf.mxu0
  %v6106 = vadd.f32 %v6092, %v6105
  %6107 = vdwg.mxu0
  %6108 = vmatpush.bf16.msra.mxu0 %v3733
  %6109 = vmatpush.bf16.msra.mxu0 %v3729
  %6110 = vmatpush.bf16.msra.mxu0 %v3725
  %6111 = vmatpush.bf16.msra.mxu0 %v3721
  %6112 = vmatpush.bf16.msra.mxu0 %v3717
  %6113 = vmatpush.bf16.msra.mxu0 %v3713
  %6114 = vmatpush.bf16.msra.mxu0 %v3709
  %6115 = vmatpush.bf16.msra.mxu0 %v3705
  %6116 = vmatmul.bf16.gmra.mxu0 %v929
  %v6117 = vpop.f32.mrf.mxu0
  %v6118 = vadd.f32 %v6104, %v6117
  %v6119 = vpop.f32.mrf.mxu0
  %v6120 = vadd.f32 %v6106, %v6119
  %6121 = vdwg.mxu0
  %6122 = vmatpush.bf16.msra.mxu0 %v3765
  %6123 = vmatpush.bf16.msra.mxu0 %v3761
  %6124 = vmatpush.bf16.msra.mxu0 %v3757
  %6125 = vmatpush.bf16.msra.mxu0 %v3753
  %6126 = vmatpush.bf16.msra.mxu0 %v3749
  %6127 = vmatpush.bf16.msra.mxu0 %v3745
  %6128 = vmatpush.bf16.msra.mxu0 %v3741
  %6129 = vmatpush.bf16.msra.mxu0 %v3737
  %6130 = vmatmul.bf16.gmra.mxu0 %v930
  %v6131 = vpop.f32.mrf.mxu0
  %v6132 = vadd.f32 %v6118, %v6131
  %v6133 = vpop.f32.mrf.mxu0
  %v6134 = vadd.f32 %v6120, %v6133
  %6135 = vdwg.mxu0
  %6136 = vmatpush.bf16.msra.mxu0 %v3797
  %6137 = vmatpush.bf16.msra.mxu0 %v3793
  %6138 = vmatpush.bf16.msra.mxu0 %v3789
  %6139 = vmatpush.bf16.msra.mxu0 %v3785
  %6140 = vmatpush.bf16.msra.mxu0 %v3781
  %6141 = vmatpush.bf16.msra.mxu0 %v3777
  %6142 = vmatpush.bf16.msra.mxu0 %v3773
  %6143 = vmatpush.bf16.msra.mxu0 %v3769
  %6144 = vmatmul.bf16.gmra.mxu0 %v931
  %v6145 = vpop.f32.mrf.mxu0
  %v6146 = vadd.f32 %v6132, %v6145
  %v6147 = vpop.f32.mrf.mxu0
  %v6148 = vadd.f32 %v6134, %v6147
  %6149 = vdwg.mxu0
  %6150 = vmatpush.bf16.msra.mxu0 %v3829
  %6151 = vmatpush.bf16.msra.mxu0 %v3825
  %6152 = vmatpush.bf16.msra.mxu0 %v3821
  %6153 = vmatpush.bf16.msra.mxu0 %v3817
  %6154 = vmatpush.bf16.msra.mxu0 %v3813
  %6155 = vmatpush.bf16.msra.mxu0 %v3809
  %6156 = vmatpush.bf16.msra.mxu0 %v3805
  %6157 = vmatpush.bf16.msra.mxu0 %v3801
  %6158 = vmatmul.bf16.gmra.mxu0 %v932
  %v6159 = vpop.f32.mrf.mxu0
  %v6160 = vadd.f32 %v6146, %v6159
  %v6161 = vpop.f32.mrf.mxu0
  %v6162 = vadd.f32 %v6148, %v6161
  %6163 = vdwg.mxu0
  %6164 = vmatpush.bf16.msra.mxu0 %v3861
  %6165 = vmatpush.bf16.msra.mxu0 %v3857
  %6166 = vmatpush.bf16.msra.mxu0 %v3853
  %6167 = vmatpush.bf16.msra.mxu0 %v3849
  %6168 = vmatpush.bf16.msra.mxu0 %v3845
  %6169 = vmatpush.bf16.msra.mxu0 %v3841
  %6170 = vmatpush.bf16.msra.mxu0 %v3837
  %6171 = vmatpush.bf16.msra.mxu0 %v3833
  %6172 = vmatmul.bf16.gmra.mxu0 %v933
  %v6173 = vpop.f32.mrf.mxu0
  %v6174 = vadd.f32 %v6160, %v6173
  %v6175 = vpop.f32.mrf.mxu0
  %v6176 = vadd.f32 %v6162, %v6175
  %6177 = vdwg.mxu0
  %6178 = vmatpush.bf16.msra.mxu0 %v3893
  %6179 = vmatpush.bf16.msra.mxu0 %v3889
  %6180 = vmatpush.bf16.msra.mxu0 %v3885
  %6181 = vmatpush.bf16.msra.mxu0 %v3881
  %6182 = vmatpush.bf16.msra.mxu0 %v3877
  %6183 = vmatpush.bf16.msra.mxu0 %v3873
  %6184 = vmatpush.bf16.msra.mxu0 %v3869
  %6185 = vmatpush.bf16.msra.mxu0 %v3865
  %6186 = vmatmul.bf16.gmra.mxu0 %v934
  %v6187 = vpop.f32.mrf.mxu0
  %v6188 = vadd.f32 %v6174, %v6187
  %v6189 = vpop.f32.mrf.mxu0
  %v6190 = vadd.f32 %v6176, %v6189
  %6191 = vdwg.mxu0
  %6192 = vmatpush.bf16.msra.mxu0 %v3925
  %6193 = vmatpush.bf16.msra.mxu0 %v3921
  %6194 = vmatpush.bf16.msra.mxu0 %v3917
  %6195 = vmatpush.bf16.msra.mxu0 %v3913
  %6196 = vmatpush.bf16.msra.mxu0 %v3909
  %6197 = vmatpush.bf16.msra.mxu0 %v3905
  %6198 = vmatpush.bf16.msra.mxu0 %v3901
  %6199 = vmatpush.bf16.msra.mxu0 %v3897
  %6200 = vmatmul.bf16.gmra.mxu0 %v935
  %v6201 = vpop.f32.mrf.mxu0
  %v6202 = vadd.f32 %v6188, %v6201
  %v6203 = vpop.f32.mrf.mxu0
  %v6204 = vadd.f32 %v6190, %v6203
  %6205 = vdwg.mxu0
  %6206 = vmatpush.bf16.msra.mxu0 %v3957
  %6207 = vmatpush.bf16.msra.mxu0 %v3953
  %6208 = vmatpush.bf16.msra.mxu0 %v3949
  %6209 = vmatpush.bf16.msra.mxu0 %v3945
  %6210 = vmatpush.bf16.msra.mxu0 %v3941
  %6211 = vmatpush.bf16.msra.mxu0 %v3937
  %6212 = vmatpush.bf16.msra.mxu0 %v3933
  %6213 = vmatpush.bf16.msra.mxu0 %v3929
  %6214 = vmatmul.bf16.gmra.mxu0 %v936
  %v6215 = vpop.f32.mrf.mxu0
  %v6216 = vadd.f32 %v6202, %v6215
  %v6217 = vpop.f32.mrf.mxu0
  %v6218 = vadd.f32 %v6204, %v6217
  %6219 = vdwg.mxu0
  %6220 = vmatpush.bf16.msra.mxu0 %v3989
  %6221 = vmatpush.bf16.msra.mxu0 %v3985
  %6222 = vmatpush.bf16.msra.mxu0 %v3981
  %6223 = vmatpush.bf16.msra.mxu0 %v3977
  %6224 = vmatpush.bf16.msra.mxu0 %v3973
  %6225 = vmatpush.bf16.msra.mxu0 %v3969
  %6226 = vmatpush.bf16.msra.mxu0 %v3965
  %6227 = vmatpush.bf16.msra.mxu0 %v3961
  %6228 = vmatmul.bf16.gmra.mxu0 %v937
  %v6229 = vpop.f32.mrf.mxu0
  %v6230 = vadd.f32 %v6216, %v6229
  %v6231 = vpop.f32.mrf.mxu0
  %v6232 = vadd.f32 %v6218, %v6231
  %6233 = vdwg.mxu0
  %6234 = vmatpush.bf16.msra.mxu0 %v4021
  %6235 = vmatpush.bf16.msra.mxu0 %v4017
  %6236 = vmatpush.bf16.msra.mxu0 %v4013
  %6237 = vmatpush.bf16.msra.mxu0 %v4009
  %6238 = vmatpush.bf16.msra.mxu0 %v4005
  %6239 = vmatpush.bf16.msra.mxu0 %v4001
  %6240 = vmatpush.bf16.msra.mxu0 %v3997
  %6241 = vmatpush.bf16.msra.mxu0 %v3993
  %6242 = vmatmul.bf16.gmra.mxu0 %v938
  %v6243 = vpop.f32.mrf.mxu0
  %v6244 = vadd.f32 %v6230, %v6243
  %v6245 = vpop.f32.mrf.mxu0
  %v6246 = vadd.f32 %v6232, %v6245
  %6247 = vdwg.mxu0
  %6248 = vmatpush.bf16.msra.mxu0 %v4053
  %6249 = vmatpush.bf16.msra.mxu0 %v4049
  %6250 = vmatpush.bf16.msra.mxu0 %v4045
  %6251 = vmatpush.bf16.msra.mxu0 %v4041
  %6252 = vmatpush.bf16.msra.mxu0 %v4037
  %6253 = vmatpush.bf16.msra.mxu0 %v4033
  %6254 = vmatpush.bf16.msra.mxu0 %v4029
  %6255 = vmatpush.bf16.msra.mxu0 %v4025
  %6256 = vmatmul.bf16.gmra.mxu0 %v939
  %v6257 = vpop.f32.mrf.mxu0
  %v6258 = vadd.f32 %v6244, %v6257
  %v6259 = vpop.f32.mrf.mxu0
  %v6260 = vadd.f32 %v6246, %v6259
  %6261 = vdwg.mxu0
  %6262 = vmatpush.bf16.msra.mxu0 %v4085
  %6263 = vmatpush.bf16.msra.mxu0 %v4081
  %6264 = vmatpush.bf16.msra.mxu0 %v4077
  %6265 = vmatpush.bf16.msra.mxu0 %v4073
  %6266 = vmatpush.bf16.msra.mxu0 %v4069
  %6267 = vmatpush.bf16.msra.mxu0 %v4065
  %6268 = vmatpush.bf16.msra.mxu0 %v4061
  %6269 = vmatpush.bf16.msra.mxu0 %v4057
  %6270 = vmatmul.bf16.gmra.mxu0 %v940
  %v6271 = vpop.f32.mrf.mxu0
  %v6272 = vadd.f32 %v6258, %v6271
  %v6273 = vpop.f32.mrf.mxu0
  %v6274 = vadd.f32 %v6260, %v6273
  %6275 = vdwg.mxu0
  %6276 = vmatpush.bf16.msra.mxu0 0
  %6277 = vmatpush.bf16.msra.mxu0 0
  %6278 = vmatpush.bf16.msra.mxu0 0
  %6279 = vmatpush.bf16.msra.mxu0 0
  %6280 = vmatpush.bf16.msra.mxu0 %v4101
  %6281 = vmatpush.bf16.msra.mxu0 %v4097
  %6282 = vmatpush.bf16.msra.mxu0 %v4093
  %6283 = vmatpush.bf16.msra.mxu0 %v4089
  %6284 = vmatmul.bf16.gmra.mxu0 %v4888
  %v6285 = vpop.f32.mrf.mxu0
  %v6286 = vadd.f32 %v6272, %v6285
  %v6287 = vpop.f32.mrf.mxu0
  %v6288 = vadd.f32 %v6274, %v6287
  %6289 = vdwg.mxu0
  %v6290 = vmax.f32 %v5236, 0.0
  %v6291 = vmax.f32 %v5586, 0.0
  %v6292 = vmax.f32 %v5936, 0.0
  %v6293 = vmax.f32 %v6286, 0.0
  %v6294 = vmax.f32 %v5238, 0.0
  %v6295 = vmax.f32 %v5588, 0.0
  %v6296 = vmax.f32 %v5938, 0.0
  %v6297 = vmax.f32 %v6288, 0.0
  %v6298 = vpack.c.bf16 %v6294, %v6290
  %v6299 = vpack.c.bf16 %v6295, %v6291
  %v6300 = vpack.c.bf16 %v6296, %v6292
  %v6301 = vpack.c.bf16 %v6297, %v6293
  %v6302 = vld [vmem:[%s3] sm:$0xf]
  %v6303 = vld [vmem:[%s3 + $0x4] sm:$0xf]
  %v6304 = vld [vmem:[%s3 + $0x8] sm:$0xf]
  %v6305 = vld [vmem:[%s3 + $0xc] sm:$0xf]
  %v6306 = vld [vmem:[%s3 + $0x10] sm:$0xf]
  %v6307 = vld [vmem:[%s3 + $0x14] sm:$0xf]
  %v6308 = vld [vmem:[%s3 + $0x18] sm:$0xf]
  %v6309 = vld [vmem:[%s3 + $0x1c] sm:$0xf]
  %v6310 = vld [vmem:[%s3 + $0x20] sm:$0xf]
  %v6311 = vld [vmem:[%s3 + $0x24] sm:$0xf]
  %v6312 = vld [vmem:[%s3 + $0x28] sm:$0xf]
  %v6313 = vld [vmem:[%s3 + $0x2c] sm:$0xf]
  %v6314 = vld [vmem:[%s3 + $0x30] sm:$0xf]
  %v6315 = vld [vmem:[%s3 + $0x34] sm:$0xf]
  %v6316 = vld [vmem:[%s3 + $0x38] sm:$0xf]
  %v6317 = vld [vmem:[%s3 + $0x3c] sm:$0xf]
  %v6318 = vld [vmem:[%s3 + $0x40] sm:$0xf]
  %v6319 = vld [vmem:[%s3 + $0x44] sm:$0xf]
  %v6320 = vld [vmem:[%s3 + $0x48] sm:$0xf]
  %v6321 = vld [vmem:[%s3 + $0x4c] sm:$0xf]
  %v6322 = vld [vmem:[%s3 + $0x50] sm:$0xf]
  %v6323 = vld [vmem:[%s3 + $0x54] sm:$0xf]
  %v6324 = vld [vmem:[%s3 + $0x58] sm:$0xf]
  %v6325 = vld [vmem:[%s3 + $0x5c] sm:$0xf]
  %v6326 = vld [vmem:[%s3 + $0x60] sm:$0xf]
  %v6327 = vld [vmem:[%s3 + $0x64] sm:$0xf]
  %v6328 = vld [vmem:[%s3 + $0x68] sm:$0xf]
  %v6329 = vld [vmem:[%s3 + $0x6c] sm:$0xf]
  %v6330 = vld [vmem:[%s3 + $0x70] sm:$0xf]
  %v6331 = vld [vmem:[%s3 + $0x74] sm:$0xf]
  %v6332 = vld [vmem:[%s3 + $0x78] sm:$0xf]
  %v6333 = vld [vmem:[%s3 + $0x7c] sm:$0xf]
  %v6334 = vld [vmem:[%s3 + $0x80] sm:$0xf]
  %v6335 = vld [vmem:[%s3 + $0x84] sm:$0xf]
  %v6336 = vld [vmem:[%s3 + $0x88] sm:$0xf]
  %v6337 = vld [vmem:[%s3 + $0x8c] sm:$0xf]
  %v6338 = vld [vmem:[%s3 + $0x90] sm:$0xf]
  %v6339 = vld [vmem:[%s3 + $0x94] sm:$0xf]
  %v6340 = vld [vmem:[%s3 + $0x98] sm:$0xf]
  %v6341 = vld [vmem:[%s3 + $0x9c] sm:$0xf]
  %v6342 = vld [vmem:[%s3 + $0xa0] sm:$0xf]
  %v6343 = vld [vmem:[%s3 + $0xa4] sm:$0xf]
  %v6344 = vld [vmem:[%s3 + $0xa8] sm:$0xf]
  %v6345 = vld [vmem:[%s3 + $0xac] sm:$0xf]
  %v6346 = vld [vmem:[%s3 + $0xb0] sm:$0xf]
  %v6347 = vld [vmem:[%s3 + $0xb4] sm:$0xf]
  %v6348 = vld [vmem:[%s3 + $0xb8] sm:$0xf]
  %v6349 = vld [vmem:[%s3 + $0xbc] sm:$0xf]
  %v6350 = vld [vmem:[%s3 + $0xc0] sm:$0xf]
  %v6351 = vld [vmem:[%s3 + $0xc4] sm:$0xf]
  %v6352 = vld [vmem:[%s3 + $0xc8] sm:$0xf]
  %v6353 = vld [vmem:[%s3 + $0xcc] sm:$0xf]
  %v6354 = vld [vmem:[%s3 + $0xd0] sm:$0xf]
  %v6355 = vld [vmem:[%s3 + $0xd4] sm:$0xf]
  %v6356 = vld [vmem:[%s3 + $0xd8] sm:$0xf]
  %v6357 = vld [vmem:[%s3 + $0xdc] sm:$0xf]
  %v6358 = vld [vmem:[%s3 + $0xe0] sm:$0xf]
  %v6359 = vld [vmem:[%s3 + $0xe4] sm:$0xf]
  %v6360 = vld [vmem:[%s3 + $0xe8] sm:$0xf]
  %v6361 = vld [vmem:[%s3 + $0xec] sm:$0xf]
  %v6362 = vld [vmem:[%s3 + $0xf0] sm:$0xf]
  %v6363 = vld [vmem:[%s3 + $0xf4] sm:$0xf]
  %v6364 = vld [vmem:[%s3 + $0xf8] sm:$0xf]
  %v6365 = vld [vmem:[%s3 + $0xfc] sm:$0xf]
  %v6366 = vld [vmem:[%s4] sm:$0x1]
  %v6368 = vperm.slane %v6366, 0
  %v6434 = vunpack.c.l.b16 %v6302
  %v6435 = vunpack.c.l.b16 %v6303
  %v6436 = vunpack.c.l.b16 %v6304
  %v6437 = vunpack.c.l.b16 %v6305
  %v6438 = vunpack.c.l.b16 %v6306
  %v6439 = vunpack.c.l.b16 %v6307
  %v6440 = vunpack.c.l.b16 %v6308
  %v6441 = vunpack.c.l.b16 %v6309
  %v6442 = vunpack.c.l.b16 %v6310
  %v6443 = vunpack.c.l.b16 %v6311
  %v6444 = vunpack.c.l.b16 %v6312
  %v6445 = vunpack.c.l.b16 %v6313
  %v6446 = vunpack.c.l.b16 %v6314
  %v6447 = vunpack.c.l.b16 %v6315
  %v6448 = vunpack.c.l.b16 %v6316
  %v6449 = vunpack.c.l.b16 %v6317
  %v6450 = vunpack.c.l.b16 %v6318
  %v6451 = vunpack.c.l.b16 %v6319
  %v6452 = vunpack.c.l.b16 %v6320
  %v6453 = vunpack.c.l.b16 %v6321
  %v6454 = vunpack.c.l.b16 %v6322
  %v6455 = vunpack.c.l.b16 %v6323
  %v6456 = vunpack.c.l.b16 %v6324
  %v6457 = vunpack.c.l.b16 %v6325
  %v6458 = vunpack.c.l.b16 %v6326
  %v6459 = vunpack.c.l.b16 %v6327
  %v6460 = vunpack.c.l.b16 %v6328
  %v6461 = vunpack.c.l.b16 %v6329
  %v6462 = vunpack.c.l.b16 %v6330
  %v6463 = vunpack.c.l.b16 %v6331
  %v6464 = vunpack.c.l.b16 %v6332
  %v6465 = vunpack.c.l.b16 %v6333
  %v6466 = vunpack.c.l.b16 %v6334
  %v6467 = vunpack.c.l.b16 %v6335
  %v6468 = vunpack.c.l.b16 %v6336
  %v6469 = vunpack.c.l.b16 %v6337
  %v6470 = vunpack.c.l.b16 %v6338
  %v6471 = vunpack.c.l.b16 %v6339
  %v6472 = vunpack.c.l.b16 %v6340
  %v6473 = vunpack.c.l.b16 %v6341
  %v6474 = vunpack.c.l.b16 %v6342
  %v6475 = vunpack.c.l.b16 %v6343
  %v6476 = vunpack.c.l.b16 %v6344
  %v6477 = vunpack.c.l.b16 %v6345
  %v6478 = vunpack.c.l.b16 %v6346
  %v6479 = vunpack.c.l.b16 %v6347
  %v6480 = vunpack.c.l.b16 %v6348
  %v6481 = vunpack.c.l.b16 %v6349
  %v6482 = vunpack.c.l.b16 %v6350
  %v6483 = vunpack.c.l.b16 %v6351
  %v6484 = vunpack.c.l.b16 %v6352
  %v6485 = vunpack.c.l.b16 %v6353
  %v6486 = vunpack.c.l.b16 %v6354
  %v6487 = vunpack.c.l.b16 %v6355
  %v6488 = vunpack.c.l.b16 %v6356
  %v6489 = vunpack.c.l.b16 %v6357
  %v6490 = vunpack.c.l.b16 %v6358
  %v6491 = vunpack.c.l.b16 %v6359
  %v6492 = vunpack.c.l.b16 %v6360
  %v6493 = vunpack.c.l.b16 %v6361
  %v6494 = vunpack.c.l.b16 %v6362
  %v6495 = vunpack.c.l.b16 %v6363
  %v6496 = vunpack.c.l.b16 %v6364
  %v6497 = vunpack.c.l.b16 %v6365
  %v6498 = vpack.c.b16 %v6435, %v6434
  %v6499 = vpack.c.b16 %v6437, %v6436
  %v6500 = vpack.c.b16 %v6439, %v6438
  %v6501 = vpack.c.b16 %v6441, %v6440
  %v6502 = vpack.c.b16 %v6443, %v6442
  %v6503 = vpack.c.b16 %v6445, %v6444
  %v6504 = vpack.c.b16 %v6447, %v6446
  %v6505 = vpack.c.b16 %v6449, %v6448
  %v6506 = vpack.c.b16 %v6451, %v6450
  %v6507 = vpack.c.b16 %v6453, %v6452
  %v6508 = vpack.c.b16 %v6455, %v6454
  %v6509 = vpack.c.b16 %v6457, %v6456
  %v6510 = vpack.c.b16 %v6459, %v6458
  %v6511 = vpack.c.b16 %v6461, %v6460
  %v6512 = vpack.c.b16 %v6463, %v6462
  %v6513 = vpack.c.b16 %v6465, %v6464
  %v6514 = vpack.c.b16 %v6467, %v6466
  %v6515 = vpack.c.b16 %v6469, %v6468
  %v6516 = vpack.c.b16 %v6471, %v6470
  %v6517 = vpack.c.b16 %v6473, %v6472
  %v6518 = vpack.c.b16 %v6475, %v6474
  %v6519 = vpack.c.b16 %v6477, %v6476
  %v6520 = vpack.c.b16 %v6479, %v6478
  %v6521 = vpack.c.b16 %v6481, %v6480
  %v6522 = vpack.c.b16 %v6483, %v6482
  %v6523 = vpack.c.b16 %v6485, %v6484
  %v6524 = vpack.c.b16 %v6487, %v6486
  %v6525 = vpack.c.b16 %v6489, %v6488
  %v6526 = vpack.c.b16 %v6491, %v6490
  %v6527 = vpack.c.b16 %v6493, %v6492
  %v6528 = vpack.c.b16 %v6495, %v6494
  %v6529 = vpack.c.b16 %v6497, %v6496
  %6562 = vmatpush.bf16.msra.mxu0 %v6505
  %6563 = vmatpush.bf16.msra.mxu0 %v6504
  %6564 = vmatpush.bf16.msra.mxu0 %v6503
  %6565 = vmatpush.bf16.msra.mxu0 %v6502
  %6566 = vmatpush.bf16.msra.mxu0 %v6501
  %6567 = vmatpush.bf16.msra.mxu0 %v6500
  %6568 = vmatpush.bf16.msra.mxu0 %v6499
  %6569 = vmatpush.bf16.msra.mxu0 %v6498
  %6570 = vmatmul.bf16.gmra.mxu0 %v6298
  %v6571 = vpop.f32.mrf.mxu0
  %v6572 = vadd.f32 %v6368, %v6571
  %v6573 = vpop.f32.mrf.mxu0
  %v6574 = vadd.f32 %v6368, %v6573
  %6575 = vdwg.mxu0
  %6576 = vmatpush.bf16.msra.mxu0 %v6513
  %6577 = vmatpush.bf16.msra.mxu0 %v6512
  %6578 = vmatpush.bf16.msra.mxu0 %v6511
  %6579 = vmatpush.bf16.msra.mxu0 %v6510
  %6580 = vmatpush.bf16.msra.mxu0 %v6509
  %6581 = vmatpush.bf16.msra.mxu0 %v6508
  %6582 = vmatpush.bf16.msra.mxu0 %v6507
  %6583 = vmatpush.bf16.msra.mxu0 %v6506
  %6584 = vmatmul.bf16.gmra.mxu0 %v6299
  %v6585 = vpop.f32.mrf.mxu0
  %v6586 = vadd.f32 %v6572, %v6585
  %v6587 = vpop.f32.mrf.mxu0
  %v6588 = vadd.f32 %v6574, %v6587
  %6589 = vdwg.mxu0
  %6590 = vmatpush.bf16.msra.mxu0 %v6521
  %6591 = vmatpush.bf16.msra.mxu0 %v6520
  %6592 = vmatpush.bf16.msra.mxu0 %v6519
  %6593 = vmatpush.bf16.msra.mxu0 %v6518
  %6594 = vmatpush.bf16.msra.mxu0 %v6517
  %6595 = vmatpush.bf16.msra.mxu0 %v6516
  %6596 = vmatpush.bf16.msra.mxu0 %v6515
  %6597 = vmatpush.bf16.msra.mxu0 %v6514
  %6598 = vmatmul.bf16.gmra.mxu0 %v6300
  %v6599 = vpop.f32.mrf.mxu0
  %v6600 = vadd.f32 %v6586, %v6599
  %v6601 = vpop.f32.mrf.mxu0
  %v6602 = vadd.f32 %v6588, %v6601
  %6603 = vdwg.mxu0
  %6604 = vmatpush.bf16.msra.mxu0 %v6529
  %6605 = vmatpush.bf16.msra.mxu0 %v6528
  %6606 = vmatpush.bf16.msra.mxu0 %v6527
  %6607 = vmatpush.bf16.msra.mxu0 %v6526
  %6608 = vmatpush.bf16.msra.mxu0 %v6525
  %6609 = vmatpush.bf16.msra.mxu0 %v6524
  %6610 = vmatpush.bf16.msra.mxu0 %v6523
  %6611 = vmatpush.bf16.msra.mxu0 %v6522
  %6612 = vmatmul.bf16.gmra.mxu0 %v6301
  %v6613 = vpop.f32.mrf.mxu0
  %v6614 = vadd.f32 %v6600, %v6613
  %v6615 = vpop.f32.mrf.mxu0
  %v6616 = vadd.f32 %v6602, %v6615
  %6617 = vdwg.mxu0
  %vm6618 = vcmask 31744
  %6619 = vst.msk [vmem:[%s5] sm:$0xff] %vm6618, %v6614
  %6620 = vst.msk [vmem:[%s5 + $0x8] sm:$0xff] %vm6618, %v6616
  // Predicated region
  $region22: #{deepmind_cnn.7} parent=0 // pred_check
    _
  $region23: #{deepmind_cnn.7} parent=0 // pred_check_branch
    %6622 = sbr.rel (0) target = $region25
  $region24: #{deepmind_cnn.7} parent=0 // pred_region
    _
  $region25: #{deepmind_cnn.7} parent=0 // pred_fallthru
    _
  // Predicated region
  $region26: #{deepmind_cnn.7} parent=0 // pred_check
    _
  $region27: #{deepmind_cnn.7} parent=0 // pred_check_branch
    %6624 = sbr.rel (0) target = $region29
  $region28: #{deepmind_cnn.7} parent=0 // pred_region
    _
  $region29: #{deepmind_cnn.7} parent=0 // pred_fallthru
    _

</llo_original>
